<compile_context>
chip_gen: v5e
topology: v5e:2x2
jax: 0.10.0
libtpu: 0.0.40
codegen_flags: <defaults>
</compile_context>

<pallas_src>
import jax
import jax.numpy as jnp
from jax import lax
from jax.experimental import pallas as pl
from jax.experimental.pallas import tpu as pltpu


def _make_bilstm_kernel(chunk, Bp, Hh):
    H4 = 4 * Hh

    def sigmoid(x):
        # 1 EUP op (tanh) + 2 VPU ops instead of exp + reciprocal.
        return 0.5 * jnp.tanh(0.5 * x) + 0.5

    def kernel(xf_ref, xb_ref,
               wih_f_ref, b_f_ref,
               wih_b_ref, b_b_ref,
               whh_blk_ref,
               hf_out_ref, hb_out_ref,
               pre_f, pre_b, hf_st, cf_st, hb_st, cb_st):
        # Chunk-level input projections for every timestep of the chunk, batched on
        # the MXU (bf16 inputs, f32 accumulation, bias added in f32).  Off the
        # serial recurrence path.
        pre_f[...] = jnp.dot(xf_ref[...], wih_f_ref[...],
                             preferred_element_type=jnp.float32) + b_f_ref[...]
        pre_b[...] = jnp.dot(xb_ref[...], wih_b_ref[...],
                             preferred_element_type=jnp.float32) + b_b_ref[...]

        # Zero the recurrent state only on the first chunk of the sequence.
        @pl.when(pl.program_id(0) == 0)
        def _():
            hf_st[...] = jnp.zeros_like(hf_st)
            cf_st[...] = jnp.zeros_like(cf_st)
            hb_st[...] = jnp.zeros_like(hb_st)
            cb_st[...] = jnp.zeros_like(cb_st)

        def cell(g, c):
            i_g = sigmoid(g[:, 0 * Hh:1 * Hh])      # 128-lane aligned slices
            f_g = sigmoid(g[:, 1 * Hh:2 * Hh])
            g_g = jnp.tanh(g[:, 2 * Hh:3 * Hh])
            o_g = sigmoid(g[:, 3 * Hh:4 * Hh])
            c = f_g * c + i_g * g_g
            return o_g * jnp.tanh(c), c

        def step(t, carry):
            h_f, c_f, h_b, c_b = carry
            row_f = pl.multiple_of(t * Bp, Bp)
            row_b = pl.multiple_of((chunk - 1 - t) * Bp, Bp)

            # Single block-diagonal recurrent matmul for both directions:
            # [h_f | h_b] (Bp, 2H) @ whh_blk (2H, 8H) -> [g_f | g_b].
            h_cat = jnp.concatenate([h_f, h_b], axis=1).astype(jnp.bfloat16)
            g_all = jnp.dot(h_cat, whh_blk_ref[...],
                            preferred_element_type=jnp.float32)
            g_f = pre_f[pl.ds(row_f, Bp), :] + g_all[:, :H4]
            g_b = pre_b[pl.ds(row_b, Bp), :] + g_all[:, H4:]

            h_f, c_f = cell(g_f, c_f)
            h_b, c_b = cell(g_b, c_b)

            hf_out_ref[pl.ds(row_f, Bp), :] = h_f
            hb_out_ref[pl.ds(row_b, Bp), :] = h_b   # forward-time position
            return (h_f, c_f, h_b, c_b)

        carry0 = (hf_st[...], cf_st[...], hb_st[...], cb_st[...])
        h_f, c_f, h_b, c_b = lax.fori_loop(0, chunk, step, carry0,
                                           unroll=min(chunk, 8))
        hf_st[...] = h_f
        cf_st[...] = c_f
        hb_st[...] = h_b
        cb_st[...] = c_b

    return kernel


def _round_up(v, m):
    return ((v + m - 1) // m) * m


def _vmem_capacity_bytes():
    try:
        return int(pltpu.get_tpu_info().vmem_capacity_bytes)
    except Exception:
        return 64 << 20            # conservative: valid on every generation


def _vmem_estimate(chunk, Bp, E, Hh):
    bf16, f32 = 2, 4
    Ep = _round_up(E, 128)
    rows = chunk * Bp
    x_blocks = 2 * 2 * rows * Ep * bf16                 # 2 operands, double-buffered
    out_blocks = 2 * 2 * rows * Hh * f32                # 2 outputs, double-buffered
    weights = 2 * (2 * Ep * 4 * Hh * bf16               # wih_f / wih_b
                   + 2 * 8 * 4 * Hh * f32               # biases (sublane padded)
                   + 2 * Hh * 8 * Hh * bf16)            # block-diagonal whh
    scratch = 2 * rows * 4 * Hh * f32 + 4 * _round_up(Bp, 8) * Hh * f32
    return x_blocks + out_blocks + weights + scratch


def fenci_zqx_forward(tokens, params, *, chunk=None):
    B, T = tokens.shape
    E = params["wih_f"].shape[0]
    Hh = params["whh_f"].shape[0]

    # Time-major bf16 gather straight from a bf16 table: no f32 (B,T,E) intermediate
    # and no transpose copy feeding the kernel.
    table = params["embedding"].astype(jnp.bfloat16)
    x = table[tokens.T]                                   # (T, B, E) bf16

    # Sublane-pad the batch so per-step (Bp, H) tiles use whole 8-row groups.
    Bp = _round_up(B, 8)
    if Bp != B:
        x = jnp.pad(x, ((0, 0), (0, Bp - B), (0, 0)))
    x_flat = x.reshape(T * Bp, E)

    vmem_cap = _vmem_capacity_bytes()
    if chunk is None:
        budget = int(0.55 * vmem_cap)
        chunk = 1
        for c in range(1, min(T, 256) + 1):
            if T % c == 0 and _vmem_estimate(c, Bp, E, Hh) <= budget:
                chunk = c
        # TODO(synk): pad T (with in-kernel masking of padded backward steps) so
        #             awkward sequence lengths still get large chunks.
    assert T % chunk == 0, "sequence length must be divisible by the time chunk"
    nt = T // chunk

    bf16 = jnp.bfloat16
    wih_f = params["wih_f"].astype(bf16)
    wih_b = params["wih_b"].astype(bf16)
    b_f = params["b_f"].astype(jnp.float32)
    b_b = params["b_b"].astype(jnp.float32)
    # Block-diagonal recurrent weight: [h_f|h_b] @ whh_blk == [h_f@whh_f | h_b@whh_b].
    whh_blk = jnp.zeros((2 * Hh, 8 * Hh), jnp.float32)
    whh_blk = whh_blk.at[:Hh, :4 * Hh].set(params["whh_f"])
    whh_blk = whh_blk.at[Hh:, 4 * Hh:].set(params["whh_b"])
    whh_blk = whh_blk.astype(bf16)

    fwd_x_spec = pl.BlockSpec((chunk * Bp, E), lambda i: (i, 0))
    bwd_x_spec = pl.BlockSpec((chunk * Bp, E), lambda i: (nt - 1 - i, 0))
    fwd_o_spec = pl.BlockSpec((chunk * Bp, Hh), lambda i: (i, 0))
    bwd_o_spec = pl.BlockSpec((chunk * Bp, Hh), lambda i: (nt - 1 - i, 0))

    def const(shape):
        # TODO(synk): pipeline_mode=pl.Buffered(1) would drop the dead second buffer
        #             of these constant-index weight blocks (small VMEM saving).
        return pl.BlockSpec(shape, lambda i: (0, 0))

    est = _vmem_estimate(chunk, Bp, E, Hh)
    vmem_limit = int(min(int(vmem_cap * 0.8), max(2 * est + (2 << 20), 16 << 20)))

    grid_spec = pltpu.PrefetchScalarGridSpec(
        num_scalar_prefetch=0,
        grid=(nt,),
        in_specs=[
            fwd_x_spec, bwd_x_spec,                        # same x array, two views
            const((E, 4 * Hh)), const((1, 4 * Hh)),        # fwd wih, bias
            const((E, 4 * Hh)), const((1, 4 * Hh)),        # bwd wih, bias
            const((2 * Hh, 8 * Hh)),                       # block-diag whh
        ],
        out_specs=[fwd_o_spec, bwd_o_spec],
        scratch_shapes=[
            pltpu.VMEM((chunk * Bp, 4 * Hh), jnp.float32),  # pre_f
            pltpu.VMEM((chunk * Bp, 4 * Hh), jnp.float32),  # pre_b
            pltpu.VMEM((Bp, Hh), jnp.float32),              # h_f state
            pltpu.VMEM((Bp, Hh), jnp.float32),              # c_f state
            pltpu.VMEM((Bp, Hh), jnp.float32),              # h_b state
            pltpu.VMEM((Bp, Hh), jnp.float32),              # c_b state
        ],
    )

    hf_flat, hb_flat = pl.pallas_call(
        _make_bilstm_kernel(chunk, Bp, Hh),
        out_shape=(jax.ShapeDtypeStruct((T * Bp, Hh), jnp.float32),
                   jax.ShapeDtypeStruct((T * Bp, Hh), jnp.float32)),
        grid_spec=grid_spec,
        compiler_params=pltpu.CompilerParams(
            dimension_semantics=("arbitrary",),
            vmem_limit_bytes=vmem_limit),
    )(x_flat, x_flat, wih_f, b_f, wih_b, b_b, whh_blk)

    hf = hf_flat.reshape(T, Bp, Hh)
    hb = hb_flat.reshape(T, Bp, Hh)      # already in forward time order (no flip)

    # Tiny 2H -> 3 projection kept in XLA so the kernel output stays lane-dense.
    out_tm = hf @ params["wlin"][:Hh] + hb @ params["wlin"][Hh:] + params["blin"][0]
    return jnp.transpose(out_tm, (1, 0, 2))[:B]            # (B, T, 3)


def init_params(key, voc_size, em_dim, H):
    ks = jax.random.split(key, 11)
    s = 1.0 / float(H) ** 0.5

    def u(k, shape):
        return jax.random.uniform(k, shape, jnp.float32, -s, s)

    return dict(
        embedding=jax.random.normal(ks[0], (voc_size, em_dim), jnp.float32),
        wih_f=u(ks[1], (em_dim, 4 * H)),
        whh_f=u(ks[2], (H, 4 * H)),
        b_f=u(ks[3], (1, 4 * H)) + u(ks[4], (1, 4 * H)),     # b_ih + b_hh
        wih_b=u(ks[5], (em_dim, 4 * H)),
        whh_b=u(ks[6], (H, 4 * H)),
        b_b=u(ks[7], (1, 4 * H)) + u(ks[8], (1, 4 * H)),
        wlin=u(ks[9], (2 * H, 3)),
        blin=u(ks[10], (1, 3)),
    )


# ---------- pure-JAX reference (same bf16-input precision policy) ----------
def _lstm_dir_ref(x_tbe, wih, whh, b, reverse):
    T, B, E = x_tbe.shape
    Hh = whh.shape[0]
    xs = jnp.flip(x_tbe, axis=0) if reverse else x_tbe
    pre = (jnp.dot(xs.astype(jnp.bfloat16).reshape(T * B, E),
                   wih.astype(jnp.bfloat16),
                   preferred_element_type=jnp.float32)
           .reshape(T, B, 4 * Hh) + b[0])

    def step(carry, g_in):
        h, c = carry
        g = g_in + jnp.dot(h.astype(jnp.bfloat16), whh.astype(jnp.bfloat16),
                           preferred_element_type=jnp.float32)
        i = jax.nn.sigmoid(g[:, :Hh])
        f = jax.nn.sigmoid(g[:, Hh:2 * Hh])
        gg = jnp.tanh(g[:, 2 * Hh:3 * Hh])
        o = jax.nn.sigmoid(g[:, 3 * Hh:])
        c = f * c + i * gg
        h = o * jnp.tanh(c)
        return (h, c), h

    init = (jnp.zeros((B, Hh), jnp.float32), jnp.zeros((B, Hh), jnp.float32))
    _, hs = lax.scan(step, init, pre)
    return jnp.flip(hs, axis=0) if reverse else hs            # (T, B, H)


def reference_forward(tokens, p):
    emb = p["embedding"][tokens].astype(jnp.float32)          # (B, T, E)
    x = jnp.transpose(emb, (1, 0, 2))                         # (T, B, E)
    hf = _lstm_dir_ref(x, p["wih_f"], p["whh_f"], p["b_f"], False)
    hb = _lstm_dir_ref(x, p["wih_b"], p["whh_b"], p["b_b"], True)
    out_tm = jnp.concatenate([hf, hb], axis=-1) @ p["wlin"] + p["blin"][0]
    return jnp.transpose(out_tm, (1, 0, 2))                   # (B, T, 3)


if __name__ == "__main__":
    # Small shapes consistent with the module: em_dim=100, H=128 (module defaults),
    # short sequence, tiny batch; chunk=8 exercises the multi-chunk recurrence grid
    # (state carry across grid steps and the reversed backward index_maps).
    B, T, E, H_, VOC = 2, 16, 100, 128, 50
    key = jax.random.PRNGKey(0)
    kp, kt = jax.random.split(key)
    params = init_params(kp, VOC, E, H_)
    tokens = jax.random.randint(kt, (B, T), 0, VOC, dtype=jnp.int32)

    out = jax.block_until_ready(fenci_zqx_forward(tokens, params, chunk=8))
    ref = jax.block_until_ready(reference_forward(tokens, params))

    assert out.shape == (B, T, 3), out.shape
    max_err = float(jnp.max(jnp.abs(out - ref)))
    assert jnp.allclose(out, ref, atol=3e-3, rtol=3e-3), \
        f"mismatch vs reference (max abs err {max_err})"
    print("KERNEL_OK")
</pallas_src>

<mosaic_0001>
module attributes {stable_mosaic.version = 11 : i64} {
  func.func @kernel(%arg0: i32, %arg1: memref<64x100xbf16, #tpu.memory_space<vmem>>, %arg2: memref<64x100xbf16, #tpu.memory_space<vmem>>, %arg3: memref<100x512xbf16, #tpu.memory_space<vmem>>, %arg4: memref<1x512xf32, #tpu.memory_space<vmem>>, %arg5: memref<100x512xbf16, #tpu.memory_space<vmem>>, %arg6: memref<1x512xf32, #tpu.memory_space<vmem>>, %arg7: memref<256x1024xbf16, #tpu.memory_space<vmem>>, %arg8: memref<64x128xf32, #tpu.memory_space<vmem>>, %arg9: memref<64x128xf32, #tpu.memory_space<vmem>>, %arg10: memref<64x512xf32, #tpu.memory_space<vmem>>, %arg11: memref<64x512xf32, #tpu.memory_space<vmem>>, %arg12: memref<8x128xf32, #tpu.memory_space<vmem>>, %arg13: memref<8x128xf32, #tpu.memory_space<vmem>>, %arg14: memref<8x128xf32, #tpu.memory_space<vmem>>, %arg15: memref<8x128xf32, #tpu.memory_space<vmem>>) attributes {dimension_semantics = [#tpu.dimension_semantics<arbitrary>], iteration_bounds = array<i64: 2>, scalar_prefetch = 0 : i64, scratch_operands = 6 : i64, tpu.core_type = #tpu.core_type<tc>, window_params = [{transform_indices = @transform_0, window_bounds = array<i64: 64, 100>}, {transform_indices = @transform_1, window_bounds = array<i64: 64, 100>}, {pipeline_mode = #tpu.pipeline_mode<synchronous>, transform_indices = @transform_2, window_bounds = array<i64: 100, 512>}, {pipeline_mode = #tpu.pipeline_mode<synchronous>, transform_indices = @transform_3, window_bounds = array<i64: 1, 512>}, {pipeline_mode = #tpu.pipeline_mode<synchronous>, transform_indices = @transform_4, window_bounds = array<i64: 100, 512>}, {pipeline_mode = #tpu.pipeline_mode<synchronous>, transform_indices = @transform_5, window_bounds = array<i64: 1, 512>}, {pipeline_mode = #tpu.pipeline_mode<synchronous>, transform_indices = @transform_6, window_bounds = array<i64: 256, 1024>}, {transform_indices = @transform_7, window_bounds = array<i64: 64, 128>}, {transform_indices = @transform_8, window_bounds = array<i64: 64, 128>}]} {
    %c0 = arith.constant 0 : index
    %c0_0 = arith.constant 0 : index
    %0 = vector.load %arg1[%c0, %c0_0] : memref<64x100xbf16, #tpu.memory_space<vmem>>, vector<64x100xbf16>
    %c0_1 = arith.constant 0 : index
    %c0_2 = arith.constant 0 : index
    %1 = vector.load %arg3[%c0_1, %c0_2] : memref<100x512xbf16, #tpu.memory_space<vmem>>, vector<100x512xbf16>
    %cst = arith.constant dense<0.000000e+00> : vector<64x512xf32>
    %2 = tpu.matmul %0, %1, %cst {dimension_numbers = #tpu.dot_dimension_numbers<[1], [0], [0], [1], [0, 0, 1, 1], [], []>} : vector<64x100xbf16>, vector<100x512xbf16>, vector<64x512xf32> -> vector<64x512xf32>
    %c0_3 = arith.constant 0 : index
    %c0_4 = arith.constant 0 : index
    %3 = vector.load %arg4[%c0_3, %c0_4] : memref<1x512xf32, #tpu.memory_space<vmem>>, vector<1x512xf32>
    %4 = vector.broadcast %3 : vector<1x512xf32> to vector<64x512xf32>
    %5 = arith.addf %2, %4 : vector<64x512xf32>
    %c0_5 = arith.constant 0 : index
    %c0_6 = arith.constant 0 : index
    %6 = vector.load %arg10[%c0_5, %c0_6] : memref<64x512xf32, #tpu.memory_space<vmem>>, vector<64x512xf32>
    tpu.vector_store %arg10[%c0_5, %c0_6], %5 {strides = array<i32>} : memref<64x512xf32, #tpu.memory_space<vmem>>, vector<64x512xf32>,
    %c0_7 = arith.constant 0 : index
    %c0_8 = arith.constant 0 : index
    %7 = vector.load %arg2[%c0_7, %c0_8] : memref<64x100xbf16, #tpu.memory_space<vmem>>, vector<64x100xbf16>
    %c0_9 = arith.constant 0 : index
    %c0_10 = arith.constant 0 : index
    %8 = vector.load %arg5[%c0_9, %c0_10] : memref<100x512xbf16, #tpu.memory_space<vmem>>, vector<100x512xbf16>
    %cst_11 = arith.constant dense<0.000000e+00> : vector<64x512xf32>
    %9 = tpu.matmul %7, %8, %cst_11 {dimension_numbers = #tpu.dot_dimension_numbers<[1], [0], [0], [1], [0, 0, 1, 1], [], []>} : vector<64x100xbf16>, vector<100x512xbf16>, vector<64x512xf32> -> vector<64x512xf32>
    %c0_12 = arith.constant 0 : index
    %c0_13 = arith.constant 0 : index
    %10 = vector.load %arg6[%c0_12, %c0_13] : memref<1x512xf32, #tpu.memory_space<vmem>>, vector<1x512xf32>
    %11 = vector.broadcast %10 : vector<1x512xf32> to vector<64x512xf32>
    %12 = arith.addf %9, %11 : vector<64x512xf32>
    %c0_14 = arith.constant 0 : index
    %c0_15 = arith.constant 0 : index
    %13 = vector.load %arg11[%c0_14, %c0_15] : memref<64x512xf32, #tpu.memory_space<vmem>>, vector<64x512xf32>
    tpu.vector_store %arg11[%c0_14, %c0_15], %12 {strides = array<i32>} : memref<64x512xf32, #tpu.memory_space<vmem>>, vector<64x512xf32>,
    %c0_i32 = arith.constant 0 : i32
    %14 = arith.cmpi eq, %arg0, %c0_i32 : i32
    %15 = arith.extui %14 : i1 to i32
    %c0_i32_16 = arith.constant 0 : i32
    %16 = arith.cmpi ne, %15, %c0_i32_16 : i32
    scf.if %16 {
      %cst_258 = arith.constant 0.000000e+00 : f32
      %689 = vector.broadcast %cst_258 : f32 to vector<8x128xf32>
      %c0_259 = arith.constant 0 : index
      %c0_260 = arith.constant 0 : index
      %690 = vector.load %arg12[%c0_259, %c0_260] : memref<8x128xf32, #tpu.memory_space<vmem>>, vector<8x128xf32>
      tpu.vector_store %arg12[%c0_259, %c0_260], %689 {strides = array<i32>} : memref<8x128xf32, #tpu.memory_space<vmem>>, vector<8x128xf32>,
      %cst_261 = arith.constant 0.000000e+00 : f32
      %691 = vector.broadcast %cst_261 : f32 to vector<8x128xf32>
      %c0_262 = arith.constant 0 : index
      %c0_263 = arith.constant 0 : index
      %692 = vector.load %arg13[%c0_262, %c0_263] : memref<8x128xf32, #tpu.memory_space<vmem>>, vector<8x128xf32>
      tpu.vector_store %arg13[%c0_262, %c0_263], %691 {strides = array<i32>} : memref<8x128xf32, #tpu.memory_space<vmem>>, vector<8x128xf32>,
      %cst_264 = arith.constant 0.000000e+00 : f32
      %693 = vector.broadcast %cst_264 : f32 to vector<8x128xf32>
      %c0_265 = arith.constant 0 : index
      %c0_266 = arith.constant 0 : index
      %694 = vector.load %arg14[%c0_265, %c0_266] : memref<8x128xf32, #tpu.memory_space<vmem>>, vector<8x128xf32>
      tpu.vector_store %arg14[%c0_265, %c0_266], %693 {strides = array<i32>} : memref<8x128xf32, #tpu.memory_space<vmem>>, vector<8x128xf32>,
      %cst_267 = arith.constant 0.000000e+00 : f32
      %695 = vector.broadcast %cst_267 : f32 to vector<8x128xf32>
      %c0_268 = arith.constant 0 : index
      %c0_269 = arith.constant 0 : index
      %696 = vector.load %arg15[%c0_268, %c0_269] : memref<8x128xf32, #tpu.memory_space<vmem>>, vector<8x128xf32>
      tpu.vector_store %arg15[%c0_268, %c0_269], %695 {strides = array<i32>} : memref<8x128xf32, #tpu.memory_space<vmem>>, vector<8x128xf32>,
    } else {
    }
    %c0_17 = arith.constant 0 : index
    %c0_18 = arith.constant 0 : index
    %17 = vector.load %arg12[%c0_17, %c0_18] : memref<8x128xf32, #tpu.memory_space<vmem>>, vector<8x128xf32>
    %c0_19 = arith.constant 0 : index
    %c0_20 = arith.constant 0 : index
    %18 = vector.load %arg13[%c0_19, %c0_20] : memref<8x128xf32, #tpu.memory_space<vmem>>, vector<8x128xf32>
    %c0_21 = arith.constant 0 : index
    %c0_22 = arith.constant 0 : index
    %19 = vector.load %arg14[%c0_21, %c0_22] : memref<8x128xf32, #tpu.memory_space<vmem>>, vector<8x128xf32>
    %c0_23 = arith.constant 0 : index
    %c0_24 = arith.constant 0 : index
    %20 = vector.load %arg15[%c0_23, %c0_24] : memref<8x128xf32, #tpu.memory_space<vmem>>, vector<8x128xf32>
    %c0_i32_25 = arith.constant 0 : i32
    %c8_i32 = arith.constant 8 : i32
    %21 = arith.muli %c0_i32_25, %c8_i32 : i32
    %22 = tpu.assume_multiple %21, 8 : i32
    %c7_i32 = arith.constant 7 : i32
    %23 = arith.subi %c7_i32, %c0_i32_25 : i32
    %c8_i32_26 = arith.constant 8 : i32
    %24 = arith.muli %23, %c8_i32_26 : i32
    %25 = tpu.assume_multiple %24, 8 : i32
    %26 = tpu.concatenate %17, %19 in 1 : vector<8x128xf32>, vector<8x128xf32> -> vector<8x256xf32>
    %27 = arith.truncf %26 : vector<8x256xf32> to vector<8x256xbf16>
    %c0_27 = arith.constant 0 : index
    %c0_28 = arith.constant 0 : index
    %28 = vector.load %arg7[%c0_27, %c0_28] : memref<256x1024xbf16, #tpu.memory_space<vmem>>, vector<256x1024xbf16>
    %cst_29 = arith.constant dense<0.000000e+00> : vector<8x1024xf32>
    %29 = tpu.matmul %27, %28, %cst_29 {dimension_numbers = #tpu.dot_dimension_numbers<[1], [0], [0], [1], [0, 0, 1, 1], [], []>} : vector<8x256xbf16>, vector<256x1024xbf16>, vector<8x1024xf32> -> vector<8x1024xf32>
    %30 = arith.index_cast %22 : i32 to index
    %c0_30 = arith.constant 0 : index
    %31 = vector.load %arg10[%30, %c0_30] : memref<64x512xf32, #tpu.memory_space<vmem>>, vector<8x512xf32>
    %32 = vector.extract_strided_slice %29 {offsets = [0, 0], sizes = [8, 512], strides = [1, 1]} : vector<8x1024xf32> to vector<8x512xf32>
    %33 = arith.addf %31, %32 : vector<8x512xf32>
    %34 = arith.index_cast %25 : i32 to index
    %c0_31 = arith.constant 0 : index
    %35 = vector.load %arg11[%34, %c0_31] : memref<64x512xf32, #tpu.memory_space<vmem>>, vector<8x512xf32>
    %36 = vector.extract_strided_slice %29 {offsets = [0, 512], sizes = [8, 512], strides = [1, 1]} : vector<8x1024xf32> to vector<8x512xf32>
    %37 = arith.addf %35, %36 : vector<8x512xf32>
    %38 = vector.extract_strided_slice %33 {offsets = [0, 0], sizes = [8, 128], strides = [1, 1]} : vector<8x512xf32> to vector<8x128xf32>
    %cst_32 = arith.constant 5.000000e-01 : f32
    %39 = vector.broadcast %cst_32 : f32 to vector<8x128xf32>
    %40 = arith.mulf %39, %38 : vector<8x128xf32>
    %41 = math.tanh %40 : vector<8x128xf32>
    %cst_33 = arith.constant 5.000000e-01 : f32
    %42 = vector.broadcast %cst_33 : f32 to vector<8x128xf32>
    %43 = arith.mulf %42, %41 : vector<8x128xf32>
    %cst_34 = arith.constant 5.000000e-01 : f32
    %44 = vector.broadcast %cst_34 : f32 to vector<8x128xf32>
    %45 = arith.addf %43, %44 : vector<8x128xf32>
    %46 = vector.extract_strided_slice %33 {offsets = [0, 128], sizes = [8, 128], strides = [1, 1]} : vector<8x512xf32> to vector<8x128xf32>
    %cst_35 = arith.constant 5.000000e-01 : f32
    %47 = vector.broadcast %cst_35 : f32 to vector<8x128xf32>
    %48 = arith.mulf %47, %46 : vector<8x128xf32>
    %49 = math.tanh %48 : vector<8x128xf32>
    %cst_36 = arith.constant 5.000000e-01 : f32
    %50 = vector.broadcast %cst_36 : f32 to vector<8x128xf32>
    %51 = arith.mulf %50, %49 : vector<8x128xf32>
    %cst_37 = arith.constant 5.000000e-01 : f32
    %52 = vector.broadcast %cst_37 : f32 to vector<8x128xf32>
    %53 = arith.addf %51, %52 : vector<8x128xf32>
    %54 = vector.extract_strided_slice %33 {offsets = [0, 256], sizes = [8, 128], strides = [1, 1]} : vector<8x512xf32> to vector<8x128xf32>
    %55 = math.tanh %54 : vector<8x128xf32>
    %56 = vector.extract_strided_slice %33 {offsets = [0, 384], sizes = [8, 128], strides = [1, 1]} : vector<8x512xf32> to vector<8x128xf32>
    %cst_38 = arith.constant 5.000000e-01 : f32
    %57 = vector.broadcast %cst_38 : f32 to vector<8x128xf32>
    %58 = arith.mulf %57, %56 : vector<8x128xf32>
    %59 = math.tanh %58 : vector<8x128xf32>
    %cst_39 = arith.constant 5.000000e-01 : f32
    %60 = vector.broadcast %cst_39 : f32 to vector<8x128xf32>
    %61 = arith.mulf %60, %59 : vector<8x128xf32>
    %cst_40 = arith.constant 5.000000e-01 : f32
    %62 = vector.broadcast %cst_40 : f32 to vector<8x128xf32>
    %63 = arith.addf %61, %62 : vector<8x128xf32>
    %64 = arith.mulf %53, %18 : vector<8x128xf32>
    %65 = arith.mulf %45, %55 : vector<8x128xf32>
    %66 = arith.addf %64, %65 : vector<8x128xf32>
    %67 = math.tanh %66 : vector<8x128xf32>
    %68 = arith.mulf %63, %67 : vector<8x128xf32>
    %69 = vector.extract_strided_slice %37 {offsets = [0, 0], sizes = [8, 128], strides = [1, 1]} : vector<8x512xf32> to vector<8x128xf32>
    %cst_41 = arith.constant 5.000000e-01 : f32
    %70 = vector.broadcast %cst_41 : f32 to vector<8x128xf32>
    %71 = arith.mulf %70, %69 : vector<8x128xf32>
    %72 = math.tanh %71 : vector<8x128xf32>
    %cst_42 = arith.constant 5.000000e-01 : f32
    %73 = vector.broadcast %cst_42 : f32 to vector<8x128xf32>
    %74 = arith.mulf %73, %72 : vector<8x128xf32>
    %cst_43 = arith.constant 5.000000e-01 : f32
    %75 = vector.broadcast %cst_43 : f32 to vector<8x128xf32>
    %76 = arith.addf %74, %75 : vector<8x128xf32>
    %77 = vector.extract_strided_slice %37 {offsets = [0, 128], sizes = [8, 128], strides = [1, 1]} : vector<8x512xf32> to vector<8x128xf32>
    %cst_44 = arith.constant 5.000000e-01 : f32
    %78 = vector.broadcast %cst_44 : f32 to vector<8x128xf32>
    %79 = arith.mulf %78, %77 : vector<8x128xf32>
    %80 = math.tanh %79 : vector<8x128xf32>
    %cst_45 = arith.constant 5.000000e-01 : f32
    %81 = vector.broadcast %cst_45 : f32 to vector<8x128xf32>
    %82 = arith.mulf %81, %80 : vector<8x128xf32>
    %cst_46 = arith.constant 5.000000e-01 : f32
    %83 = vector.broadcast %cst_46 : f32 to vector<8x128xf32>
    %84 = arith.addf %82, %83 : vector<8x128xf32>
    %85 = vector.extract_strided_slice %37 {offsets = [0, 256], sizes = [8, 128], strides = [1, 1]} : vector<8x512xf32> to vector<8x128xf32>
    %86 = math.tanh %85 : vector<8x128xf32>
    %87 = vector.extract_strided_slice %37 {offsets = [0, 384], sizes = [8, 128], strides = [1, 1]} : vector<8x512xf32> to vector<8x128xf32>
    %cst_47 = arith.constant 5.000000e-01 : f32
    %88 = vector.broadcast %cst_47 : f32 to vector<8x128xf32>
    %89 = arith.mulf %88, %87 : vector<8x128xf32>
    %90 = math.tanh %89 : vector<8x128xf32>
    %cst_48 = arith.constant 5.000000e-01 : f32
    %91 = vector.broadcast %cst_48 : f32 to vector<8x128xf32>
    %92 = arith.mulf %91, %90 : vector<8x128xf32>
    %cst_49 = arith.constant 5.000000e-01 : f32
    %93 = vector.broadcast %cst_49 : f32 to vector<8x128xf32>
    %94 = arith.addf %92, %93 : vector<8x128xf32>
    %95 = arith.mulf %84, %20 : vector<8x128xf32>
    %96 = arith.mulf %76, %86 : vector<8x128xf32>
    %97 = arith.addf %95, %96 : vector<8x128xf32>
    %98 = math.tanh %97 : vector<8x128xf32>
    %99 = arith.mulf %94, %98 : vector<8x128xf32>
    %100 = arith.index_cast %22 : i32 to index
    %c0_50 = arith.constant 0 : index
    %101 = vector.load %arg8[%100, %c0_50] : memref<64x128xf32, #tpu.memory_space<vmem>>, vector<8x128xf32>
    tpu.vector_store %arg8[%100, %c0_50], %68 {strides = array<i32>} : memref<64x128xf32, #tpu.memory_space<vmem>>, vector<8x128xf32>,
    %102 = arith.index_cast %25 : i32 to index
    %c0_51 = arith.constant 0 : index
    %103 = vector.load %arg9[%102, %c0_51] : memref<64x128xf32, #tpu.memory_space<vmem>>, vector<8x128xf32>
    tpu.vector_store %arg9[%102, %c0_51], %99 {strides = array<i32>} : memref<64x128xf32, #tpu.memory_space<vmem>>, vector<8x128xf32>,
    %c1_i32 = arith.constant 1 : i32
    %c8_i32_52 = arith.constant 8 : i32
    %104 = arith.muli %c1_i32, %c8_i32_52 : i32
    %105 = tpu.assume_multiple %104, 8 : i32
    %c7_i32_53 = arith.constant 7 : i32
    %106 = arith.subi %c7_i32_53, %c1_i32 : i32
    %c8_i32_54 = arith.constant 8 : i32
    %107 = arith.muli %106, %c8_i32_54 : i32
    %108 = tpu.assume_multiple %107, 8 : i32
    %109 = tpu.concatenate %68, %99 in 1 : vector<8x128xf32>, vector<8x128xf32> -> vector<8x256xf32>
    %110 = arith.truncf %109 : vector<8x256xf32> to vector<8x256xbf16>
    %c0_55 = arith.constant 0 : index
    %c0_56 = arith.constant 0 : index
    %111 = vector.load %arg7[%c0_55, %c0_56] : memref<256x1024xbf16, #tpu.memory_space<vmem>>, vector<256x1024xbf16>
    %cst_57 = arith.constant dense<0.000000e+00> : vector<8x1024xf32>
    %112 = tpu.matmul %110, %111, %cst_57 {dimension_numbers = #tpu.dot_dimension_numbers<[1], [0], [0], [1], [0, 0, 1, 1], [], []>} : vector<8x256xbf16>, vector<256x1024xbf16>, vector<8x1024xf32> -> vector<8x1024xf32>
    %113 = arith.index_cast %105 : i32 to index
    %c0_58 = arith.constant 0 : index
    %114 = vector.load %arg10[%113, %c0_58] : memref<64x512xf32, #tpu.memory_space<vmem>>, vector<8x512xf32>
    %115 = vector.extract_strided_slice %112 {offsets = [0, 0], sizes = [8, 512], strides = [1, 1]} : vector<8x1024xf32> to vector<8x512xf32>
    %116 = arith.addf %114, %115 : vector<8x512xf32>
    %117 = arith.index_cast %108 : i32 to index
    %c0_59 = arith.constant 0 : index
    %118 = vector.load %arg11[%117, %c0_59] : memref<64x512xf32, #tpu.memory_space<vmem>>, vector<8x512xf32>
    %119 = vector.extract_strided_slice %112 {offsets = [0, 512], sizes = [8, 512], strides = [1, 1]} : vector<8x1024xf32> to vector<8x512xf32>
    %120 = arith.addf %118, %119 : vector<8x512xf32>
    %121 = vector.extract_strided_slice %116 {offsets = [0, 0], sizes = [8, 128], strides = [1, 1]} : vector<8x512xf32> to vector<8x128xf32>
    %cst_60 = arith.constant 5.000000e-01 : f32
    %122 = vector.broadcast %cst_60 : f32 to vector<8x128xf32>
    %123 = arith.mulf %122, %121 : vector<8x128xf32>
    %124 = math.tanh %123 : vector<8x128xf32>
    %cst_61 = arith.constant 5.000000e-01 : f32
    %125 = vector.broadcast %cst_61 : f32 to vector<8x128xf32>
    %126 = arith.mulf %125, %124 : vector<8x128xf32>
    %cst_62 = arith.constant 5.000000e-01 : f32
    %127 = vector.broadcast %cst_62 : f32 to vector<8x128xf32>
    %128 = arith.addf %126, %127 : vector<8x128xf32>
    %129 = vector.extract_strided_slice %116 {offsets = [0, 128], sizes = [8, 128], strides = [1, 1]} : vector<8x512xf32> to vector<8x128xf32>
    %cst_63 = arith.constant 5.000000e-01 : f32
    %130 = vector.broadcast %cst_63 : f32 to vector<8x128xf32>
    %131 = arith.mulf %130, %129 : vector<8x128xf32>
    %132 = math.tanh %131 : vector<8x128xf32>
    %cst_64 = arith.constant 5.000000e-01 : f32
    %133 = vector.broadcast %cst_64 : f32 to vector<8x128xf32>
    %134 = arith.mulf %133, %132 : vector<8x128xf32>
    %cst_65 = arith.constant 5.000000e-01 : f32
    %135 = vector.broadcast %cst_65 : f32 to vector<8x128xf32>
    %136 = arith.addf %134, %135 : vector<8x128xf32>
    %137 = vector.extract_strided_slice %116 {offsets = [0, 256], sizes = [8, 128], strides = [1, 1]} : vector<8x512xf32> to vector<8x128xf32>
    %138 = math.tanh %137 : vector<8x128xf32>
    %139 = vector.extract_strided_slice %116 {offsets = [0, 384], sizes = [8, 128], strides = [1, 1]} : vector<8x512xf32> to vector<8x128xf32>
    %cst_66 = arith.constant 5.000000e-01 : f32
    %140 = vector.broadcast %cst_66 : f32 to vector<8x128xf32>
    %141 = arith.mulf %140, %139 : vector<8x128xf32>
    %142 = math.tanh %141 : vector<8x128xf32>
    %cst_67 = arith.constant 5.000000e-01 : f32
    %143 = vector.broadcast %cst_67 : f32 to vector<8x128xf32>
    %144 = arith.mulf %143, %142 : vector<8x128xf32>
    %cst_68 = arith.constant 5.000000e-01 : f32
    %145 = vector.broadcast %cst_68 : f32 to vector<8x128xf32>
    %146 = arith.addf %144, %145 : vector<8x128xf32>
    %147 = arith.mulf %136, %66 : vector<8x128xf32>
    %148 = arith.mulf %128, %138 : vector<8x128xf32>
    %149 = arith.addf %147, %148 : vector<8x128xf32>
    %150 = math.tanh %149 : vector<8x128xf32>
    %151 = arith.mulf %146, %150 : vector<8x128xf32>
    %152 = vector.extract_strided_slice %120 {offsets = [0, 0], sizes = [8, 128], strides = [1, 1]} : vector<8x512xf32> to vector<8x128xf32>
    %cst_69 = arith.constant 5.000000e-01 : f32
    %153 = vector.broadcast %cst_69 : f32 to vector<8x128xf32>
    %154 = arith.mulf %153, %152 : vector<8x128xf32>
    %155 = math.tanh %154 : vector<8x128xf32>
    %cst_70 = arith.constant 5.000000e-01 : f32
    %156 = vector.broadcast %cst_70 : f32 to vector<8x128xf32>
    %157 = arith.mulf %156, %155 : vector<8x128xf32>
    %cst_71 = arith.constant 5.000000e-01 : f32
    %158 = vector.broadcast %cst_71 : f32 to vector<8x128xf32>
    %159 = arith.addf %157, %158 : vector<8x128xf32>
    %160 = vector.extract_strided_slice %120 {offsets = [0, 128], sizes = [8, 128], strides = [1, 1]} : vector<8x512xf32> to vector<8x128xf32>
    %cst_72 = arith.constant 5.000000e-01 : f32
    %161 = vector.broadcast %cst_72 : f32 to vector<8x128xf32>
    %162 = arith.mulf %161, %160 : vector<8x128xf32>
    %163 = math.tanh %162 : vector<8x128xf32>
    %cst_73 = arith.constant 5.000000e-01 : f32
    %164 = vector.broadcast %cst_73 : f32 to vector<8x128xf32>
    %165 = arith.mulf %164, %163 : vector<8x128xf32>
    %cst_74 = arith.constant 5.000000e-01 : f32
    %166 = vector.broadcast %cst_74 : f32 to vector<8x128xf32>
    %167 = arith.addf %165, %166 : vector<8x128xf32>
    %168 = vector.extract_strided_slice %120 {offsets = [0, 256], sizes = [8, 128], strides = [1, 1]} : vector<8x512xf32> to vector<8x128xf32>
    %169 = math.tanh %168 : vector<8x128xf32>
    %170 = vector.extract_strided_slice %120 {offsets = [0, 384], sizes = [8, 128], strides = [1, 1]} : vector<8x512xf32> to vector<8x128xf32>
    %cst_75 = arith.constant 5.000000e-01 : f32
    %171 = vector.broadcast %cst_75 : f32 to vector<8x128xf32>
    %172 = arith.mulf %171, %170 : vector<8x128xf32>
    %173 = math.tanh %172 : vector<8x128xf32>
    %cst_76 = arith.constant 5.000000e-01 : f32
    %174 = vector.broadcast %cst_76 : f32 to vector<8x128xf32>
    %175 = arith.mulf %174, %173 : vector<8x128xf32>
    %cst_77 = arith.constant 5.000000e-01 : f32
    %176 = vector.broadcast %cst_77 : f32 to vector<8x128xf32>
    %177 = arith.addf %175, %176 : vector<8x128xf32>
    %178 = arith.mulf %167, %97 : vector<8x128xf32>
    %179 = arith.mulf %159, %169 : vector<8x128xf32>
    %180 = arith.addf %178, %179 : vector<8x128xf32>
    %181 = math.tanh %180 : vector<8x128xf32>
    %182 = arith.mulf %177, %181 : vector<8x128xf32>
    %183 = arith.index_cast %105 : i32 to index
    %c0_78 = arith.constant 0 : index
    %184 = vector.load %arg8[%183, %c0_78] : memref<64x128xf32, #tpu.memory_space<vmem>>, vector<8x128xf32>
    tpu.vector_store %arg8[%183, %c0_78], %151 {strides = array<i32>} : memref<64x128xf32, #tpu.memory_space<vmem>>, vector<8x128xf32>,
    %185 = arith.index_cast %108 : i32 to index
    %c0_79 = arith.constant 0 : index
    %186 = vector.load %arg9[%185, %c0_79] : memref<64x128xf32, #tpu.memory_space<vmem>>, vector<8x128xf32>
    tpu.vector_store %arg9[%185, %c0_79], %182 {strides = array<i32>} : memref<64x128xf32, #tpu.memory_space<vmem>>, vector<8x128xf32>,
    %c2_i32 = arith.constant 2 : i32
    %c8_i32_80 = arith.constant 8 : i32
    %187 = arith.muli %c2_i32, %c8_i32_80 : i32
    %188 = tpu.assume_multiple %187, 8 : i32
    %c7_i32_81 = arith.constant 7 : i32
    %189 = arith.subi %c7_i32_81, %c2_i32 : i32
    %c8_i32_82 = arith.constant 8 : i32
    %190 = arith.muli %189, %c8_i32_82 : i32
    %191 = tpu.assume_multiple %190, 8 : i32
    %192 = tpu.concatenate %151, %182 in 1 : vector<8x128xf32>, vector<8x128xf32> -> vector<8x256xf32>
    %193 = arith.truncf %192 : vector<8x256xf32> to vector<8x256xbf16>
    %c0_83 = arith.constant 0 : index
    %c0_84 = arith.constant 0 : index
    %194 = vector.load %arg7[%c0_83, %c0_84] : memref<256x1024xbf16, #tpu.memory_space<vmem>>, vector<256x1024xbf16>
    %cst_85 = arith.constant dense<0.000000e+00> : vector<8x1024xf32>
    %195 = tpu.matmul %193, %194, %cst_85 {dimension_numbers = #tpu.dot_dimension_numbers<[1], [0], [0], [1], [0, 0, 1, 1], [], []>} : vector<8x256xbf16>, vector<256x1024xbf16>, vector<8x1024xf32> -> vector<8x1024xf32>
    %196 = arith.index_cast %188 : i32 to index
    %c0_86 = arith.constant 0 : index
    %197 = vector.load %arg10[%196, %c0_86] : memref<64x512xf32, #tpu.memory_space<vmem>>, vector<8x512xf32>
    %198 = vector.extract_strided_slice %195 {offsets = [0, 0], sizes = [8, 512], strides = [1, 1]} : vector<8x1024xf32> to vector<8x512xf32>
    %199 = arith.addf %197, %198 : vector<8x512xf32>
    %200 = arith.index_cast %191 : i32 to index
    %c0_87 = arith.constant 0 : index
    %201 = vector.load %arg11[%200, %c0_87] : memref<64x512xf32, #tpu.memory_space<vmem>>, vector<8x512xf32>
    %202 = vector.extract_strided_slice %195 {offsets = [0, 512], sizes = [8, 512], strides = [1, 1]} : vector<8x1024xf32> to vector<8x512xf32>
    %203 = arith.addf %201, %202 : vector<8x512xf32>
    %204 = vector.extract_strided_slice %199 {offsets = [0, 0], sizes = [8, 128], strides = [1, 1]} : vector<8x512xf32> to vector<8x128xf32>
    %cst_88 = arith.constant 5.000000e-01 : f32
    %205 = vector.broadcast %cst_88 : f32 to vector<8x128xf32>
    %206 = arith.mulf %205, %204 : vector<8x128xf32>
    %207 = math.tanh %206 : vector<8x128xf32>
    %cst_89 = arith.constant 5.000000e-01 : f32
    %208 = vector.broadcast %cst_89 : f32 to vector<8x128xf32>
    %209 = arith.mulf %208, %207 : vector<8x128xf32>
    %cst_90 = arith.constant 5.000000e-01 : f32
    %210 = vector.broadcast %cst_90 : f32 to vector<8x128xf32>
    %211 = arith.addf %209, %210 : vector<8x128xf32>
    %212 = vector.extract_strided_slice %199 {offsets = [0, 128], sizes = [8, 128], strides = [1, 1]} : vector<8x512xf32> to vector<8x128xf32>
    %cst_91 = arith.constant 5.000000e-01 : f32
    %213 = vector.broadcast %cst_91 : f32 to vector<8x128xf32>
    %214 = arith.mulf %213, %212 : vector<8x128xf32>
    %215 = math.tanh %214 : vector<8x128xf32>
    %cst_92 = arith.constant 5.000000e-01 : f32
    %216 = vector.broadcast %cst_92 : f32 to vector<8x128xf32>
    %217 = arith.mulf %216, %215 : vector<8x128xf32>
    %cst_93 = arith.constant 5.000000e-01 : f32
    %218 = vector.broadcast %cst_93 : f32 to vector<8x128xf32>
    %219 = arith.addf %217, %218 : vector<8x128xf32>
    %220 = vector.extract_strided_slice %199 {offsets = [0, 256], sizes = [8, 128], strides = [1, 1]} : vector<8x512xf32> to vector<8x128xf32>
    %221 = math.tanh %220 : vector<8x128xf32>
    %222 = vector.extract_strided_slice %199 {offsets = [0, 384], sizes = [8, 128], strides = [1, 1]} : vector<8x512xf32> to vector<8x128xf32>
    %cst_94 = arith.constant 5.000000e-01 : f32
    %223 = vector.broadcast %cst_94 : f32 to vector<8x128xf32>
    %224 = arith.mulf %223, %222 : vector<8x128xf32>
    %225 = math.tanh %224 : vector<8x128xf32>
    %cst_95 = arith.constant 5.000000e-01 : f32
    %226 = vector.broadcast %cst_95 : f32 to vector<8x128xf32>
    %227 = arith.mulf %226, %225 : vector<8x128xf32>
    %cst_96 = arith.constant 5.000000e-01 : f32
    %228 = vector.broadcast %cst_96 : f32 to vector<8x128xf32>
    %229 = arith.addf %227, %228 : vector<8x128xf32>
    %230 = arith.mulf %219, %149 : vector<8x128xf32>
    %231 = arith.mulf %211, %221 : vector<8x128xf32>
    %232 = arith.addf %230, %231 : vector<8x128xf32>
    %233 = math.tanh %232 : vector<8x128xf32>
    %234 = arith.mulf %229, %233 : vector<8x128xf32>
    %235 = vector.extract_strided_slice %203 {offsets = [0, 0], sizes = [8, 128], strides = [1, 1]} : vector<8x512xf32> to vector<8x128xf32>
    %cst_97 = arith.constant 5.000000e-01 : f32
    %236 = vector.broadcast %cst_97 : f32 to vector<8x128xf32>
    %237 = arith.mulf %236, %235 : vector<8x128xf32>
    %238 = math.tanh %237 : vector<8x128xf32>
    %cst_98 = arith.constant 5.000000e-01 : f32
    %239 = vector.broadcast %cst_98 : f32 to vector<8x128xf32>
    %240 = arith.mulf %239, %238 : vector<8x128xf32>
    %cst_99 = arith.constant 5.000000e-01 : f32
    %241 = vector.broadcast %cst_99 : f32 to vector<8x128xf32>
    %242 = arith.addf %240, %241 : vector<8x128xf32>
    %243 = vector.extract_strided_slice %203 {offsets = [0, 128], sizes = [8, 128], strides = [1, 1]} : vector<8x512xf32> to vector<8x128xf32>
    %cst_100 = arith.constant 5.000000e-01 : f32
    %244 = vector.broadcast %cst_100 : f32 to vector<8x128xf32>
    %245 = arith.mulf %244, %243 : vector<8x128xf32>
    %246 = math.tanh %245 : vector<8x128xf32>
    %cst_101 = arith.constant 5.000000e-01 : f32
    %247 = vector.broadcast %cst_101 : f32 to vector<8x128xf32>
    %248 = arith.mulf %247, %246 : vector<8x128xf32>
    %cst_102 = arith.constant 5.000000e-01 : f32
    %249 = vector.broadcast %cst_102 : f32 to vector<8x128xf32>
    %250 = arith.addf %248, %249 : vector<8x128xf32>
    %251 = vector.extract_strided_slice %203 {offsets = [0, 256], sizes = [8, 128], strides = [1, 1]} : vector<8x512xf32> to vector<8x128xf32>
    %252 = math.tanh %251 : vector<8x128xf32>
    %253 = vector.extract_strided_slice %203 {offsets = [0, 384], sizes = [8, 128], strides = [1, 1]} : vector<8x512xf32> to vector<8x128xf32>
    %cst_103 = arith.constant 5.000000e-01 : f32
    %254 = vector.broadcast %cst_103 : f32 to vector<8x128xf32>
    %255 = arith.mulf %254, %253 : vector<8x128xf32>
    %256 = math.tanh %255 : vector<8x128xf32>
    %cst_104 = arith.constant 5.000000e-01 : f32
    %257 = vector.broadcast %cst_104 : f32 to vector<8x128xf32>
    %258 = arith.mulf %257, %256 : vector<8x128xf32>
    %cst_105 = arith.constant 5.000000e-01 : f32
    %259 = vector.broadcast %cst_105 : f32 to vector<8x128xf32>
    %260 = arith.addf %258, %259 : vector<8x128xf32>
    %261 = arith.mulf %250, %180 : vector<8x128xf32>
    %262 = arith.mulf %242, %252 : vector<8x128xf32>
    %263 = arith.addf %261, %262 : vector<8x128xf32>
    %264 = math.tanh %263 : vector<8x128xf32>
    %265 = arith.mulf %260, %264 : vector<8x128xf32>
    %266 = arith.index_cast %188 : i32 to index
    %c0_106 = arith.constant 0 : index
    %267 = vector.load %arg8[%266, %c0_106] : memref<64x128xf32, #tpu.memory_space<vmem>>, vector<8x128xf32>
    tpu.vector_store %arg8[%266, %c0_106], %234 {strides = array<i32>} : memref<64x128xf32, #tpu.memory_space<vmem>>, vector<8x128xf32>,
    %268 = arith.index_cast %191 : i32 to index
    %c0_107 = arith.constant 0 : index
    %269 = vector.load %arg9[%268, %c0_107] : memref<64x128xf32, #tpu.memory_space<vmem>>, vector<8x128xf32>
    tpu.vector_store %arg9[%268, %c0_107], %265 {strides = array<i32>} : memref<64x128xf32, #tpu.memory_space<vmem>>, vector<8x128xf32>,
    %c3_i32 = arith.constant 3 : i32
    %c8_i32_108 = arith.constant 8 : i32
    %270 = arith.muli %c3_i32, %c8_i32_108 : i32
    %271 = tpu.assume_multiple %270, 8 : i32
    %c7_i32_109 = arith.constant 7 : i32
    %272 = arith.subi %c7_i32_109, %c3_i32 : i32
    %c8_i32_110 = arith.constant 8 : i32
    %273 = arith.muli %272, %c8_i32_110 : i32
    %274 = tpu.assume_multiple %273, 8 : i32
    %275 = tpu.concatenate %234, %265 in 1 : vector<8x128xf32>, vector<8x128xf32> -> vector<8x256xf32>
    %276 = arith.truncf %275 : vector<8x256xf32> to vector<8x256xbf16>
    %c0_111 = arith.constant 0 : index
    %c0_112 = arith.constant 0 : index
    %277 = vector.load %arg7[%c0_111, %c0_112] : memref<256x1024xbf16, #tpu.memory_space<vmem>>, vector<256x1024xbf16>
    %cst_113 = arith.constant dense<0.000000e+00> : vector<8x1024xf32>
    %278 = tpu.matmul %276, %277, %cst_113 {dimension_numbers = #tpu.dot_dimension_numbers<[1], [0], [0], [1], [0, 0, 1, 1], [], []>} : vector<8x256xbf16>, vector<256x1024xbf16>, vector<8x1024xf32> -> vector<8x1024xf32>
    %279 = arith.index_cast %271 : i32 to index
    %c0_114 = arith.constant 0 : index
    %280 = vector.load %arg10[%279, %c0_114] : memref<64x512xf32, #tpu.memory_space<vmem>>, vector<8x512xf32>
    %281 = vector.extract_strided_slice %278 {offsets = [0, 0], sizes = [8, 512], strides = [1, 1]} : vector<8x1024xf32> to vector<8x512xf32>
    %282 = arith.addf %280, %281 : vector<8x512xf32>
    %283 = arith.index_cast %274 : i32 to index
    %c0_115 = arith.constant 0 : index
    %284 = vector.load %arg11[%283, %c0_115] : memref<64x512xf32, #tpu.memory_space<vmem>>, vector<8x512xf32>
    %285 = vector.extract_strided_slice %278 {offsets = [0, 512], sizes = [8, 512], strides = [1, 1]} : vector<8x1024xf32> to vector<8x512xf32>
    %286 = arith.addf %284, %285 : vector<8x512xf32>
    %287 = vector.extract_strided_slice %282 {offsets = [0, 0], sizes = [8, 128], strides = [1, 1]} : vector<8x512xf32> to vector<8x128xf32>
    %cst_116 = arith.constant 5.000000e-01 : f32
    %288 = vector.broadcast %cst_116 : f32 to vector<8x128xf32>
    %289 = arith.mulf %288, %287 : vector<8x128xf32>
    %290 = math.tanh %289 : vector<8x128xf32>
    %cst_117 = arith.constant 5.000000e-01 : f32
    %291 = vector.broadcast %cst_117 : f32 to vector<8x128xf32>
    %292 = arith.mulf %291, %290 : vector<8x128xf32>
    %cst_118 = arith.constant 5.000000e-01 : f32
    %293 = vector.broadcast %cst_118 : f32 to vector<8x128xf32>
    %294 = arith.addf %292, %293 : vector<8x128xf32>
    %295 = vector.extract_strided_slice %282 {offsets = [0, 128], sizes = [8, 128], strides = [1, 1]} : vector<8x512xf32> to vector<8x128xf32>
    %cst_119 = arith.constant 5.000000e-01 : f32
    %296 = vector.broadcast %cst_119 : f32 to vector<8x128xf32>
    %297 = arith.mulf %296, %295 : vector<8x128xf32>
    %298 = math.tanh %297 : vector<8x128xf32>
    %cst_120 = arith.constant 5.000000e-01 : f32
    %299 = vector.broadcast %cst_120 : f32 to vector<8x128xf32>
    %300 = arith.mulf %299, %298 : vector<8x128xf32>
    %cst_121 = arith.constant 5.000000e-01 : f32
    %301 = vector.broadcast %cst_121 : f32 to vector<8x128xf32>
    %302 = arith.addf %300, %301 : vector<8x128xf32>
    %303 = vector.extract_strided_slice %282 {offsets = [0, 256], sizes = [8, 128], strides = [1, 1]} : vector<8x512xf32> to vector<8x128xf32>
    %304 = math.tanh %303 : vector<8x128xf32>
    %305 = vector.extract_strided_slice %282 {offsets = [0, 384], sizes = [8, 128], strides = [1, 1]} : vector<8x512xf32> to vector<8x128xf32>
    %cst_122 = arith.constant 5.000000e-01 : f32
    %306 = vector.broadcast %cst_122 : f32 to vector<8x128xf32>
    %307 = arith.mulf %306, %305 : vector<8x128xf32>
    %308 = math.tanh %307 : vector<8x128xf32>
    %cst_123 = arith.constant 5.000000e-01 : f32
    %309 = vector.broadcast %cst_123 : f32 to vector<8x128xf32>
    %310 = arith.mulf %309, %308 : vector<8x128xf32>
    %cst_124 = arith.constant 5.000000e-01 : f32
    %311 = vector.broadcast %cst_124 : f32 to vector<8x128xf32>
    %312 = arith.addf %310, %311 : vector<8x128xf32>
    %313 = arith.mulf %302, %232 : vector<8x128xf32>
    %314 = arith.mulf %294, %304 : vector<8x128xf32>
    %315 = arith.addf %313, %314 : vector<8x128xf32>
    %316 = math.tanh %315 : vector<8x128xf32>
    %317 = arith.mulf %312, %316 : vector<8x128xf32>
    %318 = vector.extract_strided_slice %286 {offsets = [0, 0], sizes = [8, 128], strides = [1, 1]} : vector<8x512xf32> to vector<8x128xf32>
    %cst_125 = arith.constant 5.000000e-01 : f32
    %319 = vector.broadcast %cst_125 : f32 to vector<8x128xf32>
    %320 = arith.mulf %319, %318 : vector<8x128xf32>
    %321 = math.tanh %320 : vector<8x128xf32>
    %cst_126 = arith.constant 5.000000e-01 : f32
    %322 = vector.broadcast %cst_126 : f32 to vector<8x128xf32>
    %323 = arith.mulf %322, %321 : vector<8x128xf32>
    %cst_127 = arith.constant 5.000000e-01 : f32
    %324 = vector.broadcast %cst_127 : f32 to vector<8x128xf32>
    %325 = arith.addf %323, %324 : vector<8x128xf32>
    %326 = vector.extract_strided_slice %286 {offsets = [0, 128], sizes = [8, 128], strides = [1, 1]} : vector<8x512xf32> to vector<8x128xf32>
    %cst_128 = arith.constant 5.000000e-01 : f32
    %327 = vector.broadcast %cst_128 : f32 to vector<8x128xf32>
    %328 = arith.mulf %327, %326 : vector<8x128xf32>
    %329 = math.tanh %328 : vector<8x128xf32>
    %cst_129 = arith.constant 5.000000e-01 : f32
    %330 = vector.broadcast %cst_129 : f32 to vector<8x128xf32>
    %331 = arith.mulf %330, %329 : vector<8x128xf32>
    %cst_130 = arith.constant 5.000000e-01 : f32
    %332 = vector.broadcast %cst_130 : f32 to vector<8x128xf32>
    %333 = arith.addf %331, %332 : vector<8x128xf32>
    %334 = vector.extract_strided_slice %286 {offsets = [0, 256], sizes = [8, 128], strides = [1, 1]} : vector<8x512xf32> to vector<8x128xf32>
    %335 = math.tanh %334 : vector<8x128xf32>
    %336 = vector.extract_strided_slice %286 {offsets = [0, 384], sizes = [8, 128], strides = [1, 1]} : vector<8x512xf32> to vector<8x128xf32>
    %cst_131 = arith.constant 5.000000e-01 : f32
    %337 = vector.broadcast %cst_131 : f32 to vector<8x128xf32>
    %338 = arith.mulf %337, %336 : vector<8x128xf32>
    %339 = math.tanh %338 : vector<8x128xf32>
    %cst_132 = arith.constant 5.000000e-01 : f32
    %340 = vector.broadcast %cst_132 : f32 to vector<8x128xf32>
    %341 = arith.mulf %340, %339 : vector<8x128xf32>
    %cst_133 = arith.constant 5.000000e-01 : f32
    %342 = vector.broadcast %cst_133 : f32 to vector<8x128xf32>
    %343 = arith.addf %341, %342 : vector<8x128xf32>
    %344 = arith.mulf %333, %263 : vector<8x128xf32>
    %345 = arith.mulf %325, %335 : vector<8x128xf32>
    %346 = arith.addf %344, %345 : vector<8x128xf32>
    %347 = math.tanh %346 : vector<8x128xf32>
    %348 = arith.mulf %343, %347 : vector<8x128xf32>
    %349 = arith.index_cast %271 : i32 to index
    %c0_134 = arith.constant 0 : index
    %350 = vector.load %arg8[%349, %c0_134] : memref<64x128xf32, #tpu.memory_space<vmem>>, vector<8x128xf32>
    tpu.vector_store %arg8[%349, %c0_134], %317 {strides = array<i32>} : memref<64x128xf32, #tpu.memory_space<vmem>>, vector<8x128xf32>,
    %351 = arith.index_cast %274 : i32 to index
    %c0_135 = arith.constant 0 : index
    %352 = vector.load %arg9[%351, %c0_135] : memref<64x128xf32, #tpu.memory_space<vmem>>, vector<8x128xf32>
    tpu.vector_store %arg9[%351, %c0_135], %348 {strides = array<i32>} : memref<64x128xf32, #tpu.memory_space<vmem>>, vector<8x128xf32>,
    %c4_i32 = arith.constant 4 : i32
    %c8_i32_136 = arith.constant 8 : i32
    %353 = arith.muli %c4_i32, %c8_i32_136 : i32
    %354 = tpu.assume_multiple %353, 8 : i32
    %c7_i32_137 = arith.constant 7 : i32
    %355 = arith.subi %c7_i32_137, %c4_i32 : i32
    %c8_i32_138 = arith.constant 8 : i32
    %356 = arith.muli %355, %c8_i32_138 : i32
    %357 = tpu.assume_multiple %356, 8 : i32
    %358 = tpu.concatenate %317, %348 in 1 : vector<8x128xf32>, vector<8x128xf32> -> vector<8x256xf32>
    %359 = arith.truncf %358 : vector<8x256xf32> to vector<8x256xbf16>
    %c0_139 = arith.constant 0 : index
    %c0_140 = arith.constant 0 : index
    %360 = vector.load %arg7[%c0_139, %c0_140] : memref<256x1024xbf16, #tpu.memory_space<vmem>>, vector<256x1024xbf16>
    %cst_141 = arith.constant dense<0.000000e+00> : vector<8x1024xf32>
    %361 = tpu.matmul %359, %360, %cst_141 {dimension_numbers = #tpu.dot_dimension_numbers<[1], [0], [0], [1], [0, 0, 1, 1], [], []>} : vector<8x256xbf16>, vector<256x1024xbf16>, vector<8x1024xf32> -> vector<8x1024xf32>
    %362 = arith.index_cast %354 : i32 to index
    %c0_142 = arith.constant 0 : index
    %363 = vector.load %arg10[%362, %c0_142] : memref<64x512xf32, #tpu.memory_space<vmem>>, vector<8x512xf32>
    %364 = vector.extract_strided_slice %361 {offsets = [0, 0], sizes = [8, 512], strides = [1, 1]} : vector<8x1024xf32> to vector<8x512xf32>
    %365 = arith.addf %363, %364 : vector<8x512xf32>
    %366 = arith.index_cast %357 : i32 to index
    %c0_143 = arith.constant 0 : index
    %367 = vector.load %arg11[%366, %c0_143] : memref<64x512xf32, #tpu.memory_space<vmem>>, vector<8x512xf32>
    %368 = vector.extract_strided_slice %361 {offsets = [0, 512], sizes = [8, 512], strides = [1, 1]} : vector<8x1024xf32> to vector<8x512xf32>
    %369 = arith.addf %367, %368 : vector<8x512xf32>
    %370 = vector.extract_strided_slice %365 {offsets = [0, 0], sizes = [8, 128], strides = [1, 1]} : vector<8x512xf32> to vector<8x128xf32>
    %cst_144 = arith.constant 5.000000e-01 : f32
    %371 = vector.broadcast %cst_144 : f32 to vector<8x128xf32>
    %372 = arith.mulf %371, %370 : vector<8x128xf32>
    %373 = math.tanh %372 : vector<8x128xf32>
    %cst_145 = arith.constant 5.000000e-01 : f32
    %374 = vector.broadcast %cst_145 : f32 to vector<8x128xf32>
    %375 = arith.mulf %374, %373 : vector<8x128xf32>
    %cst_146 = arith.constant 5.000000e-01 : f32
    %376 = vector.broadcast %cst_146 : f32 to vector<8x128xf32>
    %377 = arith.addf %375, %376 : vector<8x128xf32>
    %378 = vector.extract_strided_slice %365 {offsets = [0, 128], sizes = [8, 128], strides = [1, 1]} : vector<8x512xf32> to vector<8x128xf32>
    %cst_147 = arith.constant 5.000000e-01 : f32
    %379 = vector.broadcast %cst_147 : f32 to vector<8x128xf32>
    %380 = arith.mulf %379, %378 : vector<8x128xf32>
    %381 = math.tanh %380 : vector<8x128xf32>
    %cst_148 = arith.constant 5.000000e-01 : f32
    %382 = vector.broadcast %cst_148 : f32 to vector<8x128xf32>
    %383 = arith.mulf %382, %381 : vector<8x128xf32>
    %cst_149 = arith.constant 5.000000e-01 : f32
    %384 = vector.broadcast %cst_149 : f32 to vector<8x128xf32>
    %385 = arith.addf %383, %384 : vector<8x128xf32>
    %386 = vector.extract_strided_slice %365 {offsets = [0, 256], sizes = [8, 128], strides = [1, 1]} : vector<8x512xf32> to vector<8x128xf32>
    %387 = math.tanh %386 : vector<8x128xf32>
    %388 = vector.extract_strided_slice %365 {offsets = [0, 384], sizes = [8, 128], strides = [1, 1]} : vector<8x512xf32> to vector<8x128xf32>
    %cst_150 = arith.constant 5.000000e-01 : f32
    %389 = vector.broadcast %cst_150 : f32 to vector<8x128xf32>
    %390 = arith.mulf %389, %388 : vector<8x128xf32>
    %391 = math.tanh %390 : vector<8x128xf32>
    %cst_151 = arith.constant 5.000000e-01 : f32
    %392 = vector.broadcast %cst_151 : f32 to vector<8x128xf32>
    %393 = arith.mulf %392, %391 : vector<8x128xf32>
    %cst_152 = arith.constant 5.000000e-01 : f32
    %394 = vector.broadcast %cst_152 : f32 to vector<8x128xf32>
    %395 = arith.addf %393, %394 : vector<8x128xf32>
    %396 = arith.mulf %385, %315 : vector<8x128xf32>
    %397 = arith.mulf %377, %387 : vector<8x128xf32>
    %398 = arith.addf %396, %397 : vector<8x128xf32>
    %399 = math.tanh %398 : vector<8x128xf32>
    %400 = arith.mulf %395, %399 : vector<8x128xf32>
    %401 = vector.extract_strided_slice %369 {offsets = [0, 0], sizes = [8, 128], strides = [1, 1]} : vector<8x512xf32> to vector<8x128xf32>
    %cst_153 = arith.constant 5.000000e-01 : f32
    %402 = vector.broadcast %cst_153 : f32 to vector<8x128xf32>
    %403 = arith.mulf %402, %401 : vector<8x128xf32>
    %404 = math.tanh %403 : vector<8x128xf32>
    %cst_154 = arith.constant 5.000000e-01 : f32
    %405 = vector.broadcast %cst_154 : f32 to vector<8x128xf32>
    %406 = arith.mulf %405, %404 : vector<8x128xf32>
    %cst_155 = arith.constant 5.000000e-01 : f32
    %407 = vector.broadcast %cst_155 : f32 to vector<8x128xf32>
    %408 = arith.addf %406, %407 : vector<8x128xf32>
    %409 = vector.extract_strided_slice %369 {offsets = [0, 128], sizes = [8, 128], strides = [1, 1]} : vector<8x512xf32> to vector<8x128xf32>
    %cst_156 = arith.constant 5.000000e-01 : f32
    %410 = vector.broadcast %cst_156 : f32 to vector<8x128xf32>
    %411 = arith.mulf %410, %409 : vector<8x128xf32>
    %412 = math.tanh %411 : vector<8x128xf32>
    %cst_157 = arith.constant 5.000000e-01 : f32
    %413 = vector.broadcast %cst_157 : f32 to vector<8x128xf32>
    %414 = arith.mulf %413, %412 : vector<8x128xf32>
    %cst_158 = arith.constant 5.000000e-01 : f32
    %415 = vector.broadcast %cst_158 : f32 to vector<8x128xf32>
    %416 = arith.addf %414, %415 : vector<8x128xf32>
    %417 = vector.extract_strided_slice %369 {offsets = [0, 256], sizes = [8, 128], strides = [1, 1]} : vector<8x512xf32> to vector<8x128xf32>
    %418 = math.tanh %417 : vector<8x128xf32>
    %419 = vector.extract_strided_slice %369 {offsets = [0, 384], sizes = [8, 128], strides = [1, 1]} : vector<8x512xf32> to vector<8x128xf32>
    %cst_159 = arith.constant 5.000000e-01 : f32
    %420 = vector.broadcast %cst_159 : f32 to vector<8x128xf32>
    %421 = arith.mulf %420, %419 : vector<8x128xf32>
    %422 = math.tanh %421 : vector<8x128xf32>
    %cst_160 = arith.constant 5.000000e-01 : f32
    %423 = vector.broadcast %cst_160 : f32 to vector<8x128xf32>
    %424 = arith.mulf %423, %422 : vector<8x128xf32>
    %cst_161 = arith.constant 5.000000e-01 : f32
    %425 = vector.broadcast %cst_161 : f32 to vector<8x128xf32>
    %426 = arith.addf %424, %425 : vector<8x128xf32>
    %427 = arith.mulf %416, %346 : vector<8x128xf32>
    %428 = arith.mulf %408, %418 : vector<8x128xf32>
    %429 = arith.addf %427, %428 : vector<8x128xf32>
    %430 = math.tanh %429 : vector<8x128xf32>
    %431 = arith.mulf %426, %430 : vector<8x128xf32>
    %432 = arith.index_cast %354 : i32 to index
    %c0_162 = arith.constant 0 : index
    %433 = vector.load %arg8[%432, %c0_162] : memref<64x128xf32, #tpu.memory_space<vmem>>, vector<8x128xf32>
    tpu.vector_store %arg8[%432, %c0_162], %400 {strides = array<i32>} : memref<64x128xf32, #tpu.memory_space<vmem>>, vector<8x128xf32>,
    %434 = arith.index_cast %357 : i32 to index
    %c0_163 = arith.constant 0 : index
    %435 = vector.load %arg9[%434, %c0_163] : memref<64x128xf32, #tpu.memory_space<vmem>>, vector<8x128xf32>
    tpu.vector_store %arg9[%434, %c0_163], %431 {strides = array<i32>} : memref<64x128xf32, #tpu.memory_space<vmem>>, vector<8x128xf32>,
    %c5_i32 = arith.constant 5 : i32
    %c8_i32_164 = arith.constant 8 : i32
    %436 = arith.muli %c5_i32, %c8_i32_164 : i32
    %437 = tpu.assume_multiple %436, 8 : i32
    %c7_i32_165 = arith.constant 7 : i32
    %438 = arith.subi %c7_i32_165, %c5_i32 : i32
    %c8_i32_166 = arith.constant 8 : i32
    %439 = arith.muli %438, %c8_i32_166 : i32
    %440 = tpu.assume_multiple %439, 8 : i32
    %441 = tpu.concatenate %400, %431 in 1 : vector<8x128xf32>, vector<8x128xf32> -> vector<8x256xf32>
    %442 = arith.truncf %441 : vector<8x256xf32> to vector<8x256xbf16>
    %c0_167 = arith.constant 0 : index
    %c0_168 = arith.constant 0 : index
    %443 = vector.load %arg7[%c0_167, %c0_168] : memref<256x1024xbf16, #tpu.memory_space<vmem>>, vector<256x1024xbf16>
    %cst_169 = arith.constant dense<0.000000e+00> : vector<8x1024xf32>
    %444 = tpu.matmul %442, %443, %cst_169 {dimension_numbers = #tpu.dot_dimension_numbers<[1], [0], [0], [1], [0, 0, 1, 1], [], []>} : vector<8x256xbf16>, vector<256x1024xbf16>, vector<8x1024xf32> -> vector<8x1024xf32>
    %445 = arith.index_cast %437 : i32 to index
    %c0_170 = arith.constant 0 : index
    %446 = vector.load %arg10[%445, %c0_170] : memref<64x512xf32, #tpu.memory_space<vmem>>, vector<8x512xf32>
    %447 = vector.extract_strided_slice %444 {offsets = [0, 0], sizes = [8, 512], strides = [1, 1]} : vector<8x1024xf32> to vector<8x512xf32>
    %448 = arith.addf %446, %447 : vector<8x512xf32>
    %449 = arith.index_cast %440 : i32 to index
    %c0_171 = arith.constant 0 : index
    %450 = vector.load %arg11[%449, %c0_171] : memref<64x512xf32, #tpu.memory_space<vmem>>, vector<8x512xf32>
    %451 = vector.extract_strided_slice %444 {offsets = [0, 512], sizes = [8, 512], strides = [1, 1]} : vector<8x1024xf32> to vector<8x512xf32>
    %452 = arith.addf %450, %451 : vector<8x512xf32>
    %453 = vector.extract_strided_slice %448 {offsets = [0, 0], sizes = [8, 128], strides = [1, 1]} : vector<8x512xf32> to vector<8x128xf32>
    %cst_172 = arith.constant 5.000000e-01 : f32
    %454 = vector.broadcast %cst_172 : f32 to vector<8x128xf32>
    %455 = arith.mulf %454, %453 : vector<8x128xf32>
    %456 = math.tanh %455 : vector<8x128xf32>
    %cst_173 = arith.constant 5.000000e-01 : f32
    %457 = vector.broadcast %cst_173 : f32 to vector<8x128xf32>
    %458 = arith.mulf %457, %456 : vector<8x128xf32>
    %cst_174 = arith.constant 5.000000e-01 : f32
    %459 = vector.broadcast %cst_174 : f32 to vector<8x128xf32>
    %460 = arith.addf %458, %459 : vector<8x128xf32>
    %461 = vector.extract_strided_slice %448 {offsets = [0, 128], sizes = [8, 128], strides = [1, 1]} : vector<8x512xf32> to vector<8x128xf32>
    %cst_175 = arith.constant 5.000000e-01 : f32
    %462 = vector.broadcast %cst_175 : f32 to vector<8x128xf32>
    %463 = arith.mulf %462, %461 : vector<8x128xf32>
    %464 = math.tanh %463 : vector<8x128xf32>
    %cst_176 = arith.constant 5.000000e-01 : f32
    %465 = vector.broadcast %cst_176 : f32 to vector<8x128xf32>
    %466 = arith.mulf %465, %464 : vector<8x128xf32>
    %cst_177 = arith.constant 5.000000e-01 : f32
    %467 = vector.broadcast %cst_177 : f32 to vector<8x128xf32>
    %468 = arith.addf %466, %467 : vector<8x128xf32>
    %469 = vector.extract_strided_slice %448 {offsets = [0, 256], sizes = [8, 128], strides = [1, 1]} : vector<8x512xf32> to vector<8x128xf32>
    %470 = math.tanh %469 : vector<8x128xf32>
    %471 = vector.extract_strided_slice %448 {offsets = [0, 384], sizes = [8, 128], strides = [1, 1]} : vector<8x512xf32> to vector<8x128xf32>
    %cst_178 = arith.constant 5.000000e-01 : f32
    %472 = vector.broadcast %cst_178 : f32 to vector<8x128xf32>
    %473 = arith.mulf %472, %471 : vector<8x128xf32>
    %474 = math.tanh %473 : vector<8x128xf32>
    %cst_179 = arith.constant 5.000000e-01 : f32
    %475 = vector.broadcast %cst_179 : f32 to vector<8x128xf32>
    %476 = arith.mulf %475, %474 : vector<8x128xf32>
    %cst_180 = arith.constant 5.000000e-01 : f32
    %477 = vector.broadcast %cst_180 : f32 to vector<8x128xf32>
    %478 = arith.addf %476, %477 : vector<8x128xf32>
    %479 = arith.mulf %468, %398 : vector<8x128xf32>
    %480 = arith.mulf %460, %470 : vector<8x128xf32>
    %481 = arith.addf %479, %480 : vector<8x128xf32>
    %482 = math.tanh %481 : vector<8x128xf32>
    %483 = arith.mulf %478, %482 : vector<8x128xf32>
    %484 = vector.extract_strided_slice %452 {offsets = [0, 0], sizes = [8, 128], strides = [1, 1]} : vector<8x512xf32> to vector<8x128xf32>
    %cst_181 = arith.constant 5.000000e-01 : f32
    %485 = vector.broadcast %cst_181 : f32 to vector<8x128xf32>
    %486 = arith.mulf %485, %484 : vector<8x128xf32>
    %487 = math.tanh %486 : vector<8x128xf32>
    %cst_182 = arith.constant 5.000000e-01 : f32
    %488 = vector.broadcast %cst_182 : f32 to vector<8x128xf32>
    %489 = arith.mulf %488, %487 : vector<8x128xf32>
    %cst_183 = arith.constant 5.000000e-01 : f32
    %490 = vector.broadcast %cst_183 : f32 to vector<8x128xf32>
    %491 = arith.addf %489, %490 : vector<8x128xf32>
    %492 = vector.extract_strided_slice %452 {offsets = [0, 128], sizes = [8, 128], strides = [1, 1]} : vector<8x512xf32> to vector<8x128xf32>
    %cst_184 = arith.constant 5.000000e-01 : f32
    %493 = vector.broadcast %cst_184 : f32 to vector<8x128xf32>
    %494 = arith.mulf %493, %492 : vector<8x128xf32>
    %495 = math.tanh %494 : vector<8x128xf32>
    %cst_185 = arith.constant 5.000000e-01 : f32
    %496 = vector.broadcast %cst_185 : f32 to vector<8x128xf32>
    %497 = arith.mulf %496, %495 : vector<8x128xf32>
    %cst_186 = arith.constant 5.000000e-01 : f32
    %498 = vector.broadcast %cst_186 : f32 to vector<8x128xf32>
    %499 = arith.addf %497, %498 : vector<8x128xf32>
    %500 = vector.extract_strided_slice %452 {offsets = [0, 256], sizes = [8, 128], strides = [1, 1]} : vector<8x512xf32> to vector<8x128xf32>
    %501 = math.tanh %500 : vector<8x128xf32>
    %502 = vector.extract_strided_slice %452 {offsets = [0, 384], sizes = [8, 128], strides = [1, 1]} : vector<8x512xf32> to vector<8x128xf32>
    %cst_187 = arith.constant 5.000000e-01 : f32
    %503 = vector.broadcast %cst_187 : f32 to vector<8x128xf32>
    %504 = arith.mulf %503, %502 : vector<8x128xf32>
    %505 = math.tanh %504 : vector<8x128xf32>
    %cst_188 = arith.constant 5.000000e-01 : f32
    %506 = vector.broadcast %cst_188 : f32 to vector<8x128xf32>
    %507 = arith.mulf %506, %505 : vector<8x128xf32>
    %cst_189 = arith.constant 5.000000e-01 : f32
    %508 = vector.broadcast %cst_189 : f32 to vector<8x128xf32>
    %509 = arith.addf %507, %508 : vector<8x128xf32>
    %510 = arith.mulf %499, %429 : vector<8x128xf32>
    %511 = arith.mulf %491, %501 : vector<8x128xf32>
    %512 = arith.addf %510, %511 : vector<8x128xf32>
    %513 = math.tanh %512 : vector<8x128xf32>
    %514 = arith.mulf %509, %513 : vector<8x128xf32>
    %515 = arith.index_cast %437 : i32 to index
    %c0_190 = arith.constant 0 : index
    %516 = vector.load %arg8[%515, %c0_190] : memref<64x128xf32, #tpu.memory_space<vmem>>, vector<8x128xf32>
    tpu.vector_store %arg8[%515, %c0_190], %483 {strides = array<i32>} : memref<64x128xf32, #tpu.memory_space<vmem>>, vector<8x128xf32>,
    %517 = arith.index_cast %440 : i32 to index
    %c0_191 = arith.constant 0 : index
    %518 = vector.load %arg9[%517, %c0_191] : memref<64x128xf32, #tpu.memory_space<vmem>>, vector<8x128xf32>
    tpu.vector_store %arg9[%517, %c0_191], %514 {strides = array<i32>} : memref<64x128xf32, #tpu.memory_space<vmem>>, vector<8x128xf32>,
    %c6_i32 = arith.constant 6 : i32
    %c8_i32_192 = arith.constant 8 : i32
    %519 = arith.muli %c6_i32, %c8_i32_192 : i32
    %520 = tpu.assume_multiple %519, 8 : i32
    %c7_i32_193 = arith.constant 7 : i32
    %521 = arith.subi %c7_i32_193, %c6_i32 : i32
    %c8_i32_194 = arith.constant 8 : i32
    %522 = arith.muli %521, %c8_i32_194 : i32
    %523 = tpu.assume_multiple %522, 8 : i32
    %524 = tpu.concatenate %483, %514 in 1 : vector<8x128xf32>, vector<8x128xf32> -> vector<8x256xf32>
    %525 = arith.truncf %524 : vector<8x256xf32> to vector<8x256xbf16>
    %c0_195 = arith.constant 0 : index
    %c0_196 = arith.constant 0 : index
    %526 = vector.load %arg7[%c0_195, %c0_196] : memref<256x1024xbf16, #tpu.memory_space<vmem>>, vector<256x1024xbf16>
    %cst_197 = arith.constant dense<0.000000e+00> : vector<8x1024xf32>
    %527 = tpu.matmul %525, %526, %cst_197 {dimension_numbers = #tpu.dot_dimension_numbers<[1], [0], [0], [1], [0, 0, 1, 1], [], []>} : vector<8x256xbf16>, vector<256x1024xbf16>, vector<8x1024xf32> -> vector<8x1024xf32>
    %528 = arith.index_cast %520 : i32 to index
    %c0_198 = arith.constant 0 : index
    %529 = vector.load %arg10[%528, %c0_198] : memref<64x512xf32, #tpu.memory_space<vmem>>, vector<8x512xf32>
    %530 = vector.extract_strided_slice %527 {offsets = [0, 0], sizes = [8, 512], strides = [1, 1]} : vector<8x1024xf32> to vector<8x512xf32>
    %531 = arith.addf %529, %530 : vector<8x512xf32>
    %532 = arith.index_cast %523 : i32 to index
    %c0_199 = arith.constant 0 : index
    %533 = vector.load %arg11[%532, %c0_199] : memref<64x512xf32, #tpu.memory_space<vmem>>, vector<8x512xf32>
    %534 = vector.extract_strided_slice %527 {offsets = [0, 512], sizes = [8, 512], strides = [1, 1]} : vector<8x1024xf32> to vector<8x512xf32>
    %535 = arith.addf %533, %534 : vector<8x512xf32>
    %536 = vector.extract_strided_slice %531 {offsets = [0, 0], sizes = [8, 128], strides = [1, 1]} : vector<8x512xf32> to vector<8x128xf32>
    %cst_200 = arith.constant 5.000000e-01 : f32
    %537 = vector.broadcast %cst_200 : f32 to vector<8x128xf32>
    %538 = arith.mulf %537, %536 : vector<8x128xf32>
    %539 = math.tanh %538 : vector<8x128xf32>
    %cst_201 = arith.constant 5.000000e-01 : f32
    %540 = vector.broadcast %cst_201 : f32 to vector<8x128xf32>
    %541 = arith.mulf %540, %539 : vector<8x128xf32>
    %cst_202 = arith.constant 5.000000e-01 : f32
    %542 = vector.broadcast %cst_202 : f32 to vector<8x128xf32>
    %543 = arith.addf %541, %542 : vector<8x128xf32>
    %544 = vector.extract_strided_slice %531 {offsets = [0, 128], sizes = [8, 128], strides = [1, 1]} : vector<8x512xf32> to vector<8x128xf32>
    %cst_203 = arith.constant 5.000000e-01 : f32
    %545 = vector.broadcast %cst_203 : f32 to vector<8x128xf32>
    %546 = arith.mulf %545, %544 : vector<8x128xf32>
    %547 = math.tanh %546 : vector<8x128xf32>
    %cst_204 = arith.constant 5.000000e-01 : f32
    %548 = vector.broadcast %cst_204 : f32 to vector<8x128xf32>
    %549 = arith.mulf %548, %547 : vector<8x128xf32>
    %cst_205 = arith.constant 5.000000e-01 : f32
    %550 = vector.broadcast %cst_205 : f32 to vector<8x128xf32>
    %551 = arith.addf %549, %550 : vector<8x128xf32>
    %552 = vector.extract_strided_slice %531 {offsets = [0, 256], sizes = [8, 128], strides = [1, 1]} : vector<8x512xf32> to vector<8x128xf32>
    %553 = math.tanh %552 : vector<8x128xf32>
    %554 = vector.extract_strided_slice %531 {offsets = [0, 384], sizes = [8, 128], strides = [1, 1]} : vector<8x512xf32> to vector<8x128xf32>
    %cst_206 = arith.constant 5.000000e-01 : f32
    %555 = vector.broadcast %cst_206 : f32 to vector<8x128xf32>
    %556 = arith.mulf %555, %554 : vector<8x128xf32>
    %557 = math.tanh %556 : vector<8x128xf32>
    %cst_207 = arith.constant 5.000000e-01 : f32
    %558 = vector.broadcast %cst_207 : f32 to vector<8x128xf32>
    %559 = arith.mulf %558, %557 : vector<8x128xf32>
    %cst_208 = arith.constant 5.000000e-01 : f32
    %560 = vector.broadcast %cst_208 : f32 to vector<8x128xf32>
    %561 = arith.addf %559, %560 : vector<8x128xf32>
    %562 = arith.mulf %551, %481 : vector<8x128xf32>
    %563 = arith.mulf %543, %553 : vector<8x128xf32>
    %564 = arith.addf %562, %563 : vector<8x128xf32>
    %565 = math.tanh %564 : vector<8x128xf32>
    %566 = arith.mulf %561, %565 : vector<8x128xf32>
    %567 = vector.extract_strided_slice %535 {offsets = [0, 0], sizes = [8, 128], strides = [1, 1]} : vector<8x512xf32> to vector<8x128xf32>
    %cst_209 = arith.constant 5.000000e-01 : f32
    %568 = vector.broadcast %cst_209 : f32 to vector<8x128xf32>
    %569 = arith.mulf %568, %567 : vector<8x128xf32>
    %570 = math.tanh %569 : vector<8x128xf32>
    %cst_210 = arith.constant 5.000000e-01 : f32
    %571 = vector.broadcast %cst_210 : f32 to vector<8x128xf32>
    %572 = arith.mulf %571, %570 : vector<8x128xf32>
    %cst_211 = arith.constant 5.000000e-01 : f32
    %573 = vector.broadcast %cst_211 : f32 to vector<8x128xf32>
    %574 = arith.addf %572, %573 : vector<8x128xf32>
    %575 = vector.extract_strided_slice %535 {offsets = [0, 128], sizes = [8, 128], strides = [1, 1]} : vector<8x512xf32> to vector<8x128xf32>
    %cst_212 = arith.constant 5.000000e-01 : f32
    %576 = vector.broadcast %cst_212 : f32 to vector<8x128xf32>
    %577 = arith.mulf %576, %575 : vector<8x128xf32>
    %578 = math.tanh %577 : vector<8x128xf32>
    %cst_213 = arith.constant 5.000000e-01 : f32
    %579 = vector.broadcast %cst_213 : f32 to vector<8x128xf32>
    %580 = arith.mulf %579, %578 : vector<8x128xf32>
    %cst_214 = arith.constant 5.000000e-01 : f32
    %581 = vector.broadcast %cst_214 : f32 to vector<8x128xf32>
    %582 = arith.addf %580, %581 : vector<8x128xf32>
    %583 = vector.extract_strided_slice %535 {offsets = [0, 256], sizes = [8, 128], strides = [1, 1]} : vector<8x512xf32> to vector<8x128xf32>
    %584 = math.tanh %583 : vector<8x128xf32>
    %585 = vector.extract_strided_slice %535 {offsets = [0, 384], sizes = [8, 128], strides = [1, 1]} : vector<8x512xf32> to vector<8x128xf32>
    %cst_215 = arith.constant 5.000000e-01 : f32
    %586 = vector.broadcast %cst_215 : f32 to vector<8x128xf32>
    %587 = arith.mulf %586, %585 : vector<8x128xf32>
    %588 = math.tanh %587 : vector<8x128xf32>
    %cst_216 = arith.constant 5.000000e-01 : f32
    %589 = vector.broadcast %cst_216 : f32 to vector<8x128xf32>
    %590 = arith.mulf %589, %588 : vector<8x128xf32>
    %cst_217 = arith.constant 5.000000e-01 : f32
    %591 = vector.broadcast %cst_217 : f32 to vector<8x128xf32>
    %592 = arith.addf %590, %591 : vector<8x128xf32>
    %593 = arith.mulf %582, %512 : vector<8x128xf32>
    %594 = arith.mulf %574, %584 : vector<8x128xf32>
    %595 = arith.addf %593, %594 : vector<8x128xf32>
    %596 = math.tanh %595 : vector<8x128xf32>
    %597 = arith.mulf %592, %596 : vector<8x128xf32>
    %598 = arith.index_cast %520 : i32 to index
    %c0_218 = arith.constant 0 : index
    %599 = vector.load %arg8[%598, %c0_218] : memref<64x128xf32, #tpu.memory_space<vmem>>, vector<8x128xf32>
    tpu.vector_store %arg8[%598, %c0_218], %566 {strides = array<i32>} : memref<64x128xf32, #tpu.memory_space<vmem>>, vector<8x128xf32>,
    %600 = arith.index_cast %523 : i32 to index
    %c0_219 = arith.constant 0 : index
    %601 = vector.load %arg9[%600, %c0_219] : memref<64x128xf32, #tpu.memory_space<vmem>>, vector<8x128xf32>
    tpu.vector_store %arg9[%600, %c0_219], %597 {strides = array<i32>} : memref<64x128xf32, #tpu.memory_space<vmem>>, vector<8x128xf32>,
    %c7_i32_220 = arith.constant 7 : i32
    %c8_i32_221 = arith.constant 8 : i32
    %602 = arith.muli %c7_i32_220, %c8_i32_221 : i32
    %603 = tpu.assume_multiple %602, 8 : i32
    %c7_i32_222 = arith.constant 7 : i32
    %604 = arith.subi %c7_i32_222, %c7_i32_220 : i32
    %c8_i32_223 = arith.constant 8 : i32
    %605 = arith.muli %604, %c8_i32_223 : i32
    %606 = tpu.assume_multiple %605, 8 : i32
    %607 = tpu.concatenate %566, %597 in 1 : vector<8x128xf32>, vector<8x128xf32> -> vector<8x256xf32>
    %608 = arith.truncf %607 : vector<8x256xf32> to vector<8x256xbf16>
    %c0_224 = arith.constant 0 : index
    %c0_225 = arith.constant 0 : index
    %609 = vector.load %arg7[%c0_224, %c0_225] : memref<256x1024xbf16, #tpu.memory_space<vmem>>, vector<256x1024xbf16>
    %cst_226 = arith.constant dense<0.000000e+00> : vector<8x1024xf32>
    %610 = tpu.matmul %608, %609, %cst_226 {dimension_numbers = #tpu.dot_dimension_numbers<[1], [0], [0], [1], [0, 0, 1, 1], [], []>} : vector<8x256xbf16>, vector<256x1024xbf16>, vector<8x1024xf32> -> vector<8x1024xf32>
    %611 = arith.index_cast %603 : i32 to index
    %c0_227 = arith.constant 0 : index
    %612 = vector.load %arg10[%611, %c0_227] : memref<64x512xf32, #tpu.memory_space<vmem>>, vector<8x512xf32>
    %613 = vector.extract_strided_slice %610 {offsets = [0, 0], sizes = [8, 512], strides = [1, 1]} : vector<8x1024xf32> to vector<8x512xf32>
    %614 = arith.addf %612, %613 : vector<8x512xf32>
    %615 = arith.index_cast %606 : i32 to index
    %c0_228 = arith.constant 0 : index
    %616 = vector.load %arg11[%615, %c0_228] : memref<64x512xf32, #tpu.memory_space<vmem>>, vector<8x512xf32>
    %617 = vector.extract_strided_slice %610 {offsets = [0, 512], sizes = [8, 512], strides = [1, 1]} : vector<8x1024xf32> to vector<8x512xf32>
    %618 = arith.addf %616, %617 : vector<8x512xf32>
    %619 = vector.extract_strided_slice %614 {offsets = [0, 0], sizes = [8, 128], strides = [1, 1]} : vector<8x512xf32> to vector<8x128xf32>
    %cst_229 = arith.constant 5.000000e-01 : f32
    %620 = vector.broadcast %cst_229 : f32 to vector<8x128xf32>
    %621 = arith.mulf %620, %619 : vector<8x128xf32>
    %622 = math.tanh %621 : vector<8x128xf32>
    %cst_230 = arith.constant 5.000000e-01 : f32
    %623 = vector.broadcast %cst_230 : f32 to vector<8x128xf32>
    %624 = arith.mulf %623, %622 : vector<8x128xf32>
    %cst_231 = arith.constant 5.000000e-01 : f32
    %625 = vector.broadcast %cst_231 : f32 to vector<8x128xf32>
    %626 = arith.addf %624, %625 : vector<8x128xf32>
    %627 = vector.extract_strided_slice %614 {offsets = [0, 128], sizes = [8, 128], strides = [1, 1]} : vector<8x512xf32> to vector<8x128xf32>
    %cst_232 = arith.constant 5.000000e-01 : f32
    %628 = vector.broadcast %cst_232 : f32 to vector<8x128xf32>
    %629 = arith.mulf %628, %627 : vector<8x128xf32>
    %630 = math.tanh %629 : vector<8x128xf32>
    %cst_233 = arith.constant 5.000000e-01 : f32
    %631 = vector.broadcast %cst_233 : f32 to vector<8x128xf32>
    %632 = arith.mulf %631, %630 : vector<8x128xf32>
    %cst_234 = arith.constant 5.000000e-01 : f32
    %633 = vector.broadcast %cst_234 : f32 to vector<8x128xf32>
    %634 = arith.addf %632, %633 : vector<8x128xf32>
    %635 = vector.extract_strided_slice %614 {offsets = [0, 256], sizes = [8, 128], strides = [1, 1]} : vector<8x512xf32> to vector<8x128xf32>
    %636 = math.tanh %635 : vector<8x128xf32>
    %637 = vector.extract_strided_slice %614 {offsets = [0, 384], sizes = [8, 128], strides = [1, 1]} : vector<8x512xf32> to vector<8x128xf32>
    %cst_235 = arith.constant 5.000000e-01 : f32
    %638 = vector.broadcast %cst_235 : f32 to vector<8x128xf32>
    %639 = arith.mulf %638, %637 : vector<8x128xf32>
    %640 = math.tanh %639 : vector<8x128xf32>
    %cst_236 = arith.constant 5.000000e-01 : f32
    %641 = vector.broadcast %cst_236 : f32 to vector<8x128xf32>
    %642 = arith.mulf %641, %640 : vector<8x128xf32>
    %cst_237 = arith.constant 5.000000e-01 : f32
    %643 = vector.broadcast %cst_237 : f32 to vector<8x128xf32>
    %644 = arith.addf %642, %643 : vector<8x128xf32>
    %645 = arith.mulf %634, %564 : vector<8x128xf32>
    %646 = arith.mulf %626, %636 : vector<8x128xf32>
    %647 = arith.addf %645, %646 : vector<8x128xf32>
    %648 = math.tanh %647 : vector<8x128xf32>
    %649 = arith.mulf %644, %648 : vector<8x128xf32>
    %650 = vector.extract_strided_slice %618 {offsets = [0, 0], sizes = [8, 128], strides = [1, 1]} : vector<8x512xf32> to vector<8x128xf32>
    %cst_238 = arith.constant 5.000000e-01 : f32
    %651 = vector.broadcast %cst_238 : f32 to vector<8x128xf32>
    %652 = arith.mulf %651, %650 : vector<8x128xf32>
    %653 = math.tanh %652 : vector<8x128xf32>
    %cst_239 = arith.constant 5.000000e-01 : f32
    %654 = vector.broadcast %cst_239 : f32 to vector<8x128xf32>
    %655 = arith.mulf %654, %653 : vector<8x128xf32>
    %cst_240 = arith.constant 5.000000e-01 : f32
    %656 = vector.broadcast %cst_240 : f32 to vector<8x128xf32>
    %657 = arith.addf %655, %656 : vector<8x128xf32>
    %658 = vector.extract_strided_slice %618 {offsets = [0, 128], sizes = [8, 128], strides = [1, 1]} : vector<8x512xf32> to vector<8x128xf32>
    %cst_241 = arith.constant 5.000000e-01 : f32
    %659 = vector.broadcast %cst_241 : f32 to vector<8x128xf32>
    %660 = arith.mulf %659, %658 : vector<8x128xf32>
    %661 = math.tanh %660 : vector<8x128xf32>
    %cst_242 = arith.constant 5.000000e-01 : f32
    %662 = vector.broadcast %cst_242 : f32 to vector<8x128xf32>
    %663 = arith.mulf %662, %661 : vector<8x128xf32>
    %cst_243 = arith.constant 5.000000e-01 : f32
    %664 = vector.broadcast %cst_243 : f32 to vector<8x128xf32>
    %665 = arith.addf %663, %664 : vector<8x128xf32>
    %666 = vector.extract_strided_slice %618 {offsets = [0, 256], sizes = [8, 128], strides = [1, 1]} : vector<8x512xf32> to vector<8x128xf32>
    %667 = math.tanh %666 : vector<8x128xf32>
    %668 = vector.extract_strided_slice %618 {offsets = [0, 384], sizes = [8, 128], strides = [1, 1]} : vector<8x512xf32> to vector<8x128xf32>
    %cst_244 = arith.constant 5.000000e-01 : f32
    %669 = vector.broadcast %cst_244 : f32 to vector<8x128xf32>
    %670 = arith.mulf %669, %668 : vector<8x128xf32>
    %671 = math.tanh %670 : vector<8x128xf32>
    %cst_245 = arith.constant 5.000000e-01 : f32
    %672 = vector.broadcast %cst_245 : f32 to vector<8x128xf32>
    %673 = arith.mulf %672, %671 : vector<8x128xf32>
    %cst_246 = arith.constant 5.000000e-01 : f32
    %674 = vector.broadcast %cst_246 : f32 to vector<8x128xf32>
    %675 = arith.addf %673, %674 : vector<8x128xf32>
    %676 = arith.mulf %665, %595 : vector<8x128xf32>
    %677 = arith.mulf %657, %667 : vector<8x128xf32>
    %678 = arith.addf %676, %677 : vector<8x128xf32>
    %679 = math.tanh %678 : vector<8x128xf32>
    %680 = arith.mulf %675, %679 : vector<8x128xf32>
    %681 = arith.index_cast %603 : i32 to index
    %c0_247 = arith.constant 0 : index
    %682 = vector.load %arg8[%681, %c0_247] : memref<64x128xf32, #tpu.memory_space<vmem>>, vector<8x128xf32>
    tpu.vector_store %arg8[%681, %c0_247], %649 {strides = array<i32>} : memref<64x128xf32, #tpu.memory_space<vmem>>, vector<8x128xf32>,
    %683 = arith.index_cast %606 : i32 to index
    %c0_248 = arith.constant 0 : index
    %684 = vector.load %arg9[%683, %c0_248] : memref<64x128xf32, #tpu.memory_space<vmem>>, vector<8x128xf32>
    tpu.vector_store %arg9[%683, %c0_248], %680 {strides = array<i32>} : memref<64x128xf32, #tpu.memory_space<vmem>>, vector<8x128xf32>,
    %c8_i32_249 = arith.constant 8 : i32
    %c0_250 = arith.constant 0 : index
    %c0_251 = arith.constant 0 : index
    %685 = vector.load %arg12[%c0_250, %c0_251] : memref<8x128xf32, #tpu.memory_space<vmem>>, vector<8x128xf32>
    tpu.vector_store %arg12[%c0_250, %c0_251], %649 {strides = array<i32>} : memref<8x128xf32, #tpu.memory_space<vmem>>, vector<8x128xf32>,
    %c0_252 = arith.constant 0 : index
    %c0_253 = arith.constant 0 : index
    %686 = vector.load %arg13[%c0_252, %c0_253] : memref<8x128xf32, #tpu.memory_space<vmem>>, vector<8x128xf32>
    tpu.vector_store %arg13[%c0_252, %c0_253], %647 {strides = array<i32>} : memref<8x128xf32, #tpu.memory_space<vmem>>, vector<8x128xf32>,
    %c0_254 = arith.constant 0 : index
    %c0_255 = arith.constant 0 : index
    %687 = vector.load %arg14[%c0_254, %c0_255] : memref<8x128xf32, #tpu.memory_space<vmem>>, vector<8x128xf32>
    tpu.vector_store %arg14[%c0_254, %c0_255], %680 {strides = array<i32>} : memref<8x128xf32, #tpu.memory_space<vmem>>, vector<8x128xf32>,
    %c0_256 = arith.constant 0 : index
    %c0_257 = arith.constant 0 : index
    %688 = vector.load %arg15[%c0_256, %c0_257] : memref<8x128xf32, #tpu.memory_space<vmem>>, vector<8x128xf32>
    tpu.vector_store %arg15[%c0_256, %c0_257], %678 {strides = array<i32>} : memref<8x128xf32, #tpu.memory_space<vmem>>, vector<8x128xf32>,
    return
  }
  func.func @transform_0(%arg0: i32) -> (i32, i32) {
    %c0_i32 = arith.constant 0 : i32
    %c0_i32_0 = arith.constant 0 : i32
    return %arg0, %c0_i32 : i32, i32
  }
  func.func @transform_1(%arg0: i32) -> (i32, i32) {
    %c1_i32 = arith.constant 1 : i32
    %0 = arith.subi %c1_i32, %arg0 : i32
    %c0_i32 = arith.constant 0 : i32
    %c0_i32_0 = arith.constant 0 : i32
    return %0, %c0_i32 : i32, i32
  }
  func.func @transform_2(%arg0: i32) -> (i32, i32) {
    %c0_i32 = arith.constant 0 : i32
    %c0_i32_0 = arith.constant 0 : i32
    %c0_i32_1 = arith.constant 0 : i32
    return %c0_i32, %c0_i32_0 : i32, i32
  }
  func.func @transform_3(%arg0: i32) -> (i32, i32) {
    %c0_i32 = arith.constant 0 : i32
    %c0_i32_0 = arith.constant 0 : i32
    %c0_i32_1 = arith.constant 0 : i32
    return %c0_i32, %c0_i32_0 : i32, i32
  }
  func.func @transform_4(%arg0: i32) -> (i32, i32) {
    %c0_i32 = arith.constant 0 : i32
    %c0_i32_0 = arith.constant 0 : i32
    %c0_i32_1 = arith.constant 0 : i32
    return %c0_i32, %c0_i32_0 : i32, i32
  }
  func.func @transform_5(%arg0: i32) -> (i32, i32) {
    %c0_i32 = arith.constant 0 : i32
    %c0_i32_0 = arith.constant 0 : i32
    %c0_i32_1 = arith.constant 0 : i32
    return %c0_i32, %c0_i32_0 : i32, i32
  }
  func.func @transform_6(%arg0: i32) -> (i32, i32) {
    %c0_i32 = arith.constant 0 : i32
    %c0_i32_0 = arith.constant 0 : i32
    %c0_i32_1 = arith.constant 0 : i32
    return %c0_i32, %c0_i32_0 : i32, i32
  }
  func.func @transform_7(%arg0: i32) -> (i32, i32) {
    %c0_i32 = arith.constant 0 : i32
    %c0_i32_0 = arith.constant 0 : i32
    return %arg0, %c0_i32 : i32, i32
  }
  func.func @transform_8(%arg0: i32) -> (i32, i32) {
    %c1_i32 = arith.constant 1 : i32
    %0 = arith.subi %c1_i32, %arg0 : i32
    %c0_i32 = arith.constant 0 : i32
    %c0_i32_0 = arith.constant 0 : i32
    return %0, %c0_i32 : i32, i32
  }
}

</mosaic_0001>

<llo_original>
// kernel: tpu_custom_call.1
$region0: #{tpu_custom_call.1}
  #allocation0 [shape = 'u32[]', space=smem, size = 0x4, offset = 0x4, fixed_abs, tag = 'smem constant byte address 0x4 - core index']
  #allocation1 [shape = 'u32[72,128]{1,0:T(1,128)}', space=vmem, size = 0x9000, scoped, tag = 'internal scratch']
  #allocation2 [shape = 'f32[64,512]{1,0:T(8,128)}', space=vmem, size = 0x20000, scoped, tag = 'scratch operand']
  #allocation3 [shape = 'f32[64,512]{1,0:T(8,128)}', space=vmem, size = 0x20000, scoped, tag = 'scratch operand']
  #allocation4 [shape = 'f32[8,128]{1,0:T(8,128)}', space=vmem, size = 0x1000, scoped, tag = 'scratch operand']
  #allocation5 [shape = 'f32[8,128]{1,0:T(8,128)}', space=vmem, size = 0x1000, scoped, tag = 'scratch operand']
  #allocation6 [shape = 'f32[8,128]{1,0:T(8,128)}', space=vmem, size = 0x1000, scoped, tag = 'scratch operand']
  #allocation7 [shape = 'f32[8,128]{1,0:T(8,128)}', space=vmem, size = 0x1000, scoped, tag = 'scratch operand']
  %s0 = inlined_call_operand.vmem [shape: bf16[128,100], index: 0, kind: input, shape index: {}]
  %s1 = inlined_call_operand.vmem [shape: bf16[128,100], index: 1, kind: input, shape index: {}]
  %s2 = inlined_call_operand.hbm [shape: bf16[100,512], index: 2, kind: input, shape index: {}]
  %s3 = inlined_call_operand.vmem [shape: f32[1,512], index: 3, kind: input, shape index: {}]
  %s4 = inlined_call_operand.hbm [shape: bf16[100,512], index: 4, kind: input, shape index: {}]
  %s5 = inlined_call_operand.vmem [shape: f32[1,512], index: 5, kind: input, shape index: {}]
  %s6 = inlined_call_operand.hbm [shape: bf16[256,1024], index: 6, kind: input, shape index: {}]
  %s7 = inlined_call_operand.hbm [shape: f32[128,128], index: 7, kind: output, shape index: {0}]
  %s8 = inlined_call_operand.hbm [shape: f32[128,128], index: 8, kind: output, shape index: {1}]
  %9 = xla_tuple %s7, %s8
  %s10 = sld [smem:[#allocation0]]
  $region85: #{tpu_custom_call.1} parent=0
    _
  %s12 = ssub.s32 1, %s10
  %s13 = scalar_select 0, %s12, %s10
  $region1: #{tpu_custom_call.1} parent=0
    #allocation8 [shape = 'u8[106496]{0}', space=vmem, size = 0x1a000, scoped, tag = 'input window, operand 2, single buffered']
    #allocation9 [shape = 's32[2]{0}', space=sflag, size = 0x8, scoped, tag = 'scoped memory for tpu_custom_call.1']
    #allocation10 [shape = 's32[2]{0}', space=sflag, size = 0x8, scoped, tag = 'scoped memory for tpu_custom_call.1']
    #allocation11 [shape = 'u8[106496]{0}', space=vmem, size = 0x1a000, scoped, tag = 'input window, operand 4, single buffered']
    #allocation12 [shape = 's32[1]{0}', space=sflag, size = 0x4, scoped, tag = 'scoped memory for tpu_custom_call.1']
    #allocation13 [shape = 'u8[524288]{0}', space=vmem, size = 0x80000, scoped, tag = 'input window, operand 6, single buffered']
    #allocation14 [shape = 'u8[65536]{0}', space=vmem, size = 0x10000, scoped, tag = 'output window, operand 0']
    #allocation15 [shape = 'u8[65536]{0}', space=vmem, size = 0x10000, scoped, tag = 'output window, operand 1']
    #allocation16 [shape = 's32[2]{0}', space=sflag, size = 0x8, scoped, tag = 'scoped memory for tpu_custom_call.1']
    %14 = vsyncpa [#allocation9], 0
    %15 = vsyncpa [#allocation12], 0
    %16 = vsyncpa [#allocation10], 0
    %s17 = scalar_lea.sflag [#allocation10], 1
    %18 = vsyncpa %s17, 0
    %19 = vsyncpa [#allocation16], 0
    %s20 = scalar_lea.sflag [#allocation16], 1
    %21 = vsyncpa %s20, 0
    loop: start=0, step=1, limit=4
    $region2: #{tpu_custom_call.1} parent=1 // loop_pre_header
      _
    $region3: #{tpu_custom_call.1} parent=1 // loop_header
      %s23 = sphi 0, %s27
      %p24 = scmp.ge.s32.totalorder %s23, 4
      %s33 = sphi 0, %s35
      %s36 = sphi 0, %s33
      %s37 = sphi 0, %s36
      %s53 = sphi 0, %s37
      %s61 = sphi 0, %s63
      %s64 = sphi 0, %s61
      %s65 = sphi 0, %s64
      %s81 = sphi 0, %s65
      %s85 = sphi 0, %s85
      %s87 = sphi 0, %s85
      %s88 = sphi 0, %s87
      %s102 = sphi 0, %s88
      %s106 = sphi 0, %s106
      %s108 = sphi 0, %s106
      %s109 = sphi 0, %s108
      %s123 = sphi 0, %s109
      %s127 = sphi 0, %s127
      %s129 = sphi 0, %s127
      %s130 = sphi 0, %s129
      %s144 = sphi 0, %s130
      %s148 = sphi 0, %s148
      %s150 = sphi 0, %s148
      %s151 = sphi 0, %s150
      %s165 = sphi 0, %s151
      %s169 = sphi 0, %s169
      %s171 = sphi 0, %s169
      %s172 = sphi 0, %s171
      %s186 = sphi 0, %s172
      %s192 = sphi 0, %s194
      %s195 = sphi 0, %s192
      %s196 = sphi 0, %s195
      %s212 = sphi 0, %s196
      %s220 = sphi 0, %s222
      %s223 = sphi 0, %s220
      %s224 = sphi 0, %s223
      %s240 = sphi 0, %s224
    $region4: #{tpu_custom_call.1} parent=1 // loop_header_branch
      %26 = sbr.rel (%p24) target = $region8
    $region5: #{tpu_custom_call.1} parent=1 // loop_body
      %s28 = ssub.s32 %s23, 1
      %s29 = ssub.s32 %s23, 2
      %s30 = sadd.s32 %s23, 1
      %s31 = ssub.s32 %s23, %s30
      %p32 = scmp.eq.s32.totalorder %s31, 0
      %s34 = sadd.s32 %s33, 1
      %s35 = scalar_select %p32, %s33, %s34
      %p38 = pneg %p32
      %p39 = scmp.eq.s32.totalorder %s23, 1
      %p40 = por %p38, %p39
      %p41 = scmp.ne.s32.totalorder %s33, %s36
      %p42 = scmp.eq.s32.totalorder %s23, 0
      %p43 = por %p41, %p42
      %p44 = scmp.ne.s32.totalorder %s33, %s36
      %p45 = scmp.eq.s32.totalorder %s28, 1
      %p46 = por %p44, %p45
      %p47 = scmp.ne.s32.totalorder %s36, %s37
      %p48 = scmp.eq.s32.totalorder %s28, 0
      %p49 = por %p47, %p48
      %p50 = scmp.ne.s32.totalorder %s36, %s37
      %p51 = scmp.eq.s32.totalorder %s29, 1
      %p52 = por %p50, %p51
      %p54 = scmp.ne.s32.totalorder %s37, %s53
      %p55 = scmp.eq.s32.totalorder %s29, 0
      %p56 = por %p54, %p55
      %s57 = ssub.s32 1, %s23
      %s58 = ssub.s32 1, %s30
      %s59 = ssub.s32 %s57, %s58
      %p60 = scmp.eq.s32.totalorder %s59, 0
      %s62 = sadd.s32 %s61, 1
      %s63 = scalar_select %p60, %s61, %s62
      %p66 = pneg %p60
      %p67 = scmp.eq.s32.totalorder %s23, 1
      %p68 = por %p66, %p67
      %p69 = scmp.ne.s32.totalorder %s61, %s64
      %p70 = scmp.eq.s32.totalorder %s23, 0
      %p71 = por %p69, %p70
      %p72 = scmp.ne.s32.totalorder %s61, %s64
      %p73 = scmp.eq.s32.totalorder %s28, 1
      %p74 = por %p72, %p73
      %p75 = scmp.ne.s32.totalorder %s64, %s65
      %p76 = scmp.eq.s32.totalorder %s28, 0
      %p77 = por %p75, %p76
      %p78 = scmp.ne.s32.totalorder %s64, %s65
      %p79 = scmp.eq.s32.totalorder %s29, 1
      %p80 = por %p78, %p79
      %p82 = scmp.ne.s32.totalorder %s65, %s81
      %p83 = scmp.eq.s32.totalorder %s29, 0
      %p84 = por %p82, %p83
      %s86 = sadd.s32 %s85, 1
      %p89 = scmp.eq.s32.totalorder %s23, 1
      %p90 = scmp.ne.s32.totalorder %s85, %s87
      %p91 = scmp.eq.s32.totalorder %s23, 0
      %p92 = por %p90, %p91
      %p93 = scmp.ne.s32.totalorder %s85, %s87
      %p94 = scmp.eq.s32.totalorder %s28, 1
      %p95 = por %p93, %p94
      %p96 = scmp.ne.s32.totalorder %s87, %s88
      %p97 = scmp.eq.s32.totalorder %s28, 0
      %p98 = por %p96, %p97
      %p99 = scmp.ne.s32.totalorder %s87, %s88
      %p100 = scmp.eq.s32.totalorder %s29, 1
      %p101 = por %p99, %p100
      %p103 = scmp.ne.s32.totalorder %s88, %s102
      %p104 = scmp.eq.s32.totalorder %s29, 0
      %p105 = por %p103, %p104
      %s107 = sadd.s32 %s106, 1
      %p110 = scmp.eq.s32.totalorder %s23, 1
      %p111 = scmp.ne.s32.totalorder %s106, %s108
      %p112 = scmp.eq.s32.totalorder %s23, 0
      %p113 = por %p111, %p112
      %p114 = scmp.ne.s32.totalorder %s106, %s108
      %p115 = scmp.eq.s32.totalorder %s28, 1
      %p116 = por %p114, %p115
      %p117 = scmp.ne.s32.totalorder %s108, %s109
      %p118 = scmp.eq.s32.totalorder %s28, 0
      %p119 = por %p117, %p118
      %p120 = scmp.ne.s32.totalorder %s108, %s109
      %p121 = scmp.eq.s32.totalorder %s29, 1
      %p122 = por %p120, %p121
      %p124 = scmp.ne.s32.totalorder %s109, %s123
      %p125 = scmp.eq.s32.totalorder %s29, 0
      %p126 = por %p124, %p125
      %s128 = sadd.s32 %s127, 1
      %p131 = scmp.eq.s32.totalorder %s23, 1
      %p132 = scmp.ne.s32.totalorder %s127, %s129
      %p133 = scmp.eq.s32.totalorder %s23, 0
      %p134 = por %p132, %p133
      %p135 = scmp.ne.s32.totalorder %s127, %s129
      %p136 = scmp.eq.s32.totalorder %s28, 1
      %p137 = por %p135, %p136
      %p138 = scmp.ne.s32.totalorder %s129, %s130
      %p139 = scmp.eq.s32.totalorder %s28, 0
      %p140 = por %p138, %p139
      %p141 = scmp.ne.s32.totalorder %s129, %s130
      %p142 = scmp.eq.s32.totalorder %s29, 1
      %p143 = por %p141, %p142
      %p145 = scmp.ne.s32.totalorder %s130, %s144
      %p146 = scmp.eq.s32.totalorder %s29, 0
      %p147 = por %p145, %p146
      %s149 = sadd.s32 %s148, 1
      %p152 = scmp.eq.s32.totalorder %s23, 1
      %p153 = scmp.ne.s32.totalorder %s148, %s150
      %p154 = scmp.eq.s32.totalorder %s23, 0
      %p155 = por %p153, %p154
      %p156 = scmp.ne.s32.totalorder %s148, %s150
      %p157 = scmp.eq.s32.totalorder %s28, 1
      %p158 = por %p156, %p157
      %p159 = scmp.ne.s32.totalorder %s150, %s151
      %p160 = scmp.eq.s32.totalorder %s28, 0
      %p161 = por %p159, %p160
      %p162 = scmp.ne.s32.totalorder %s150, %s151
      %p163 = scmp.eq.s32.totalorder %s29, 1
      %p164 = por %p162, %p163
      %p166 = scmp.ne.s32.totalorder %s151, %s165
      %p167 = scmp.eq.s32.totalorder %s29, 0
      %p168 = por %p166, %p167
      %s170 = sadd.s32 %s169, 1
      %p173 = scmp.eq.s32.totalorder %s23, 1
      %p174 = scmp.ne.s32.totalorder %s169, %s171
      %p175 = scmp.eq.s32.totalorder %s23, 0
      %p176 = por %p174, %p175
      %p177 = scmp.ne.s32.totalorder %s169, %s171
      %p178 = scmp.eq.s32.totalorder %s28, 1
      %p179 = por %p177, %p178
      %p180 = scmp.ne.s32.totalorder %s171, %s172
      %p181 = scmp.eq.s32.totalorder %s28, 0
      %p182 = por %p180, %p181
      %p183 = scmp.ne.s32.totalorder %s171, %s172
      %p184 = scmp.eq.s32.totalorder %s29, 1
      %p185 = por %p183, %p184
      %p187 = scmp.ne.s32.totalorder %s172, %s186
      %p188 = scmp.eq.s32.totalorder %s29, 0
      %p189 = por %p187, %p188
      %s190 = ssub.s32 %s23, %s30
      %p191 = scmp.eq.s32.totalorder %s190, 0
      %s193 = sadd.s32 %s192, 1
      %s194 = scalar_select %p191, %s192, %s193
      %p197 = pneg %p191
      %p198 = scmp.eq.s32.totalorder %s23, 1
      %p199 = por %p197, %p198
      %p200 = scmp.ne.s32.totalorder %s192, %s195
      %p201 = scmp.eq.s32.totalorder %s23, 0
      %p202 = por %p200, %p201
      %p203 = scmp.ne.s32.totalorder %s192, %s195
      %p204 = scmp.eq.s32.totalorder %s28, 1
      %p205 = por %p203, %p204
      %p206 = scmp.ne.s32.totalorder %s195, %s196
      %p207 = scmp.eq.s32.totalorder %s28, 0
      %p208 = por %p206, %p207
      %p209 = scmp.ne.s32.totalorder %s195, %s196
      %p210 = scmp.eq.s32.totalorder %s29, 1
      %p211 = por %p209, %p210
      %p213 = scmp.ne.s32.totalorder %s196, %s212
      %p214 = scmp.eq.s32.totalorder %s29, 0
      %p215 = por %p213, %p214
      %s216 = ssub.s32 1, %s23
      %s217 = ssub.s32 1, %s30
      %s218 = ssub.s32 %s216, %s217
      %p219 = scmp.eq.s32.totalorder %s218, 0
      %s221 = sadd.s32 %s220, 1
      %s222 = scalar_select %p219, %s220, %s221
      %p225 = pneg %p219
      %p226 = scmp.eq.s32.totalorder %s23, 1
      %p227 = por %p225, %p226
      %p228 = scmp.ne.s32.totalorder %s220, %s223
      %p229 = scmp.eq.s32.totalorder %s23, 0
      %p230 = por %p228, %p229
      %p231 = scmp.ne.s32.totalorder %s220, %s223
      %p232 = scmp.eq.s32.totalorder %s28, 1
      %p233 = por %p231, %p232
      %p234 = scmp.ne.s32.totalorder %s223, %s224
      %p235 = scmp.eq.s32.totalorder %s28, 0
      %p236 = por %p234, %p235
      %p237 = scmp.ne.s32.totalorder %s223, %s224
      %p238 = scmp.eq.s32.totalorder %s29, 1
      %p239 = por %p237, %p238
      %p241 = scmp.ne.s32.totalorder %s224, %s240
      %p242 = scmp.eq.s32.totalorder %s29, 0
      %p243 = por %p241, %p242
      %p244 = scmp.le.s32.totalorder 1, %s23
      %p245 = scmp.lt.s32.totalorder %s23, 3
      %p246 = pnand %p244, %p245
      %p247 = pneg %p246
      // Predicated region
      $region9: #{tpu_custom_call.1} parent=5 // pred_check
        _
      $region10: #{tpu_custom_call.1} parent=5 // pred_check_branch
        %249 = sbr.rel (%p246) target = $region12
      $region11: #{tpu_custom_call.1} parent=5 // pred_region
        %s250 = ssub.s32 %s23, 1
        // Predicated region
        $region13: #{tpu_custom_call.1} parent=11 // pred_check
          %p251 = pneg %p98
        $region14: #{tpu_custom_call.1} parent=11 // pred_check_branch
          %253 = sbr.rel (%p251) target = $region16
        $region15: #{tpu_custom_call.1} parent=11 // pred_region
          %255 = vsyncadd [#allocation9], 0
          %s256 = sshll.u32 %s2, 4
          %s257 = int_to_ptr.hbm [resolvable:$true] %s256
          %s258 = sshll.u32 [#allocation8], 4
          %s259 = int_to_ptr.vmem [resolvable:$true] %s258
          %264 = dma.hbm_to_vmem [thread:$0]  %s257, 3328, %s259, [#allocation9], 256, 256, 16
        $region16: #{tpu_custom_call.1} parent=11 // pred_fallthru
          _
        // Predicated region
        $region17: #{tpu_custom_call.1} parent=11 // pred_check
          %p265 = pneg %p119
        $region18: #{tpu_custom_call.1} parent=11 // pred_check_branch
          %267 = sbr.rel (%p265) target = $region20
        $region19: #{tpu_custom_call.1} parent=11 // pred_region
          _
        $region20: #{tpu_custom_call.1} parent=11 // pred_fallthru
          _
        // Predicated region
        $region21: #{tpu_custom_call.1} parent=11 // pred_check
          %p268 = pneg %p140
        $region22: #{tpu_custom_call.1} parent=11 // pred_check_branch
          %270 = sbr.rel (%p268) target = $region24
        $region23: #{tpu_custom_call.1} parent=11 // pred_region
          %272 = vsyncadd [#allocation12], 0
          %s273 = sshll.u32 %s4, 4
          %s274 = int_to_ptr.hbm [resolvable:$true] %s273
          %s275 = sshll.u32 [#allocation11], 4
          %s276 = int_to_ptr.vmem [resolvable:$true] %s275
          %281 = dma.hbm_to_vmem [thread:$0]  %s274, 3328, %s276, [#allocation12], 256, 256, 16
        $region24: #{tpu_custom_call.1} parent=11 // pred_fallthru
          _
        // Predicated region
        $region25: #{tpu_custom_call.1} parent=11 // pred_check
          %p282 = pneg %p161
        $region26: #{tpu_custom_call.1} parent=11 // pred_check_branch
          %284 = sbr.rel (%p282) target = $region28
        $region27: #{tpu_custom_call.1} parent=11 // pred_region
          _
        $region28: #{tpu_custom_call.1} parent=11 // pred_fallthru
          _
        // Predicated region
        $region29: #{tpu_custom_call.1} parent=11 // pred_check
          %p285 = pneg %p182
        $region30: #{tpu_custom_call.1} parent=11 // pred_check_branch
          %287 = sbr.rel (%p285) target = $region32
        $region31: #{tpu_custom_call.1} parent=11 // pred_region
          %289 = vsyncadd [#allocation12], 0
          %s290 = sshll.u32 %s6, 4
          %s291 = int_to_ptr.hbm [resolvable:$true] %s290
          %s292 = sshll.u32 [#allocation13], 4
          %s293 = int_to_ptr.vmem [resolvable:$true] %s292
          %298 = dma.hbm_to_vmem [thread:$0]  %s291, 16384, %s293, [#allocation12], 512, 512, 32
        $region32: #{tpu_custom_call.1} parent=11 // pred_fallthru
          _
      $region12: #{tpu_custom_call.1} parent=5 // pred_fallthru
        _
      %p299 = scmp.lt.s32.totalorder %s23, 2
      // Predicated region
      $region33: #{tpu_custom_call.1} parent=5 // pred_check
        %p300 = pneg %p299
      $region34: #{tpu_custom_call.1} parent=5 // pred_check_branch
        %302 = sbr.rel (%p300) target = $region36
      $region35: #{tpu_custom_call.1} parent=5 // pred_region
        // Predicated region
        $region37: #{tpu_custom_call.1} parent=35 // pred_check
          %p303 = pneg %p43
        $region38: #{tpu_custom_call.1} parent=35 // pred_check_branch
          %305 = sbr.rel (%p303) target = $region40
        $region39: #{tpu_custom_call.1} parent=35 // pred_region
          %s306 = smul.u32 8, %s23
          %p307 = scmp.lt.s32.totalorder %s306, 15
          %s308 = scalar_select %p307, %s306, 15
          %s309 = smul.addr %s308, 4
          %s310 = scalar_lea.vmem %s0, %s309
          %s311 = smul.u32 8, %s23
        $region40: #{tpu_custom_call.1} parent=35 // pred_fallthru
          _
        // Predicated region
        $region41: #{tpu_custom_call.1} parent=35 // pred_check
          %p312 = pneg %p71
        $region42: #{tpu_custom_call.1} parent=35 // pred_check_branch
          %314 = sbr.rel (%p312) target = $region44
        $region43: #{tpu_custom_call.1} parent=35 // pred_region
          %s315 = ssub.s32 1, %s23
          %s316 = smul.u32 8, %s315
          %p317 = scmp.lt.s32.totalorder %s316, 15
          %s318 = scalar_select %p317, %s316, 15
          %s319 = smul.addr %s318, 4
          %s320 = scalar_lea.vmem %s1, %s319
          %s321 = ssub.s32 1, %s23
          %s322 = smul.u32 8, %s321
        $region44: #{tpu_custom_call.1} parent=35 // pred_fallthru
          _
      $region36: #{tpu_custom_call.1} parent=5 // pred_fallthru
        _
      %p323 = scmp.le.s32.totalorder 1, %s23
      %p324 = scmp.lt.s32.totalorder %s23, 3
      %p325 = pnand %p323, %p324
      %p326 = pneg %p325
      // Predicated region
      $region45: #{tpu_custom_call.1} parent=5 // pred_check
        _
      $region46: #{tpu_custom_call.1} parent=5 // pred_check_branch
        %328 = sbr.rel (%p325) target = $region48
      $region47: #{tpu_custom_call.1} parent=5 // pred_region
        %s329 = ssub.s32 %s23, 1
        // Predicated region
        $region49: #{tpu_custom_call.1} parent=47 // pred_check
          %p330 = pneg %p98
        $region50: #{tpu_custom_call.1} parent=47 // pred_check_branch
          %332 = sbr.rel (%p330) target = $region52
        $region51: #{tpu_custom_call.1} parent=47 // pred_region
          %334 = dma.done [#allocation9], 3328
        $region52: #{tpu_custom_call.1} parent=47 // pred_fallthru
          _
        // Predicated region
        $region53: #{tpu_custom_call.1} parent=47 // pred_check
          %p335 = pneg %p140
        $region54: #{tpu_custom_call.1} parent=47 // pred_check_branch
          %337 = sbr.rel (%p335) target = $region56
        $region55: #{tpu_custom_call.1} parent=47 // pred_region
          %339 = dma.done [#allocation12], 3328
        $region56: #{tpu_custom_call.1} parent=47 // pred_fallthru
          _
        // Predicated region
        $region57: #{tpu_custom_call.1} parent=47 // pred_check
          %p340 = pneg %p182
        $region58: #{tpu_custom_call.1} parent=47 // pred_check_branch
          %342 = sbr.rel (%p340) target = $region60
        $region59: #{tpu_custom_call.1} parent=47 // pred_region
          %344 = dma.done [#allocation12], 16384
        $region60: #{tpu_custom_call.1} parent=47 // pred_fallthru
          _
        %s345 = smul.u32 8, %s28
        %p346 = scmp.lt.s32.totalorder %s345, 15
        %s347 = scalar_select %p346, %s345, 15
        %s348 = smul.addr %s347, 4
        %s349 = scalar_lea.vmem %s0, %s348
        %p350 = pneg %p49
        %p351 = pneg %p46
        %s352 = ssub.s32 1, %s28
        %s353 = smul.u32 8, %s352
        %p354 = scmp.lt.s32.totalorder %s353, 15
        %s355 = scalar_select %p354, %s353, 15
        %s356 = smul.addr %s355, 4
        %s357 = scalar_lea.vmem %s1, %s356
        %p358 = pneg %p77
        %p359 = pneg %p74
        %p360 = pneg %p98
        %p361 = pneg %p95
        %p362 = pneg %p119
        %p363 = pneg %p116
        %p364 = pneg %p140
        %p365 = pneg %p137
        %p366 = pneg %p161
        %p367 = pneg %p158
        %p368 = pneg %p182
        %p369 = pneg %p179
        %p370 = pneg %p208
        %p371 = pneg %p205
        %s372 = sand.u32 %s195, 1
        %s373 = scalar_lea.sflag [#allocation10], %s372
        %s374 = sand.u32 %s195, 1
        %s375 = smul.addr %s374, 64
        %s376 = scalar_lea.vmem [#allocation14], %s375
        %p377 = pneg %p236
        %p378 = pneg %p233
        %s379 = sand.u32 %s223, 1
        %s380 = scalar_lea.sflag [#allocation16], %s379
        %s381 = sand.u32 %s223, 1
        %s382 = smul.addr %s381, 64
        %s383 = scalar_lea.vmem [#allocation15], %s382
        %s384 = smul.u32 8, %s28
        %p385 = scmp.lt.s32.totalorder %s384, 15
        %s386 = scalar_select %p385, %s384, 15
        %s387 = smul.addr %s386, 4
        %s388 = scalar_lea.vmem %s0, %s387
        %s389 = smul.u32 8, %s28
        %s390 = ssub.s32 1, %s28
        %s391 = smul.u32 8, %s390
        %p392 = scmp.lt.s32.totalorder %s391, 15
        %s393 = scalar_select %p392, %s391, 15
        %s394 = smul.addr %s393, 4
        %s395 = scalar_lea.vmem %s1, %s394
        %s396 = ssub.s32 1, %s28
        %s397 = smul.u32 8, %s396
        %s398 = smul.u32 8, %s28
        %s399 = ssub.s32 1, %s28
        %s400 = smul.u32 8, %s399
        %v402 = vld [vmem:[%s388] sm:$0xf]
        %v403 = vld [vmem:[%s388 + $0x4] sm:$0xf]
        %v404 = vld [vmem:[%s388 + $0x8] sm:$0xf]
        %v405 = vld [vmem:[%s388 + $0xc] sm:$0xf]
        %v406 = vld [vmem:[%s388 + $0x10] sm:$0xf]
        %v407 = vld [vmem:[%s388 + $0x14] sm:$0xf]
        %v408 = vld [vmem:[%s388 + $0x18] sm:$0xf]
        %v409 = vld [vmem:[%s388 + $0x1c] sm:$0xf]
        %v410 = vld [vmem:[#allocation8] sm:$0xff]
        %v411 = vld [vmem:[#allocation8 + $0x8] sm:$0xff]
        %v412 = vld [vmem:[#allocation8 + $0x10] sm:$0xff]
        %v413 = vld [vmem:[#allocation8 + $0x18] sm:$0xff]
        %v414 = vld [vmem:[#allocation8 + $0x20] sm:$0xff]
        %v415 = vld [vmem:[#allocation8 + $0x28] sm:$0xff]
        %v416 = vld [vmem:[#allocation8 + $0x30] sm:$0xff]
        %v417 = vld [vmem:[#allocation8 + $0x38] sm:$0xff]
        %v418 = vld [vmem:[#allocation8 + $0x40] sm:$0xff]
        %v419 = vld [vmem:[#allocation8 + $0x48] sm:$0xff]
        %v420 = vld [vmem:[#allocation8 + $0x50] sm:$0xff]
        %v421 = vld [vmem:[#allocation8 + $0x58] sm:$0xff]
        %v422 = vld [vmem:[#allocation8 + $0x60] sm:$0xff]
        %v423 = vld [vmem:[#allocation8 + $0x68] sm:$0xff]
        %v424 = vld [vmem:[#allocation8 + $0x70] sm:$0xff]
        %v425 = vld [vmem:[#allocation8 + $0x78] sm:$0xff]
        %v426 = vld [vmem:[#allocation8 + $0x80] sm:$0xff]
        %v427 = vld [vmem:[#allocation8 + $0x88] sm:$0xff]
        %v428 = vld [vmem:[#allocation8 + $0x90] sm:$0xff]
        %v429 = vld [vmem:[#allocation8 + $0x98] sm:$0xff]
        %v430 = vld [vmem:[#allocation8 + $0xa0] sm:$0xff]
        %v431 = vld [vmem:[#allocation8 + $0xa8] sm:$0xff]
        %v432 = vld [vmem:[#allocation8 + $0xb0] sm:$0xff]
        %v433 = vld [vmem:[#allocation8 + $0xb8] sm:$0xff]
        %v434 = vld [vmem:[#allocation8 + $0xc0] sm:$0x33]
        %v435 = vld [vmem:[#allocation8 + $0xc8] sm:$0x33]
        %v436 = vld [vmem:[%s3] sm:$0xf]
        %v438 = vperm.slane %v436, 0
        %v439 = vperm.slane %v436, 1
        %v440 = vperm.slane %v436, 2
        %v441 = vperm.slane %v436, 3
        %v454 = vunpack.c.l.b16 %v402
        %v455 = vunpack.c.l.b16 %v403
        %v456 = vunpack.c.l.b16 %v404
        %v457 = vunpack.c.l.b16 %v405
        %v458 = vunpack.c.l.b16 %v406
        %v459 = vunpack.c.l.b16 %v407
        %v460 = vunpack.c.l.b16 %v408
        %v461 = vunpack.c.l.b16 %v409
        %v462 = vpack.c.b16 %v455, %v454
        %v463 = vpack.c.b16 %v457, %v456
        %v464 = vpack.c.b16 %v459, %v458
        %v465 = vpack.c.b16 %v461, %v460
        %v492 = vunpack.c.l.b16 %v410
        %v493 = vunpack.c.h.b16 %v410
        %v494 = vunpack.c.l.b16 %v411
        %v495 = vunpack.c.h.b16 %v411
        %v496 = vunpack.c.l.b16 %v412
        %v497 = vunpack.c.h.b16 %v412
        %v498 = vunpack.c.l.b16 %v413
        %v499 = vunpack.c.h.b16 %v413
        %v500 = vunpack.c.l.b16 %v414
        %v501 = vunpack.c.h.b16 %v414
        %v502 = vunpack.c.l.b16 %v415
        %v503 = vunpack.c.h.b16 %v415
        %v504 = vunpack.c.l.b16 %v416
        %v505 = vunpack.c.h.b16 %v416
        %v506 = vunpack.c.l.b16 %v417
        %v507 = vunpack.c.h.b16 %v417
        %v508 = vunpack.c.l.b16 %v418
        %v509 = vunpack.c.h.b16 %v418
        %v510 = vunpack.c.l.b16 %v419
        %v511 = vunpack.c.h.b16 %v419
        %v512 = vunpack.c.l.b16 %v420
        %v513 = vunpack.c.h.b16 %v420
        %v514 = vunpack.c.l.b16 %v421
        %v515 = vunpack.c.h.b16 %v421
        %v516 = vunpack.c.l.b16 %v422
        %v517 = vunpack.c.h.b16 %v422
        %v518 = vunpack.c.l.b16 %v423
        %v519 = vunpack.c.h.b16 %v423
        %v520 = vunpack.c.l.b16 %v424
        %v521 = vunpack.c.h.b16 %v424
        %v522 = vunpack.c.l.b16 %v425
        %v523 = vunpack.c.h.b16 %v425
        %v524 = vunpack.c.l.b16 %v426
        %v525 = vunpack.c.h.b16 %v426
        %v526 = vunpack.c.l.b16 %v427
        %v527 = vunpack.c.h.b16 %v427
        %v528 = vunpack.c.l.b16 %v428
        %v529 = vunpack.c.h.b16 %v428
        %v530 = vunpack.c.l.b16 %v429
        %v531 = vunpack.c.h.b16 %v429
        %v532 = vunpack.c.l.b16 %v430
        %v533 = vunpack.c.h.b16 %v430
        %v534 = vunpack.c.l.b16 %v431
        %v535 = vunpack.c.h.b16 %v431
        %v536 = vunpack.c.l.b16 %v432
        %v537 = vunpack.c.h.b16 %v432
        %v538 = vunpack.c.l.b16 %v433
        %v539 = vunpack.c.h.b16 %v433
        %v540 = vunpack.c.l.b16 %v434
        %v541 = vunpack.c.h.b16 %v434
        %v542 = vunpack.c.l.b16 %v435
        %v543 = vunpack.c.h.b16 %v435
        %v544 = vpack.c.b16 %v496, %v492
        %v545 = vpack.c.b16 %v497, %v493
        %v546 = vpack.c.b16 %v498, %v494
        %v547 = vpack.c.b16 %v499, %v495
        %v548 = vpack.c.b16 %v504, %v500
        %v549 = vpack.c.b16 %v505, %v501
        %v550 = vpack.c.b16 %v506, %v502
        %v551 = vpack.c.b16 %v507, %v503
        %v552 = vpack.c.b16 %v512, %v508
        %v553 = vpack.c.b16 %v513, %v509
        %v554 = vpack.c.b16 %v514, %v510
        %v555 = vpack.c.b16 %v515, %v511
        %v556 = vpack.c.b16 %v520, %v516
        %v557 = vpack.c.b16 %v521, %v517
        %v558 = vpack.c.b16 %v522, %v518
        %v559 = vpack.c.b16 %v523, %v519
        %v560 = vpack.c.b16 %v528, %v524
        %v561 = vpack.c.b16 %v529, %v525
        %v562 = vpack.c.b16 %v530, %v526
        %v563 = vpack.c.b16 %v531, %v527
        %v564 = vpack.c.b16 %v536, %v532
        %v565 = vpack.c.b16 %v537, %v533
        %v566 = vpack.c.b16 %v538, %v534
        %v567 = vpack.c.b16 %v539, %v535
        %v568 = vpack.c.b16 %v540, %v540
        %v569 = vpack.c.b16 %v541, %v541
        %v570 = vpack.c.b16 %v542, %v542
        %v571 = vpack.c.b16 %v543, %v543
        %vm596 = vcmask 818176
        %v598 = vsel %vm596, %v462, 0
        %v601 = vsel %vm596, %v463, 0
        %v604 = vsel %vm596, %v464, 0
        %v607 = vsel %vm596, %v465, 0
        %vm609 = vcmask 1041408
        %v611 = vsel %vm609, %v568, 0
        %v614 = vsel %vm609, %v569, 0
        %v617 = vsel %vm609, %v570, 0
        %v620 = vsel %vm609, %v571, 0
        %622 = vmatpush.bf16.msra.mxu0 0
        %623 = vmatpush.bf16.msra.mxu0 %v611
        %624 = vmatpush.bf16.msra.mxu0 %v564
        %625 = vmatpush.bf16.msra.mxu0 %v560
        %626 = vmatpush.bf16.msra.mxu0 %v556
        %627 = vmatpush.bf16.msra.mxu0 %v552
        %628 = vmatpush.bf16.msra.mxu0 %v548
        %629 = vmatpush.bf16.msra.mxu0 %v544
        %630 = vmatmul.bf16.gmra.mxu0 %v598
        %v631 = vpop.f32.mrf.mxu0
        %v632 = vadd.f32 %v438, %v631
        %v633 = vpop.f32.mrf.mxu0
        %v634 = vadd.f32 %v438, %v633
        %635 = vmatmul.bf16.gmra.mxu0 %v601
        %v636 = vpop.f32.mrf.mxu0
        %v637 = vadd.f32 %v438, %v636
        %v638 = vpop.f32.mrf.mxu0
        %v639 = vadd.f32 %v438, %v638
        %640 = vmatmul.bf16.gmra.mxu0 %v604
        %v641 = vpop.f32.mrf.mxu0
        %v642 = vadd.f32 %v438, %v641
        %v643 = vpop.f32.mrf.mxu0
        %v644 = vadd.f32 %v438, %v643
        %645 = vmatmul.bf16.gmra.mxu0 %v607
        %v646 = vpop.f32.mrf.mxu0
        %v647 = vadd.f32 %v438, %v646
        %v648 = vpop.f32.mrf.mxu0
        %v649 = vadd.f32 %v438, %v648
        %650 = vdwg.mxu0
        %651 = vmatpush.bf16.msra.mxu0 0
        %652 = vmatpush.bf16.msra.mxu0 %v614
        %653 = vmatpush.bf16.msra.mxu0 %v565
        %654 = vmatpush.bf16.msra.mxu0 %v561
        %655 = vmatpush.bf16.msra.mxu0 %v557
        %656 = vmatpush.bf16.msra.mxu0 %v553
        %657 = vmatpush.bf16.msra.mxu0 %v549
        %658 = vmatpush.bf16.msra.mxu0 %v545
        %659 = vmatmul.bf16.gmra.mxu0 %v598
        %v660 = vpop.f32.mrf.mxu0
        %v661 = vadd.f32 %v439, %v660
        %v662 = vpop.f32.mrf.mxu0
        %v663 = vadd.f32 %v439, %v662
        %664 = vmatmul.bf16.gmra.mxu0 %v601
        %v665 = vpop.f32.mrf.mxu0
        %v666 = vadd.f32 %v439, %v665
        %v667 = vpop.f32.mrf.mxu0
        %v668 = vadd.f32 %v439, %v667
        %669 = vmatmul.bf16.gmra.mxu0 %v604
        %v670 = vpop.f32.mrf.mxu0
        %v671 = vadd.f32 %v439, %v670
        %v672 = vpop.f32.mrf.mxu0
        %v673 = vadd.f32 %v439, %v672
        %674 = vmatmul.bf16.gmra.mxu0 %v607
        %v675 = vpop.f32.mrf.mxu0
        %v676 = vadd.f32 %v439, %v675
        %v677 = vpop.f32.mrf.mxu0
        %v678 = vadd.f32 %v439, %v677
        %679 = vdwg.mxu0
        %680 = vmatpush.bf16.msra.mxu0 0
        %681 = vmatpush.bf16.msra.mxu0 %v617
        %682 = vmatpush.bf16.msra.mxu0 %v566
        %683 = vmatpush.bf16.msra.mxu0 %v562
        %684 = vmatpush.bf16.msra.mxu0 %v558
        %685 = vmatpush.bf16.msra.mxu0 %v554
        %686 = vmatpush.bf16.msra.mxu0 %v550
        %687 = vmatpush.bf16.msra.mxu0 %v546
        %688 = vmatmul.bf16.gmra.mxu0 %v598
        %v689 = vpop.f32.mrf.mxu0
        %v690 = vadd.f32 %v440, %v689
        %v691 = vpop.f32.mrf.mxu0
        %v692 = vadd.f32 %v440, %v691
        %693 = vmatmul.bf16.gmra.mxu0 %v601
        %v694 = vpop.f32.mrf.mxu0
        %v695 = vadd.f32 %v440, %v694
        %v696 = vpop.f32.mrf.mxu0
        %v697 = vadd.f32 %v440, %v696
        %698 = vmatmul.bf16.gmra.mxu0 %v604
        %v699 = vpop.f32.mrf.mxu0
        %v700 = vadd.f32 %v440, %v699
        %v701 = vpop.f32.mrf.mxu0
        %v702 = vadd.f32 %v440, %v701
        %703 = vmatmul.bf16.gmra.mxu0 %v607
        %v704 = vpop.f32.mrf.mxu0
        %v705 = vadd.f32 %v440, %v704
        %v706 = vpop.f32.mrf.mxu0
        %v707 = vadd.f32 %v440, %v706
        %708 = vdwg.mxu0
        %709 = vmatpush.bf16.msra.mxu0 0
        %710 = vmatpush.bf16.msra.mxu0 %v620
        %711 = vmatpush.bf16.msra.mxu0 %v567
        %712 = vmatpush.bf16.msra.mxu0 %v563
        %713 = vmatpush.bf16.msra.mxu0 %v559
        %714 = vmatpush.bf16.msra.mxu0 %v555
        %715 = vmatpush.bf16.msra.mxu0 %v551
        %716 = vmatpush.bf16.msra.mxu0 %v547
        %717 = vmatmul.bf16.gmra.mxu0 %v598
        %v718 = vpop.f32.mrf.mxu0
        %v719 = vadd.f32 %v441, %v718
        %v720 = vpop.f32.mrf.mxu0
        %v721 = vadd.f32 %v441, %v720
        %722 = vmatmul.bf16.gmra.mxu0 %v601
        %v723 = vpop.f32.mrf.mxu0
        %v724 = vadd.f32 %v441, %v723
        %v725 = vpop.f32.mrf.mxu0
        %v726 = vadd.f32 %v441, %v725
        %727 = vmatmul.bf16.gmra.mxu0 %v604
        %v728 = vpop.f32.mrf.mxu0
        %v729 = vadd.f32 %v441, %v728
        %v730 = vpop.f32.mrf.mxu0
        %v731 = vadd.f32 %v441, %v730
        %732 = vmatmul.bf16.gmra.mxu0 %v607
        %v733 = vpop.f32.mrf.mxu0
        %v734 = vadd.f32 %v441, %v733
        %v735 = vpop.f32.mrf.mxu0
        %v736 = vadd.f32 %v441, %v735
        %737 = vdwg.mxu0
        %738 = vst [vmem:[#allocation2] sm:$0xff] %v632
        %739 = vst [vmem:[#allocation2 + $0x8] sm:$0xff] %v661
        %740 = vst [vmem:[#allocation2 + $0x10] sm:$0xff] %v690
        %741 = vst [vmem:[#allocation2 + $0x18] sm:$0xff] %v719
        %742 = vst [vmem:[#allocation2 + $0x20] sm:$0xff] %v634
        %743 = vst [vmem:[#allocation2 + $0x28] sm:$0xff] %v663
        %744 = vst [vmem:[#allocation2 + $0x30] sm:$0xff] %v692
        %745 = vst [vmem:[#allocation2 + $0x38] sm:$0xff] %v721
        %746 = vst [vmem:[#allocation2 + $0x40] sm:$0xff] %v637
        %747 = vst [vmem:[#allocation2 + $0x48] sm:$0xff] %v666
        %748 = vst [vmem:[#allocation2 + $0x50] sm:$0xff] %v695
        %749 = vst [vmem:[#allocation2 + $0x58] sm:$0xff] %v724
        %750 = vst [vmem:[#allocation2 + $0x60] sm:$0xff] %v639
        %751 = vst [vmem:[#allocation2 + $0x68] sm:$0xff] %v668
        %752 = vst [vmem:[#allocation2 + $0x70] sm:$0xff] %v697
        %753 = vst [vmem:[#allocation2 + $0x78] sm:$0xff] %v726
        %754 = vst [vmem:[#allocation2 + $0x80] sm:$0xff] %v642
        %755 = vst [vmem:[#allocation2 + $0x88] sm:$0xff] %v671
        %756 = vst [vmem:[#allocation2 + $0x90] sm:$0xff] %v700
        %757 = vst [vmem:[#allocation2 + $0x98] sm:$0xff] %v729
        %758 = vst [vmem:[#allocation2 + $0xa0] sm:$0xff] %v644
        %759 = vst [vmem:[#allocation2 + $0xa8] sm:$0xff] %v673
        %760 = vst [vmem:[#allocation2 + $0xb0] sm:$0xff] %v702
        %761 = vst [vmem:[#allocation2 + $0xb8] sm:$0xff] %v731
        %762 = vst [vmem:[#allocation2 + $0xc0] sm:$0xff] %v647
        %763 = vst [vmem:[#allocation2 + $0xc8] sm:$0xff] %v676
        %764 = vst [vmem:[#allocation2 + $0xd0] sm:$0xff] %v705
        %765 = vst [vmem:[#allocation2 + $0xd8] sm:$0xff] %v734
        %766 = vst [vmem:[#allocation2 + $0xe0] sm:$0xff] %v649
        %767 = vst [vmem:[#allocation2 + $0xe8] sm:$0xff] %v678
        %768 = vst [vmem:[#allocation2 + $0xf0] sm:$0xff] %v707
        %769 = vst [vmem:[#allocation2 + $0xf8] sm:$0xff] %v736
        %v770 = vld [vmem:[%s395] sm:$0xf]
        %v771 = vld [vmem:[%s395 + $0x4] sm:$0xf]
        %v772 = vld [vmem:[%s395 + $0x8] sm:$0xf]
        %v773 = vld [vmem:[%s395 + $0xc] sm:$0xf]
        %v774 = vld [vmem:[%s395 + $0x10] sm:$0xf]
        %v775 = vld [vmem:[%s395 + $0x14] sm:$0xf]
        %v776 = vld [vmem:[%s395 + $0x18] sm:$0xf]
        %v777 = vld [vmem:[%s395 + $0x1c] sm:$0xf]
        %v778 = vld [vmem:[#allocation11] sm:$0xff]
        %v779 = vld [vmem:[#allocation11 + $0x8] sm:$0xff]
        %v780 = vld [vmem:[#allocation11 + $0x10] sm:$0xff]
        %v781 = vld [vmem:[#allocation11 + $0x18] sm:$0xff]
        %v782 = vld [vmem:[#allocation11 + $0x20] sm:$0xff]
        %v783 = vld [vmem:[#allocation11 + $0x28] sm:$0xff]
        %v784 = vld [vmem:[#allocation11 + $0x30] sm:$0xff]
        %v785 = vld [vmem:[#allocation11 + $0x38] sm:$0xff]
        %v786 = vld [vmem:[#allocation11 + $0x40] sm:$0xff]
        %v787 = vld [vmem:[#allocation11 + $0x48] sm:$0xff]
        %v788 = vld [vmem:[#allocation11 + $0x50] sm:$0xff]
        %v789 = vld [vmem:[#allocation11 + $0x58] sm:$0xff]
        %v790 = vld [vmem:[#allocation11 + $0x60] sm:$0xff]
        %v791 = vld [vmem:[#allocation11 + $0x68] sm:$0xff]
        %v792 = vld [vmem:[#allocation11 + $0x70] sm:$0xff]
        %v793 = vld [vmem:[#allocation11 + $0x78] sm:$0xff]
        %v794 = vld [vmem:[#allocation11 + $0x80] sm:$0xff]
        %v795 = vld [vmem:[#allocation11 + $0x88] sm:$0xff]
        %v796 = vld [vmem:[#allocation11 + $0x90] sm:$0xff]
        %v797 = vld [vmem:[#allocation11 + $0x98] sm:$0xff]
        %v798 = vld [vmem:[#allocation11 + $0xa0] sm:$0xff]
        %v799 = vld [vmem:[#allocation11 + $0xa8] sm:$0xff]
        %v800 = vld [vmem:[#allocation11 + $0xb0] sm:$0xff]
        %v801 = vld [vmem:[#allocation11 + $0xb8] sm:$0xff]
        %v802 = vld [vmem:[#allocation11 + $0xc0] sm:$0x33]
        %v803 = vld [vmem:[#allocation11 + $0xc8] sm:$0x33]
        %v804 = vld [vmem:[%s5] sm:$0xf]
        %v806 = vperm.slane %v804, 0
        %v807 = vperm.slane %v804, 1
        %v808 = vperm.slane %v804, 2
        %v809 = vperm.slane %v804, 3
        %v822 = vunpack.c.l.b16 %v770
        %v823 = vunpack.c.l.b16 %v771
        %v824 = vunpack.c.l.b16 %v772
        %v825 = vunpack.c.l.b16 %v773
        %v826 = vunpack.c.l.b16 %v774
        %v827 = vunpack.c.l.b16 %v775
        %v828 = vunpack.c.l.b16 %v776
        %v829 = vunpack.c.l.b16 %v777
        %v830 = vpack.c.b16 %v823, %v822
        %v831 = vpack.c.b16 %v825, %v824
        %v832 = vpack.c.b16 %v827, %v826
        %v833 = vpack.c.b16 %v829, %v828
        %v860 = vunpack.c.l.b16 %v778
        %v861 = vunpack.c.h.b16 %v778
        %v862 = vunpack.c.l.b16 %v779
        %v863 = vunpack.c.h.b16 %v779
        %v864 = vunpack.c.l.b16 %v780
        %v865 = vunpack.c.h.b16 %v780
        %v866 = vunpack.c.l.b16 %v781
        %v867 = vunpack.c.h.b16 %v781
        %v868 = vunpack.c.l.b16 %v782
        %v869 = vunpack.c.h.b16 %v782
        %v870 = vunpack.c.l.b16 %v783
        %v871 = vunpack.c.h.b16 %v783
        %v872 = vunpack.c.l.b16 %v784
        %v873 = vunpack.c.h.b16 %v784
        %v874 = vunpack.c.l.b16 %v785
        %v875 = vunpack.c.h.b16 %v785
        %v876 = vunpack.c.l.b16 %v786
        %v877 = vunpack.c.h.b16 %v786
        %v878 = vunpack.c.l.b16 %v787
        %v879 = vunpack.c.h.b16 %v787
        %v880 = vunpack.c.l.b16 %v788
        %v881 = vunpack.c.h.b16 %v788
        %v882 = vunpack.c.l.b16 %v789
        %v883 = vunpack.c.h.b16 %v789
        %v884 = vunpack.c.l.b16 %v790
        %v885 = vunpack.c.h.b16 %v790
        %v886 = vunpack.c.l.b16 %v791
        %v887 = vunpack.c.h.b16 %v791
        %v888 = vunpack.c.l.b16 %v792
        %v889 = vunpack.c.h.b16 %v792
        %v890 = vunpack.c.l.b16 %v793
        %v891 = vunpack.c.h.b16 %v793
        %v892 = vunpack.c.l.b16 %v794
        %v893 = vunpack.c.h.b16 %v794
        %v894 = vunpack.c.l.b16 %v795
        %v895 = vunpack.c.h.b16 %v795
        %v896 = vunpack.c.l.b16 %v796
        %v897 = vunpack.c.h.b16 %v796
        %v898 = vunpack.c.l.b16 %v797
        %v899 = vunpack.c.h.b16 %v797
        %v900 = vunpack.c.l.b16 %v798
        %v901 = vunpack.c.h.b16 %v798
        %v902 = vunpack.c.l.b16 %v799
        %v903 = vunpack.c.h.b16 %v799
        %v904 = vunpack.c.l.b16 %v800
        %v905 = vunpack.c.h.b16 %v800
        %v906 = vunpack.c.l.b16 %v801
        %v907 = vunpack.c.h.b16 %v801
        %v908 = vunpack.c.l.b16 %v802
        %v909 = vunpack.c.h.b16 %v802
        %v910 = vunpack.c.l.b16 %v803
        %v911 = vunpack.c.h.b16 %v803
        %v912 = vpack.c.b16 %v864, %v860
        %v913 = vpack.c.b16 %v865, %v861
        %v914 = vpack.c.b16 %v866, %v862
        %v915 = vpack.c.b16 %v867, %v863
        %v916 = vpack.c.b16 %v872, %v868
        %v917 = vpack.c.b16 %v873, %v869
        %v918 = vpack.c.b16 %v874, %v870
        %v919 = vpack.c.b16 %v875, %v871
        %v920 = vpack.c.b16 %v880, %v876
        %v921 = vpack.c.b16 %v881, %v877
        %v922 = vpack.c.b16 %v882, %v878
        %v923 = vpack.c.b16 %v883, %v879
        %v924 = vpack.c.b16 %v888, %v884
        %v925 = vpack.c.b16 %v889, %v885
        %v926 = vpack.c.b16 %v890, %v886
        %v927 = vpack.c.b16 %v891, %v887
        %v928 = vpack.c.b16 %v896, %v892
        %v929 = vpack.c.b16 %v897, %v893
        %v930 = vpack.c.b16 %v898, %v894
        %v931 = vpack.c.b16 %v899, %v895
        %v932 = vpack.c.b16 %v904, %v900
        %v933 = vpack.c.b16 %v905, %v901
        %v934 = vpack.c.b16 %v906, %v902
        %v935 = vpack.c.b16 %v907, %v903
        %v936 = vpack.c.b16 %v908, %v908
        %v937 = vpack.c.b16 %v909, %v909
        %v938 = vpack.c.b16 %v910, %v910
        %v939 = vpack.c.b16 %v911, %v911
        %v965 = vsel %vm596, %v830, 0
        %v968 = vsel %vm596, %v831, 0
        %v971 = vsel %vm596, %v832, 0
        %v974 = vsel %vm596, %v833, 0
        %v977 = vsel %vm609, %v936, 0
        %v980 = vsel %vm609, %v937, 0
        %v983 = vsel %vm609, %v938, 0
        %v986 = vsel %vm609, %v939, 0
        %988 = vmatpush.bf16.msra.mxu0 0
        %989 = vmatpush.bf16.msra.mxu0 %v977
        %990 = vmatpush.bf16.msra.mxu0 %v932
        %991 = vmatpush.bf16.msra.mxu0 %v928
        %992 = vmatpush.bf16.msra.mxu0 %v924
        %993 = vmatpush.bf16.msra.mxu0 %v920
        %994 = vmatpush.bf16.msra.mxu0 %v916
        %995 = vmatpush.bf16.msra.mxu0 %v912
        %996 = vmatmul.bf16.gmra.mxu0 %v965
        %v997 = vpop.f32.mrf.mxu0
        %v998 = vadd.f32 %v806, %v997
        %v999 = vpop.f32.mrf.mxu0
        %v1000 = vadd.f32 %v806, %v999
        %1001 = vmatmul.bf16.gmra.mxu0 %v968
        %v1002 = vpop.f32.mrf.mxu0
        %v1003 = vadd.f32 %v806, %v1002
        %v1004 = vpop.f32.mrf.mxu0
        %v1005 = vadd.f32 %v806, %v1004
        %1006 = vmatmul.bf16.gmra.mxu0 %v971
        %v1007 = vpop.f32.mrf.mxu0
        %v1008 = vadd.f32 %v806, %v1007
        %v1009 = vpop.f32.mrf.mxu0
        %v1010 = vadd.f32 %v806, %v1009
        %1011 = vmatmul.bf16.gmra.mxu0 %v974
        %v1012 = vpop.f32.mrf.mxu0
        %v1013 = vadd.f32 %v806, %v1012
        %v1014 = vpop.f32.mrf.mxu0
        %v1015 = vadd.f32 %v806, %v1014
        %1016 = vdwg.mxu0
        %1017 = vmatpush.bf16.msra.mxu0 0
        %1018 = vmatpush.bf16.msra.mxu0 %v980
        %1019 = vmatpush.bf16.msra.mxu0 %v933
        %1020 = vmatpush.bf16.msra.mxu0 %v929
        %1021 = vmatpush.bf16.msra.mxu0 %v925
        %1022 = vmatpush.bf16.msra.mxu0 %v921
        %1023 = vmatpush.bf16.msra.mxu0 %v917
        %1024 = vmatpush.bf16.msra.mxu0 %v913
        %1025 = vmatmul.bf16.gmra.mxu0 %v965
        %v1026 = vpop.f32.mrf.mxu0
        %v1027 = vadd.f32 %v807, %v1026
        %v1028 = vpop.f32.mrf.mxu0
        %v1029 = vadd.f32 %v807, %v1028
        %1030 = vmatmul.bf16.gmra.mxu0 %v968
        %v1031 = vpop.f32.mrf.mxu0
        %v1032 = vadd.f32 %v807, %v1031
        %v1033 = vpop.f32.mrf.mxu0
        %v1034 = vadd.f32 %v807, %v1033
        %1035 = vmatmul.bf16.gmra.mxu0 %v971
        %v1036 = vpop.f32.mrf.mxu0
        %v1037 = vadd.f32 %v807, %v1036
        %v1038 = vpop.f32.mrf.mxu0
        %v1039 = vadd.f32 %v807, %v1038
        %1040 = vmatmul.bf16.gmra.mxu0 %v974
        %v1041 = vpop.f32.mrf.mxu0
        %v1042 = vadd.f32 %v807, %v1041
        %v1043 = vpop.f32.mrf.mxu0
        %v1044 = vadd.f32 %v807, %v1043
        %1045 = vdwg.mxu0
        %1046 = vmatpush.bf16.msra.mxu0 0
        %1047 = vmatpush.bf16.msra.mxu0 %v983
        %1048 = vmatpush.bf16.msra.mxu0 %v934
        %1049 = vmatpush.bf16.msra.mxu0 %v930
        %1050 = vmatpush.bf16.msra.mxu0 %v926
        %1051 = vmatpush.bf16.msra.mxu0 %v922
        %1052 = vmatpush.bf16.msra.mxu0 %v918
        %1053 = vmatpush.bf16.msra.mxu0 %v914
        %1054 = vmatmul.bf16.gmra.mxu0 %v965
        %v1055 = vpop.f32.mrf.mxu0
        %v1056 = vadd.f32 %v808, %v1055
        %v1057 = vpop.f32.mrf.mxu0
        %v1058 = vadd.f32 %v808, %v1057
        %1059 = vmatmul.bf16.gmra.mxu0 %v968
        %v1060 = vpop.f32.mrf.mxu0
        %v1061 = vadd.f32 %v808, %v1060
        %v1062 = vpop.f32.mrf.mxu0
        %v1063 = vadd.f32 %v808, %v1062
        %1064 = vmatmul.bf16.gmra.mxu0 %v971
        %v1065 = vpop.f32.mrf.mxu0
        %v1066 = vadd.f32 %v808, %v1065
        %v1067 = vpop.f32.mrf.mxu0
        %v1068 = vadd.f32 %v808, %v1067
        %1069 = vmatmul.bf16.gmra.mxu0 %v974
        %v1070 = vpop.f32.mrf.mxu0
        %v1071 = vadd.f32 %v808, %v1070
        %v1072 = vpop.f32.mrf.mxu0
        %v1073 = vadd.f32 %v808, %v1072
        %1074 = vdwg.mxu0
        %1075 = vmatpush.bf16.msra.mxu0 0
        %1076 = vmatpush.bf16.msra.mxu0 %v986
        %1077 = vmatpush.bf16.msra.mxu0 %v935
        %1078 = vmatpush.bf16.msra.mxu0 %v931
        %1079 = vmatpush.bf16.msra.mxu0 %v927
        %1080 = vmatpush.bf16.msra.mxu0 %v923
        %1081 = vmatpush.bf16.msra.mxu0 %v919
        %1082 = vmatpush.bf16.msra.mxu0 %v915
        %1083 = vmatmul.bf16.gmra.mxu0 %v965
        %v1084 = vpop.f32.mrf.mxu0
        %v1085 = vadd.f32 %v809, %v1084
        %v1086 = vpop.f32.mrf.mxu0
        %v1087 = vadd.f32 %v809, %v1086
        %1088 = vmatmul.bf16.gmra.mxu0 %v968
        %v1089 = vpop.f32.mrf.mxu0
        %v1090 = vadd.f32 %v809, %v1089
        %v1091 = vpop.f32.mrf.mxu0
        %v1092 = vadd.f32 %v809, %v1091
        %1093 = vmatmul.bf16.gmra.mxu0 %v971
        %v1094 = vpop.f32.mrf.mxu0
        %v1095 = vadd.f32 %v809, %v1094
        %v1096 = vpop.f32.mrf.mxu0
        %v1097 = vadd.f32 %v809, %v1096
        %1098 = vmatmul.bf16.gmra.mxu0 %v974
        %v1099 = vpop.f32.mrf.mxu0
        %v1100 = vadd.f32 %v809, %v1099
        %v1101 = vpop.f32.mrf.mxu0
        %v1102 = vadd.f32 %v809, %v1101
        %1103 = vdwg.mxu0
        %1104 = vst [vmem:[#allocation3] sm:$0xff] %v998
        %1105 = vst [vmem:[#allocation3 + $0x8] sm:$0xff] %v1027
        %1106 = vst [vmem:[#allocation3 + $0x10] sm:$0xff] %v1056
        %1107 = vst [vmem:[#allocation3 + $0x18] sm:$0xff] %v1085
        %1108 = vst [vmem:[#allocation3 + $0x20] sm:$0xff] %v1000
        %1109 = vst [vmem:[#allocation3 + $0x28] sm:$0xff] %v1029
        %1110 = vst [vmem:[#allocation3 + $0x30] sm:$0xff] %v1058
        %1111 = vst [vmem:[#allocation3 + $0x38] sm:$0xff] %v1087
        %1112 = vst [vmem:[#allocation3 + $0x40] sm:$0xff] %v1003
        %1113 = vst [vmem:[#allocation3 + $0x48] sm:$0xff] %v1032
        %1114 = vst [vmem:[#allocation3 + $0x50] sm:$0xff] %v1061
        %1115 = vst [vmem:[#allocation3 + $0x58] sm:$0xff] %v1090
        %1116 = vst [vmem:[#allocation3 + $0x60] sm:$0xff] %v1005
        %1117 = vst [vmem:[#allocation3 + $0x68] sm:$0xff] %v1034
        %1118 = vst [vmem:[#allocation3 + $0x70] sm:$0xff] %v1063
        %1119 = vst [vmem:[#allocation3 + $0x78] sm:$0xff] %v1092
        %1120 = vst [vmem:[#allocation3 + $0x80] sm:$0xff] %v1008
        %1121 = vst [vmem:[#allocation3 + $0x88] sm:$0xff] %v1037
        %1122 = vst [vmem:[#allocation3 + $0x90] sm:$0xff] %v1066
        %1123 = vst [vmem:[#allocation3 + $0x98] sm:$0xff] %v1095
        %1124 = vst [vmem:[#allocation3 + $0xa0] sm:$0xff] %v1010
        %1125 = vst [vmem:[#allocation3 + $0xa8] sm:$0xff] %v1039
        %1126 = vst [vmem:[#allocation3 + $0xb0] sm:$0xff] %v1068
        %1127 = vst [vmem:[#allocation3 + $0xb8] sm:$0xff] %v1097
        %1128 = vst [vmem:[#allocation3 + $0xc0] sm:$0xff] %v1013
        %1129 = vst [vmem:[#allocation3 + $0xc8] sm:$0xff] %v1042
        %1130 = vst [vmem:[#allocation3 + $0xd0] sm:$0xff] %v1071
        %1131 = vst [vmem:[#allocation3 + $0xd8] sm:$0xff] %v1100
        %1132 = vst [vmem:[#allocation3 + $0xe0] sm:$0xff] %v1015
        %1133 = vst [vmem:[#allocation3 + $0xe8] sm:$0xff] %v1044
        %1134 = vst [vmem:[#allocation3 + $0xf0] sm:$0xff] %v1073
        %1135 = vst [vmem:[#allocation3 + $0xf8] sm:$0xff] %v1102
        %p1136 = scmp.eq.s32.totalorder %s28, 0
        // Predicated region
        $region61: #{tpu_custom_call.1} parent=47 // pred_check
          %p1137 = pneg %p1136
        $region62: #{tpu_custom_call.1} parent=47 // pred_check_branch
          %1139 = sbr.rel (%p1137) target = $region64
        $region63: #{tpu_custom_call.1} parent=47 // pred_region
          %1140 = vst [vmem:[#allocation4] sm:$0xff] 0.0
          %1141 = vst [vmem:[#allocation5] sm:$0xff] 0.0
          %1142 = vst [vmem:[#allocation6] sm:$0xff] 0.0
          %1143 = vst [vmem:[#allocation7] sm:$0xff] 0.0
        $region64: #{tpu_custom_call.1} parent=47 // pred_fallthru
          _
        %v1144 = vld [vmem:[#allocation4] sm:$0xff]
        %v1145 = vld [vmem:[#allocation5] sm:$0xff]
        %v1146 = vld [vmem:[#allocation6] sm:$0xff]
        %v1147 = vld [vmem:[#allocation7] sm:$0xff]
        %v1148 = vpack.c.bf16 %v1144, %v1144
        %v1149 = vpack.c.bf16 %v1146, %v1146
        %v1150 = vld [vmem:[#allocation13] sm:$0xff]
        %v1151 = vld [vmem:[#allocation13 + $0x8] sm:$0xff]
        %v1152 = vld [vmem:[#allocation13 + $0x10] sm:$0xff]
        %v1153 = vld [vmem:[#allocation13 + $0x18] sm:$0xff]
        %v1154 = vld [vmem:[#allocation13 + $0x20] sm:$0xff]
        %v1155 = vld [vmem:[#allocation13 + $0x28] sm:$0xff]
        %v1156 = vld [vmem:[#allocation13 + $0x30] sm:$0xff]
        %v1157 = vld [vmem:[#allocation13 + $0x38] sm:$0xff]
        %v1158 = vld [vmem:[#allocation13 + $0x40] sm:$0xff]
        %v1159 = vld [vmem:[#allocation13 + $0x48] sm:$0xff]
        %v1160 = vld [vmem:[#allocation13 + $0x50] sm:$0xff]
        %v1161 = vld [vmem:[#allocation13 + $0x58] sm:$0xff]
        %v1162 = vld [vmem:[#allocation13 + $0x60] sm:$0xff]
        %v1163 = vld [vmem:[#allocation13 + $0x68] sm:$0xff]
        %v1164 = vld [vmem:[#allocation13 + $0x70] sm:$0xff]
        %v1165 = vld [vmem:[#allocation13 + $0x78] sm:$0xff]
        %v1166 = vld [vmem:[#allocation13 + $0x80] sm:$0xff]
        %v1167 = vld [vmem:[#allocation13 + $0x88] sm:$0xff]
        %v1168 = vld [vmem:[#allocation13 + $0x90] sm:$0xff]
        %v1169 = vld [vmem:[#allocation13 + $0x98] sm:$0xff]
        %v1170 = vld [vmem:[#allocation13 + $0xa0] sm:$0xff]
        %v1171 = vld [vmem:[#allocation13 + $0xa8] sm:$0xff]
        %v1172 = vld [vmem:[#allocation13 + $0xb0] sm:$0xff]
        %v1173 = vld [vmem:[#allocation13 + $0xb8] sm:$0xff]
        %v1174 = vld [vmem:[#allocation13 + $0xc0] sm:$0xff]
        %v1175 = vld [vmem:[#allocation13 + $0xc8] sm:$0xff]
        %v1176 = vld [vmem:[#allocation13 + $0xd0] sm:$0xff]
        %v1177 = vld [vmem:[#allocation13 + $0xd8] sm:$0xff]
        %v1178 = vld [vmem:[#allocation13 + $0xe0] sm:$0xff]
        %v1179 = vld [vmem:[#allocation13 + $0xe8] sm:$0xff]
        %v1180 = vld [vmem:[#allocation13 + $0xf0] sm:$0xff]
        %v1181 = vld [vmem:[#allocation13 + $0xf8] sm:$0xff]
        %v1182 = vld [vmem:[#allocation13 + $0x100] sm:$0xff]
        %v1183 = vld [vmem:[#allocation13 + $0x108] sm:$0xff]
        %v1184 = vld [vmem:[#allocation13 + $0x110] sm:$0xff]
        %v1185 = vld [vmem:[#allocation13 + $0x118] sm:$0xff]
        %v1186 = vld [vmem:[#allocation13 + $0x120] sm:$0xff]
        %v1187 = vld [vmem:[#allocation13 + $0x128] sm:$0xff]
        %v1188 = vld [vmem:[#allocation13 + $0x130] sm:$0xff]
        %v1189 = vld [vmem:[#allocation13 + $0x138] sm:$0xff]
        %v1190 = vld [vmem:[#allocation13 + $0x140] sm:$0xff]
        %v1191 = vld [vmem:[#allocation13 + $0x148] sm:$0xff]
        %v1192 = vld [vmem:[#allocation13 + $0x150] sm:$0xff]
        %v1193 = vld [vmem:[#allocation13 + $0x158] sm:$0xff]
        %v1194 = vld [vmem:[#allocation13 + $0x160] sm:$0xff]
        %v1195 = vld [vmem:[#allocation13 + $0x168] sm:$0xff]
        %v1196 = vld [vmem:[#allocation13 + $0x170] sm:$0xff]
        %v1197 = vld [vmem:[#allocation13 + $0x178] sm:$0xff]
        %v1198 = vld [vmem:[#allocation13 + $0x180] sm:$0xff]
        %v1199 = vld [vmem:[#allocation13 + $0x188] sm:$0xff]
        %v1200 = vld [vmem:[#allocation13 + $0x190] sm:$0xff]
        %v1201 = vld [vmem:[#allocation13 + $0x198] sm:$0xff]
        %v1202 = vld [vmem:[#allocation13 + $0x1a0] sm:$0xff]
        %v1203 = vld [vmem:[#allocation13 + $0x1a8] sm:$0xff]
        %v1204 = vld [vmem:[#allocation13 + $0x1b0] sm:$0xff]
        %v1205 = vld [vmem:[#allocation13 + $0x1b8] sm:$0xff]
        %v1206 = vld [vmem:[#allocation13 + $0x1c0] sm:$0xff]
        %v1207 = vld [vmem:[#allocation13 + $0x1c8] sm:$0xff]
        %v1208 = vld [vmem:[#allocation13 + $0x1d0] sm:$0xff]
        %v1209 = vld [vmem:[#allocation13 + $0x1d8] sm:$0xff]
        %v1210 = vld [vmem:[#allocation13 + $0x1e0] sm:$0xff]
        %v1211 = vld [vmem:[#allocation13 + $0x1e8] sm:$0xff]
        %v1212 = vld [vmem:[#allocation13 + $0x1f0] sm:$0xff]
        %v1213 = vld [vmem:[#allocation13 + $0x1f8] sm:$0xff]
        %v1214 = vld [vmem:[#allocation13 + $0x200] sm:$0xff]
        %v1215 = vld [vmem:[#allocation13 + $0x208] sm:$0xff]
        %v1216 = vld [vmem:[#allocation13 + $0x210] sm:$0xff]
        %v1217 = vld [vmem:[#allocation13 + $0x218] sm:$0xff]
        %v1218 = vld [vmem:[#allocation13 + $0x220] sm:$0xff]
        %v1219 = vld [vmem:[#allocation13 + $0x228] sm:$0xff]
        %v1220 = vld [vmem:[#allocation13 + $0x230] sm:$0xff]
        %v1221 = vld [vmem:[#allocation13 + $0x238] sm:$0xff]
        %v1222 = vld [vmem:[#allocation13 + $0x240] sm:$0xff]
        %v1223 = vld [vmem:[#allocation13 + $0x248] sm:$0xff]
        %v1224 = vld [vmem:[#allocation13 + $0x250] sm:$0xff]
        %v1225 = vld [vmem:[#allocation13 + $0x258] sm:$0xff]
        %v1226 = vld [vmem:[#allocation13 + $0x260] sm:$0xff]
        %v1227 = vld [vmem:[#allocation13 + $0x268] sm:$0xff]
        %v1228 = vld [vmem:[#allocation13 + $0x270] sm:$0xff]
        %v1229 = vld [vmem:[#allocation13 + $0x278] sm:$0xff]
        %v1230 = vld [vmem:[#allocation13 + $0x280] sm:$0xff]
        %v1231 = vld [vmem:[#allocation13 + $0x288] sm:$0xff]
        %v1232 = vld [vmem:[#allocation13 + $0x290] sm:$0xff]
        %v1233 = vld [vmem:[#allocation13 + $0x298] sm:$0xff]
        %v1234 = vld [vmem:[#allocation13 + $0x2a0] sm:$0xff]
        %v1235 = vld [vmem:[#allocation13 + $0x2a8] sm:$0xff]
        %v1236 = vld [vmem:[#allocation13 + $0x2b0] sm:$0xff]
        %v1237 = vld [vmem:[#allocation13 + $0x2b8] sm:$0xff]
        %v1238 = vld [vmem:[#allocation13 + $0x2c0] sm:$0xff]
        %v1239 = vld [vmem:[#allocation13 + $0x2c8] sm:$0xff]
        %v1240 = vld [vmem:[#allocation13 + $0x2d0] sm:$0xff]
        %v1241 = vld [vmem:[#allocation13 + $0x2d8] sm:$0xff]
        %v1242 = vld [vmem:[#allocation13 + $0x2e0] sm:$0xff]
        %v1243 = vld [vmem:[#allocation13 + $0x2e8] sm:$0xff]
        %v1244 = vld [vmem:[#allocation13 + $0x2f0] sm:$0xff]
        %v1245 = vld [vmem:[#allocation13 + $0x2f8] sm:$0xff]
        %v1246 = vld [vmem:[#allocation13 + $0x300] sm:$0xff]
        %v1247 = vld [vmem:[#allocation13 + $0x308] sm:$0xff]
        %v1248 = vld [vmem:[#allocation13 + $0x310] sm:$0xff]
        %v1249 = vld [vmem:[#allocation13 + $0x318] sm:$0xff]
        %v1250 = vld [vmem:[#allocation13 + $0x320] sm:$0xff]
        %v1251 = vld [vmem:[#allocation13 + $0x328] sm:$0xff]
        %v1252 = vld [vmem:[#allocation13 + $0x330] sm:$0xff]
        %v1253 = vld [vmem:[#allocation13 + $0x338] sm:$0xff]
        %v1254 = vld [vmem:[#allocation13 + $0x340] sm:$0xff]
        %v1255 = vld [vmem:[#allocation13 + $0x348] sm:$0xff]
        %v1256 = vld [vmem:[#allocation13 + $0x350] sm:$0xff]
        %v1257 = vld [vmem:[#allocation13 + $0x358] sm:$0xff]
        %v1258 = vld [vmem:[#allocation13 + $0x360] sm:$0xff]
        %v1259 = vld [vmem:[#allocation13 + $0x368] sm:$0xff]
        %v1260 = vld [vmem:[#allocation13 + $0x370] sm:$0xff]
        %v1261 = vld [vmem:[#allocation13 + $0x378] sm:$0xff]
        %v1262 = vld [vmem:[#allocation13 + $0x380] sm:$0xff]
        %v1263 = vld [vmem:[#allocation13 + $0x388] sm:$0xff]
        %v1264 = vld [vmem:[#allocation13 + $0x390] sm:$0xff]
        %v1265 = vld [vmem:[#allocation13 + $0x398] sm:$0xff]
        %v1266 = vld [vmem:[#allocation13 + $0x3a0] sm:$0xff]
        %v1267 = vld [vmem:[#allocation13 + $0x3a8] sm:$0xff]
        %v1268 = vld [vmem:[#allocation13 + $0x3b0] sm:$0xff]
        %v1269 = vld [vmem:[#allocation13 + $0x3b8] sm:$0xff]
        %v1270 = vld [vmem:[#allocation13 + $0x3c0] sm:$0xff]
        %v1271 = vld [vmem:[#allocation13 + $0x3c8] sm:$0xff]
        %v1272 = vld [vmem:[#allocation13 + $0x3d0] sm:$0xff]
        %v1273 = vld [vmem:[#allocation13 + $0x3d8] sm:$0xff]
        %v1274 = vld [vmem:[#allocation13 + $0x3e0] sm:$0xff]
        %v1275 = vld [vmem:[#allocation13 + $0x3e8] sm:$0xff]
        %v1276 = vld [vmem:[#allocation13 + $0x3f0] sm:$0xff]
        %v1277 = vld [vmem:[#allocation13 + $0x3f8] sm:$0xff]
        %v1406 = vunpack.c.l.b16 %v1150
        %v1407 = vunpack.c.h.b16 %v1150
        %v1408 = vunpack.c.l.b16 %v1151
        %v1409 = vunpack.c.h.b16 %v1151
        %v1410 = vunpack.c.l.b16 %v1152
        %v1411 = vunpack.c.h.b16 %v1152
        %v1412 = vunpack.c.l.b16 %v1153
        %v1413 = vunpack.c.h.b16 %v1153
        %v1414 = vunpack.c.l.b16 %v1154
        %v1415 = vunpack.c.h.b16 %v1154
        %v1416 = vunpack.c.l.b16 %v1155
        %v1417 = vunpack.c.h.b16 %v1155
        %v1418 = vunpack.c.l.b16 %v1156
        %v1419 = vunpack.c.h.b16 %v1156
        %v1420 = vunpack.c.l.b16 %v1157
        %v1421 = vunpack.c.h.b16 %v1157
        %v1422 = vunpack.c.l.b16 %v1158
        %v1423 = vunpack.c.h.b16 %v1158
        %v1424 = vunpack.c.l.b16 %v1159
        %v1425 = vunpack.c.h.b16 %v1159
        %v1426 = vunpack.c.l.b16 %v1160
        %v1427 = vunpack.c.h.b16 %v1160
        %v1428 = vunpack.c.l.b16 %v1161
        %v1429 = vunpack.c.h.b16 %v1161
        %v1430 = vunpack.c.l.b16 %v1162
        %v1431 = vunpack.c.h.b16 %v1162
        %v1432 = vunpack.c.l.b16 %v1163
        %v1433 = vunpack.c.h.b16 %v1163
        %v1434 = vunpack.c.l.b16 %v1164
        %v1435 = vunpack.c.h.b16 %v1164
        %v1436 = vunpack.c.l.b16 %v1165
        %v1437 = vunpack.c.h.b16 %v1165
        %v1438 = vunpack.c.l.b16 %v1166
        %v1439 = vunpack.c.h.b16 %v1166
        %v1440 = vunpack.c.l.b16 %v1167
        %v1441 = vunpack.c.h.b16 %v1167
        %v1442 = vunpack.c.l.b16 %v1168
        %v1443 = vunpack.c.h.b16 %v1168
        %v1444 = vunpack.c.l.b16 %v1169
        %v1445 = vunpack.c.h.b16 %v1169
        %v1446 = vunpack.c.l.b16 %v1170
        %v1447 = vunpack.c.h.b16 %v1170
        %v1448 = vunpack.c.l.b16 %v1171
        %v1449 = vunpack.c.h.b16 %v1171
        %v1450 = vunpack.c.l.b16 %v1172
        %v1451 = vunpack.c.h.b16 %v1172
        %v1452 = vunpack.c.l.b16 %v1173
        %v1453 = vunpack.c.h.b16 %v1173
        %v1454 = vunpack.c.l.b16 %v1174
        %v1455 = vunpack.c.h.b16 %v1174
        %v1456 = vunpack.c.l.b16 %v1175
        %v1457 = vunpack.c.h.b16 %v1175
        %v1458 = vunpack.c.l.b16 %v1176
        %v1459 = vunpack.c.h.b16 %v1176
        %v1460 = vunpack.c.l.b16 %v1177
        %v1461 = vunpack.c.h.b16 %v1177
        %v1462 = vunpack.c.l.b16 %v1178
        %v1463 = vunpack.c.h.b16 %v1178
        %v1464 = vunpack.c.l.b16 %v1179
        %v1465 = vunpack.c.h.b16 %v1179
        %v1466 = vunpack.c.l.b16 %v1180
        %v1467 = vunpack.c.h.b16 %v1180
        %v1468 = vunpack.c.l.b16 %v1181
        %v1469 = vunpack.c.h.b16 %v1181
        %v1470 = vunpack.c.l.b16 %v1182
        %v1471 = vunpack.c.h.b16 %v1182
        %v1472 = vunpack.c.l.b16 %v1183
        %v1473 = vunpack.c.h.b16 %v1183
        %v1474 = vunpack.c.l.b16 %v1184
        %v1475 = vunpack.c.h.b16 %v1184
        %v1476 = vunpack.c.l.b16 %v1185
        %v1477 = vunpack.c.h.b16 %v1185
        %v1478 = vunpack.c.l.b16 %v1186
        %v1479 = vunpack.c.h.b16 %v1186
        %v1480 = vunpack.c.l.b16 %v1187
        %v1481 = vunpack.c.h.b16 %v1187
        %v1482 = vunpack.c.l.b16 %v1188
        %v1483 = vunpack.c.h.b16 %v1188
        %v1484 = vunpack.c.l.b16 %v1189
        %v1485 = vunpack.c.h.b16 %v1189
        %v1486 = vunpack.c.l.b16 %v1190
        %v1487 = vunpack.c.h.b16 %v1190
        %v1488 = vunpack.c.l.b16 %v1191
        %v1489 = vunpack.c.h.b16 %v1191
        %v1490 = vunpack.c.l.b16 %v1192
        %v1491 = vunpack.c.h.b16 %v1192
        %v1492 = vunpack.c.l.b16 %v1193
        %v1493 = vunpack.c.h.b16 %v1193
        %v1494 = vunpack.c.l.b16 %v1194
        %v1495 = vunpack.c.h.b16 %v1194
        %v1496 = vunpack.c.l.b16 %v1195
        %v1497 = vunpack.c.h.b16 %v1195
        %v1498 = vunpack.c.l.b16 %v1196
        %v1499 = vunpack.c.h.b16 %v1196
        %v1500 = vunpack.c.l.b16 %v1197
        %v1501 = vunpack.c.h.b16 %v1197
        %v1502 = vunpack.c.l.b16 %v1198
        %v1503 = vunpack.c.h.b16 %v1198
        %v1504 = vunpack.c.l.b16 %v1199
        %v1505 = vunpack.c.h.b16 %v1199
        %v1506 = vunpack.c.l.b16 %v1200
        %v1507 = vunpack.c.h.b16 %v1200
        %v1508 = vunpack.c.l.b16 %v1201
        %v1509 = vunpack.c.h.b16 %v1201
        %v1510 = vunpack.c.l.b16 %v1202
        %v1511 = vunpack.c.h.b16 %v1202
        %v1512 = vunpack.c.l.b16 %v1203
        %v1513 = vunpack.c.h.b16 %v1203
        %v1514 = vunpack.c.l.b16 %v1204
        %v1515 = vunpack.c.h.b16 %v1204
        %v1516 = vunpack.c.l.b16 %v1205
        %v1517 = vunpack.c.h.b16 %v1205
        %v1518 = vunpack.c.l.b16 %v1206
        %v1519 = vunpack.c.h.b16 %v1206
        %v1520 = vunpack.c.l.b16 %v1207
        %v1521 = vunpack.c.h.b16 %v1207
        %v1522 = vunpack.c.l.b16 %v1208
        %v1523 = vunpack.c.h.b16 %v1208
        %v1524 = vunpack.c.l.b16 %v1209
        %v1525 = vunpack.c.h.b16 %v1209
        %v1526 = vunpack.c.l.b16 %v1210
        %v1527 = vunpack.c.h.b16 %v1210
        %v1528 = vunpack.c.l.b16 %v1211
        %v1529 = vunpack.c.h.b16 %v1211
        %v1530 = vunpack.c.l.b16 %v1212
        %v1531 = vunpack.c.h.b16 %v1212
        %v1532 = vunpack.c.l.b16 %v1213
        %v1533 = vunpack.c.h.b16 %v1213
        %v1534 = vunpack.c.l.b16 %v1214
        %v1535 = vunpack.c.h.b16 %v1214
        %v1536 = vunpack.c.l.b16 %v1215
        %v1537 = vunpack.c.h.b16 %v1215
        %v1538 = vunpack.c.l.b16 %v1216
        %v1539 = vunpack.c.h.b16 %v1216
        %v1540 = vunpack.c.l.b16 %v1217
        %v1541 = vunpack.c.h.b16 %v1217
        %v1542 = vunpack.c.l.b16 %v1218
        %v1543 = vunpack.c.h.b16 %v1218
        %v1544 = vunpack.c.l.b16 %v1219
        %v1545 = vunpack.c.h.b16 %v1219
        %v1546 = vunpack.c.l.b16 %v1220
        %v1547 = vunpack.c.h.b16 %v1220
        %v1548 = vunpack.c.l.b16 %v1221
        %v1549 = vunpack.c.h.b16 %v1221
        %v1550 = vunpack.c.l.b16 %v1222
        %v1551 = vunpack.c.h.b16 %v1222
        %v1552 = vunpack.c.l.b16 %v1223
        %v1553 = vunpack.c.h.b16 %v1223
        %v1554 = vunpack.c.l.b16 %v1224
        %v1555 = vunpack.c.h.b16 %v1224
        %v1556 = vunpack.c.l.b16 %v1225
        %v1557 = vunpack.c.h.b16 %v1225
        %v1558 = vunpack.c.l.b16 %v1226
        %v1559 = vunpack.c.h.b16 %v1226
        %v1560 = vunpack.c.l.b16 %v1227
        %v1561 = vunpack.c.h.b16 %v1227
        %v1562 = vunpack.c.l.b16 %v1228
        %v1563 = vunpack.c.h.b16 %v1228
        %v1564 = vunpack.c.l.b16 %v1229
        %v1565 = vunpack.c.h.b16 %v1229
        %v1566 = vunpack.c.l.b16 %v1230
        %v1567 = vunpack.c.h.b16 %v1230
        %v1568 = vunpack.c.l.b16 %v1231
        %v1569 = vunpack.c.h.b16 %v1231
        %v1570 = vunpack.c.l.b16 %v1232
        %v1571 = vunpack.c.h.b16 %v1232
        %v1572 = vunpack.c.l.b16 %v1233
        %v1573 = vunpack.c.h.b16 %v1233
        %v1574 = vunpack.c.l.b16 %v1234
        %v1575 = vunpack.c.h.b16 %v1234
        %v1576 = vunpack.c.l.b16 %v1235
        %v1577 = vunpack.c.h.b16 %v1235
        %v1578 = vunpack.c.l.b16 %v1236
        %v1579 = vunpack.c.h.b16 %v1236
        %v1580 = vunpack.c.l.b16 %v1237
        %v1581 = vunpack.c.h.b16 %v1237
        %v1582 = vunpack.c.l.b16 %v1238
        %v1583 = vunpack.c.h.b16 %v1238
        %v1584 = vunpack.c.l.b16 %v1239
        %v1585 = vunpack.c.h.b16 %v1239
        %v1586 = vunpack.c.l.b16 %v1240
        %v1587 = vunpack.c.h.b16 %v1240
        %v1588 = vunpack.c.l.b16 %v1241
        %v1589 = vunpack.c.h.b16 %v1241
        %v1590 = vunpack.c.l.b16 %v1242
        %v1591 = vunpack.c.h.b16 %v1242
        %v1592 = vunpack.c.l.b16 %v1243
        %v1593 = vunpack.c.h.b16 %v1243
        %v1594 = vunpack.c.l.b16 %v1244
        %v1595 = vunpack.c.h.b16 %v1244
        %v1596 = vunpack.c.l.b16 %v1245
        %v1597 = vunpack.c.h.b16 %v1245
        %v1598 = vunpack.c.l.b16 %v1246
        %v1599 = vunpack.c.h.b16 %v1246
        %v1600 = vunpack.c.l.b16 %v1247
        %v1601 = vunpack.c.h.b16 %v1247
        %v1602 = vunpack.c.l.b16 %v1248
        %v1603 = vunpack.c.h.b16 %v1248
        %v1604 = vunpack.c.l.b16 %v1249
        %v1605 = vunpack.c.h.b16 %v1249
        %v1606 = vunpack.c.l.b16 %v1250
        %v1607 = vunpack.c.h.b16 %v1250
        %v1608 = vunpack.c.l.b16 %v1251
        %v1609 = vunpack.c.h.b16 %v1251
        %v1610 = vunpack.c.l.b16 %v1252
        %v1611 = vunpack.c.h.b16 %v1252
        %v1612 = vunpack.c.l.b16 %v1253
        %v1613 = vunpack.c.h.b16 %v1253
        %v1614 = vunpack.c.l.b16 %v1254
        %v1615 = vunpack.c.h.b16 %v1254
        %v1616 = vunpack.c.l.b16 %v1255
        %v1617 = vunpack.c.h.b16 %v1255
        %v1618 = vunpack.c.l.b16 %v1256
        %v1619 = vunpack.c.h.b16 %v1256
        %v1620 = vunpack.c.l.b16 %v1257
        %v1621 = vunpack.c.h.b16 %v1257
        %v1622 = vunpack.c.l.b16 %v1258
        %v1623 = vunpack.c.h.b16 %v1258
        %v1624 = vunpack.c.l.b16 %v1259
        %v1625 = vunpack.c.h.b16 %v1259
        %v1626 = vunpack.c.l.b16 %v1260
        %v1627 = vunpack.c.h.b16 %v1260
        %v1628 = vunpack.c.l.b16 %v1261
        %v1629 = vunpack.c.h.b16 %v1261
        %v1630 = vunpack.c.l.b16 %v1262
        %v1631 = vunpack.c.h.b16 %v1262
        %v1632 = vunpack.c.l.b16 %v1263
        %v1633 = vunpack.c.h.b16 %v1263
        %v1634 = vunpack.c.l.b16 %v1264
        %v1635 = vunpack.c.h.b16 %v1264
        %v1636 = vunpack.c.l.b16 %v1265
        %v1637 = vunpack.c.h.b16 %v1265
        %v1638 = vunpack.c.l.b16 %v1266
        %v1639 = vunpack.c.h.b16 %v1266
        %v1640 = vunpack.c.l.b16 %v1267
        %v1641 = vunpack.c.h.b16 %v1267
        %v1642 = vunpack.c.l.b16 %v1268
        %v1643 = vunpack.c.h.b16 %v1268
        %v1644 = vunpack.c.l.b16 %v1269
        %v1645 = vunpack.c.h.b16 %v1269
        %v1646 = vunpack.c.l.b16 %v1270
        %v1647 = vunpack.c.h.b16 %v1270
        %v1648 = vunpack.c.l.b16 %v1271
        %v1649 = vunpack.c.h.b16 %v1271
        %v1650 = vunpack.c.l.b16 %v1272
        %v1651 = vunpack.c.h.b16 %v1272
        %v1652 = vunpack.c.l.b16 %v1273
        %v1653 = vunpack.c.h.b16 %v1273
        %v1654 = vunpack.c.l.b16 %v1274
        %v1655 = vunpack.c.h.b16 %v1274
        %v1656 = vunpack.c.l.b16 %v1275
        %v1657 = vunpack.c.h.b16 %v1275
        %v1658 = vunpack.c.l.b16 %v1276
        %v1659 = vunpack.c.h.b16 %v1276
        %v1660 = vunpack.c.l.b16 %v1277
        %v1661 = vunpack.c.h.b16 %v1277
        %v1662 = vpack.c.b16 %v1414, %v1406
        %v1663 = vpack.c.b16 %v1415, %v1407
        %v1664 = vpack.c.b16 %v1416, %v1408
        %v1665 = vpack.c.b16 %v1417, %v1409
        %v1666 = vpack.c.b16 %v1418, %v1410
        %v1667 = vpack.c.b16 %v1419, %v1411
        %v1668 = vpack.c.b16 %v1420, %v1412
        %v1669 = vpack.c.b16 %v1421, %v1413
        %v1670 = vpack.c.b16 %v1430, %v1422
        %v1671 = vpack.c.b16 %v1431, %v1423
        %v1672 = vpack.c.b16 %v1432, %v1424
        %v1673 = vpack.c.b16 %v1433, %v1425
        %v1674 = vpack.c.b16 %v1434, %v1426
        %v1675 = vpack.c.b16 %v1435, %v1427
        %v1676 = vpack.c.b16 %v1436, %v1428
        %v1677 = vpack.c.b16 %v1437, %v1429
        %v1678 = vpack.c.b16 %v1446, %v1438
        %v1679 = vpack.c.b16 %v1447, %v1439
        %v1680 = vpack.c.b16 %v1448, %v1440
        %v1681 = vpack.c.b16 %v1449, %v1441
        %v1682 = vpack.c.b16 %v1450, %v1442
        %v1683 = vpack.c.b16 %v1451, %v1443
        %v1684 = vpack.c.b16 %v1452, %v1444
        %v1685 = vpack.c.b16 %v1453, %v1445
        %v1686 = vpack.c.b16 %v1462, %v1454
        %v1687 = vpack.c.b16 %v1463, %v1455
        %v1688 = vpack.c.b16 %v1464, %v1456
        %v1689 = vpack.c.b16 %v1465, %v1457
        %v1690 = vpack.c.b16 %v1466, %v1458
        %v1691 = vpack.c.b16 %v1467, %v1459
        %v1692 = vpack.c.b16 %v1468, %v1460
        %v1693 = vpack.c.b16 %v1469, %v1461
        %v1694 = vpack.c.b16 %v1478, %v1470
        %v1695 = vpack.c.b16 %v1479, %v1471
        %v1696 = vpack.c.b16 %v1480, %v1472
        %v1697 = vpack.c.b16 %v1481, %v1473
        %v1698 = vpack.c.b16 %v1482, %v1474
        %v1699 = vpack.c.b16 %v1483, %v1475
        %v1700 = vpack.c.b16 %v1484, %v1476
        %v1701 = vpack.c.b16 %v1485, %v1477
        %v1702 = vpack.c.b16 %v1494, %v1486
        %v1703 = vpack.c.b16 %v1495, %v1487
        %v1704 = vpack.c.b16 %v1496, %v1488
        %v1705 = vpack.c.b16 %v1497, %v1489
        %v1706 = vpack.c.b16 %v1498, %v1490
        %v1707 = vpack.c.b16 %v1499, %v1491
        %v1708 = vpack.c.b16 %v1500, %v1492
        %v1709 = vpack.c.b16 %v1501, %v1493
        %v1710 = vpack.c.b16 %v1510, %v1502
        %v1711 = vpack.c.b16 %v1511, %v1503
        %v1712 = vpack.c.b16 %v1512, %v1504
        %v1713 = vpack.c.b16 %v1513, %v1505
        %v1714 = vpack.c.b16 %v1514, %v1506
        %v1715 = vpack.c.b16 %v1515, %v1507
        %v1716 = vpack.c.b16 %v1516, %v1508
        %v1717 = vpack.c.b16 %v1517, %v1509
        %v1718 = vpack.c.b16 %v1526, %v1518
        %v1719 = vpack.c.b16 %v1527, %v1519
        %v1720 = vpack.c.b16 %v1528, %v1520
        %v1721 = vpack.c.b16 %v1529, %v1521
        %v1722 = vpack.c.b16 %v1530, %v1522
        %v1723 = vpack.c.b16 %v1531, %v1523
        %v1724 = vpack.c.b16 %v1532, %v1524
        %v1725 = vpack.c.b16 %v1533, %v1525
        %v1726 = vpack.c.b16 %v1542, %v1534
        %v1727 = vpack.c.b16 %v1543, %v1535
        %v1728 = vpack.c.b16 %v1544, %v1536
        %v1729 = vpack.c.b16 %v1545, %v1537
        %v1730 = vpack.c.b16 %v1546, %v1538
        %v1731 = vpack.c.b16 %v1547, %v1539
        %v1732 = vpack.c.b16 %v1548, %v1540
        %v1733 = vpack.c.b16 %v1549, %v1541
        %v1734 = vpack.c.b16 %v1558, %v1550
        %v1735 = vpack.c.b16 %v1559, %v1551
        %v1736 = vpack.c.b16 %v1560, %v1552
        %v1737 = vpack.c.b16 %v1561, %v1553
        %v1738 = vpack.c.b16 %v1562, %v1554
        %v1739 = vpack.c.b16 %v1563, %v1555
        %v1740 = vpack.c.b16 %v1564, %v1556
        %v1741 = vpack.c.b16 %v1565, %v1557
        %v1742 = vpack.c.b16 %v1574, %v1566
        %v1743 = vpack.c.b16 %v1575, %v1567
        %v1744 = vpack.c.b16 %v1576, %v1568
        %v1745 = vpack.c.b16 %v1577, %v1569
        %v1746 = vpack.c.b16 %v1578, %v1570
        %v1747 = vpack.c.b16 %v1579, %v1571
        %v1748 = vpack.c.b16 %v1580, %v1572
        %v1749 = vpack.c.b16 %v1581, %v1573
        %v1750 = vpack.c.b16 %v1590, %v1582
        %v1751 = vpack.c.b16 %v1591, %v1583
        %v1752 = vpack.c.b16 %v1592, %v1584
        %v1753 = vpack.c.b16 %v1593, %v1585
        %v1754 = vpack.c.b16 %v1594, %v1586
        %v1755 = vpack.c.b16 %v1595, %v1587
        %v1756 = vpack.c.b16 %v1596, %v1588
        %v1757 = vpack.c.b16 %v1597, %v1589
        %v1758 = vpack.c.b16 %v1606, %v1598
        %v1759 = vpack.c.b16 %v1607, %v1599
        %v1760 = vpack.c.b16 %v1608, %v1600
        %v1761 = vpack.c.b16 %v1609, %v1601
        %v1762 = vpack.c.b16 %v1610, %v1602
        %v1763 = vpack.c.b16 %v1611, %v1603
        %v1764 = vpack.c.b16 %v1612, %v1604
        %v1765 = vpack.c.b16 %v1613, %v1605
        %v1766 = vpack.c.b16 %v1622, %v1614
        %v1767 = vpack.c.b16 %v1623, %v1615
        %v1768 = vpack.c.b16 %v1624, %v1616
        %v1769 = vpack.c.b16 %v1625, %v1617
        %v1770 = vpack.c.b16 %v1626, %v1618
        %v1771 = vpack.c.b16 %v1627, %v1619
        %v1772 = vpack.c.b16 %v1628, %v1620
        %v1773 = vpack.c.b16 %v1629, %v1621
        %v1774 = vpack.c.b16 %v1638, %v1630
        %v1775 = vpack.c.b16 %v1639, %v1631
        %v1776 = vpack.c.b16 %v1640, %v1632
        %v1777 = vpack.c.b16 %v1641, %v1633
        %v1778 = vpack.c.b16 %v1642, %v1634
        %v1779 = vpack.c.b16 %v1643, %v1635
        %v1780 = vpack.c.b16 %v1644, %v1636
        %v1781 = vpack.c.b16 %v1645, %v1637
        %v1782 = vpack.c.b16 %v1654, %v1646
        %v1783 = vpack.c.b16 %v1655, %v1647
        %v1784 = vpack.c.b16 %v1656, %v1648
        %v1785 = vpack.c.b16 %v1657, %v1649
        %v1786 = vpack.c.b16 %v1658, %v1650
        %v1787 = vpack.c.b16 %v1659, %v1651
        %v1788 = vpack.c.b16 %v1660, %v1652
        %v1789 = vpack.c.b16 %v1661, %v1653
        %1918 = vmatpush.bf16.msra.mxu0 %v1718
        %1919 = vmatpush.bf16.msra.mxu0 %v1710
        %1920 = vmatpush.bf16.msra.mxu0 %v1702
        %1921 = vmatpush.bf16.msra.mxu0 %v1694
        %1922 = vmatpush.bf16.msra.mxu0 %v1686
        %1923 = vmatpush.bf16.msra.mxu0 %v1678
        %1924 = vmatpush.bf16.msra.mxu0 %v1670
        %1925 = vmatpush.bf16.msra.mxu0 %v1662
        %1926 = vmatmul.bf16.gmra.mxu0 %v1148
        %v1927 = vpop.f32.mrf.mxu0
        %v1928 = vadd.f32 0.0, %v1927
        %v1929 = vpop.f32.mrf.mxu0
        %1930 = vdwg.mxu0
        %1931 = vmatpush.bf16.msra.mxu0 %v1782
        %1932 = vmatpush.bf16.msra.mxu0 %v1774
        %1933 = vmatpush.bf16.msra.mxu0 %v1766
        %1934 = vmatpush.bf16.msra.mxu0 %v1758
        %1935 = vmatpush.bf16.msra.mxu0 %v1750
        %1936 = vmatpush.bf16.msra.mxu0 %v1742
        %1937 = vmatpush.bf16.msra.mxu0 %v1734
        %1938 = vmatpush.bf16.msra.mxu0 %v1726
        %1939 = vmatmul.bf16.gmra.mxu0 %v1149
        %v1940 = vpop.f32.mrf.mxu0
        %v1941 = vadd.f32 %v1928, %v1940
        %v1942 = vpop.f32.mrf.mxu0
        %1943 = vdwg.mxu0
        %1944 = vmatpush.bf16.msra.mxu0 %v1719
        %1945 = vmatpush.bf16.msra.mxu0 %v1711
        %1946 = vmatpush.bf16.msra.mxu0 %v1703
        %1947 = vmatpush.bf16.msra.mxu0 %v1695
        %1948 = vmatpush.bf16.msra.mxu0 %v1687
        %1949 = vmatpush.bf16.msra.mxu0 %v1679
        %1950 = vmatpush.bf16.msra.mxu0 %v1671
        %1951 = vmatpush.bf16.msra.mxu0 %v1663
        %1952 = vmatmul.bf16.gmra.mxu0 %v1148
        %v1953 = vpop.f32.mrf.mxu0
        %v1954 = vadd.f32 0.0, %v1953
        %v1955 = vpop.f32.mrf.mxu0
        %1956 = vdwg.mxu0
        %1957 = vmatpush.bf16.msra.mxu0 %v1783
        %1958 = vmatpush.bf16.msra.mxu0 %v1775
        %1959 = vmatpush.bf16.msra.mxu0 %v1767
        %1960 = vmatpush.bf16.msra.mxu0 %v1759
        %1961 = vmatpush.bf16.msra.mxu0 %v1751
        %1962 = vmatpush.bf16.msra.mxu0 %v1743
        %1963 = vmatpush.bf16.msra.mxu0 %v1735
        %1964 = vmatpush.bf16.msra.mxu0 %v1727
        %1965 = vmatmul.bf16.gmra.mxu0 %v1149
        %v1966 = vpop.f32.mrf.mxu0
        %v1967 = vadd.f32 %v1954, %v1966
        %v1968 = vpop.f32.mrf.mxu0
        %1969 = vdwg.mxu0
        %1970 = vmatpush.bf16.msra.mxu0 %v1720
        %1971 = vmatpush.bf16.msra.mxu0 %v1712
        %1972 = vmatpush.bf16.msra.mxu0 %v1704
        %1973 = vmatpush.bf16.msra.mxu0 %v1696
        %1974 = vmatpush.bf16.msra.mxu0 %v1688
        %1975 = vmatpush.bf16.msra.mxu0 %v1680
        %1976 = vmatpush.bf16.msra.mxu0 %v1672
        %1977 = vmatpush.bf16.msra.mxu0 %v1664
        %1978 = vmatmul.bf16.gmra.mxu0 %v1148
        %v1979 = vpop.f32.mrf.mxu0
        %v1980 = vadd.f32 0.0, %v1979
        %v1981 = vpop.f32.mrf.mxu0
        %1982 = vdwg.mxu0
        %1983 = vmatpush.bf16.msra.mxu0 %v1784
        %1984 = vmatpush.bf16.msra.mxu0 %v1776
        %1985 = vmatpush.bf16.msra.mxu0 %v1768
        %1986 = vmatpush.bf16.msra.mxu0 %v1760
        %1987 = vmatpush.bf16.msra.mxu0 %v1752
        %1988 = vmatpush.bf16.msra.mxu0 %v1744
        %1989 = vmatpush.bf16.msra.mxu0 %v1736
        %1990 = vmatpush.bf16.msra.mxu0 %v1728
        %1991 = vmatmul.bf16.gmra.mxu0 %v1149
        %v1992 = vpop.f32.mrf.mxu0
        %v1993 = vadd.f32 %v1980, %v1992
        %v1994 = vpop.f32.mrf.mxu0
        %1995 = vdwg.mxu0
        %1996 = vmatpush.bf16.msra.mxu0 %v1721
        %1997 = vmatpush.bf16.msra.mxu0 %v1713
        %1998 = vmatpush.bf16.msra.mxu0 %v1705
        %1999 = vmatpush.bf16.msra.mxu0 %v1697
        %2000 = vmatpush.bf16.msra.mxu0 %v1689
        %2001 = vmatpush.bf16.msra.mxu0 %v1681
        %2002 = vmatpush.bf16.msra.mxu0 %v1673
        %2003 = vmatpush.bf16.msra.mxu0 %v1665
        %2004 = vmatmul.bf16.gmra.mxu0 %v1148
        %v2005 = vpop.f32.mrf.mxu0
        %v2006 = vadd.f32 0.0, %v2005
        %v2007 = vpop.f32.mrf.mxu0
        %2008 = vdwg.mxu0
        %2009 = vmatpush.bf16.msra.mxu0 %v1785
        %2010 = vmatpush.bf16.msra.mxu0 %v1777
        %2011 = vmatpush.bf16.msra.mxu0 %v1769
        %2012 = vmatpush.bf16.msra.mxu0 %v1761
        %2013 = vmatpush.bf16.msra.mxu0 %v1753
        %2014 = vmatpush.bf16.msra.mxu0 %v1745
        %2015 = vmatpush.bf16.msra.mxu0 %v1737
        %2016 = vmatpush.bf16.msra.mxu0 %v1729
        %2017 = vmatmul.bf16.gmra.mxu0 %v1149
        %v2018 = vpop.f32.mrf.mxu0
        %v2019 = vadd.f32 %v2006, %v2018
        %v2020 = vpop.f32.mrf.mxu0
        %2021 = vdwg.mxu0
        %2022 = vmatpush.bf16.msra.mxu0 %v1722
        %2023 = vmatpush.bf16.msra.mxu0 %v1714
        %2024 = vmatpush.bf16.msra.mxu0 %v1706
        %2025 = vmatpush.bf16.msra.mxu0 %v1698
        %2026 = vmatpush.bf16.msra.mxu0 %v1690
        %2027 = vmatpush.bf16.msra.mxu0 %v1682
        %2028 = vmatpush.bf16.msra.mxu0 %v1674
        %2029 = vmatpush.bf16.msra.mxu0 %v1666
        %2030 = vmatmul.bf16.gmra.mxu0 %v1148
        %v2031 = vpop.f32.mrf.mxu0
        %v2032 = vadd.f32 0.0, %v2031
        %v2033 = vpop.f32.mrf.mxu0
        %2034 = vdwg.mxu0
        %2035 = vmatpush.bf16.msra.mxu0 %v1786
        %2036 = vmatpush.bf16.msra.mxu0 %v1778
        %2037 = vmatpush.bf16.msra.mxu0 %v1770
        %2038 = vmatpush.bf16.msra.mxu0 %v1762
        %2039 = vmatpush.bf16.msra.mxu0 %v1754
        %2040 = vmatpush.bf16.msra.mxu0 %v1746
        %2041 = vmatpush.bf16.msra.mxu0 %v1738
        %2042 = vmatpush.bf16.msra.mxu0 %v1730
        %2043 = vmatmul.bf16.gmra.mxu0 %v1149
        %v2044 = vpop.f32.mrf.mxu0
        %v2045 = vadd.f32 %v2032, %v2044
        %v2046 = vpop.f32.mrf.mxu0
        %2047 = vdwg.mxu0
        %2048 = vmatpush.bf16.msra.mxu0 %v1723
        %2049 = vmatpush.bf16.msra.mxu0 %v1715
        %2050 = vmatpush.bf16.msra.mxu0 %v1707
        %2051 = vmatpush.bf16.msra.mxu0 %v1699
        %2052 = vmatpush.bf16.msra.mxu0 %v1691
        %2053 = vmatpush.bf16.msra.mxu0 %v1683
        %2054 = vmatpush.bf16.msra.mxu0 %v1675
        %2055 = vmatpush.bf16.msra.mxu0 %v1667
        %2056 = vmatmul.bf16.gmra.mxu0 %v1148
        %v2057 = vpop.f32.mrf.mxu0
        %v2058 = vadd.f32 0.0, %v2057
        %v2059 = vpop.f32.mrf.mxu0
        %2060 = vdwg.mxu0
        %2061 = vmatpush.bf16.msra.mxu0 %v1787
        %2062 = vmatpush.bf16.msra.mxu0 %v1779
        %2063 = vmatpush.bf16.msra.mxu0 %v1771
        %2064 = vmatpush.bf16.msra.mxu0 %v1763
        %2065 = vmatpush.bf16.msra.mxu0 %v1755
        %2066 = vmatpush.bf16.msra.mxu0 %v1747
        %2067 = vmatpush.bf16.msra.mxu0 %v1739
        %2068 = vmatpush.bf16.msra.mxu0 %v1731
        %2069 = vmatmul.bf16.gmra.mxu0 %v1149
        %v2070 = vpop.f32.mrf.mxu0
        %v2071 = vadd.f32 %v2058, %v2070
        %v2072 = vpop.f32.mrf.mxu0
        %2073 = vdwg.mxu0
        %2074 = vmatpush.bf16.msra.mxu0 %v1724
        %2075 = vmatpush.bf16.msra.mxu0 %v1716
        %2076 = vmatpush.bf16.msra.mxu0 %v1708
        %2077 = vmatpush.bf16.msra.mxu0 %v1700
        %2078 = vmatpush.bf16.msra.mxu0 %v1692
        %2079 = vmatpush.bf16.msra.mxu0 %v1684
        %2080 = vmatpush.bf16.msra.mxu0 %v1676
        %2081 = vmatpush.bf16.msra.mxu0 %v1668
        %2082 = vmatmul.bf16.gmra.mxu0 %v1148
        %v2083 = vpop.f32.mrf.mxu0
        %v2084 = vadd.f32 0.0, %v2083
        %v2085 = vpop.f32.mrf.mxu0
        %2086 = vdwg.mxu0
        %2087 = vmatpush.bf16.msra.mxu0 %v1788
        %2088 = vmatpush.bf16.msra.mxu0 %v1780
        %2089 = vmatpush.bf16.msra.mxu0 %v1772
        %2090 = vmatpush.bf16.msra.mxu0 %v1764
        %2091 = vmatpush.bf16.msra.mxu0 %v1756
        %2092 = vmatpush.bf16.msra.mxu0 %v1748
        %2093 = vmatpush.bf16.msra.mxu0 %v1740
        %2094 = vmatpush.bf16.msra.mxu0 %v1732
        %2095 = vmatmul.bf16.gmra.mxu0 %v1149
        %v2096 = vpop.f32.mrf.mxu0
        %v2097 = vadd.f32 %v2084, %v2096
        %v2098 = vpop.f32.mrf.mxu0
        %2099 = vdwg.mxu0
        %2100 = vmatpush.bf16.msra.mxu0 %v1725
        %2101 = vmatpush.bf16.msra.mxu0 %v1717
        %2102 = vmatpush.bf16.msra.mxu0 %v1709
        %2103 = vmatpush.bf16.msra.mxu0 %v1701
        %2104 = vmatpush.bf16.msra.mxu0 %v1693
        %2105 = vmatpush.bf16.msra.mxu0 %v1685
        %2106 = vmatpush.bf16.msra.mxu0 %v1677
        %2107 = vmatpush.bf16.msra.mxu0 %v1669
        %2108 = vmatmul.bf16.gmra.mxu0 %v1148
        %v2109 = vpop.f32.mrf.mxu0
        %v2110 = vadd.f32 0.0, %v2109
        %v2111 = vpop.f32.mrf.mxu0
        %2112 = vdwg.mxu0
        %2113 = vmatpush.bf16.msra.mxu0 %v1789
        %2114 = vmatpush.bf16.msra.mxu0 %v1781
        %2115 = vmatpush.bf16.msra.mxu0 %v1773
        %2116 = vmatpush.bf16.msra.mxu0 %v1765
        %2117 = vmatpush.bf16.msra.mxu0 %v1757
        %2118 = vmatpush.bf16.msra.mxu0 %v1749
        %2119 = vmatpush.bf16.msra.mxu0 %v1741
        %2120 = vmatpush.bf16.msra.mxu0 %v1733
        %2121 = vmatmul.bf16.gmra.mxu0 %v1149
        %v2122 = vpop.f32.mrf.mxu0
        %v2123 = vadd.f32 %v2110, %v2122
        %v2124 = vpop.f32.mrf.mxu0
        %2125 = vdwg.mxu0
        %s2126 = smul.u32 0, 4
        %s2127 = smul.addr %s2126, 8
        %s2128 = scalar_lea.vmem [#allocation2], %s2127
        %v2129 = vld [vmem:[%s2128] sm:$0xff]
        %v2130 = vld [vmem:[%s2128 + $0x8] sm:$0xff]
        %v2131 = vld [vmem:[%s2128 + $0x10] sm:$0xff]
        %v2132 = vld [vmem:[%s2128 + $0x18] sm:$0xff]
        %v2133 = vadd.f32 %v2129, %v1941
        %v2134 = vadd.f32 %v2130, %v1967
        %v2135 = vadd.f32 %v2131, %v1993
        %v2136 = vadd.f32 %v2132, %v2019
        %s2137 = smul.u32 7, 4
        %s2138 = smul.addr %s2137, 8
        %s2139 = scalar_lea.vmem [#allocation3], %s2138
        %v2140 = vld [vmem:[%s2139] sm:$0xff]
        %v2141 = vld [vmem:[%s2139 + $0x8] sm:$0xff]
        %v2142 = vld [vmem:[%s2139 + $0x10] sm:$0xff]
        %v2143 = vld [vmem:[%s2139 + $0x18] sm:$0xff]
        %v2144 = vadd.f32 %v2140, %v2045
        %v2145 = vadd.f32 %v2141, %v2071
        %v2146 = vadd.f32 %v2142, %v2097
        %v2147 = vadd.f32 %v2143, %v2123
        %v2148 = vmul.f32 %v2133, 0.5
        %v2149 = vtanh.pop %v2148
        %v2150 = vmul.f32 %v2149, 0.5
        %v2151 = vadd.f32 %v2150, 0.5
        %v2152 = vmul.f32 %v2134, 0.5
        %v2153 = vtanh.pop %v2152
        %v2154 = vmul.f32 %v2153, 0.5
        %v2155 = vadd.f32 %v2154, 0.5
        %v2156 = vtanh.pop %v2135
        %v2157 = vmul.f32 %v2136, 0.5
        %v2158 = vtanh.pop %v2157
        %v2159 = vmul.f32 %v2158, 0.5
        %v2160 = vadd.f32 %v2159, 0.5
        %v2161 = vmul.f32 %v2155, %v1145
        %v2162 = vmul.f32 %v2151, %v2156
        %v2163 = vadd.f32 %v2161, %v2162
        %v2164 = vtanh.pop %v2163
        %v2165 = vmul.f32 %v2160, %v2164
        %v2166 = vmul.f32 %v2144, 0.5
        %v2167 = vtanh.pop %v2166
        %v2168 = vmul.f32 %v2167, 0.5
        %v2169 = vadd.f32 %v2168, 0.5
        %v2170 = vmul.f32 %v2145, 0.5
        %v2171 = vtanh.pop %v2170
        %v2172 = vmul.f32 %v2171, 0.5
        %v2173 = vadd.f32 %v2172, 0.5
        %v2174 = vtanh.pop %v2146
        %v2175 = vmul.f32 %v2147, 0.5
        %v2176 = vtanh.pop %v2175
        %v2177 = vmul.f32 %v2176, 0.5
        %v2178 = vadd.f32 %v2177, 0.5
        %v2179 = vmul.f32 %v2173, %v1147
        %v2180 = vmul.f32 %v2169, %v2174
        %v2181 = vadd.f32 %v2179, %v2180
        %v2182 = vtanh.pop %v2181
        %v2183 = vmul.f32 %v2178, %v2182
        %2184 = vst [vmem:[%s376] sm:$0xff] %v2165
        %s2185 = scalar_lea.vmem %s383, 56 [#allocation15]
        %2186 = vst [vmem:[%s2185] sm:$0xff] %v2183
        %v2187 = vpack.c.bf16 %v2165, %v2165
        %v2188 = vpack.c.bf16 %v2183, %v2183
        %v2189 = vld [vmem:[#allocation13] sm:$0xff]
        %v2190 = vld [vmem:[#allocation13 + $0x8] sm:$0xff]
        %v2191 = vld [vmem:[#allocation13 + $0x10] sm:$0xff]
        %v2192 = vld [vmem:[#allocation13 + $0x18] sm:$0xff]
        %v2193 = vld [vmem:[#allocation13 + $0x20] sm:$0xff]
        %v2194 = vld [vmem:[#allocation13 + $0x28] sm:$0xff]
        %v2195 = vld [vmem:[#allocation13 + $0x30] sm:$0xff]
        %v2196 = vld [vmem:[#allocation13 + $0x38] sm:$0xff]
        %v2197 = vld [vmem:[#allocation13 + $0x40] sm:$0xff]
        %v2198 = vld [vmem:[#allocation13 + $0x48] sm:$0xff]
        %v2199 = vld [vmem:[#allocation13 + $0x50] sm:$0xff]
        %v2200 = vld [vmem:[#allocation13 + $0x58] sm:$0xff]
        %v2201 = vld [vmem:[#allocation13 + $0x60] sm:$0xff]
        %v2202 = vld [vmem:[#allocation13 + $0x68] sm:$0xff]
        %v2203 = vld [vmem:[#allocation13 + $0x70] sm:$0xff]
        %v2204 = vld [vmem:[#allocation13 + $0x78] sm:$0xff]
        %v2205 = vld [vmem:[#allocation13 + $0x80] sm:$0xff]
        %v2206 = vld [vmem:[#allocation13 + $0x88] sm:$0xff]
        %v2207 = vld [vmem:[#allocation13 + $0x90] sm:$0xff]
        %v2208 = vld [vmem:[#allocation13 + $0x98] sm:$0xff]
        %v2209 = vld [vmem:[#allocation13 + $0xa0] sm:$0xff]
        %v2210 = vld [vmem:[#allocation13 + $0xa8] sm:$0xff]
        %v2211 = vld [vmem:[#allocation13 + $0xb0] sm:$0xff]
        %v2212 = vld [vmem:[#allocation13 + $0xb8] sm:$0xff]
        %v2213 = vld [vmem:[#allocation13 + $0xc0] sm:$0xff]
        %v2214 = vld [vmem:[#allocation13 + $0xc8] sm:$0xff]
        %v2215 = vld [vmem:[#allocation13 + $0xd0] sm:$0xff]
        %v2216 = vld [vmem:[#allocation13 + $0xd8] sm:$0xff]
        %v2217 = vld [vmem:[#allocation13 + $0xe0] sm:$0xff]
        %v2218 = vld [vmem:[#allocation13 + $0xe8] sm:$0xff]
        %v2219 = vld [vmem:[#allocation13 + $0xf0] sm:$0xff]
        %v2220 = vld [vmem:[#allocation13 + $0xf8] sm:$0xff]
        %v2221 = vld [vmem:[#allocation13 + $0x100] sm:$0xff]
        %v2222 = vld [vmem:[#allocation13 + $0x108] sm:$0xff]
        %v2223 = vld [vmem:[#allocation13 + $0x110] sm:$0xff]
        %v2224 = vld [vmem:[#allocation13 + $0x118] sm:$0xff]
        %v2225 = vld [vmem:[#allocation13 + $0x120] sm:$0xff]
        %v2226 = vld [vmem:[#allocation13 + $0x128] sm:$0xff]
        %v2227 = vld [vmem:[#allocation13 + $0x130] sm:$0xff]
        %v2228 = vld [vmem:[#allocation13 + $0x138] sm:$0xff]
        %v2229 = vld [vmem:[#allocation13 + $0x140] sm:$0xff]
        %v2230 = vld [vmem:[#allocation13 + $0x148] sm:$0xff]
        %v2231 = vld [vmem:[#allocation13 + $0x150] sm:$0xff]
        %v2232 = vld [vmem:[#allocation13 + $0x158] sm:$0xff]
        %v2233 = vld [vmem:[#allocation13 + $0x160] sm:$0xff]
        %v2234 = vld [vmem:[#allocation13 + $0x168] sm:$0xff]
        %v2235 = vld [vmem:[#allocation13 + $0x170] sm:$0xff]
        %v2236 = vld [vmem:[#allocation13 + $0x178] sm:$0xff]
        %v2237 = vld [vmem:[#allocation13 + $0x180] sm:$0xff]
        %v2238 = vld [vmem:[#allocation13 + $0x188] sm:$0xff]
        %v2239 = vld [vmem:[#allocation13 + $0x190] sm:$0xff]
        %v2240 = vld [vmem:[#allocation13 + $0x198] sm:$0xff]
        %v2241 = vld [vmem:[#allocation13 + $0x1a0] sm:$0xff]
        %v2242 = vld [vmem:[#allocation13 + $0x1a8] sm:$0xff]
        %v2243 = vld [vmem:[#allocation13 + $0x1b0] sm:$0xff]
        %v2244 = vld [vmem:[#allocation13 + $0x1b8] sm:$0xff]
        %v2245 = vld [vmem:[#allocation13 + $0x1c0] sm:$0xff]
        %v2246 = vld [vmem:[#allocation13 + $0x1c8] sm:$0xff]
        %v2247 = vld [vmem:[#allocation13 + $0x1d0] sm:$0xff]
        %v2248 = vld [vmem:[#allocation13 + $0x1d8] sm:$0xff]
        %v2249 = vld [vmem:[#allocation13 + $0x1e0] sm:$0xff]
        %v2250 = vld [vmem:[#allocation13 + $0x1e8] sm:$0xff]
        %v2251 = vld [vmem:[#allocation13 + $0x1f0] sm:$0xff]
        %v2252 = vld [vmem:[#allocation13 + $0x1f8] sm:$0xff]
        %v2253 = vld [vmem:[#allocation13 + $0x200] sm:$0xff]
        %v2254 = vld [vmem:[#allocation13 + $0x208] sm:$0xff]
        %v2255 = vld [vmem:[#allocation13 + $0x210] sm:$0xff]
        %v2256 = vld [vmem:[#allocation13 + $0x218] sm:$0xff]
        %v2257 = vld [vmem:[#allocation13 + $0x220] sm:$0xff]
        %v2258 = vld [vmem:[#allocation13 + $0x228] sm:$0xff]
        %v2259 = vld [vmem:[#allocation13 + $0x230] sm:$0xff]
        %v2260 = vld [vmem:[#allocation13 + $0x238] sm:$0xff]
        %v2261 = vld [vmem:[#allocation13 + $0x240] sm:$0xff]
        %v2262 = vld [vmem:[#allocation13 + $0x248] sm:$0xff]
        %v2263 = vld [vmem:[#allocation13 + $0x250] sm:$0xff]
        %v2264 = vld [vmem:[#allocation13 + $0x258] sm:$0xff]
        %v2265 = vld [vmem:[#allocation13 + $0x260] sm:$0xff]
        %v2266 = vld [vmem:[#allocation13 + $0x268] sm:$0xff]
        %v2267 = vld [vmem:[#allocation13 + $0x270] sm:$0xff]
        %v2268 = vld [vmem:[#allocation13 + $0x278] sm:$0xff]
        %v2269 = vld [vmem:[#allocation13 + $0x280] sm:$0xff]
        %v2270 = vld [vmem:[#allocation13 + $0x288] sm:$0xff]
        %v2271 = vld [vmem:[#allocation13 + $0x290] sm:$0xff]
        %v2272 = vld [vmem:[#allocation13 + $0x298] sm:$0xff]
        %v2273 = vld [vmem:[#allocation13 + $0x2a0] sm:$0xff]
        %v2274 = vld [vmem:[#allocation13 + $0x2a8] sm:$0xff]
        %v2275 = vld [vmem:[#allocation13 + $0x2b0] sm:$0xff]
        %v2276 = vld [vmem:[#allocation13 + $0x2b8] sm:$0xff]
        %v2277 = vld [vmem:[#allocation13 + $0x2c0] sm:$0xff]
        %v2278 = vld [vmem:[#allocation13 + $0x2c8] sm:$0xff]
        %v2279 = vld [vmem:[#allocation13 + $0x2d0] sm:$0xff]
        %v2280 = vld [vmem:[#allocation13 + $0x2d8] sm:$0xff]
        %v2281 = vld [vmem:[#allocation13 + $0x2e0] sm:$0xff]
        %v2282 = vld [vmem:[#allocation13 + $0x2e8] sm:$0xff]
        %v2283 = vld [vmem:[#allocation13 + $0x2f0] sm:$0xff]
        %v2284 = vld [vmem:[#allocation13 + $0x2f8] sm:$0xff]
        %v2285 = vld [vmem:[#allocation13 + $0x300] sm:$0xff]
        %v2286 = vld [vmem:[#allocation13 + $0x308] sm:$0xff]
        %v2287 = vld [vmem:[#allocation13 + $0x310] sm:$0xff]
        %v2288 = vld [vmem:[#allocation13 + $0x318] sm:$0xff]
        %v2289 = vld [vmem:[#allocation13 + $0x320] sm:$0xff]
        %v2290 = vld [vmem:[#allocation13 + $0x328] sm:$0xff]
        %v2291 = vld [vmem:[#allocation13 + $0x330] sm:$0xff]
        %v2292 = vld [vmem:[#allocation13 + $0x338] sm:$0xff]
        %v2293 = vld [vmem:[#allocation13 + $0x340] sm:$0xff]
        %v2294 = vld [vmem:[#allocation13 + $0x348] sm:$0xff]
        %v2295 = vld [vmem:[#allocation13 + $0x350] sm:$0xff]
        %v2296 = vld [vmem:[#allocation13 + $0x358] sm:$0xff]
        %v2297 = vld [vmem:[#allocation13 + $0x360] sm:$0xff]
        %v2298 = vld [vmem:[#allocation13 + $0x368] sm:$0xff]
        %v2299 = vld [vmem:[#allocation13 + $0x370] sm:$0xff]
        %v2300 = vld [vmem:[#allocation13 + $0x378] sm:$0xff]
        %v2301 = vld [vmem:[#allocation13 + $0x380] sm:$0xff]
        %v2302 = vld [vmem:[#allocation13 + $0x388] sm:$0xff]
        %v2303 = vld [vmem:[#allocation13 + $0x390] sm:$0xff]
        %v2304 = vld [vmem:[#allocation13 + $0x398] sm:$0xff]
        %v2305 = vld [vmem:[#allocation13 + $0x3a0] sm:$0xff]
        %v2306 = vld [vmem:[#allocation13 + $0x3a8] sm:$0xff]
        %v2307 = vld [vmem:[#allocation13 + $0x3b0] sm:$0xff]
        %v2308 = vld [vmem:[#allocation13 + $0x3b8] sm:$0xff]
        %v2309 = vld [vmem:[#allocation13 + $0x3c0] sm:$0xff]
        %v2310 = vld [vmem:[#allocation13 + $0x3c8] sm:$0xff]
        %v2311 = vld [vmem:[#allocation13 + $0x3d0] sm:$0xff]
        %v2312 = vld [vmem:[#allocation13 + $0x3d8] sm:$0xff]
        %v2313 = vld [vmem:[#allocation13 + $0x3e0] sm:$0xff]
        %v2314 = vld [vmem:[#allocation13 + $0x3e8] sm:$0xff]
        %v2315 = vld [vmem:[#allocation13 + $0x3f0] sm:$0xff]
        %v2316 = vld [vmem:[#allocation13 + $0x3f8] sm:$0xff]
        %v2445 = vunpack.c.l.b16 %v2189
        %v2446 = vunpack.c.h.b16 %v2189
        %v2447 = vunpack.c.l.b16 %v2190
        %v2448 = vunpack.c.h.b16 %v2190
        %v2449 = vunpack.c.l.b16 %v2191
        %v2450 = vunpack.c.h.b16 %v2191
        %v2451 = vunpack.c.l.b16 %v2192
        %v2452 = vunpack.c.h.b16 %v2192
        %v2453 = vunpack.c.l.b16 %v2193
        %v2454 = vunpack.c.h.b16 %v2193
        %v2455 = vunpack.c.l.b16 %v2194
        %v2456 = vunpack.c.h.b16 %v2194
        %v2457 = vunpack.c.l.b16 %v2195
        %v2458 = vunpack.c.h.b16 %v2195
        %v2459 = vunpack.c.l.b16 %v2196
        %v2460 = vunpack.c.h.b16 %v2196
        %v2461 = vunpack.c.l.b16 %v2197
        %v2462 = vunpack.c.h.b16 %v2197
        %v2463 = vunpack.c.l.b16 %v2198
        %v2464 = vunpack.c.h.b16 %v2198
        %v2465 = vunpack.c.l.b16 %v2199
        %v2466 = vunpack.c.h.b16 %v2199
        %v2467 = vunpack.c.l.b16 %v2200
        %v2468 = vunpack.c.h.b16 %v2200
        %v2469 = vunpack.c.l.b16 %v2201
        %v2470 = vunpack.c.h.b16 %v2201
        %v2471 = vunpack.c.l.b16 %v2202
        %v2472 = vunpack.c.h.b16 %v2202
        %v2473 = vunpack.c.l.b16 %v2203
        %v2474 = vunpack.c.h.b16 %v2203
        %v2475 = vunpack.c.l.b16 %v2204
        %v2476 = vunpack.c.h.b16 %v2204
        %v2477 = vunpack.c.l.b16 %v2205
        %v2478 = vunpack.c.h.b16 %v2205
        %v2479 = vunpack.c.l.b16 %v2206
        %v2480 = vunpack.c.h.b16 %v2206
        %v2481 = vunpack.c.l.b16 %v2207
        %v2482 = vunpack.c.h.b16 %v2207
        %v2483 = vunpack.c.l.b16 %v2208
        %v2484 = vunpack.c.h.b16 %v2208
        %v2485 = vunpack.c.l.b16 %v2209
        %v2486 = vunpack.c.h.b16 %v2209
        %v2487 = vunpack.c.l.b16 %v2210
        %v2488 = vunpack.c.h.b16 %v2210
        %v2489 = vunpack.c.l.b16 %v2211
        %v2490 = vunpack.c.h.b16 %v2211
        %v2491 = vunpack.c.l.b16 %v2212
        %v2492 = vunpack.c.h.b16 %v2212
        %v2493 = vunpack.c.l.b16 %v2213
        %v2494 = vunpack.c.h.b16 %v2213
        %v2495 = vunpack.c.l.b16 %v2214
        %v2496 = vunpack.c.h.b16 %v2214
        %v2497 = vunpack.c.l.b16 %v2215
        %v2498 = vunpack.c.h.b16 %v2215
        %v2499 = vunpack.c.l.b16 %v2216
        %v2500 = vunpack.c.h.b16 %v2216
        %v2501 = vunpack.c.l.b16 %v2217
        %v2502 = vunpack.c.h.b16 %v2217
        %v2503 = vunpack.c.l.b16 %v2218
        %v2504 = vunpack.c.h.b16 %v2218
        %v2505 = vunpack.c.l.b16 %v2219
        %v2506 = vunpack.c.h.b16 %v2219
        %v2507 = vunpack.c.l.b16 %v2220
        %v2508 = vunpack.c.h.b16 %v2220
        %v2509 = vunpack.c.l.b16 %v2221
        %v2510 = vunpack.c.h.b16 %v2221
        %v2511 = vunpack.c.l.b16 %v2222
        %v2512 = vunpack.c.h.b16 %v2222
        %v2513 = vunpack.c.l.b16 %v2223
        %v2514 = vunpack.c.h.b16 %v2223
        %v2515 = vunpack.c.l.b16 %v2224
        %v2516 = vunpack.c.h.b16 %v2224
        %v2517 = vunpack.c.l.b16 %v2225
        %v2518 = vunpack.c.h.b16 %v2225
        %v2519 = vunpack.c.l.b16 %v2226
        %v2520 = vunpack.c.h.b16 %v2226
        %v2521 = vunpack.c.l.b16 %v2227
        %v2522 = vunpack.c.h.b16 %v2227
        %v2523 = vunpack.c.l.b16 %v2228
        %v2524 = vunpack.c.h.b16 %v2228
        %v2525 = vunpack.c.l.b16 %v2229
        %v2526 = vunpack.c.h.b16 %v2229
        %v2527 = vunpack.c.l.b16 %v2230
        %v2528 = vunpack.c.h.b16 %v2230
        %v2529 = vunpack.c.l.b16 %v2231
        %v2530 = vunpack.c.h.b16 %v2231
        %v2531 = vunpack.c.l.b16 %v2232
        %v2532 = vunpack.c.h.b16 %v2232
        %v2533 = vunpack.c.l.b16 %v2233
        %v2534 = vunpack.c.h.b16 %v2233
        %v2535 = vunpack.c.l.b16 %v2234
        %v2536 = vunpack.c.h.b16 %v2234
        %v2537 = vunpack.c.l.b16 %v2235
        %v2538 = vunpack.c.h.b16 %v2235
        %v2539 = vunpack.c.l.b16 %v2236
        %v2540 = vunpack.c.h.b16 %v2236
        %v2541 = vunpack.c.l.b16 %v2237
        %v2542 = vunpack.c.h.b16 %v2237
        %v2543 = vunpack.c.l.b16 %v2238
        %v2544 = vunpack.c.h.b16 %v2238
        %v2545 = vunpack.c.l.b16 %v2239
        %v2546 = vunpack.c.h.b16 %v2239
        %v2547 = vunpack.c.l.b16 %v2240
        %v2548 = vunpack.c.h.b16 %v2240
        %v2549 = vunpack.c.l.b16 %v2241
        %v2550 = vunpack.c.h.b16 %v2241
        %v2551 = vunpack.c.l.b16 %v2242
        %v2552 = vunpack.c.h.b16 %v2242
        %v2553 = vunpack.c.l.b16 %v2243
        %v2554 = vunpack.c.h.b16 %v2243
        %v2555 = vunpack.c.l.b16 %v2244
        %v2556 = vunpack.c.h.b16 %v2244
        %v2557 = vunpack.c.l.b16 %v2245
        %v2558 = vunpack.c.h.b16 %v2245
        %v2559 = vunpack.c.l.b16 %v2246
        %v2560 = vunpack.c.h.b16 %v2246
        %v2561 = vunpack.c.l.b16 %v2247
        %v2562 = vunpack.c.h.b16 %v2247
        %v2563 = vunpack.c.l.b16 %v2248
        %v2564 = vunpack.c.h.b16 %v2248
        %v2565 = vunpack.c.l.b16 %v2249
        %v2566 = vunpack.c.h.b16 %v2249
        %v2567 = vunpack.c.l.b16 %v2250
        %v2568 = vunpack.c.h.b16 %v2250
        %v2569 = vunpack.c.l.b16 %v2251
        %v2570 = vunpack.c.h.b16 %v2251
        %v2571 = vunpack.c.l.b16 %v2252
        %v2572 = vunpack.c.h.b16 %v2252
        %v2573 = vunpack.c.l.b16 %v2253
        %v2574 = vunpack.c.h.b16 %v2253
        %v2575 = vunpack.c.l.b16 %v2254
        %v2576 = vunpack.c.h.b16 %v2254
        %v2577 = vunpack.c.l.b16 %v2255
        %v2578 = vunpack.c.h.b16 %v2255
        %v2579 = vunpack.c.l.b16 %v2256
        %v2580 = vunpack.c.h.b16 %v2256
        %v2581 = vunpack.c.l.b16 %v2257
        %v2582 = vunpack.c.h.b16 %v2257
        %v2583 = vunpack.c.l.b16 %v2258
        %v2584 = vunpack.c.h.b16 %v2258
        %v2585 = vunpack.c.l.b16 %v2259
        %v2586 = vunpack.c.h.b16 %v2259
        %v2587 = vunpack.c.l.b16 %v2260
        %v2588 = vunpack.c.h.b16 %v2260
        %v2589 = vunpack.c.l.b16 %v2261
        %v2590 = vunpack.c.h.b16 %v2261
        %v2591 = vunpack.c.l.b16 %v2262
        %v2592 = vunpack.c.h.b16 %v2262
        %v2593 = vunpack.c.l.b16 %v2263
        %v2594 = vunpack.c.h.b16 %v2263
        %v2595 = vunpack.c.l.b16 %v2264
        %v2596 = vunpack.c.h.b16 %v2264
        %v2597 = vunpack.c.l.b16 %v2265
        %v2598 = vunpack.c.h.b16 %v2265
        %v2599 = vunpack.c.l.b16 %v2266
        %v2600 = vunpack.c.h.b16 %v2266
        %v2601 = vunpack.c.l.b16 %v2267
        %v2602 = vunpack.c.h.b16 %v2267
        %v2603 = vunpack.c.l.b16 %v2268
        %v2604 = vunpack.c.h.b16 %v2268
        %v2605 = vunpack.c.l.b16 %v2269
        %v2606 = vunpack.c.h.b16 %v2269
        %v2607 = vunpack.c.l.b16 %v2270
        %v2608 = vunpack.c.h.b16 %v2270
        %v2609 = vunpack.c.l.b16 %v2271
        %v2610 = vunpack.c.h.b16 %v2271
        %v2611 = vunpack.c.l.b16 %v2272
        %v2612 = vunpack.c.h.b16 %v2272
        %v2613 = vunpack.c.l.b16 %v2273
        %v2614 = vunpack.c.h.b16 %v2273
        %v2615 = vunpack.c.l.b16 %v2274
        %v2616 = vunpack.c.h.b16 %v2274
        %v2617 = vunpack.c.l.b16 %v2275
        %v2618 = vunpack.c.h.b16 %v2275
        %v2619 = vunpack.c.l.b16 %v2276
        %v2620 = vunpack.c.h.b16 %v2276
        %v2621 = vunpack.c.l.b16 %v2277
        %v2622 = vunpack.c.h.b16 %v2277
        %v2623 = vunpack.c.l.b16 %v2278
        %v2624 = vunpack.c.h.b16 %v2278
        %v2625 = vunpack.c.l.b16 %v2279
        %v2626 = vunpack.c.h.b16 %v2279
        %v2627 = vunpack.c.l.b16 %v2280
        %v2628 = vunpack.c.h.b16 %v2280
        %v2629 = vunpack.c.l.b16 %v2281
        %v2630 = vunpack.c.h.b16 %v2281
        %v2631 = vunpack.c.l.b16 %v2282
        %v2632 = vunpack.c.h.b16 %v2282
        %v2633 = vunpack.c.l.b16 %v2283
        %v2634 = vunpack.c.h.b16 %v2283
        %v2635 = vunpack.c.l.b16 %v2284
        %v2636 = vunpack.c.h.b16 %v2284
        %v2637 = vunpack.c.l.b16 %v2285
        %v2638 = vunpack.c.h.b16 %v2285
        %v2639 = vunpack.c.l.b16 %v2286
        %v2640 = vunpack.c.h.b16 %v2286
        %v2641 = vunpack.c.l.b16 %v2287
        %v2642 = vunpack.c.h.b16 %v2287
        %v2643 = vunpack.c.l.b16 %v2288
        %v2644 = vunpack.c.h.b16 %v2288
        %v2645 = vunpack.c.l.b16 %v2289
        %v2646 = vunpack.c.h.b16 %v2289
        %v2647 = vunpack.c.l.b16 %v2290
        %v2648 = vunpack.c.h.b16 %v2290
        %v2649 = vunpack.c.l.b16 %v2291
        %v2650 = vunpack.c.h.b16 %v2291
        %v2651 = vunpack.c.l.b16 %v2292
        %v2652 = vunpack.c.h.b16 %v2292
        %v2653 = vunpack.c.l.b16 %v2293
        %v2654 = vunpack.c.h.b16 %v2293
        %v2655 = vunpack.c.l.b16 %v2294
        %v2656 = vunpack.c.h.b16 %v2294
        %v2657 = vunpack.c.l.b16 %v2295
        %v2658 = vunpack.c.h.b16 %v2295
        %v2659 = vunpack.c.l.b16 %v2296
        %v2660 = vunpack.c.h.b16 %v2296
        %v2661 = vunpack.c.l.b16 %v2297
        %v2662 = vunpack.c.h.b16 %v2297
        %v2663 = vunpack.c.l.b16 %v2298
        %v2664 = vunpack.c.h.b16 %v2298
        %v2665 = vunpack.c.l.b16 %v2299
        %v2666 = vunpack.c.h.b16 %v2299
        %v2667 = vunpack.c.l.b16 %v2300
        %v2668 = vunpack.c.h.b16 %v2300
        %v2669 = vunpack.c.l.b16 %v2301
        %v2670 = vunpack.c.h.b16 %v2301
        %v2671 = vunpack.c.l.b16 %v2302
        %v2672 = vunpack.c.h.b16 %v2302
        %v2673 = vunpack.c.l.b16 %v2303
        %v2674 = vunpack.c.h.b16 %v2303
        %v2675 = vunpack.c.l.b16 %v2304
        %v2676 = vunpack.c.h.b16 %v2304
        %v2677 = vunpack.c.l.b16 %v2305
        %v2678 = vunpack.c.h.b16 %v2305
        %v2679 = vunpack.c.l.b16 %v2306
        %v2680 = vunpack.c.h.b16 %v2306
        %v2681 = vunpack.c.l.b16 %v2307
        %v2682 = vunpack.c.h.b16 %v2307
        %v2683 = vunpack.c.l.b16 %v2308
        %v2684 = vunpack.c.h.b16 %v2308
        %v2685 = vunpack.c.l.b16 %v2309
        %v2686 = vunpack.c.h.b16 %v2309
        %v2687 = vunpack.c.l.b16 %v2310
        %v2688 = vunpack.c.h.b16 %v2310
        %v2689 = vunpack.c.l.b16 %v2311
        %v2690 = vunpack.c.h.b16 %v2311
        %v2691 = vunpack.c.l.b16 %v2312
        %v2692 = vunpack.c.h.b16 %v2312
        %v2693 = vunpack.c.l.b16 %v2313
        %v2694 = vunpack.c.h.b16 %v2313
        %v2695 = vunpack.c.l.b16 %v2314
        %v2696 = vunpack.c.h.b16 %v2314
        %v2697 = vunpack.c.l.b16 %v2315
        %v2698 = vunpack.c.h.b16 %v2315
        %v2699 = vunpack.c.l.b16 %v2316
        %v2700 = vunpack.c.h.b16 %v2316
        %v2701 = vpack.c.b16 %v2453, %v2445
        %v2702 = vpack.c.b16 %v2454, %v2446
        %v2703 = vpack.c.b16 %v2455, %v2447
        %v2704 = vpack.c.b16 %v2456, %v2448
        %v2705 = vpack.c.b16 %v2457, %v2449
        %v2706 = vpack.c.b16 %v2458, %v2450
        %v2707 = vpack.c.b16 %v2459, %v2451
        %v2708 = vpack.c.b16 %v2460, %v2452
        %v2709 = vpack.c.b16 %v2469, %v2461
        %v2710 = vpack.c.b16 %v2470, %v2462
        %v2711 = vpack.c.b16 %v2471, %v2463
        %v2712 = vpack.c.b16 %v2472, %v2464
        %v2713 = vpack.c.b16 %v2473, %v2465
        %v2714 = vpack.c.b16 %v2474, %v2466
        %v2715 = vpack.c.b16 %v2475, %v2467
        %v2716 = vpack.c.b16 %v2476, %v2468
        %v2717 = vpack.c.b16 %v2485, %v2477
        %v2718 = vpack.c.b16 %v2486, %v2478
        %v2719 = vpack.c.b16 %v2487, %v2479
        %v2720 = vpack.c.b16 %v2488, %v2480
        %v2721 = vpack.c.b16 %v2489, %v2481
        %v2722 = vpack.c.b16 %v2490, %v2482
        %v2723 = vpack.c.b16 %v2491, %v2483
        %v2724 = vpack.c.b16 %v2492, %v2484
        %v2725 = vpack.c.b16 %v2501, %v2493
        %v2726 = vpack.c.b16 %v2502, %v2494
        %v2727 = vpack.c.b16 %v2503, %v2495
        %v2728 = vpack.c.b16 %v2504, %v2496
        %v2729 = vpack.c.b16 %v2505, %v2497
        %v2730 = vpack.c.b16 %v2506, %v2498
        %v2731 = vpack.c.b16 %v2507, %v2499
        %v2732 = vpack.c.b16 %v2508, %v2500
        %v2733 = vpack.c.b16 %v2517, %v2509
        %v2734 = vpack.c.b16 %v2518, %v2510
        %v2735 = vpack.c.b16 %v2519, %v2511
        %v2736 = vpack.c.b16 %v2520, %v2512
        %v2737 = vpack.c.b16 %v2521, %v2513
        %v2738 = vpack.c.b16 %v2522, %v2514
        %v2739 = vpack.c.b16 %v2523, %v2515
        %v2740 = vpack.c.b16 %v2524, %v2516
        %v2741 = vpack.c.b16 %v2533, %v2525
        %v2742 = vpack.c.b16 %v2534, %v2526
        %v2743 = vpack.c.b16 %v2535, %v2527
        %v2744 = vpack.c.b16 %v2536, %v2528
        %v2745 = vpack.c.b16 %v2537, %v2529
        %v2746 = vpack.c.b16 %v2538, %v2530
        %v2747 = vpack.c.b16 %v2539, %v2531
        %v2748 = vpack.c.b16 %v2540, %v2532
        %v2749 = vpack.c.b16 %v2549, %v2541
        %v2750 = vpack.c.b16 %v2550, %v2542
        %v2751 = vpack.c.b16 %v2551, %v2543
        %v2752 = vpack.c.b16 %v2552, %v2544
        %v2753 = vpack.c.b16 %v2553, %v2545
        %v2754 = vpack.c.b16 %v2554, %v2546
        %v2755 = vpack.c.b16 %v2555, %v2547
        %v2756 = vpack.c.b16 %v2556, %v2548
        %v2757 = vpack.c.b16 %v2565, %v2557
        %v2758 = vpack.c.b16 %v2566, %v2558
        %v2759 = vpack.c.b16 %v2567, %v2559
        %v2760 = vpack.c.b16 %v2568, %v2560
        %v2761 = vpack.c.b16 %v2569, %v2561
        %v2762 = vpack.c.b16 %v2570, %v2562
        %v2763 = vpack.c.b16 %v2571, %v2563
        %v2764 = vpack.c.b16 %v2572, %v2564
        %v2765 = vpack.c.b16 %v2581, %v2573
        %v2766 = vpack.c.b16 %v2582, %v2574
        %v2767 = vpack.c.b16 %v2583, %v2575
        %v2768 = vpack.c.b16 %v2584, %v2576
        %v2769 = vpack.c.b16 %v2585, %v2577
        %v2770 = vpack.c.b16 %v2586, %v2578
        %v2771 = vpack.c.b16 %v2587, %v2579
        %v2772 = vpack.c.b16 %v2588, %v2580
        %v2773 = vpack.c.b16 %v2597, %v2589
        %v2774 = vpack.c.b16 %v2598, %v2590
        %v2775 = vpack.c.b16 %v2599, %v2591
        %v2776 = vpack.c.b16 %v2600, %v2592
        %v2777 = vpack.c.b16 %v2601, %v2593
        %v2778 = vpack.c.b16 %v2602, %v2594
        %v2779 = vpack.c.b16 %v2603, %v2595
        %v2780 = vpack.c.b16 %v2604, %v2596
        %v2781 = vpack.c.b16 %v2613, %v2605
        %v2782 = vpack.c.b16 %v2614, %v2606
        %v2783 = vpack.c.b16 %v2615, %v2607
        %v2784 = vpack.c.b16 %v2616, %v2608
        %v2785 = vpack.c.b16 %v2617, %v2609
        %v2786 = vpack.c.b16 %v2618, %v2610
        %v2787 = vpack.c.b16 %v2619, %v2611
        %v2788 = vpack.c.b16 %v2620, %v2612
        %v2789 = vpack.c.b16 %v2629, %v2621
        %v2790 = vpack.c.b16 %v2630, %v2622
        %v2791 = vpack.c.b16 %v2631, %v2623
        %v2792 = vpack.c.b16 %v2632, %v2624
        %v2793 = vpack.c.b16 %v2633, %v2625
        %v2794 = vpack.c.b16 %v2634, %v2626
        %v2795 = vpack.c.b16 %v2635, %v2627
        %v2796 = vpack.c.b16 %v2636, %v2628
        %v2797 = vpack.c.b16 %v2645, %v2637
        %v2798 = vpack.c.b16 %v2646, %v2638
        %v2799 = vpack.c.b16 %v2647, %v2639
        %v2800 = vpack.c.b16 %v2648, %v2640
        %v2801 = vpack.c.b16 %v2649, %v2641
        %v2802 = vpack.c.b16 %v2650, %v2642
        %v2803 = vpack.c.b16 %v2651, %v2643
        %v2804 = vpack.c.b16 %v2652, %v2644
        %v2805 = vpack.c.b16 %v2661, %v2653
        %v2806 = vpack.c.b16 %v2662, %v2654
        %v2807 = vpack.c.b16 %v2663, %v2655
        %v2808 = vpack.c.b16 %v2664, %v2656
        %v2809 = vpack.c.b16 %v2665, %v2657
        %v2810 = vpack.c.b16 %v2666, %v2658
        %v2811 = vpack.c.b16 %v2667, %v2659
        %v2812 = vpack.c.b16 %v2668, %v2660
        %v2813 = vpack.c.b16 %v2677, %v2669
        %v2814 = vpack.c.b16 %v2678, %v2670
        %v2815 = vpack.c.b16 %v2679, %v2671
        %v2816 = vpack.c.b16 %v2680, %v2672
        %v2817 = vpack.c.b16 %v2681, %v2673
        %v2818 = vpack.c.b16 %v2682, %v2674
        %v2819 = vpack.c.b16 %v2683, %v2675
        %v2820 = vpack.c.b16 %v2684, %v2676
        %v2821 = vpack.c.b16 %v2693, %v2685
        %v2822 = vpack.c.b16 %v2694, %v2686
        %v2823 = vpack.c.b16 %v2695, %v2687
        %v2824 = vpack.c.b16 %v2696, %v2688
        %v2825 = vpack.c.b16 %v2697, %v2689
        %v2826 = vpack.c.b16 %v2698, %v2690
        %v2827 = vpack.c.b16 %v2699, %v2691
        %v2828 = vpack.c.b16 %v2700, %v2692
        %2957 = vmatpush.bf16.msra.mxu0 %v2757
        %2958 = vmatpush.bf16.msra.mxu0 %v2749
        %2959 = vmatpush.bf16.msra.mxu0 %v2741
        %2960 = vmatpush.bf16.msra.mxu0 %v2733
        %2961 = vmatpush.bf16.msra.mxu0 %v2725
        %2962 = vmatpush.bf16.msra.mxu0 %v2717
        %2963 = vmatpush.bf16.msra.mxu0 %v2709
        %2964 = vmatpush.bf16.msra.mxu0 %v2701
        %2965 = vmatmul.bf16.gmra.mxu0 %v2187
        %v2966 = vpop.f32.mrf.mxu0
        %v2967 = vadd.f32 0.0, %v2966
        %v2968 = vpop.f32.mrf.mxu0
        %2969 = vdwg.mxu0
        %2970 = vmatpush.bf16.msra.mxu0 %v2821
        %2971 = vmatpush.bf16.msra.mxu0 %v2813
        %2972 = vmatpush.bf16.msra.mxu0 %v2805
        %2973 = vmatpush.bf16.msra.mxu0 %v2797
        %2974 = vmatpush.bf16.msra.mxu0 %v2789
        %2975 = vmatpush.bf16.msra.mxu0 %v2781
        %2976 = vmatpush.bf16.msra.mxu0 %v2773
        %2977 = vmatpush.bf16.msra.mxu0 %v2765
        %2978 = vmatmul.bf16.gmra.mxu0 %v2188
        %v2979 = vpop.f32.mrf.mxu0
        %v2980 = vadd.f32 %v2967, %v2979
        %v2981 = vpop.f32.mrf.mxu0
        %2982 = vdwg.mxu0
        %2983 = vmatpush.bf16.msra.mxu0 %v2758
        %2984 = vmatpush.bf16.msra.mxu0 %v2750
        %2985 = vmatpush.bf16.msra.mxu0 %v2742
        %2986 = vmatpush.bf16.msra.mxu0 %v2734
        %2987 = vmatpush.bf16.msra.mxu0 %v2726
        %2988 = vmatpush.bf16.msra.mxu0 %v2718
        %2989 = vmatpush.bf16.msra.mxu0 %v2710
        %2990 = vmatpush.bf16.msra.mxu0 %v2702
        %2991 = vmatmul.bf16.gmra.mxu0 %v2187
        %v2992 = vpop.f32.mrf.mxu0
        %v2993 = vadd.f32 0.0, %v2992
        %v2994 = vpop.f32.mrf.mxu0
        %2995 = vdwg.mxu0
        %2996 = vmatpush.bf16.msra.mxu0 %v2822
        %2997 = vmatpush.bf16.msra.mxu0 %v2814
        %2998 = vmatpush.bf16.msra.mxu0 %v2806
        %2999 = vmatpush.bf16.msra.mxu0 %v2798
        %3000 = vmatpush.bf16.msra.mxu0 %v2790
        %3001 = vmatpush.bf16.msra.mxu0 %v2782
        %3002 = vmatpush.bf16.msra.mxu0 %v2774
        %3003 = vmatpush.bf16.msra.mxu0 %v2766
        %3004 = vmatmul.bf16.gmra.mxu0 %v2188
        %v3005 = vpop.f32.mrf.mxu0
        %v3006 = vadd.f32 %v2993, %v3005
        %v3007 = vpop.f32.mrf.mxu0
        %3008 = vdwg.mxu0
        %3009 = vmatpush.bf16.msra.mxu0 %v2759
        %3010 = vmatpush.bf16.msra.mxu0 %v2751
        %3011 = vmatpush.bf16.msra.mxu0 %v2743
        %3012 = vmatpush.bf16.msra.mxu0 %v2735
        %3013 = vmatpush.bf16.msra.mxu0 %v2727
        %3014 = vmatpush.bf16.msra.mxu0 %v2719
        %3015 = vmatpush.bf16.msra.mxu0 %v2711
        %3016 = vmatpush.bf16.msra.mxu0 %v2703
        %3017 = vmatmul.bf16.gmra.mxu0 %v2187
        %v3018 = vpop.f32.mrf.mxu0
        %v3019 = vadd.f32 0.0, %v3018
        %v3020 = vpop.f32.mrf.mxu0
        %3021 = vdwg.mxu0
        %3022 = vmatpush.bf16.msra.mxu0 %v2823
        %3023 = vmatpush.bf16.msra.mxu0 %v2815
        %3024 = vmatpush.bf16.msra.mxu0 %v2807
        %3025 = vmatpush.bf16.msra.mxu0 %v2799
        %3026 = vmatpush.bf16.msra.mxu0 %v2791
        %3027 = vmatpush.bf16.msra.mxu0 %v2783
        %3028 = vmatpush.bf16.msra.mxu0 %v2775
        %3029 = vmatpush.bf16.msra.mxu0 %v2767
        %3030 = vmatmul.bf16.gmra.mxu0 %v2188
        %v3031 = vpop.f32.mrf.mxu0
        %v3032 = vadd.f32 %v3019, %v3031
        %v3033 = vpop.f32.mrf.mxu0
        %3034 = vdwg.mxu0
        %3035 = vmatpush.bf16.msra.mxu0 %v2760
        %3036 = vmatpush.bf16.msra.mxu0 %v2752
        %3037 = vmatpush.bf16.msra.mxu0 %v2744
        %3038 = vmatpush.bf16.msra.mxu0 %v2736
        %3039 = vmatpush.bf16.msra.mxu0 %v2728
        %3040 = vmatpush.bf16.msra.mxu0 %v2720
        %3041 = vmatpush.bf16.msra.mxu0 %v2712
        %3042 = vmatpush.bf16.msra.mxu0 %v2704
        %3043 = vmatmul.bf16.gmra.mxu0 %v2187
        %v3044 = vpop.f32.mrf.mxu0
        %v3045 = vadd.f32 0.0, %v3044
        %v3046 = vpop.f32.mrf.mxu0
        %3047 = vdwg.mxu0
        %3048 = vmatpush.bf16.msra.mxu0 %v2824
        %3049 = vmatpush.bf16.msra.mxu0 %v2816
        %3050 = vmatpush.bf16.msra.mxu0 %v2808
        %3051 = vmatpush.bf16.msra.mxu0 %v2800
        %3052 = vmatpush.bf16.msra.mxu0 %v2792
        %3053 = vmatpush.bf16.msra.mxu0 %v2784
        %3054 = vmatpush.bf16.msra.mxu0 %v2776
        %3055 = vmatpush.bf16.msra.mxu0 %v2768
        %3056 = vmatmul.bf16.gmra.mxu0 %v2188
        %v3057 = vpop.f32.mrf.mxu0
        %v3058 = vadd.f32 %v3045, %v3057
        %v3059 = vpop.f32.mrf.mxu0
        %3060 = vdwg.mxu0
        %3061 = vmatpush.bf16.msra.mxu0 %v2761
        %3062 = vmatpush.bf16.msra.mxu0 %v2753
        %3063 = vmatpush.bf16.msra.mxu0 %v2745
        %3064 = vmatpush.bf16.msra.mxu0 %v2737
        %3065 = vmatpush.bf16.msra.mxu0 %v2729
        %3066 = vmatpush.bf16.msra.mxu0 %v2721
        %3067 = vmatpush.bf16.msra.mxu0 %v2713
        %3068 = vmatpush.bf16.msra.mxu0 %v2705
        %3069 = vmatmul.bf16.gmra.mxu0 %v2187
        %v3070 = vpop.f32.mrf.mxu0
        %v3071 = vadd.f32 0.0, %v3070
        %v3072 = vpop.f32.mrf.mxu0
        %3073 = vdwg.mxu0
        %3074 = vmatpush.bf16.msra.mxu0 %v2825
        %3075 = vmatpush.bf16.msra.mxu0 %v2817
        %3076 = vmatpush.bf16.msra.mxu0 %v2809
        %3077 = vmatpush.bf16.msra.mxu0 %v2801
        %3078 = vmatpush.bf16.msra.mxu0 %v2793
        %3079 = vmatpush.bf16.msra.mxu0 %v2785
        %3080 = vmatpush.bf16.msra.mxu0 %v2777
        %3081 = vmatpush.bf16.msra.mxu0 %v2769
        %3082 = vmatmul.bf16.gmra.mxu0 %v2188
        %v3083 = vpop.f32.mrf.mxu0
        %v3084 = vadd.f32 %v3071, %v3083
        %v3085 = vpop.f32.mrf.mxu0
        %3086 = vdwg.mxu0
        %3087 = vmatpush.bf16.msra.mxu0 %v2762
        %3088 = vmatpush.bf16.msra.mxu0 %v2754
        %3089 = vmatpush.bf16.msra.mxu0 %v2746
        %3090 = vmatpush.bf16.msra.mxu0 %v2738
        %3091 = vmatpush.bf16.msra.mxu0 %v2730
        %3092 = vmatpush.bf16.msra.mxu0 %v2722
        %3093 = vmatpush.bf16.msra.mxu0 %v2714
        %3094 = vmatpush.bf16.msra.mxu0 %v2706
        %3095 = vmatmul.bf16.gmra.mxu0 %v2187
        %v3096 = vpop.f32.mrf.mxu0
        %v3097 = vadd.f32 0.0, %v3096
        %v3098 = vpop.f32.mrf.mxu0
        %3099 = vdwg.mxu0
        %3100 = vmatpush.bf16.msra.mxu0 %v2826
        %3101 = vmatpush.bf16.msra.mxu0 %v2818
        %3102 = vmatpush.bf16.msra.mxu0 %v2810
        %3103 = vmatpush.bf16.msra.mxu0 %v2802
        %3104 = vmatpush.bf16.msra.mxu0 %v2794
        %3105 = vmatpush.bf16.msra.mxu0 %v2786
        %3106 = vmatpush.bf16.msra.mxu0 %v2778
        %3107 = vmatpush.bf16.msra.mxu0 %v2770
        %3108 = vmatmul.bf16.gmra.mxu0 %v2188
        %v3109 = vpop.f32.mrf.mxu0
        %v3110 = vadd.f32 %v3097, %v3109
        %v3111 = vpop.f32.mrf.mxu0
        %3112 = vdwg.mxu0
        %3113 = vmatpush.bf16.msra.mxu0 %v2763
        %3114 = vmatpush.bf16.msra.mxu0 %v2755
        %3115 = vmatpush.bf16.msra.mxu0 %v2747
        %3116 = vmatpush.bf16.msra.mxu0 %v2739
        %3117 = vmatpush.bf16.msra.mxu0 %v2731
        %3118 = vmatpush.bf16.msra.mxu0 %v2723
        %3119 = vmatpush.bf16.msra.mxu0 %v2715
        %3120 = vmatpush.bf16.msra.mxu0 %v2707
        %3121 = vmatmul.bf16.gmra.mxu0 %v2187
        %v3122 = vpop.f32.mrf.mxu0
        %v3123 = vadd.f32 0.0, %v3122
        %v3124 = vpop.f32.mrf.mxu0
        %3125 = vdwg.mxu0
        %3126 = vmatpush.bf16.msra.mxu0 %v2827
        %3127 = vmatpush.bf16.msra.mxu0 %v2819
        %3128 = vmatpush.bf16.msra.mxu0 %v2811
        %3129 = vmatpush.bf16.msra.mxu0 %v2803
        %3130 = vmatpush.bf16.msra.mxu0 %v2795
        %3131 = vmatpush.bf16.msra.mxu0 %v2787
        %3132 = vmatpush.bf16.msra.mxu0 %v2779
        %3133 = vmatpush.bf16.msra.mxu0 %v2771
        %3134 = vmatmul.bf16.gmra.mxu0 %v2188
        %v3135 = vpop.f32.mrf.mxu0
        %v3136 = vadd.f32 %v3123, %v3135
        %v3137 = vpop.f32.mrf.mxu0
        %3138 = vdwg.mxu0
        %3139 = vmatpush.bf16.msra.mxu0 %v2764
        %3140 = vmatpush.bf16.msra.mxu0 %v2756
        %3141 = vmatpush.bf16.msra.mxu0 %v2748
        %3142 = vmatpush.bf16.msra.mxu0 %v2740
        %3143 = vmatpush.bf16.msra.mxu0 %v2732
        %3144 = vmatpush.bf16.msra.mxu0 %v2724
        %3145 = vmatpush.bf16.msra.mxu0 %v2716
        %3146 = vmatpush.bf16.msra.mxu0 %v2708
        %3147 = vmatmul.bf16.gmra.mxu0 %v2187
        %v3148 = vpop.f32.mrf.mxu0
        %v3149 = vadd.f32 0.0, %v3148
        %v3150 = vpop.f32.mrf.mxu0
        %3151 = vdwg.mxu0
        %3152 = vmatpush.bf16.msra.mxu0 %v2828
        %3153 = vmatpush.bf16.msra.mxu0 %v2820
        %3154 = vmatpush.bf16.msra.mxu0 %v2812
        %3155 = vmatpush.bf16.msra.mxu0 %v2804
        %3156 = vmatpush.bf16.msra.mxu0 %v2796
        %3157 = vmatpush.bf16.msra.mxu0 %v2788
        %3158 = vmatpush.bf16.msra.mxu0 %v2780
        %3159 = vmatpush.bf16.msra.mxu0 %v2772
        %3160 = vmatmul.bf16.gmra.mxu0 %v2188
        %v3161 = vpop.f32.mrf.mxu0
        %v3162 = vadd.f32 %v3149, %v3161
        %v3163 = vpop.f32.mrf.mxu0
        %3164 = vdwg.mxu0
        %s3165 = smul.u32 1, 4
        %s3166 = smul.addr %s3165, 8
        %s3167 = scalar_lea.vmem [#allocation2], %s3166
        %v3168 = vld [vmem:[%s3167] sm:$0xff]
        %v3169 = vld [vmem:[%s3167 + $0x8] sm:$0xff]
        %v3170 = vld [vmem:[%s3167 + $0x10] sm:$0xff]
        %v3171 = vld [vmem:[%s3167 + $0x18] sm:$0xff]
        %v3172 = vadd.f32 %v3168, %v2980
        %v3173 = vadd.f32 %v3169, %v3006
        %v3174 = vadd.f32 %v3170, %v3032
        %v3175 = vadd.f32 %v3171, %v3058
        %s3176 = smul.u32 6, 4
        %s3177 = smul.addr %s3176, 8
        %s3178 = scalar_lea.vmem [#allocation3], %s3177
        %v3179 = vld [vmem:[%s3178] sm:$0xff]
        %v3180 = vld [vmem:[%s3178 + $0x8] sm:$0xff]
        %v3181 = vld [vmem:[%s3178 + $0x10] sm:$0xff]
        %v3182 = vld [vmem:[%s3178 + $0x18] sm:$0xff]
        %v3183 = vadd.f32 %v3179, %v3084
        %v3184 = vadd.f32 %v3180, %v3110
        %v3185 = vadd.f32 %v3181, %v3136
        %v3186 = vadd.f32 %v3182, %v3162
        %v3187 = vmul.f32 %v3172, 0.5
        %v3188 = vtanh.pop %v3187
        %v3189 = vmul.f32 %v3188, 0.5
        %v3190 = vadd.f32 %v3189, 0.5
        %v3191 = vmul.f32 %v3173, 0.5
        %v3192 = vtanh.pop %v3191
        %v3193 = vmul.f32 %v3192, 0.5
        %v3194 = vadd.f32 %v3193, 0.5
        %v3195 = vtanh.pop %v3174
        %v3196 = vmul.f32 %v3175, 0.5
        %v3197 = vtanh.pop %v3196
        %v3198 = vmul.f32 %v3197, 0.5
        %v3199 = vadd.f32 %v3198, 0.5
        %v3200 = vmul.f32 %v3194, %v2163
        %v3201 = vmul.f32 %v3190, %v3195
        %v3202 = vadd.f32 %v3200, %v3201
        %v3203 = vtanh.pop %v3202
        %v3204 = vmul.f32 %v3199, %v3203
        %v3205 = vmul.f32 %v3183, 0.5
        %v3206 = vtanh.pop %v3205
        %v3207 = vmul.f32 %v3206, 0.5
        %v3208 = vadd.f32 %v3207, 0.5
        %v3209 = vmul.f32 %v3184, 0.5
        %v3210 = vtanh.pop %v3209
        %v3211 = vmul.f32 %v3210, 0.5
        %v3212 = vadd.f32 %v3211, 0.5
        %v3213 = vtanh.pop %v3185
        %v3214 = vmul.f32 %v3186, 0.5
        %v3215 = vtanh.pop %v3214
        %v3216 = vmul.f32 %v3215, 0.5
        %v3217 = vadd.f32 %v3216, 0.5
        %v3218 = vmul.f32 %v3212, %v2181
        %v3219 = vmul.f32 %v3208, %v3213
        %v3220 = vadd.f32 %v3218, %v3219
        %v3221 = vtanh.pop %v3220
        %v3222 = vmul.f32 %v3217, %v3221
        %s3223 = scalar_lea.vmem %s376, 8 [#allocation14]
        %3224 = vst [vmem:[%s3223] sm:$0xff] %v3204
        %s3225 = scalar_lea.vmem %s383, 48 [#allocation15]
        %3226 = vst [vmem:[%s3225] sm:$0xff] %v3222
        %v3227 = vpack.c.bf16 %v3204, %v3204
        %v3228 = vpack.c.bf16 %v3222, %v3222
        %v3229 = vld [vmem:[#allocation13] sm:$0xff]
        %v3230 = vld [vmem:[#allocation13 + $0x8] sm:$0xff]
        %v3231 = vld [vmem:[#allocation13 + $0x10] sm:$0xff]
        %v3232 = vld [vmem:[#allocation13 + $0x18] sm:$0xff]
        %v3233 = vld [vmem:[#allocation13 + $0x20] sm:$0xff]
        %v3234 = vld [vmem:[#allocation13 + $0x28] sm:$0xff]
        %v3235 = vld [vmem:[#allocation13 + $0x30] sm:$0xff]
        %v3236 = vld [vmem:[#allocation13 + $0x38] sm:$0xff]
        %v3237 = vld [vmem:[#allocation13 + $0x40] sm:$0xff]
        %v3238 = vld [vmem:[#allocation13 + $0x48] sm:$0xff]
        %v3239 = vld [vmem:[#allocation13 + $0x50] sm:$0xff]
        %v3240 = vld [vmem:[#allocation13 + $0x58] sm:$0xff]
        %v3241 = vld [vmem:[#allocation13 + $0x60] sm:$0xff]
        %v3242 = vld [vmem:[#allocation13 + $0x68] sm:$0xff]
        %v3243 = vld [vmem:[#allocation13 + $0x70] sm:$0xff]
        %v3244 = vld [vmem:[#allocation13 + $0x78] sm:$0xff]
        %v3245 = vld [vmem:[#allocation13 + $0x80] sm:$0xff]
        %v3246 = vld [vmem:[#allocation13 + $0x88] sm:$0xff]
        %v3247 = vld [vmem:[#allocation13 + $0x90] sm:$0xff]
        %v3248 = vld [vmem:[#allocation13 + $0x98] sm:$0xff]
        %v3249 = vld [vmem:[#allocation13 + $0xa0] sm:$0xff]
        %v3250 = vld [vmem:[#allocation13 + $0xa8] sm:$0xff]
        %v3251 = vld [vmem:[#allocation13 + $0xb0] sm:$0xff]
        %v3252 = vld [vmem:[#allocation13 + $0xb8] sm:$0xff]
        %v3253 = vld [vmem:[#allocation13 + $0xc0] sm:$0xff]
        %v3254 = vld [vmem:[#allocation13 + $0xc8] sm:$0xff]
        %v3255 = vld [vmem:[#allocation13 + $0xd0] sm:$0xff]
        %v3256 = vld [vmem:[#allocation13 + $0xd8] sm:$0xff]
        %v3257 = vld [vmem:[#allocation13 + $0xe0] sm:$0xff]
        %v3258 = vld [vmem:[#allocation13 + $0xe8] sm:$0xff]
        %v3259 = vld [vmem:[#allocation13 + $0xf0] sm:$0xff]
        %v3260 = vld [vmem:[#allocation13 + $0xf8] sm:$0xff]
        %v3261 = vld [vmem:[#allocation13 + $0x100] sm:$0xff]
        %v3262 = vld [vmem:[#allocation13 + $0x108] sm:$0xff]
        %v3263 = vld [vmem:[#allocation13 + $0x110] sm:$0xff]
        %v3264 = vld [vmem:[#allocation13 + $0x118] sm:$0xff]
        %v3265 = vld [vmem:[#allocation13 + $0x120] sm:$0xff]
        %v3266 = vld [vmem:[#allocation13 + $0x128] sm:$0xff]
        %v3267 = vld [vmem:[#allocation13 + $0x130] sm:$0xff]
        %v3268 = vld [vmem:[#allocation13 + $0x138] sm:$0xff]
        %v3269 = vld [vmem:[#allocation13 + $0x140] sm:$0xff]
        %v3270 = vld [vmem:[#allocation13 + $0x148] sm:$0xff]
        %v3271 = vld [vmem:[#allocation13 + $0x150] sm:$0xff]
        %v3272 = vld [vmem:[#allocation13 + $0x158] sm:$0xff]
        %v3273 = vld [vmem:[#allocation13 + $0x160] sm:$0xff]
        %v3274 = vld [vmem:[#allocation13 + $0x168] sm:$0xff]
        %v3275 = vld [vmem:[#allocation13 + $0x170] sm:$0xff]
        %v3276 = vld [vmem:[#allocation13 + $0x178] sm:$0xff]
        %v3277 = vld [vmem:[#allocation13 + $0x180] sm:$0xff]
        %v3278 = vld [vmem:[#allocation13 + $0x188] sm:$0xff]
        %v3279 = vld [vmem:[#allocation13 + $0x190] sm:$0xff]
        %v3280 = vld [vmem:[#allocation13 + $0x198] sm:$0xff]
        %v3281 = vld [vmem:[#allocation13 + $0x1a0] sm:$0xff]
        %v3282 = vld [vmem:[#allocation13 + $0x1a8] sm:$0xff]
        %v3283 = vld [vmem:[#allocation13 + $0x1b0] sm:$0xff]
        %v3284 = vld [vmem:[#allocation13 + $0x1b8] sm:$0xff]
        %v3285 = vld [vmem:[#allocation13 + $0x1c0] sm:$0xff]
        %v3286 = vld [vmem:[#allocation13 + $0x1c8] sm:$0xff]
        %v3287 = vld [vmem:[#allocation13 + $0x1d0] sm:$0xff]
        %v3288 = vld [vmem:[#allocation13 + $0x1d8] sm:$0xff]
        %v3289 = vld [vmem:[#allocation13 + $0x1e0] sm:$0xff]
        %v3290 = vld [vmem:[#allocation13 + $0x1e8] sm:$0xff]
        %v3291 = vld [vmem:[#allocation13 + $0x1f0] sm:$0xff]
        %v3292 = vld [vmem:[#allocation13 + $0x1f8] sm:$0xff]
        %v3293 = vld [vmem:[#allocation13 + $0x200] sm:$0xff]
        %v3294 = vld [vmem:[#allocation13 + $0x208] sm:$0xff]
        %v3295 = vld [vmem:[#allocation13 + $0x210] sm:$0xff]
        %v3296 = vld [vmem:[#allocation13 + $0x218] sm:$0xff]
        %v3297 = vld [vmem:[#allocation13 + $0x220] sm:$0xff]
        %v3298 = vld [vmem:[#allocation13 + $0x228] sm:$0xff]
        %v3299 = vld [vmem:[#allocation13 + $0x230] sm:$0xff]
        %v3300 = vld [vmem:[#allocation13 + $0x238] sm:$0xff]
        %v3301 = vld [vmem:[#allocation13 + $0x240] sm:$0xff]
        %v3302 = vld [vmem:[#allocation13 + $0x248] sm:$0xff]
        %v3303 = vld [vmem:[#allocation13 + $0x250] sm:$0xff]
        %v3304 = vld [vmem:[#allocation13 + $0x258] sm:$0xff]
        %v3305 = vld [vmem:[#allocation13 + $0x260] sm:$0xff]
        %v3306 = vld [vmem:[#allocation13 + $0x268] sm:$0xff]
        %v3307 = vld [vmem:[#allocation13 + $0x270] sm:$0xff]
        %v3308 = vld [vmem:[#allocation13 + $0x278] sm:$0xff]
        %v3309 = vld [vmem:[#allocation13 + $0x280] sm:$0xff]
        %v3310 = vld [vmem:[#allocation13 + $0x288] sm:$0xff]
        %v3311 = vld [vmem:[#allocation13 + $0x290] sm:$0xff]
        %v3312 = vld [vmem:[#allocation13 + $0x298] sm:$0xff]
        %v3313 = vld [vmem:[#allocation13 + $0x2a0] sm:$0xff]
        %v3314 = vld [vmem:[#allocation13 + $0x2a8] sm:$0xff]
        %v3315 = vld [vmem:[#allocation13 + $0x2b0] sm:$0xff]
        %v3316 = vld [vmem:[#allocation13 + $0x2b8] sm:$0xff]
        %v3317 = vld [vmem:[#allocation13 + $0x2c0] sm:$0xff]
        %v3318 = vld [vmem:[#allocation13 + $0x2c8] sm:$0xff]
        %v3319 = vld [vmem:[#allocation13 + $0x2d0] sm:$0xff]
        %v3320 = vld [vmem:[#allocation13 + $0x2d8] sm:$0xff]
        %v3321 = vld [vmem:[#allocation13 + $0x2e0] sm:$0xff]
        %v3322 = vld [vmem:[#allocation13 + $0x2e8] sm:$0xff]
        %v3323 = vld [vmem:[#allocation13 + $0x2f0] sm:$0xff]
        %v3324 = vld [vmem:[#allocation13 + $0x2f8] sm:$0xff]
        %v3325 = vld [vmem:[#allocation13 + $0x300] sm:$0xff]
        %v3326 = vld [vmem:[#allocation13 + $0x308] sm:$0xff]
        %v3327 = vld [vmem:[#allocation13 + $0x310] sm:$0xff]
        %v3328 = vld [vmem:[#allocation13 + $0x318] sm:$0xff]
        %v3329 = vld [vmem:[#allocation13 + $0x320] sm:$0xff]
        %v3330 = vld [vmem:[#allocation13 + $0x328] sm:$0xff]
        %v3331 = vld [vmem:[#allocation13 + $0x330] sm:$0xff]
        %v3332 = vld [vmem:[#allocation13 + $0x338] sm:$0xff]
        %v3333 = vld [vmem:[#allocation13 + $0x340] sm:$0xff]
        %v3334 = vld [vmem:[#allocation13 + $0x348] sm:$0xff]
        %v3335 = vld [vmem:[#allocation13 + $0x350] sm:$0xff]
        %v3336 = vld [vmem:[#allocation13 + $0x358] sm:$0xff]
        %v3337 = vld [vmem:[#allocation13 + $0x360] sm:$0xff]
        %v3338 = vld [vmem:[#allocation13 + $0x368] sm:$0xff]
        %v3339 = vld [vmem:[#allocation13 + $0x370] sm:$0xff]
        %v3340 = vld [vmem:[#allocation13 + $0x378] sm:$0xff]
        %v3341 = vld [vmem:[#allocation13 + $0x380] sm:$0xff]
        %v3342 = vld [vmem:[#allocation13 + $0x388] sm:$0xff]
        %v3343 = vld [vmem:[#allocation13 + $0x390] sm:$0xff]
        %v3344 = vld [vmem:[#allocation13 + $0x398] sm:$0xff]
        %v3345 = vld [vmem:[#allocation13 + $0x3a0] sm:$0xff]
        %v3346 = vld [vmem:[#allocation13 + $0x3a8] sm:$0xff]
        %v3347 = vld [vmem:[#allocation13 + $0x3b0] sm:$0xff]
        %v3348 = vld [vmem:[#allocation13 + $0x3b8] sm:$0xff]
        %v3349 = vld [vmem:[#allocation13 + $0x3c0] sm:$0xff]
        %v3350 = vld [vmem:[#allocation13 + $0x3c8] sm:$0xff]
        %v3351 = vld [vmem:[#allocation13 + $0x3d0] sm:$0xff]
        %v3352 = vld [vmem:[#allocation13 + $0x3d8] sm:$0xff]
        %v3353 = vld [vmem:[#allocation13 + $0x3e0] sm:$0xff]
        %v3354 = vld [vmem:[#allocation13 + $0x3e8] sm:$0xff]
        %v3355 = vld [vmem:[#allocation13 + $0x3f0] sm:$0xff]
        %v3356 = vld [vmem:[#allocation13 + $0x3f8] sm:$0xff]
        %v3485 = vunpack.c.l.b16 %v3229
        %v3486 = vunpack.c.h.b16 %v3229
        %v3487 = vunpack.c.l.b16 %v3230
        %v3488 = vunpack.c.h.b16 %v3230
        %v3489 = vunpack.c.l.b16 %v3231
        %v3490 = vunpack.c.h.b16 %v3231
        %v3491 = vunpack.c.l.b16 %v3232
        %v3492 = vunpack.c.h.b16 %v3232
        %v3493 = vunpack.c.l.b16 %v3233
        %v3494 = vunpack.c.h.b16 %v3233
        %v3495 = vunpack.c.l.b16 %v3234
        %v3496 = vunpack.c.h.b16 %v3234
        %v3497 = vunpack.c.l.b16 %v3235
        %v3498 = vunpack.c.h.b16 %v3235
        %v3499 = vunpack.c.l.b16 %v3236
        %v3500 = vunpack.c.h.b16 %v3236
        %v3501 = vunpack.c.l.b16 %v3237
        %v3502 = vunpack.c.h.b16 %v3237
        %v3503 = vunpack.c.l.b16 %v3238
        %v3504 = vunpack.c.h.b16 %v3238
        %v3505 = vunpack.c.l.b16 %v3239
        %v3506 = vunpack.c.h.b16 %v3239
        %v3507 = vunpack.c.l.b16 %v3240
        %v3508 = vunpack.c.h.b16 %v3240
        %v3509 = vunpack.c.l.b16 %v3241
        %v3510 = vunpack.c.h.b16 %v3241
        %v3511 = vunpack.c.l.b16 %v3242
        %v3512 = vunpack.c.h.b16 %v3242
        %v3513 = vunpack.c.l.b16 %v3243
        %v3514 = vunpack.c.h.b16 %v3243
        %v3515 = vunpack.c.l.b16 %v3244
        %v3516 = vunpack.c.h.b16 %v3244
        %v3517 = vunpack.c.l.b16 %v3245
        %v3518 = vunpack.c.h.b16 %v3245
        %v3519 = vunpack.c.l.b16 %v3246
        %v3520 = vunpack.c.h.b16 %v3246
        %v3521 = vunpack.c.l.b16 %v3247
        %v3522 = vunpack.c.h.b16 %v3247
        %v3523 = vunpack.c.l.b16 %v3248
        %v3524 = vunpack.c.h.b16 %v3248
        %v3525 = vunpack.c.l.b16 %v3249
        %v3526 = vunpack.c.h.b16 %v3249
        %v3527 = vunpack.c.l.b16 %v3250
        %v3528 = vunpack.c.h.b16 %v3250
        %v3529 = vunpack.c.l.b16 %v3251
        %v3530 = vunpack.c.h.b16 %v3251
        %v3531 = vunpack.c.l.b16 %v3252
        %v3532 = vunpack.c.h.b16 %v3252
        %v3533 = vunpack.c.l.b16 %v3253
        %v3534 = vunpack.c.h.b16 %v3253
        %v3535 = vunpack.c.l.b16 %v3254
        %v3536 = vunpack.c.h.b16 %v3254
        %v3537 = vunpack.c.l.b16 %v3255
        %v3538 = vunpack.c.h.b16 %v3255
        %v3539 = vunpack.c.l.b16 %v3256
        %v3540 = vunpack.c.h.b16 %v3256
        %v3541 = vunpack.c.l.b16 %v3257
        %v3542 = vunpack.c.h.b16 %v3257
        %v3543 = vunpack.c.l.b16 %v3258
        %v3544 = vunpack.c.h.b16 %v3258
        %v3545 = vunpack.c.l.b16 %v3259
        %v3546 = vunpack.c.h.b16 %v3259
        %v3547 = vunpack.c.l.b16 %v3260
        %v3548 = vunpack.c.h.b16 %v3260
        %v3549 = vunpack.c.l.b16 %v3261
        %v3550 = vunpack.c.h.b16 %v3261
        %v3551 = vunpack.c.l.b16 %v3262
        %v3552 = vunpack.c.h.b16 %v3262
        %v3553 = vunpack.c.l.b16 %v3263
        %v3554 = vunpack.c.h.b16 %v3263
        %v3555 = vunpack.c.l.b16 %v3264
        %v3556 = vunpack.c.h.b16 %v3264
        %v3557 = vunpack.c.l.b16 %v3265
        %v3558 = vunpack.c.h.b16 %v3265
        %v3559 = vunpack.c.l.b16 %v3266
        %v3560 = vunpack.c.h.b16 %v3266
        %v3561 = vunpack.c.l.b16 %v3267
        %v3562 = vunpack.c.h.b16 %v3267
        %v3563 = vunpack.c.l.b16 %v3268
        %v3564 = vunpack.c.h.b16 %v3268
        %v3565 = vunpack.c.l.b16 %v3269
        %v3566 = vunpack.c.h.b16 %v3269
        %v3567 = vunpack.c.l.b16 %v3270
        %v3568 = vunpack.c.h.b16 %v3270
        %v3569 = vunpack.c.l.b16 %v3271
        %v3570 = vunpack.c.h.b16 %v3271
        %v3571 = vunpack.c.l.b16 %v3272
        %v3572 = vunpack.c.h.b16 %v3272
        %v3573 = vunpack.c.l.b16 %v3273
        %v3574 = vunpack.c.h.b16 %v3273
        %v3575 = vunpack.c.l.b16 %v3274
        %v3576 = vunpack.c.h.b16 %v3274
        %v3577 = vunpack.c.l.b16 %v3275
        %v3578 = vunpack.c.h.b16 %v3275
        %v3579 = vunpack.c.l.b16 %v3276
        %v3580 = vunpack.c.h.b16 %v3276
        %v3581 = vunpack.c.l.b16 %v3277
        %v3582 = vunpack.c.h.b16 %v3277
        %v3583 = vunpack.c.l.b16 %v3278
        %v3584 = vunpack.c.h.b16 %v3278
        %v3585 = vunpack.c.l.b16 %v3279
        %v3586 = vunpack.c.h.b16 %v3279
        %v3587 = vunpack.c.l.b16 %v3280
        %v3588 = vunpack.c.h.b16 %v3280
        %v3589 = vunpack.c.l.b16 %v3281
        %v3590 = vunpack.c.h.b16 %v3281
        %v3591 = vunpack.c.l.b16 %v3282
        %v3592 = vunpack.c.h.b16 %v3282
        %v3593 = vunpack.c.l.b16 %v3283
        %v3594 = vunpack.c.h.b16 %v3283
        %v3595 = vunpack.c.l.b16 %v3284
        %v3596 = vunpack.c.h.b16 %v3284
        %v3597 = vunpack.c.l.b16 %v3285
        %v3598 = vunpack.c.h.b16 %v3285
        %v3599 = vunpack.c.l.b16 %v3286
        %v3600 = vunpack.c.h.b16 %v3286
        %v3601 = vunpack.c.l.b16 %v3287
        %v3602 = vunpack.c.h.b16 %v3287
        %v3603 = vunpack.c.l.b16 %v3288
        %v3604 = vunpack.c.h.b16 %v3288
        %v3605 = vunpack.c.l.b16 %v3289
        %v3606 = vunpack.c.h.b16 %v3289
        %v3607 = vunpack.c.l.b16 %v3290
        %v3608 = vunpack.c.h.b16 %v3290
        %v3609 = vunpack.c.l.b16 %v3291
        %v3610 = vunpack.c.h.b16 %v3291
        %v3611 = vunpack.c.l.b16 %v3292
        %v3612 = vunpack.c.h.b16 %v3292
        %v3613 = vunpack.c.l.b16 %v3293
        %v3614 = vunpack.c.h.b16 %v3293
        %v3615 = vunpack.c.l.b16 %v3294
        %v3616 = vunpack.c.h.b16 %v3294
        %v3617 = vunpack.c.l.b16 %v3295
        %v3618 = vunpack.c.h.b16 %v3295
        %v3619 = vunpack.c.l.b16 %v3296
        %v3620 = vunpack.c.h.b16 %v3296
        %v3621 = vunpack.c.l.b16 %v3297
        %v3622 = vunpack.c.h.b16 %v3297
        %v3623 = vunpack.c.l.b16 %v3298
        %v3624 = vunpack.c.h.b16 %v3298
        %v3625 = vunpack.c.l.b16 %v3299
        %v3626 = vunpack.c.h.b16 %v3299
        %v3627 = vunpack.c.l.b16 %v3300
        %v3628 = vunpack.c.h.b16 %v3300
        %v3629 = vunpack.c.l.b16 %v3301
        %v3630 = vunpack.c.h.b16 %v3301
        %v3631 = vunpack.c.l.b16 %v3302
        %v3632 = vunpack.c.h.b16 %v3302
        %v3633 = vunpack.c.l.b16 %v3303
        %v3634 = vunpack.c.h.b16 %v3303
        %v3635 = vunpack.c.l.b16 %v3304
        %v3636 = vunpack.c.h.b16 %v3304
        %v3637 = vunpack.c.l.b16 %v3305
        %v3638 = vunpack.c.h.b16 %v3305
        %v3639 = vunpack.c.l.b16 %v3306
        %v3640 = vunpack.c.h.b16 %v3306
        %v3641 = vunpack.c.l.b16 %v3307
        %v3642 = vunpack.c.h.b16 %v3307
        %v3643 = vunpack.c.l.b16 %v3308
        %v3644 = vunpack.c.h.b16 %v3308
        %v3645 = vunpack.c.l.b16 %v3309
        %v3646 = vunpack.c.h.b16 %v3309
        %v3647 = vunpack.c.l.b16 %v3310
        %v3648 = vunpack.c.h.b16 %v3310
        %v3649 = vunpack.c.l.b16 %v3311
        %v3650 = vunpack.c.h.b16 %v3311
        %v3651 = vunpack.c.l.b16 %v3312
        %v3652 = vunpack.c.h.b16 %v3312
        %v3653 = vunpack.c.l.b16 %v3313
        %v3654 = vunpack.c.h.b16 %v3313
        %v3655 = vunpack.c.l.b16 %v3314
        %v3656 = vunpack.c.h.b16 %v3314
        %v3657 = vunpack.c.l.b16 %v3315
        %v3658 = vunpack.c.h.b16 %v3315
        %v3659 = vunpack.c.l.b16 %v3316
        %v3660 = vunpack.c.h.b16 %v3316
        %v3661 = vunpack.c.l.b16 %v3317
        %v3662 = vunpack.c.h.b16 %v3317
        %v3663 = vunpack.c.l.b16 %v3318
        %v3664 = vunpack.c.h.b16 %v3318
        %v3665 = vunpack.c.l.b16 %v3319
        %v3666 = vunpack.c.h.b16 %v3319
        %v3667 = vunpack.c.l.b16 %v3320
        %v3668 = vunpack.c.h.b16 %v3320
        %v3669 = vunpack.c.l.b16 %v3321
        %v3670 = vunpack.c.h.b16 %v3321
        %v3671 = vunpack.c.l.b16 %v3322
        %v3672 = vunpack.c.h.b16 %v3322
        %v3673 = vunpack.c.l.b16 %v3323
        %v3674 = vunpack.c.h.b16 %v3323
        %v3675 = vunpack.c.l.b16 %v3324
        %v3676 = vunpack.c.h.b16 %v3324
        %v3677 = vunpack.c.l.b16 %v3325
        %v3678 = vunpack.c.h.b16 %v3325
        %v3679 = vunpack.c.l.b16 %v3326
        %v3680 = vunpack.c.h.b16 %v3326
        %v3681 = vunpack.c.l.b16 %v3327
        %v3682 = vunpack.c.h.b16 %v3327
        %v3683 = vunpack.c.l.b16 %v3328
        %v3684 = vunpack.c.h.b16 %v3328
        %v3685 = vunpack.c.l.b16 %v3329
        %v3686 = vunpack.c.h.b16 %v3329
        %v3687 = vunpack.c.l.b16 %v3330
        %v3688 = vunpack.c.h.b16 %v3330
        %v3689 = vunpack.c.l.b16 %v3331
        %v3690 = vunpack.c.h.b16 %v3331
        %v3691 = vunpack.c.l.b16 %v3332
        %v3692 = vunpack.c.h.b16 %v3332
        %v3693 = vunpack.c.l.b16 %v3333
        %v3694 = vunpack.c.h.b16 %v3333
        %v3695 = vunpack.c.l.b16 %v3334
        %v3696 = vunpack.c.h.b16 %v3334
        %v3697 = vunpack.c.l.b16 %v3335
        %v3698 = vunpack.c.h.b16 %v3335
        %v3699 = vunpack.c.l.b16 %v3336
        %v3700 = vunpack.c.h.b16 %v3336
        %v3701 = vunpack.c.l.b16 %v3337
        %v3702 = vunpack.c.h.b16 %v3337
        %v3703 = vunpack.c.l.b16 %v3338
        %v3704 = vunpack.c.h.b16 %v3338
        %v3705 = vunpack.c.l.b16 %v3339
        %v3706 = vunpack.c.h.b16 %v3339
        %v3707 = vunpack.c.l.b16 %v3340
        %v3708 = vunpack.c.h.b16 %v3340
        %v3709 = vunpack.c.l.b16 %v3341
        %v3710 = vunpack.c.h.b16 %v3341
        %v3711 = vunpack.c.l.b16 %v3342
        %v3712 = vunpack.c.h.b16 %v3342
        %v3713 = vunpack.c.l.b16 %v3343
        %v3714 = vunpack.c.h.b16 %v3343
        %v3715 = vunpack.c.l.b16 %v3344
        %v3716 = vunpack.c.h.b16 %v3344
        %v3717 = vunpack.c.l.b16 %v3345
        %v3718 = vunpack.c.h.b16 %v3345
        %v3719 = vunpack.c.l.b16 %v3346
        %v3720 = vunpack.c.h.b16 %v3346
        %v3721 = vunpack.c.l.b16 %v3347
        %v3722 = vunpack.c.h.b16 %v3347
        %v3723 = vunpack.c.l.b16 %v3348
        %v3724 = vunpack.c.h.b16 %v3348
        %v3725 = vunpack.c.l.b16 %v3349
        %v3726 = vunpack.c.h.b16 %v3349
        %v3727 = vunpack.c.l.b16 %v3350
        %v3728 = vunpack.c.h.b16 %v3350
        %v3729 = vunpack.c.l.b16 %v3351
        %v3730 = vunpack.c.h.b16 %v3351
        %v3731 = vunpack.c.l.b16 %v3352
        %v3732 = vunpack.c.h.b16 %v3352
        %v3733 = vunpack.c.l.b16 %v3353
        %v3734 = vunpack.c.h.b16 %v3353
        %v3735 = vunpack.c.l.b16 %v3354
        %v3736 = vunpack.c.h.b16 %v3354
        %v3737 = vunpack.c.l.b16 %v3355
        %v3738 = vunpack.c.h.b16 %v3355
        %v3739 = vunpack.c.l.b16 %v3356
        %v3740 = vunpack.c.h.b16 %v3356
        %v3741 = vpack.c.b16 %v3493, %v3485
        %v3742 = vpack.c.b16 %v3494, %v3486
        %v3743 = vpack.c.b16 %v3495, %v3487
        %v3744 = vpack.c.b16 %v3496, %v3488
        %v3745 = vpack.c.b16 %v3497, %v3489
        %v3746 = vpack.c.b16 %v3498, %v3490
        %v3747 = vpack.c.b16 %v3499, %v3491
        %v3748 = vpack.c.b16 %v3500, %v3492
        %v3749 = vpack.c.b16 %v3509, %v3501
        %v3750 = vpack.c.b16 %v3510, %v3502
        %v3751 = vpack.c.b16 %v3511, %v3503
        %v3752 = vpack.c.b16 %v3512, %v3504
        %v3753 = vpack.c.b16 %v3513, %v3505
        %v3754 = vpack.c.b16 %v3514, %v3506
        %v3755 = vpack.c.b16 %v3515, %v3507
        %v3756 = vpack.c.b16 %v3516, %v3508
        %v3757 = vpack.c.b16 %v3525, %v3517
        %v3758 = vpack.c.b16 %v3526, %v3518
        %v3759 = vpack.c.b16 %v3527, %v3519
        %v3760 = vpack.c.b16 %v3528, %v3520
        %v3761 = vpack.c.b16 %v3529, %v3521
        %v3762 = vpack.c.b16 %v3530, %v3522
        %v3763 = vpack.c.b16 %v3531, %v3523
        %v3764 = vpack.c.b16 %v3532, %v3524
        %v3765 = vpack.c.b16 %v3541, %v3533
        %v3766 = vpack.c.b16 %v3542, %v3534
        %v3767 = vpack.c.b16 %v3543, %v3535
        %v3768 = vpack.c.b16 %v3544, %v3536
        %v3769 = vpack.c.b16 %v3545, %v3537
        %v3770 = vpack.c.b16 %v3546, %v3538
        %v3771 = vpack.c.b16 %v3547, %v3539
        %v3772 = vpack.c.b16 %v3548, %v3540
        %v3773 = vpack.c.b16 %v3557, %v3549
        %v3774 = vpack.c.b16 %v3558, %v3550
        %v3775 = vpack.c.b16 %v3559, %v3551
        %v3776 = vpack.c.b16 %v3560, %v3552
        %v3777 = vpack.c.b16 %v3561, %v3553
        %v3778 = vpack.c.b16 %v3562, %v3554
        %v3779 = vpack.c.b16 %v3563, %v3555
        %v3780 = vpack.c.b16 %v3564, %v3556
        %v3781 = vpack.c.b16 %v3573, %v3565
        %v3782 = vpack.c.b16 %v3574, %v3566
        %v3783 = vpack.c.b16 %v3575, %v3567
        %v3784 = vpack.c.b16 %v3576, %v3568
        %v3785 = vpack.c.b16 %v3577, %v3569
        %v3786 = vpack.c.b16 %v3578, %v3570
        %v3787 = vpack.c.b16 %v3579, %v3571
        %v3788 = vpack.c.b16 %v3580, %v3572
        %v3789 = vpack.c.b16 %v3589, %v3581
        %v3790 = vpack.c.b16 %v3590, %v3582
        %v3791 = vpack.c.b16 %v3591, %v3583
        %v3792 = vpack.c.b16 %v3592, %v3584
        %v3793 = vpack.c.b16 %v3593, %v3585
        %v3794 = vpack.c.b16 %v3594, %v3586
        %v3795 = vpack.c.b16 %v3595, %v3587
        %v3796 = vpack.c.b16 %v3596, %v3588
        %v3797 = vpack.c.b16 %v3605, %v3597
        %v3798 = vpack.c.b16 %v3606, %v3598
        %v3799 = vpack.c.b16 %v3607, %v3599
        %v3800 = vpack.c.b16 %v3608, %v3600
        %v3801 = vpack.c.b16 %v3609, %v3601
        %v3802 = vpack.c.b16 %v3610, %v3602
        %v3803 = vpack.c.b16 %v3611, %v3603
        %v3804 = vpack.c.b16 %v3612, %v3604
        %v3805 = vpack.c.b16 %v3621, %v3613
        %v3806 = vpack.c.b16 %v3622, %v3614
        %v3807 = vpack.c.b16 %v3623, %v3615
        %v3808 = vpack.c.b16 %v3624, %v3616
        %v3809 = vpack.c.b16 %v3625, %v3617
        %v3810 = vpack.c.b16 %v3626, %v3618
        %v3811 = vpack.c.b16 %v3627, %v3619
        %v3812 = vpack.c.b16 %v3628, %v3620
        %v3813 = vpack.c.b16 %v3637, %v3629
        %v3814 = vpack.c.b16 %v3638, %v3630
        %v3815 = vpack.c.b16 %v3639, %v3631
        %v3816 = vpack.c.b16 %v3640, %v3632
        %v3817 = vpack.c.b16 %v3641, %v3633
        %v3818 = vpack.c.b16 %v3642, %v3634
        %v3819 = vpack.c.b16 %v3643, %v3635
        %v3820 = vpack.c.b16 %v3644, %v3636
        %v3821 = vpack.c.b16 %v3653, %v3645
        %v3822 = vpack.c.b16 %v3654, %v3646
        %v3823 = vpack.c.b16 %v3655, %v3647
        %v3824 = vpack.c.b16 %v3656, %v3648
        %v3825 = vpack.c.b16 %v3657, %v3649
        %v3826 = vpack.c.b16 %v3658, %v3650
        %v3827 = vpack.c.b16 %v3659, %v3651
        %v3828 = vpack.c.b16 %v3660, %v3652
        %v3829 = vpack.c.b16 %v3669, %v3661
        %v3830 = vpack.c.b16 %v3670, %v3662
        %v3831 = vpack.c.b16 %v3671, %v3663
        %v3832 = vpack.c.b16 %v3672, %v3664
        %v3833 = vpack.c.b16 %v3673, %v3665
        %v3834 = vpack.c.b16 %v3674, %v3666
        %v3835 = vpack.c.b16 %v3675, %v3667
        %v3836 = vpack.c.b16 %v3676, %v3668
        %v3837 = vpack.c.b16 %v3685, %v3677
        %v3838 = vpack.c.b16 %v3686, %v3678
        %v3839 = vpack.c.b16 %v3687, %v3679
        %v3840 = vpack.c.b16 %v3688, %v3680
        %v3841 = vpack.c.b16 %v3689, %v3681
        %v3842 = vpack.c.b16 %v3690, %v3682
        %v3843 = vpack.c.b16 %v3691, %v3683
        %v3844 = vpack.c.b16 %v3692, %v3684
        %v3845 = vpack.c.b16 %v3701, %v3693
        %v3846 = vpack.c.b16 %v3702, %v3694
        %v3847 = vpack.c.b16 %v3703, %v3695
        %v3848 = vpack.c.b16 %v3704, %v3696
        %v3849 = vpack.c.b16 %v3705, %v3697
        %v3850 = vpack.c.b16 %v3706, %v3698
        %v3851 = vpack.c.b16 %v3707, %v3699
        %v3852 = vpack.c.b16 %v3708, %v3700
        %v3853 = vpack.c.b16 %v3717, %v3709
        %v3854 = vpack.c.b16 %v3718, %v3710
        %v3855 = vpack.c.b16 %v3719, %v3711
        %v3856 = vpack.c.b16 %v3720, %v3712
        %v3857 = vpack.c.b16 %v3721, %v3713
        %v3858 = vpack.c.b16 %v3722, %v3714
        %v3859 = vpack.c.b16 %v3723, %v3715
        %v3860 = vpack.c.b16 %v3724, %v3716
        %v3861 = vpack.c.b16 %v3733, %v3725
        %v3862 = vpack.c.b16 %v3734, %v3726
        %v3863 = vpack.c.b16 %v3735, %v3727
        %v3864 = vpack.c.b16 %v3736, %v3728
        %v3865 = vpack.c.b16 %v3737, %v3729
        %v3866 = vpack.c.b16 %v3738, %v3730
        %v3867 = vpack.c.b16 %v3739, %v3731
        %v3868 = vpack.c.b16 %v3740, %v3732
        %3997 = vmatpush.bf16.msra.mxu0 %v3797
        %3998 = vmatpush.bf16.msra.mxu0 %v3789
        %3999 = vmatpush.bf16.msra.mxu0 %v3781
        %4000 = vmatpush.bf16.msra.mxu0 %v3773
        %4001 = vmatpush.bf16.msra.mxu0 %v3765
        %4002 = vmatpush.bf16.msra.mxu0 %v3757
        %4003 = vmatpush.bf16.msra.mxu0 %v3749
        %4004 = vmatpush.bf16.msra.mxu0 %v3741
        %4005 = vmatmul.bf16.gmra.mxu0 %v3227
        %v4006 = vpop.f32.mrf.mxu0
        %v4007 = vadd.f32 0.0, %v4006
        %v4008 = vpop.f32.mrf.mxu0
        %4009 = vdwg.mxu0
        %4010 = vmatpush.bf16.msra.mxu0 %v3861
        %4011 = vmatpush.bf16.msra.mxu0 %v3853
        %4012 = vmatpush.bf16.msra.mxu0 %v3845
        %4013 = vmatpush.bf16.msra.mxu0 %v3837
        %4014 = vmatpush.bf16.msra.mxu0 %v3829
        %4015 = vmatpush.bf16.msra.mxu0 %v3821
        %4016 = vmatpush.bf16.msra.mxu0 %v3813
        %4017 = vmatpush.bf16.msra.mxu0 %v3805
        %4018 = vmatmul.bf16.gmra.mxu0 %v3228
        %v4019 = vpop.f32.mrf.mxu0
        %v4020 = vadd.f32 %v4007, %v4019
        %v4021 = vpop.f32.mrf.mxu0
        %4022 = vdwg.mxu0
        %4023 = vmatpush.bf16.msra.mxu0 %v3798
        %4024 = vmatpush.bf16.msra.mxu0 %v3790
        %4025 = vmatpush.bf16.msra.mxu0 %v3782
        %4026 = vmatpush.bf16.msra.mxu0 %v3774
        %4027 = vmatpush.bf16.msra.mxu0 %v3766
        %4028 = vmatpush.bf16.msra.mxu0 %v3758
        %4029 = vmatpush.bf16.msra.mxu0 %v3750
        %4030 = vmatpush.bf16.msra.mxu0 %v3742
        %4031 = vmatmul.bf16.gmra.mxu0 %v3227
        %v4032 = vpop.f32.mrf.mxu0
        %v4033 = vadd.f32 0.0, %v4032
        %v4034 = vpop.f32.mrf.mxu0
        %4035 = vdwg.mxu0
        %4036 = vmatpush.bf16.msra.mxu0 %v3862
        %4037 = vmatpush.bf16.msra.mxu0 %v3854
        %4038 = vmatpush.bf16.msra.mxu0 %v3846
        %4039 = vmatpush.bf16.msra.mxu0 %v3838
        %4040 = vmatpush.bf16.msra.mxu0 %v3830
        %4041 = vmatpush.bf16.msra.mxu0 %v3822
        %4042 = vmatpush.bf16.msra.mxu0 %v3814
        %4043 = vmatpush.bf16.msra.mxu0 %v3806
        %4044 = vmatmul.bf16.gmra.mxu0 %v3228
        %v4045 = vpop.f32.mrf.mxu0
        %v4046 = vadd.f32 %v4033, %v4045
        %v4047 = vpop.f32.mrf.mxu0
        %4048 = vdwg.mxu0
        %4049 = vmatpush.bf16.msra.mxu0 %v3799
        %4050 = vmatpush.bf16.msra.mxu0 %v3791
        %4051 = vmatpush.bf16.msra.mxu0 %v3783
        %4052 = vmatpush.bf16.msra.mxu0 %v3775
        %4053 = vmatpush.bf16.msra.mxu0 %v3767
        %4054 = vmatpush.bf16.msra.mxu0 %v3759
        %4055 = vmatpush.bf16.msra.mxu0 %v3751
        %4056 = vmatpush.bf16.msra.mxu0 %v3743
        %4057 = vmatmul.bf16.gmra.mxu0 %v3227
        %v4058 = vpop.f32.mrf.mxu0
        %v4059 = vadd.f32 0.0, %v4058
        %v4060 = vpop.f32.mrf.mxu0
        %4061 = vdwg.mxu0
        %4062 = vmatpush.bf16.msra.mxu0 %v3863
        %4063 = vmatpush.bf16.msra.mxu0 %v3855
        %4064 = vmatpush.bf16.msra.mxu0 %v3847
        %4065 = vmatpush.bf16.msra.mxu0 %v3839
        %4066 = vmatpush.bf16.msra.mxu0 %v3831
        %4067 = vmatpush.bf16.msra.mxu0 %v3823
        %4068 = vmatpush.bf16.msra.mxu0 %v3815
        %4069 = vmatpush.bf16.msra.mxu0 %v3807
        %4070 = vmatmul.bf16.gmra.mxu0 %v3228
        %v4071 = vpop.f32.mrf.mxu0
        %v4072 = vadd.f32 %v4059, %v4071
        %v4073 = vpop.f32.mrf.mxu0
        %4074 = vdwg.mxu0
        %4075 = vmatpush.bf16.msra.mxu0 %v3800
        %4076 = vmatpush.bf16.msra.mxu0 %v3792
        %4077 = vmatpush.bf16.msra.mxu0 %v3784
        %4078 = vmatpush.bf16.msra.mxu0 %v3776
        %4079 = vmatpush.bf16.msra.mxu0 %v3768
        %4080 = vmatpush.bf16.msra.mxu0 %v3760
        %4081 = vmatpush.bf16.msra.mxu0 %v3752
        %4082 = vmatpush.bf16.msra.mxu0 %v3744
        %4083 = vmatmul.bf16.gmra.mxu0 %v3227
        %v4084 = vpop.f32.mrf.mxu0
        %v4085 = vadd.f32 0.0, %v4084
        %v4086 = vpop.f32.mrf.mxu0
        %4087 = vdwg.mxu0
        %4088 = vmatpush.bf16.msra.mxu0 %v3864
        %4089 = vmatpush.bf16.msra.mxu0 %v3856
        %4090 = vmatpush.bf16.msra.mxu0 %v3848
        %4091 = vmatpush.bf16.msra.mxu0 %v3840
        %4092 = vmatpush.bf16.msra.mxu0 %v3832
        %4093 = vmatpush.bf16.msra.mxu0 %v3824
        %4094 = vmatpush.bf16.msra.mxu0 %v3816
        %4095 = vmatpush.bf16.msra.mxu0 %v3808
        %4096 = vmatmul.bf16.gmra.mxu0 %v3228
        %v4097 = vpop.f32.mrf.mxu0
        %v4098 = vadd.f32 %v4085, %v4097
        %v4099 = vpop.f32.mrf.mxu0
        %4100 = vdwg.mxu0
        %4101 = vmatpush.bf16.msra.mxu0 %v3801
        %4102 = vmatpush.bf16.msra.mxu0 %v3793
        %4103 = vmatpush.bf16.msra.mxu0 %v3785
        %4104 = vmatpush.bf16.msra.mxu0 %v3777
        %4105 = vmatpush.bf16.msra.mxu0 %v3769
        %4106 = vmatpush.bf16.msra.mxu0 %v3761
        %4107 = vmatpush.bf16.msra.mxu0 %v3753
        %4108 = vmatpush.bf16.msra.mxu0 %v3745
        %4109 = vmatmul.bf16.gmra.mxu0 %v3227
        %v4110 = vpop.f32.mrf.mxu0
        %v4111 = vadd.f32 0.0, %v4110
        %v4112 = vpop.f32.mrf.mxu0
        %4113 = vdwg.mxu0
        %4114 = vmatpush.bf16.msra.mxu0 %v3865
        %4115 = vmatpush.bf16.msra.mxu0 %v3857
        %4116 = vmatpush.bf16.msra.mxu0 %v3849
        %4117 = vmatpush.bf16.msra.mxu0 %v3841
        %4118 = vmatpush.bf16.msra.mxu0 %v3833
        %4119 = vmatpush.bf16.msra.mxu0 %v3825
        %4120 = vmatpush.bf16.msra.mxu0 %v3817
        %4121 = vmatpush.bf16.msra.mxu0 %v3809
        %4122 = vmatmul.bf16.gmra.mxu0 %v3228
        %v4123 = vpop.f32.mrf.mxu0
        %v4124 = vadd.f32 %v4111, %v4123
        %v4125 = vpop.f32.mrf.mxu0
        %4126 = vdwg.mxu0
        %4127 = vmatpush.bf16.msra.mxu0 %v3802
        %4128 = vmatpush.bf16.msra.mxu0 %v3794
        %4129 = vmatpush.bf16.msra.mxu0 %v3786
        %4130 = vmatpush.bf16.msra.mxu0 %v3778
        %4131 = vmatpush.bf16.msra.mxu0 %v3770
        %4132 = vmatpush.bf16.msra.mxu0 %v3762
        %4133 = vmatpush.bf16.msra.mxu0 %v3754
        %4134 = vmatpush.bf16.msra.mxu0 %v3746
        %4135 = vmatmul.bf16.gmra.mxu0 %v3227
        %v4136 = vpop.f32.mrf.mxu0
        %v4137 = vadd.f32 0.0, %v4136
        %v4138 = vpop.f32.mrf.mxu0
        %4139 = vdwg.mxu0
        %4140 = vmatpush.bf16.msra.mxu0 %v3866
        %4141 = vmatpush.bf16.msra.mxu0 %v3858
        %4142 = vmatpush.bf16.msra.mxu0 %v3850
        %4143 = vmatpush.bf16.msra.mxu0 %v3842
        %4144 = vmatpush.bf16.msra.mxu0 %v3834
        %4145 = vmatpush.bf16.msra.mxu0 %v3826
        %4146 = vmatpush.bf16.msra.mxu0 %v3818
        %4147 = vmatpush.bf16.msra.mxu0 %v3810
        %4148 = vmatmul.bf16.gmra.mxu0 %v3228
        %v4149 = vpop.f32.mrf.mxu0
        %v4150 = vadd.f32 %v4137, %v4149
        %v4151 = vpop.f32.mrf.mxu0
        %4152 = vdwg.mxu0
        %4153 = vmatpush.bf16.msra.mxu0 %v3803
        %4154 = vmatpush.bf16.msra.mxu0 %v3795
        %4155 = vmatpush.bf16.msra.mxu0 %v3787
        %4156 = vmatpush.bf16.msra.mxu0 %v3779
        %4157 = vmatpush.bf16.msra.mxu0 %v3771
        %4158 = vmatpush.bf16.msra.mxu0 %v3763
        %4159 = vmatpush.bf16.msra.mxu0 %v3755
        %4160 = vmatpush.bf16.msra.mxu0 %v3747
        %4161 = vmatmul.bf16.gmra.mxu0 %v3227
        %v4162 = vpop.f32.mrf.mxu0
        %v4163 = vadd.f32 0.0, %v4162
        %v4164 = vpop.f32.mrf.mxu0
        %4165 = vdwg.mxu0
        %4166 = vmatpush.bf16.msra.mxu0 %v3867
        %4167 = vmatpush.bf16.msra.mxu0 %v3859
        %4168 = vmatpush.bf16.msra.mxu0 %v3851
        %4169 = vmatpush.bf16.msra.mxu0 %v3843
        %4170 = vmatpush.bf16.msra.mxu0 %v3835
        %4171 = vmatpush.bf16.msra.mxu0 %v3827
        %4172 = vmatpush.bf16.msra.mxu0 %v3819
        %4173 = vmatpush.bf16.msra.mxu0 %v3811
        %4174 = vmatmul.bf16.gmra.mxu0 %v3228
        %v4175 = vpop.f32.mrf.mxu0
        %v4176 = vadd.f32 %v4163, %v4175
        %v4177 = vpop.f32.mrf.mxu0
        %4178 = vdwg.mxu0
        %4179 = vmatpush.bf16.msra.mxu0 %v3804
        %4180 = vmatpush.bf16.msra.mxu0 %v3796
        %4181 = vmatpush.bf16.msra.mxu0 %v3788
        %4182 = vmatpush.bf16.msra.mxu0 %v3780
        %4183 = vmatpush.bf16.msra.mxu0 %v3772
        %4184 = vmatpush.bf16.msra.mxu0 %v3764
        %4185 = vmatpush.bf16.msra.mxu0 %v3756
        %4186 = vmatpush.bf16.msra.mxu0 %v3748
        %4187 = vmatmul.bf16.gmra.mxu0 %v3227
        %v4188 = vpop.f32.mrf.mxu0
        %v4189 = vadd.f32 0.0, %v4188
        %v4190 = vpop.f32.mrf.mxu0
        %4191 = vdwg.mxu0
        %4192 = vmatpush.bf16.msra.mxu0 %v3868
        %4193 = vmatpush.bf16.msra.mxu0 %v3860
        %4194 = vmatpush.bf16.msra.mxu0 %v3852
        %4195 = vmatpush.bf16.msra.mxu0 %v3844
        %4196 = vmatpush.bf16.msra.mxu0 %v3836
        %4197 = vmatpush.bf16.msra.mxu0 %v3828
        %4198 = vmatpush.bf16.msra.mxu0 %v3820
        %4199 = vmatpush.bf16.msra.mxu0 %v3812
        %4200 = vmatmul.bf16.gmra.mxu0 %v3228
        %v4201 = vpop.f32.mrf.mxu0
        %v4202 = vadd.f32 %v4189, %v4201
        %v4203 = vpop.f32.mrf.mxu0
        %4204 = vdwg.mxu0
        %s4205 = smul.u32 2, 4
        %s4206 = smul.addr %s4205, 8
        %s4207 = scalar_lea.vmem [#allocation2], %s4206
        %v4208 = vld [vmem:[%s4207] sm:$0xff]
        %v4209 = vld [vmem:[%s4207 + $0x8] sm:$0xff]
        %v4210 = vld [vmem:[%s4207 + $0x10] sm:$0xff]
        %v4211 = vld [vmem:[%s4207 + $0x18] sm:$0xff]
        %v4212 = vadd.f32 %v4208, %v4020
        %v4213 = vadd.f32 %v4209, %v4046
        %v4214 = vadd.f32 %v4210, %v4072
        %v4215 = vadd.f32 %v4211, %v4098
        %s4216 = smul.u32 5, 4
        %s4217 = smul.addr %s4216, 8
        %s4218 = scalar_lea.vmem [#allocation3], %s4217
        %v4219 = vld [vmem:[%s4218] sm:$0xff]
        %v4220 = vld [vmem:[%s4218 + $0x8] sm:$0xff]
        %v4221 = vld [vmem:[%s4218 + $0x10] sm:$0xff]
        %v4222 = vld [vmem:[%s4218 + $0x18] sm:$0xff]
        %v4223 = vadd.f32 %v4219, %v4124
        %v4224 = vadd.f32 %v4220, %v4150
        %v4225 = vadd.f32 %v4221, %v4176
        %v4226 = vadd.f32 %v4222, %v4202
        %v4227 = vmul.f32 %v4212, 0.5
        %v4228 = vtanh.pop %v4227
        %v4229 = vmul.f32 %v4228, 0.5
        %v4230 = vadd.f32 %v4229, 0.5
        %v4231 = vmul.f32 %v4213, 0.5
        %v4232 = vtanh.pop %v4231
        %v4233 = vmul.f32 %v4232, 0.5
        %v4234 = vadd.f32 %v4233, 0.5
        %v4235 = vtanh.pop %v4214
        %v4236 = vmul.f32 %v4215, 0.5
        %v4237 = vtanh.pop %v4236
        %v4238 = vmul.f32 %v4237, 0.5
        %v4239 = vadd.f32 %v4238, 0.5
        %v4240 = vmul.f32 %v4234, %v3202
        %v4241 = vmul.f32 %v4230, %v4235
        %v4242 = vadd.f32 %v4240, %v4241
        %v4243 = vtanh.pop %v4242
        %v4244 = vmul.f32 %v4239, %v4243
        %v4245 = vmul.f32 %v4223, 0.5
        %v4246 = vtanh.pop %v4245
        %v4247 = vmul.f32 %v4246, 0.5
        %v4248 = vadd.f32 %v4247, 0.5
        %v4249 = vmul.f32 %v4224, 0.5
        %v4250 = vtanh.pop %v4249
        %v4251 = vmul.f32 %v4250, 0.5
        %v4252 = vadd.f32 %v4251, 0.5
        %v4253 = vtanh.pop %v4225
        %v4254 = vmul.f32 %v4226, 0.5
        %v4255 = vtanh.pop %v4254
        %v4256 = vmul.f32 %v4255, 0.5
        %v4257 = vadd.f32 %v4256, 0.5
        %v4258 = vmul.f32 %v4252, %v3220
        %v4259 = vmul.f32 %v4248, %v4253
        %v4260 = vadd.f32 %v4258, %v4259
        %v4261 = vtanh.pop %v4260
        %v4262 = vmul.f32 %v4257, %v4261
        %s4263 = scalar_lea.vmem %s376, 16 [#allocation14]
        %4264 = vst [vmem:[%s4263] sm:$0xff] %v4244
        %s4265 = scalar_lea.vmem %s383, 40 [#allocation15]
        %4266 = vst [vmem:[%s4265] sm:$0xff] %v4262
        %v4267 = vpack.c.bf16 %v4244, %v4244
        %v4268 = vpack.c.bf16 %v4262, %v4262
        %v4269 = vld [vmem:[#allocation13] sm:$0xff]
        %v4270 = vld [vmem:[#allocation13 + $0x8] sm:$0xff]
        %v4271 = vld [vmem:[#allocation13 + $0x10] sm:$0xff]
        %v4272 = vld [vmem:[#allocation13 + $0x18] sm:$0xff]
        %v4273 = vld [vmem:[#allocation13 + $0x20] sm:$0xff]
        %v4274 = vld [vmem:[#allocation13 + $0x28] sm:$0xff]
        %v4275 = vld [vmem:[#allocation13 + $0x30] sm:$0xff]
        %v4276 = vld [vmem:[#allocation13 + $0x38] sm:$0xff]
        %v4277 = vld [vmem:[#allocation13 + $0x40] sm:$0xff]
        %v4278 = vld [vmem:[#allocation13 + $0x48] sm:$0xff]
        %v4279 = vld [vmem:[#allocation13 + $0x50] sm:$0xff]
        %v4280 = vld [vmem:[#allocation13 + $0x58] sm:$0xff]
        %v4281 = vld [vmem:[#allocation13 + $0x60] sm:$0xff]
        %v4282 = vld [vmem:[#allocation13 + $0x68] sm:$0xff]
        %v4283 = vld [vmem:[#allocation13 + $0x70] sm:$0xff]
        %v4284 = vld [vmem:[#allocation13 + $0x78] sm:$0xff]
        %v4285 = vld [vmem:[#allocation13 + $0x80] sm:$0xff]
        %v4286 = vld [vmem:[#allocation13 + $0x88] sm:$0xff]
        %v4287 = vld [vmem:[#allocation13 + $0x90] sm:$0xff]
        %v4288 = vld [vmem:[#allocation13 + $0x98] sm:$0xff]
        %v4289 = vld [vmem:[#allocation13 + $0xa0] sm:$0xff]
        %v4290 = vld [vmem:[#allocation13 + $0xa8] sm:$0xff]
        %v4291 = vld [vmem:[#allocation13 + $0xb0] sm:$0xff]
        %v4292 = vld [vmem:[#allocation13 + $0xb8] sm:$0xff]
        %v4293 = vld [vmem:[#allocation13 + $0xc0] sm:$0xff]
        %v4294 = vld [vmem:[#allocation13 + $0xc8] sm:$0xff]
        %v4295 = vld [vmem:[#allocation13 + $0xd0] sm:$0xff]
        %v4296 = vld [vmem:[#allocation13 + $0xd8] sm:$0xff]
        %v4297 = vld [vmem:[#allocation13 + $0xe0] sm:$0xff]
        %v4298 = vld [vmem:[#allocation13 + $0xe8] sm:$0xff]
        %v4299 = vld [vmem:[#allocation13 + $0xf0] sm:$0xff]
        %v4300 = vld [vmem:[#allocation13 + $0xf8] sm:$0xff]
        %v4301 = vld [vmem:[#allocation13 + $0x100] sm:$0xff]
        %v4302 = vld [vmem:[#allocation13 + $0x108] sm:$0xff]
        %v4303 = vld [vmem:[#allocation13 + $0x110] sm:$0xff]
        %v4304 = vld [vmem:[#allocation13 + $0x118] sm:$0xff]
        %v4305 = vld [vmem:[#allocation13 + $0x120] sm:$0xff]
        %v4306 = vld [vmem:[#allocation13 + $0x128] sm:$0xff]
        %v4307 = vld [vmem:[#allocation13 + $0x130] sm:$0xff]
        %v4308 = vld [vmem:[#allocation13 + $0x138] sm:$0xff]
        %v4309 = vld [vmem:[#allocation13 + $0x140] sm:$0xff]
        %v4310 = vld [vmem:[#allocation13 + $0x148] sm:$0xff]
        %v4311 = vld [vmem:[#allocation13 + $0x150] sm:$0xff]
        %v4312 = vld [vmem:[#allocation13 + $0x158] sm:$0xff]
        %v4313 = vld [vmem:[#allocation13 + $0x160] sm:$0xff]
        %v4314 = vld [vmem:[#allocation13 + $0x168] sm:$0xff]
        %v4315 = vld [vmem:[#allocation13 + $0x170] sm:$0xff]
        %v4316 = vld [vmem:[#allocation13 + $0x178] sm:$0xff]
        %v4317 = vld [vmem:[#allocation13 + $0x180] sm:$0xff]
        %v4318 = vld [vmem:[#allocation13 + $0x188] sm:$0xff]
        %v4319 = vld [vmem:[#allocation13 + $0x190] sm:$0xff]
        %v4320 = vld [vmem:[#allocation13 + $0x198] sm:$0xff]
        %v4321 = vld [vmem:[#allocation13 + $0x1a0] sm:$0xff]
        %v4322 = vld [vmem:[#allocation13 + $0x1a8] sm:$0xff]
        %v4323 = vld [vmem:[#allocation13 + $0x1b0] sm:$0xff]
        %v4324 = vld [vmem:[#allocation13 + $0x1b8] sm:$0xff]
        %v4325 = vld [vmem:[#allocation13 + $0x1c0] sm:$0xff]
        %v4326 = vld [vmem:[#allocation13 + $0x1c8] sm:$0xff]
        %v4327 = vld [vmem:[#allocation13 + $0x1d0] sm:$0xff]
        %v4328 = vld [vmem:[#allocation13 + $0x1d8] sm:$0xff]
        %v4329 = vld [vmem:[#allocation13 + $0x1e0] sm:$0xff]
        %v4330 = vld [vmem:[#allocation13 + $0x1e8] sm:$0xff]
        %v4331 = vld [vmem:[#allocation13 + $0x1f0] sm:$0xff]
        %v4332 = vld [vmem:[#allocation13 + $0x1f8] sm:$0xff]
        %v4333 = vld [vmem:[#allocation13 + $0x200] sm:$0xff]
        %v4334 = vld [vmem:[#allocation13 + $0x208] sm:$0xff]
        %v4335 = vld [vmem:[#allocation13 + $0x210] sm:$0xff]
        %v4336 = vld [vmem:[#allocation13 + $0x218] sm:$0xff]
        %v4337 = vld [vmem:[#allocation13 + $0x220] sm:$0xff]
        %v4338 = vld [vmem:[#allocation13 + $0x228] sm:$0xff]
        %v4339 = vld [vmem:[#allocation13 + $0x230] sm:$0xff]
        %v4340 = vld [vmem:[#allocation13 + $0x238] sm:$0xff]
        %v4341 = vld [vmem:[#allocation13 + $0x240] sm:$0xff]
        %v4342 = vld [vmem:[#allocation13 + $0x248] sm:$0xff]
        %v4343 = vld [vmem:[#allocation13 + $0x250] sm:$0xff]
        %v4344 = vld [vmem:[#allocation13 + $0x258] sm:$0xff]
        %v4345 = vld [vmem:[#allocation13 + $0x260] sm:$0xff]
        %v4346 = vld [vmem:[#allocation13 + $0x268] sm:$0xff]
        %v4347 = vld [vmem:[#allocation13 + $0x270] sm:$0xff]
        %v4348 = vld [vmem:[#allocation13 + $0x278] sm:$0xff]
        %v4349 = vld [vmem:[#allocation13 + $0x280] sm:$0xff]
        %v4350 = vld [vmem:[#allocation13 + $0x288] sm:$0xff]
        %v4351 = vld [vmem:[#allocation13 + $0x290] sm:$0xff]
        %v4352 = vld [vmem:[#allocation13 + $0x298] sm:$0xff]
        %v4353 = vld [vmem:[#allocation13 + $0x2a0] sm:$0xff]
        %v4354 = vld [vmem:[#allocation13 + $0x2a8] sm:$0xff]
        %v4355 = vld [vmem:[#allocation13 + $0x2b0] sm:$0xff]
        %v4356 = vld [vmem:[#allocation13 + $0x2b8] sm:$0xff]
        %v4357 = vld [vmem:[#allocation13 + $0x2c0] sm:$0xff]
        %v4358 = vld [vmem:[#allocation13 + $0x2c8] sm:$0xff]
        %v4359 = vld [vmem:[#allocation13 + $0x2d0] sm:$0xff]
        %v4360 = vld [vmem:[#allocation13 + $0x2d8] sm:$0xff]
        %v4361 = vld [vmem:[#allocation13 + $0x2e0] sm:$0xff]
        %v4362 = vld [vmem:[#allocation13 + $0x2e8] sm:$0xff]
        %v4363 = vld [vmem:[#allocation13 + $0x2f0] sm:$0xff]
        %v4364 = vld [vmem:[#allocation13 + $0x2f8] sm:$0xff]
        %v4365 = vld [vmem:[#allocation13 + $0x300] sm:$0xff]
        %v4366 = vld [vmem:[#allocation13 + $0x308] sm:$0xff]
        %v4367 = vld [vmem:[#allocation13 + $0x310] sm:$0xff]
        %v4368 = vld [vmem:[#allocation13 + $0x318] sm:$0xff]
        %v4369 = vld [vmem:[#allocation13 + $0x320] sm:$0xff]
        %v4370 = vld [vmem:[#allocation13 + $0x328] sm:$0xff]
        %v4371 = vld [vmem:[#allocation13 + $0x330] sm:$0xff]
        %v4372 = vld [vmem:[#allocation13 + $0x338] sm:$0xff]
        %v4373 = vld [vmem:[#allocation13 + $0x340] sm:$0xff]
        %v4374 = vld [vmem:[#allocation13 + $0x348] sm:$0xff]
        %v4375 = vld [vmem:[#allocation13 + $0x350] sm:$0xff]
        %v4376 = vld [vmem:[#allocation13 + $0x358] sm:$0xff]
        %v4377 = vld [vmem:[#allocation13 + $0x360] sm:$0xff]
        %v4378 = vld [vmem:[#allocation13 + $0x368] sm:$0xff]
        %v4379 = vld [vmem:[#allocation13 + $0x370] sm:$0xff]
        %v4380 = vld [vmem:[#allocation13 + $0x378] sm:$0xff]
        %v4381 = vld [vmem:[#allocation13 + $0x380] sm:$0xff]
        %v4382 = vld [vmem:[#allocation13 + $0x388] sm:$0xff]
        %v4383 = vld [vmem:[#allocation13 + $0x390] sm:$0xff]
        %v4384 = vld [vmem:[#allocation13 + $0x398] sm:$0xff]
        %v4385 = vld [vmem:[#allocation13 + $0x3a0] sm:$0xff]
        %v4386 = vld [vmem:[#allocation13 + $0x3a8] sm:$0xff]
        %v4387 = vld [vmem:[#allocation13 + $0x3b0] sm:$0xff]
        %v4388 = vld [vmem:[#allocation13 + $0x3b8] sm:$0xff]
        %v4389 = vld [vmem:[#allocation13 + $0x3c0] sm:$0xff]
        %v4390 = vld [vmem:[#allocation13 + $0x3c8] sm:$0xff]
        %v4391 = vld [vmem:[#allocation13 + $0x3d0] sm:$0xff]
        %v4392 = vld [vmem:[#allocation13 + $0x3d8] sm:$0xff]
        %v4393 = vld [vmem:[#allocation13 + $0x3e0] sm:$0xff]
        %v4394 = vld [vmem:[#allocation13 + $0x3e8] sm:$0xff]
        %v4395 = vld [vmem:[#allocation13 + $0x3f0] sm:$0xff]
        %v4396 = vld [vmem:[#allocation13 + $0x3f8] sm:$0xff]
        %v4525 = vunpack.c.l.b16 %v4269
        %v4526 = vunpack.c.h.b16 %v4269
        %v4527 = vunpack.c.l.b16 %v4270
        %v4528 = vunpack.c.h.b16 %v4270
        %v4529 = vunpack.c.l.b16 %v4271
        %v4530 = vunpack.c.h.b16 %v4271
        %v4531 = vunpack.c.l.b16 %v4272
        %v4532 = vunpack.c.h.b16 %v4272
        %v4533 = vunpack.c.l.b16 %v4273
        %v4534 = vunpack.c.h.b16 %v4273
        %v4535 = vunpack.c.l.b16 %v4274
        %v4536 = vunpack.c.h.b16 %v4274
        %v4537 = vunpack.c.l.b16 %v4275
        %v4538 = vunpack.c.h.b16 %v4275
        %v4539 = vunpack.c.l.b16 %v4276
        %v4540 = vunpack.c.h.b16 %v4276
        %v4541 = vunpack.c.l.b16 %v4277
        %v4542 = vunpack.c.h.b16 %v4277
        %v4543 = vunpack.c.l.b16 %v4278
        %v4544 = vunpack.c.h.b16 %v4278
        %v4545 = vunpack.c.l.b16 %v4279
        %v4546 = vunpack.c.h.b16 %v4279
        %v4547 = vunpack.c.l.b16 %v4280
        %v4548 = vunpack.c.h.b16 %v4280
        %v4549 = vunpack.c.l.b16 %v4281
        %v4550 = vunpack.c.h.b16 %v4281
        %v4551 = vunpack.c.l.b16 %v4282
        %v4552 = vunpack.c.h.b16 %v4282
        %v4553 = vunpack.c.l.b16 %v4283
        %v4554 = vunpack.c.h.b16 %v4283
        %v4555 = vunpack.c.l.b16 %v4284
        %v4556 = vunpack.c.h.b16 %v4284
        %v4557 = vunpack.c.l.b16 %v4285
        %v4558 = vunpack.c.h.b16 %v4285
        %v4559 = vunpack.c.l.b16 %v4286
        %v4560 = vunpack.c.h.b16 %v4286
        %v4561 = vunpack.c.l.b16 %v4287
        %v4562 = vunpack.c.h.b16 %v4287
        %v4563 = vunpack.c.l.b16 %v4288
        %v4564 = vunpack.c.h.b16 %v4288
        %v4565 = vunpack.c.l.b16 %v4289
        %v4566 = vunpack.c.h.b16 %v4289
        %v4567 = vunpack.c.l.b16 %v4290
        %v4568 = vunpack.c.h.b16 %v4290
        %v4569 = vunpack.c.l.b16 %v4291
        %v4570 = vunpack.c.h.b16 %v4291
        %v4571 = vunpack.c.l.b16 %v4292
        %v4572 = vunpack.c.h.b16 %v4292
        %v4573 = vunpack.c.l.b16 %v4293
        %v4574 = vunpack.c.h.b16 %v4293
        %v4575 = vunpack.c.l.b16 %v4294
        %v4576 = vunpack.c.h.b16 %v4294
        %v4577 = vunpack.c.l.b16 %v4295
        %v4578 = vunpack.c.h.b16 %v4295
        %v4579 = vunpack.c.l.b16 %v4296
        %v4580 = vunpack.c.h.b16 %v4296
        %v4581 = vunpack.c.l.b16 %v4297
        %v4582 = vunpack.c.h.b16 %v4297
        %v4583 = vunpack.c.l.b16 %v4298
        %v4584 = vunpack.c.h.b16 %v4298
        %v4585 = vunpack.c.l.b16 %v4299
        %v4586 = vunpack.c.h.b16 %v4299
        %v4587 = vunpack.c.l.b16 %v4300
        %v4588 = vunpack.c.h.b16 %v4300
        %v4589 = vunpack.c.l.b16 %v4301
        %v4590 = vunpack.c.h.b16 %v4301
        %v4591 = vunpack.c.l.b16 %v4302
        %v4592 = vunpack.c.h.b16 %v4302
        %v4593 = vunpack.c.l.b16 %v4303
        %v4594 = vunpack.c.h.b16 %v4303
        %v4595 = vunpack.c.l.b16 %v4304
        %v4596 = vunpack.c.h.b16 %v4304
        %v4597 = vunpack.c.l.b16 %v4305
        %v4598 = vunpack.c.h.b16 %v4305
        %v4599 = vunpack.c.l.b16 %v4306
        %v4600 = vunpack.c.h.b16 %v4306
        %v4601 = vunpack.c.l.b16 %v4307
        %v4602 = vunpack.c.h.b16 %v4307
        %v4603 = vunpack.c.l.b16 %v4308
        %v4604 = vunpack.c.h.b16 %v4308
        %v4605 = vunpack.c.l.b16 %v4309
        %v4606 = vunpack.c.h.b16 %v4309
        %v4607 = vunpack.c.l.b16 %v4310
        %v4608 = vunpack.c.h.b16 %v4310
        %v4609 = vunpack.c.l.b16 %v4311
        %v4610 = vunpack.c.h.b16 %v4311
        %v4611 = vunpack.c.l.b16 %v4312
        %v4612 = vunpack.c.h.b16 %v4312
        %v4613 = vunpack.c.l.b16 %v4313
        %v4614 = vunpack.c.h.b16 %v4313
        %v4615 = vunpack.c.l.b16 %v4314
        %v4616 = vunpack.c.h.b16 %v4314
        %v4617 = vunpack.c.l.b16 %v4315
        %v4618 = vunpack.c.h.b16 %v4315
        %v4619 = vunpack.c.l.b16 %v4316
        %v4620 = vunpack.c.h.b16 %v4316
        %v4621 = vunpack.c.l.b16 %v4317
        %v4622 = vunpack.c.h.b16 %v4317
        %v4623 = vunpack.c.l.b16 %v4318
        %v4624 = vunpack.c.h.b16 %v4318
        %v4625 = vunpack.c.l.b16 %v4319
        %v4626 = vunpack.c.h.b16 %v4319
        %v4627 = vunpack.c.l.b16 %v4320
        %v4628 = vunpack.c.h.b16 %v4320
        %v4629 = vunpack.c.l.b16 %v4321
        %v4630 = vunpack.c.h.b16 %v4321
        %v4631 = vunpack.c.l.b16 %v4322
        %v4632 = vunpack.c.h.b16 %v4322
        %v4633 = vunpack.c.l.b16 %v4323
        %v4634 = vunpack.c.h.b16 %v4323
        %v4635 = vunpack.c.l.b16 %v4324
        %v4636 = vunpack.c.h.b16 %v4324
        %v4637 = vunpack.c.l.b16 %v4325
        %v4638 = vunpack.c.h.b16 %v4325
        %v4639 = vunpack.c.l.b16 %v4326
        %v4640 = vunpack.c.h.b16 %v4326
        %v4641 = vunpack.c.l.b16 %v4327
        %v4642 = vunpack.c.h.b16 %v4327
        %v4643 = vunpack.c.l.b16 %v4328
        %v4644 = vunpack.c.h.b16 %v4328
        %v4645 = vunpack.c.l.b16 %v4329
        %v4646 = vunpack.c.h.b16 %v4329
        %v4647 = vunpack.c.l.b16 %v4330
        %v4648 = vunpack.c.h.b16 %v4330
        %v4649 = vunpack.c.l.b16 %v4331
        %v4650 = vunpack.c.h.b16 %v4331
        %v4651 = vunpack.c.l.b16 %v4332
        %v4652 = vunpack.c.h.b16 %v4332
        %v4653 = vunpack.c.l.b16 %v4333
        %v4654 = vunpack.c.h.b16 %v4333
        %v4655 = vunpack.c.l.b16 %v4334
        %v4656 = vunpack.c.h.b16 %v4334
        %v4657 = vunpack.c.l.b16 %v4335
        %v4658 = vunpack.c.h.b16 %v4335
        %v4659 = vunpack.c.l.b16 %v4336
        %v4660 = vunpack.c.h.b16 %v4336
        %v4661 = vunpack.c.l.b16 %v4337
        %v4662 = vunpack.c.h.b16 %v4337
        %v4663 = vunpack.c.l.b16 %v4338
        %v4664 = vunpack.c.h.b16 %v4338
        %v4665 = vunpack.c.l.b16 %v4339
        %v4666 = vunpack.c.h.b16 %v4339
        %v4667 = vunpack.c.l.b16 %v4340
        %v4668 = vunpack.c.h.b16 %v4340
        %v4669 = vunpack.c.l.b16 %v4341
        %v4670 = vunpack.c.h.b16 %v4341
        %v4671 = vunpack.c.l.b16 %v4342
        %v4672 = vunpack.c.h.b16 %v4342
        %v4673 = vunpack.c.l.b16 %v4343
        %v4674 = vunpack.c.h.b16 %v4343
        %v4675 = vunpack.c.l.b16 %v4344
        %v4676 = vunpack.c.h.b16 %v4344
        %v4677 = vunpack.c.l.b16 %v4345
        %v4678 = vunpack.c.h.b16 %v4345
        %v4679 = vunpack.c.l.b16 %v4346
        %v4680 = vunpack.c.h.b16 %v4346
        %v4681 = vunpack.c.l.b16 %v4347
        %v4682 = vunpack.c.h.b16 %v4347
        %v4683 = vunpack.c.l.b16 %v4348
        %v4684 = vunpack.c.h.b16 %v4348
        %v4685 = vunpack.c.l.b16 %v4349
        %v4686 = vunpack.c.h.b16 %v4349
        %v4687 = vunpack.c.l.b16 %v4350
        %v4688 = vunpack.c.h.b16 %v4350
        %v4689 = vunpack.c.l.b16 %v4351
        %v4690 = vunpack.c.h.b16 %v4351
        %v4691 = vunpack.c.l.b16 %v4352
        %v4692 = vunpack.c.h.b16 %v4352
        %v4693 = vunpack.c.l.b16 %v4353
        %v4694 = vunpack.c.h.b16 %v4353
        %v4695 = vunpack.c.l.b16 %v4354
        %v4696 = vunpack.c.h.b16 %v4354
        %v4697 = vunpack.c.l.b16 %v4355
        %v4698 = vunpack.c.h.b16 %v4355
        %v4699 = vunpack.c.l.b16 %v4356
        %v4700 = vunpack.c.h.b16 %v4356
        %v4701 = vunpack.c.l.b16 %v4357
        %v4702 = vunpack.c.h.b16 %v4357
        %v4703 = vunpack.c.l.b16 %v4358
        %v4704 = vunpack.c.h.b16 %v4358
        %v4705 = vunpack.c.l.b16 %v4359
        %v4706 = vunpack.c.h.b16 %v4359
        %v4707 = vunpack.c.l.b16 %v4360
        %v4708 = vunpack.c.h.b16 %v4360
        %v4709 = vunpack.c.l.b16 %v4361
        %v4710 = vunpack.c.h.b16 %v4361
        %v4711 = vunpack.c.l.b16 %v4362
        %v4712 = vunpack.c.h.b16 %v4362
        %v4713 = vunpack.c.l.b16 %v4363
        %v4714 = vunpack.c.h.b16 %v4363
        %v4715 = vunpack.c.l.b16 %v4364
        %v4716 = vunpack.c.h.b16 %v4364
        %v4717 = vunpack.c.l.b16 %v4365
        %v4718 = vunpack.c.h.b16 %v4365
        %v4719 = vunpack.c.l.b16 %v4366
        %v4720 = vunpack.c.h.b16 %v4366
        %v4721 = vunpack.c.l.b16 %v4367
        %v4722 = vunpack.c.h.b16 %v4367
        %v4723 = vunpack.c.l.b16 %v4368
        %v4724 = vunpack.c.h.b16 %v4368
        %v4725 = vunpack.c.l.b16 %v4369
        %v4726 = vunpack.c.h.b16 %v4369
        %v4727 = vunpack.c.l.b16 %v4370
        %v4728 = vunpack.c.h.b16 %v4370
        %v4729 = vunpack.c.l.b16 %v4371
        %v4730 = vunpack.c.h.b16 %v4371
        %v4731 = vunpack.c.l.b16 %v4372
        %v4732 = vunpack.c.h.b16 %v4372
        %v4733 = vunpack.c.l.b16 %v4373
        %v4734 = vunpack.c.h.b16 %v4373
        %v4735 = vunpack.c.l.b16 %v4374
        %v4736 = vunpack.c.h.b16 %v4374
        %v4737 = vunpack.c.l.b16 %v4375
        %v4738 = vunpack.c.h.b16 %v4375
        %v4739 = vunpack.c.l.b16 %v4376
        %v4740 = vunpack.c.h.b16 %v4376
        %v4741 = vunpack.c.l.b16 %v4377
        %v4742 = vunpack.c.h.b16 %v4377
        %v4743 = vunpack.c.l.b16 %v4378
        %v4744 = vunpack.c.h.b16 %v4378
        %v4745 = vunpack.c.l.b16 %v4379
        %v4746 = vunpack.c.h.b16 %v4379
        %v4747 = vunpack.c.l.b16 %v4380
        %v4748 = vunpack.c.h.b16 %v4380
        %v4749 = vunpack.c.l.b16 %v4381
        %v4750 = vunpack.c.h.b16 %v4381
        %v4751 = vunpack.c.l.b16 %v4382
        %v4752 = vunpack.c.h.b16 %v4382
        %v4753 = vunpack.c.l.b16 %v4383
        %v4754 = vunpack.c.h.b16 %v4383
        %v4755 = vunpack.c.l.b16 %v4384
        %v4756 = vunpack.c.h.b16 %v4384
        %v4757 = vunpack.c.l.b16 %v4385
        %v4758 = vunpack.c.h.b16 %v4385
        %v4759 = vunpack.c.l.b16 %v4386
        %v4760 = vunpack.c.h.b16 %v4386
        %v4761 = vunpack.c.l.b16 %v4387
        %v4762 = vunpack.c.h.b16 %v4387
        %v4763 = vunpack.c.l.b16 %v4388
        %v4764 = vunpack.c.h.b16 %v4388
        %v4765 = vunpack.c.l.b16 %v4389
        %v4766 = vunpack.c.h.b16 %v4389
        %v4767 = vunpack.c.l.b16 %v4390
        %v4768 = vunpack.c.h.b16 %v4390
        %v4769 = vunpack.c.l.b16 %v4391
        %v4770 = vunpack.c.h.b16 %v4391
        %v4771 = vunpack.c.l.b16 %v4392
        %v4772 = vunpack.c.h.b16 %v4392
        %v4773 = vunpack.c.l.b16 %v4393
        %v4774 = vunpack.c.h.b16 %v4393
        %v4775 = vunpack.c.l.b16 %v4394
        %v4776 = vunpack.c.h.b16 %v4394
        %v4777 = vunpack.c.l.b16 %v4395
        %v4778 = vunpack.c.h.b16 %v4395
        %v4779 = vunpack.c.l.b16 %v4396
        %v4780 = vunpack.c.h.b16 %v4396
        %v4781 = vpack.c.b16 %v4533, %v4525
        %v4782 = vpack.c.b16 %v4534, %v4526
        %v4783 = vpack.c.b16 %v4535, %v4527
        %v4784 = vpack.c.b16 %v4536, %v4528
        %v4785 = vpack.c.b16 %v4537, %v4529
        %v4786 = vpack.c.b16 %v4538, %v4530
        %v4787 = vpack.c.b16 %v4539, %v4531
        %v4788 = vpack.c.b16 %v4540, %v4532
        %v4789 = vpack.c.b16 %v4549, %v4541
        %v4790 = vpack.c.b16 %v4550, %v4542
        %v4791 = vpack.c.b16 %v4551, %v4543
        %v4792 = vpack.c.b16 %v4552, %v4544
        %v4793 = vpack.c.b16 %v4553, %v4545
        %v4794 = vpack.c.b16 %v4554, %v4546
        %v4795 = vpack.c.b16 %v4555, %v4547
        %v4796 = vpack.c.b16 %v4556, %v4548
        %v4797 = vpack.c.b16 %v4565, %v4557
        %v4798 = vpack.c.b16 %v4566, %v4558
        %v4799 = vpack.c.b16 %v4567, %v4559
        %v4800 = vpack.c.b16 %v4568, %v4560
        %v4801 = vpack.c.b16 %v4569, %v4561
        %v4802 = vpack.c.b16 %v4570, %v4562
        %v4803 = vpack.c.b16 %v4571, %v4563
        %v4804 = vpack.c.b16 %v4572, %v4564
        %v4805 = vpack.c.b16 %v4581, %v4573
        %v4806 = vpack.c.b16 %v4582, %v4574
        %v4807 = vpack.c.b16 %v4583, %v4575
        %v4808 = vpack.c.b16 %v4584, %v4576
        %v4809 = vpack.c.b16 %v4585, %v4577
        %v4810 = vpack.c.b16 %v4586, %v4578
        %v4811 = vpack.c.b16 %v4587, %v4579
        %v4812 = vpack.c.b16 %v4588, %v4580
        %v4813 = vpack.c.b16 %v4597, %v4589
        %v4814 = vpack.c.b16 %v4598, %v4590
        %v4815 = vpack.c.b16 %v4599, %v4591
        %v4816 = vpack.c.b16 %v4600, %v4592
        %v4817 = vpack.c.b16 %v4601, %v4593
        %v4818 = vpack.c.b16 %v4602, %v4594
        %v4819 = vpack.c.b16 %v4603, %v4595
        %v4820 = vpack.c.b16 %v4604, %v4596
        %v4821 = vpack.c.b16 %v4613, %v4605
        %v4822 = vpack.c.b16 %v4614, %v4606
        %v4823 = vpack.c.b16 %v4615, %v4607
        %v4824 = vpack.c.b16 %v4616, %v4608
        %v4825 = vpack.c.b16 %v4617, %v4609
        %v4826 = vpack.c.b16 %v4618, %v4610
        %v4827 = vpack.c.b16 %v4619, %v4611
        %v4828 = vpack.c.b16 %v4620, %v4612
        %v4829 = vpack.c.b16 %v4629, %v4621
        %v4830 = vpack.c.b16 %v4630, %v4622
        %v4831 = vpack.c.b16 %v4631, %v4623
        %v4832 = vpack.c.b16 %v4632, %v4624
        %v4833 = vpack.c.b16 %v4633, %v4625
        %v4834 = vpack.c.b16 %v4634, %v4626
        %v4835 = vpack.c.b16 %v4635, %v4627
        %v4836 = vpack.c.b16 %v4636, %v4628
        %v4837 = vpack.c.b16 %v4645, %v4637
        %v4838 = vpack.c.b16 %v4646, %v4638
        %v4839 = vpack.c.b16 %v4647, %v4639
        %v4840 = vpack.c.b16 %v4648, %v4640
        %v4841 = vpack.c.b16 %v4649, %v4641
        %v4842 = vpack.c.b16 %v4650, %v4642
        %v4843 = vpack.c.b16 %v4651, %v4643
        %v4844 = vpack.c.b16 %v4652, %v4644
        %v4845 = vpack.c.b16 %v4661, %v4653
        %v4846 = vpack.c.b16 %v4662, %v4654
        %v4847 = vpack.c.b16 %v4663, %v4655
        %v4848 = vpack.c.b16 %v4664, %v4656
        %v4849 = vpack.c.b16 %v4665, %v4657
        %v4850 = vpack.c.b16 %v4666, %v4658
        %v4851 = vpack.c.b16 %v4667, %v4659
        %v4852 = vpack.c.b16 %v4668, %v4660
        %v4853 = vpack.c.b16 %v4677, %v4669
        %v4854 = vpack.c.b16 %v4678, %v4670
        %v4855 = vpack.c.b16 %v4679, %v4671
        %v4856 = vpack.c.b16 %v4680, %v4672
        %v4857 = vpack.c.b16 %v4681, %v4673
        %v4858 = vpack.c.b16 %v4682, %v4674
        %v4859 = vpack.c.b16 %v4683, %v4675
        %v4860 = vpack.c.b16 %v4684, %v4676
        %v4861 = vpack.c.b16 %v4693, %v4685
        %v4862 = vpack.c.b16 %v4694, %v4686
        %v4863 = vpack.c.b16 %v4695, %v4687
        %v4864 = vpack.c.b16 %v4696, %v4688
        %v4865 = vpack.c.b16 %v4697, %v4689
        %v4866 = vpack.c.b16 %v4698, %v4690
        %v4867 = vpack.c.b16 %v4699, %v4691
        %v4868 = vpack.c.b16 %v4700, %v4692
        %v4869 = vpack.c.b16 %v4709, %v4701
        %v4870 = vpack.c.b16 %v4710, %v4702
        %v4871 = vpack.c.b16 %v4711, %v4703
        %v4872 = vpack.c.b16 %v4712, %v4704
        %v4873 = vpack.c.b16 %v4713, %v4705
        %v4874 = vpack.c.b16 %v4714, %v4706
        %v4875 = vpack.c.b16 %v4715, %v4707
        %v4876 = vpack.c.b16 %v4716, %v4708
        %v4877 = vpack.c.b16 %v4725, %v4717
        %v4878 = vpack.c.b16 %v4726, %v4718
        %v4879 = vpack.c.b16 %v4727, %v4719
        %v4880 = vpack.c.b16 %v4728, %v4720
        %v4881 = vpack.c.b16 %v4729, %v4721
        %v4882 = vpack.c.b16 %v4730, %v4722
        %v4883 = vpack.c.b16 %v4731, %v4723
        %v4884 = vpack.c.b16 %v4732, %v4724
        %v4885 = vpack.c.b16 %v4741, %v4733
        %v4886 = vpack.c.b16 %v4742, %v4734
        %v4887 = vpack.c.b16 %v4743, %v4735
        %v4888 = vpack.c.b16 %v4744, %v4736
        %v4889 = vpack.c.b16 %v4745, %v4737
        %v4890 = vpack.c.b16 %v4746, %v4738
        %v4891 = vpack.c.b16 %v4747, %v4739
        %v4892 = vpack.c.b16 %v4748, %v4740
        %v4893 = vpack.c.b16 %v4757, %v4749
        %v4894 = vpack.c.b16 %v4758, %v4750
        %v4895 = vpack.c.b16 %v4759, %v4751
        %v4896 = vpack.c.b16 %v4760, %v4752
        %v4897 = vpack.c.b16 %v4761, %v4753
        %v4898 = vpack.c.b16 %v4762, %v4754
        %v4899 = vpack.c.b16 %v4763, %v4755
        %v4900 = vpack.c.b16 %v4764, %v4756
        %v4901 = vpack.c.b16 %v4773, %v4765
        %v4902 = vpack.c.b16 %v4774, %v4766
        %v4903 = vpack.c.b16 %v4775, %v4767
        %v4904 = vpack.c.b16 %v4776, %v4768
        %v4905 = vpack.c.b16 %v4777, %v4769
        %v4906 = vpack.c.b16 %v4778, %v4770
        %v4907 = vpack.c.b16 %v4779, %v4771
        %v4908 = vpack.c.b16 %v4780, %v4772
        %5037 = vmatpush.bf16.msra.mxu0 %v4837
        %5038 = vmatpush.bf16.msra.mxu0 %v4829
        %5039 = vmatpush.bf16.msra.mxu0 %v4821
        %5040 = vmatpush.bf16.msra.mxu0 %v4813
        %5041 = vmatpush.bf16.msra.mxu0 %v4805
        %5042 = vmatpush.bf16.msra.mxu0 %v4797
        %5043 = vmatpush.bf16.msra.mxu0 %v4789
        %5044 = vmatpush.bf16.msra.mxu0 %v4781
        %5045 = vmatmul.bf16.gmra.mxu0 %v4267
        %v5046 = vpop.f32.mrf.mxu0
        %v5047 = vadd.f32 0.0, %v5046
        %v5048 = vpop.f32.mrf.mxu0
        %5049 = vdwg.mxu0
        %5050 = vmatpush.bf16.msra.mxu0 %v4901
        %5051 = vmatpush.bf16.msra.mxu0 %v4893
        %5052 = vmatpush.bf16.msra.mxu0 %v4885
        %5053 = vmatpush.bf16.msra.mxu0 %v4877
        %5054 = vmatpush.bf16.msra.mxu0 %v4869
        %5055 = vmatpush.bf16.msra.mxu0 %v4861
        %5056 = vmatpush.bf16.msra.mxu0 %v4853
        %5057 = vmatpush.bf16.msra.mxu0 %v4845
        %5058 = vmatmul.bf16.gmra.mxu0 %v4268
        %v5059 = vpop.f32.mrf.mxu0
        %v5060 = vadd.f32 %v5047, %v5059
        %v5061 = vpop.f32.mrf.mxu0
        %5062 = vdwg.mxu0
        %5063 = vmatpush.bf16.msra.mxu0 %v4838
        %5064 = vmatpush.bf16.msra.mxu0 %v4830
        %5065 = vmatpush.bf16.msra.mxu0 %v4822
        %5066 = vmatpush.bf16.msra.mxu0 %v4814
        %5067 = vmatpush.bf16.msra.mxu0 %v4806
        %5068 = vmatpush.bf16.msra.mxu0 %v4798
        %5069 = vmatpush.bf16.msra.mxu0 %v4790
        %5070 = vmatpush.bf16.msra.mxu0 %v4782
        %5071 = vmatmul.bf16.gmra.mxu0 %v4267
        %v5072 = vpop.f32.mrf.mxu0
        %v5073 = vadd.f32 0.0, %v5072
        %v5074 = vpop.f32.mrf.mxu0
        %5075 = vdwg.mxu0
        %5076 = vmatpush.bf16.msra.mxu0 %v4902
        %5077 = vmatpush.bf16.msra.mxu0 %v4894
        %5078 = vmatpush.bf16.msra.mxu0 %v4886
        %5079 = vmatpush.bf16.msra.mxu0 %v4878
        %5080 = vmatpush.bf16.msra.mxu0 %v4870
        %5081 = vmatpush.bf16.msra.mxu0 %v4862
        %5082 = vmatpush.bf16.msra.mxu0 %v4854
        %5083 = vmatpush.bf16.msra.mxu0 %v4846
        %5084 = vmatmul.bf16.gmra.mxu0 %v4268
        %v5085 = vpop.f32.mrf.mxu0
        %v5086 = vadd.f32 %v5073, %v5085
        %v5087 = vpop.f32.mrf.mxu0
        %5088 = vdwg.mxu0
        %5089 = vmatpush.bf16.msra.mxu0 %v4839
        %5090 = vmatpush.bf16.msra.mxu0 %v4831
        %5091 = vmatpush.bf16.msra.mxu0 %v4823
        %5092 = vmatpush.bf16.msra.mxu0 %v4815
        %5093 = vmatpush.bf16.msra.mxu0 %v4807
        %5094 = vmatpush.bf16.msra.mxu0 %v4799
        %5095 = vmatpush.bf16.msra.mxu0 %v4791
        %5096 = vmatpush.bf16.msra.mxu0 %v4783
        %5097 = vmatmul.bf16.gmra.mxu0 %v4267
        %v5098 = vpop.f32.mrf.mxu0
        %v5099 = vadd.f32 0.0, %v5098
        %v5100 = vpop.f32.mrf.mxu0
        %5101 = vdwg.mxu0
        %5102 = vmatpush.bf16.msra.mxu0 %v4903
        %5103 = vmatpush.bf16.msra.mxu0 %v4895
        %5104 = vmatpush.bf16.msra.mxu0 %v4887
        %5105 = vmatpush.bf16.msra.mxu0 %v4879
        %5106 = vmatpush.bf16.msra.mxu0 %v4871
        %5107 = vmatpush.bf16.msra.mxu0 %v4863
        %5108 = vmatpush.bf16.msra.mxu0 %v4855
        %5109 = vmatpush.bf16.msra.mxu0 %v4847
        %5110 = vmatmul.bf16.gmra.mxu0 %v4268
        %v5111 = vpop.f32.mrf.mxu0
        %v5112 = vadd.f32 %v5099, %v5111
        %v5113 = vpop.f32.mrf.mxu0
        %5114 = vdwg.mxu0
        %5115 = vmatpush.bf16.msra.mxu0 %v4840
        %5116 = vmatpush.bf16.msra.mxu0 %v4832
        %5117 = vmatpush.bf16.msra.mxu0 %v4824
        %5118 = vmatpush.bf16.msra.mxu0 %v4816
        %5119 = vmatpush.bf16.msra.mxu0 %v4808
        %5120 = vmatpush.bf16.msra.mxu0 %v4800
        %5121 = vmatpush.bf16.msra.mxu0 %v4792
        %5122 = vmatpush.bf16.msra.mxu0 %v4784
        %5123 = vmatmul.bf16.gmra.mxu0 %v4267
        %v5124 = vpop.f32.mrf.mxu0
        %v5125 = vadd.f32 0.0, %v5124
        %v5126 = vpop.f32.mrf.mxu0
        %5127 = vdwg.mxu0
        %5128 = vmatpush.bf16.msra.mxu0 %v4904
        %5129 = vmatpush.bf16.msra.mxu0 %v4896
        %5130 = vmatpush.bf16.msra.mxu0 %v4888
        %5131 = vmatpush.bf16.msra.mxu0 %v4880
        %5132 = vmatpush.bf16.msra.mxu0 %v4872
        %5133 = vmatpush.bf16.msra.mxu0 %v4864
        %5134 = vmatpush.bf16.msra.mxu0 %v4856
        %5135 = vmatpush.bf16.msra.mxu0 %v4848
        %5136 = vmatmul.bf16.gmra.mxu0 %v4268
        %v5137 = vpop.f32.mrf.mxu0
        %v5138 = vadd.f32 %v5125, %v5137
        %v5139 = vpop.f32.mrf.mxu0
        %5140 = vdwg.mxu0
        %5141 = vmatpush.bf16.msra.mxu0 %v4841
        %5142 = vmatpush.bf16.msra.mxu0 %v4833
        %5143 = vmatpush.bf16.msra.mxu0 %v4825
        %5144 = vmatpush.bf16.msra.mxu0 %v4817
        %5145 = vmatpush.bf16.msra.mxu0 %v4809
        %5146 = vmatpush.bf16.msra.mxu0 %v4801
        %5147 = vmatpush.bf16.msra.mxu0 %v4793
        %5148 = vmatpush.bf16.msra.mxu0 %v4785
        %5149 = vmatmul.bf16.gmra.mxu0 %v4267
        %v5150 = vpop.f32.mrf.mxu0
        %v5151 = vadd.f32 0.0, %v5150
        %v5152 = vpop.f32.mrf.mxu0
        %5153 = vdwg.mxu0
        %5154 = vmatpush.bf16.msra.mxu0 %v4905
        %5155 = vmatpush.bf16.msra.mxu0 %v4897
        %5156 = vmatpush.bf16.msra.mxu0 %v4889
        %5157 = vmatpush.bf16.msra.mxu0 %v4881
        %5158 = vmatpush.bf16.msra.mxu0 %v4873
        %5159 = vmatpush.bf16.msra.mxu0 %v4865
        %5160 = vmatpush.bf16.msra.mxu0 %v4857
        %5161 = vmatpush.bf16.msra.mxu0 %v4849
        %5162 = vmatmul.bf16.gmra.mxu0 %v4268
        %v5163 = vpop.f32.mrf.mxu0
        %v5164 = vadd.f32 %v5151, %v5163
        %v5165 = vpop.f32.mrf.mxu0
        %5166 = vdwg.mxu0
        %5167 = vmatpush.bf16.msra.mxu0 %v4842
        %5168 = vmatpush.bf16.msra.mxu0 %v4834
        %5169 = vmatpush.bf16.msra.mxu0 %v4826
        %5170 = vmatpush.bf16.msra.mxu0 %v4818
        %5171 = vmatpush.bf16.msra.mxu0 %v4810
        %5172 = vmatpush.bf16.msra.mxu0 %v4802
        %5173 = vmatpush.bf16.msra.mxu0 %v4794
        %5174 = vmatpush.bf16.msra.mxu0 %v4786
        %5175 = vmatmul.bf16.gmra.mxu0 %v4267
        %v5176 = vpop.f32.mrf.mxu0
        %v5177 = vadd.f32 0.0, %v5176
        %v5178 = vpop.f32.mrf.mxu0
        %5179 = vdwg.mxu0
        %5180 = vmatpush.bf16.msra.mxu0 %v4906
        %5181 = vmatpush.bf16.msra.mxu0 %v4898
        %5182 = vmatpush.bf16.msra.mxu0 %v4890
        %5183 = vmatpush.bf16.msra.mxu0 %v4882
        %5184 = vmatpush.bf16.msra.mxu0 %v4874
        %5185 = vmatpush.bf16.msra.mxu0 %v4866
        %5186 = vmatpush.bf16.msra.mxu0 %v4858
        %5187 = vmatpush.bf16.msra.mxu0 %v4850
        %5188 = vmatmul.bf16.gmra.mxu0 %v4268
        %v5189 = vpop.f32.mrf.mxu0
        %v5190 = vadd.f32 %v5177, %v5189
        %v5191 = vpop.f32.mrf.mxu0
        %5192 = vdwg.mxu0
        %5193 = vmatpush.bf16.msra.mxu0 %v4843
        %5194 = vmatpush.bf16.msra.mxu0 %v4835
        %5195 = vmatpush.bf16.msra.mxu0 %v4827
        %5196 = vmatpush.bf16.msra.mxu0 %v4819
        %5197 = vmatpush.bf16.msra.mxu0 %v4811
        %5198 = vmatpush.bf16.msra.mxu0 %v4803
        %5199 = vmatpush.bf16.msra.mxu0 %v4795
        %5200 = vmatpush.bf16.msra.mxu0 %v4787
        %5201 = vmatmul.bf16.gmra.mxu0 %v4267
        %v5202 = vpop.f32.mrf.mxu0
        %v5203 = vadd.f32 0.0, %v5202
        %v5204 = vpop.f32.mrf.mxu0
        %5205 = vdwg.mxu0
        %5206 = vmatpush.bf16.msra.mxu0 %v4907
        %5207 = vmatpush.bf16.msra.mxu0 %v4899
        %5208 = vmatpush.bf16.msra.mxu0 %v4891
        %5209 = vmatpush.bf16.msra.mxu0 %v4883
        %5210 = vmatpush.bf16.msra.mxu0 %v4875
        %5211 = vmatpush.bf16.msra.mxu0 %v4867
        %5212 = vmatpush.bf16.msra.mxu0 %v4859
        %5213 = vmatpush.bf16.msra.mxu0 %v4851
        %5214 = vmatmul.bf16.gmra.mxu0 %v4268
        %v5215 = vpop.f32.mrf.mxu0
        %v5216 = vadd.f32 %v5203, %v5215
        %v5217 = vpop.f32.mrf.mxu0
        %5218 = vdwg.mxu0
        %5219 = vmatpush.bf16.msra.mxu0 %v4844
        %5220 = vmatpush.bf16.msra.mxu0 %v4836
        %5221 = vmatpush.bf16.msra.mxu0 %v4828
        %5222 = vmatpush.bf16.msra.mxu0 %v4820
        %5223 = vmatpush.bf16.msra.mxu0 %v4812
        %5224 = vmatpush.bf16.msra.mxu0 %v4804
        %5225 = vmatpush.bf16.msra.mxu0 %v4796
        %5226 = vmatpush.bf16.msra.mxu0 %v4788
        %5227 = vmatmul.bf16.gmra.mxu0 %v4267
        %v5228 = vpop.f32.mrf.mxu0
        %v5229 = vadd.f32 0.0, %v5228
        %v5230 = vpop.f32.mrf.mxu0
        %5231 = vdwg.mxu0
        %5232 = vmatpush.bf16.msra.mxu0 %v4908
        %5233 = vmatpush.bf16.msra.mxu0 %v4900
        %5234 = vmatpush.bf16.msra.mxu0 %v4892
        %5235 = vmatpush.bf16.msra.mxu0 %v4884
        %5236 = vmatpush.bf16.msra.mxu0 %v4876
        %5237 = vmatpush.bf16.msra.mxu0 %v4868
        %5238 = vmatpush.bf16.msra.mxu0 %v4860
        %5239 = vmatpush.bf16.msra.mxu0 %v4852
        %5240 = vmatmul.bf16.gmra.mxu0 %v4268
        %v5241 = vpop.f32.mrf.mxu0
        %v5242 = vadd.f32 %v5229, %v5241
        %v5243 = vpop.f32.mrf.mxu0
        %5244 = vdwg.mxu0
        %s5245 = smul.u32 3, 4
        %s5246 = smul.addr %s5245, 8
        %s5247 = scalar_lea.vmem [#allocation2], %s5246
        %v5248 = vld [vmem:[%s5247] sm:$0xff]
        %v5249 = vld [vmem:[%s5247 + $0x8] sm:$0xff]
        %v5250 = vld [vmem:[%s5247 + $0x10] sm:$0xff]
        %v5251 = vld [vmem:[%s5247 + $0x18] sm:$0xff]
        %v5252 = vadd.f32 %v5248, %v5060
        %v5253 = vadd.f32 %v5249, %v5086
        %v5254 = vadd.f32 %v5250, %v5112
        %v5255 = vadd.f32 %v5251, %v5138
        %s5256 = smul.u32 4, 4
        %s5257 = smul.addr %s5256, 8
        %s5258 = scalar_lea.vmem [#allocation3], %s5257
        %v5259 = vld [vmem:[%s5258] sm:$0xff]
        %v5260 = vld [vmem:[%s5258 + $0x8] sm:$0xff]
        %v5261 = vld [vmem:[%s5258 + $0x10] sm:$0xff]
        %v5262 = vld [vmem:[%s5258 + $0x18] sm:$0xff]
        %v5263 = vadd.f32 %v5259, %v5164
        %v5264 = vadd.f32 %v5260, %v5190
        %v5265 = vadd.f32 %v5261, %v5216
        %v5266 = vadd.f32 %v5262, %v5242
        %v5267 = vmul.f32 %v5252, 0.5
        %v5268 = vtanh.pop %v5267
        %v5269 = vmul.f32 %v5268, 0.5
        %v5270 = vadd.f32 %v5269, 0.5
        %v5271 = vmul.f32 %v5253, 0.5
        %v5272 = vtanh.pop %v5271
        %v5273 = vmul.f32 %v5272, 0.5
        %v5274 = vadd.f32 %v5273, 0.5
        %v5275 = vtanh.pop %v5254
        %v5276 = vmul.f32 %v5255, 0.5
        %v5277 = vtanh.pop %v5276
        %v5278 = vmul.f32 %v5277, 0.5
        %v5279 = vadd.f32 %v5278, 0.5
        %v5280 = vmul.f32 %v5274, %v4242
        %v5281 = vmul.f32 %v5270, %v5275
        %v5282 = vadd.f32 %v5280, %v5281
        %v5283 = vtanh.pop %v5282
        %v5284 = vmul.f32 %v5279, %v5283
        %v5285 = vmul.f32 %v5263, 0.5
        %v5286 = vtanh.pop %v5285
        %v5287 = vmul.f32 %v5286, 0.5
        %v5288 = vadd.f32 %v5287, 0.5
        %v5289 = vmul.f32 %v5264, 0.5
        %v5290 = vtanh.pop %v5289
        %v5291 = vmul.f32 %v5290, 0.5
        %v5292 = vadd.f32 %v5291, 0.5
        %v5293 = vtanh.pop %v5265
        %v5294 = vmul.f32 %v5266, 0.5
        %v5295 = vtanh.pop %v5294
        %v5296 = vmul.f32 %v5295, 0.5
        %v5297 = vadd.f32 %v5296, 0.5
        %v5298 = vmul.f32 %v5292, %v4260
        %v5299 = vmul.f32 %v5288, %v5293
        %v5300 = vadd.f32 %v5298, %v5299
        %v5301 = vtanh.pop %v5300
        %v5302 = vmul.f32 %v5297, %v5301
        %s5303 = scalar_lea.vmem %s376, 24 [#allocation14]
        %5304 = vst [vmem:[%s5303] sm:$0xff] %v5284
        %s5305 = scalar_lea.vmem %s383, 32 [#allocation15]
        %5306 = vst [vmem:[%s5305] sm:$0xff] %v5302
        %v5307 = vpack.c.bf16 %v5284, %v5284
        %v5308 = vpack.c.bf16 %v5302, %v5302
        %v5309 = vld [vmem:[#allocation13] sm:$0xff]
        %v5310 = vld [vmem:[#allocation13 + $0x8] sm:$0xff]
        %v5311 = vld [vmem:[#allocation13 + $0x10] sm:$0xff]
        %v5312 = vld [vmem:[#allocation13 + $0x18] sm:$0xff]
        %v5313 = vld [vmem:[#allocation13 + $0x20] sm:$0xff]
        %v5314 = vld [vmem:[#allocation13 + $0x28] sm:$0xff]
        %v5315 = vld [vmem:[#allocation13 + $0x30] sm:$0xff]
        %v5316 = vld [vmem:[#allocation13 + $0x38] sm:$0xff]
        %v5317 = vld [vmem:[#allocation13 + $0x40] sm:$0xff]
        %v5318 = vld [vmem:[#allocation13 + $0x48] sm:$0xff]
        %v5319 = vld [vmem:[#allocation13 + $0x50] sm:$0xff]
        %v5320 = vld [vmem:[#allocation13 + $0x58] sm:$0xff]
        %v5321 = vld [vmem:[#allocation13 + $0x60] sm:$0xff]
        %v5322 = vld [vmem:[#allocation13 + $0x68] sm:$0xff]
        %v5323 = vld [vmem:[#allocation13 + $0x70] sm:$0xff]
        %v5324 = vld [vmem:[#allocation13 + $0x78] sm:$0xff]
        %v5325 = vld [vmem:[#allocation13 + $0x80] sm:$0xff]
        %v5326 = vld [vmem:[#allocation13 + $0x88] sm:$0xff]
        %v5327 = vld [vmem:[#allocation13 + $0x90] sm:$0xff]
        %v5328 = vld [vmem:[#allocation13 + $0x98] sm:$0xff]
        %v5329 = vld [vmem:[#allocation13 + $0xa0] sm:$0xff]
        %v5330 = vld [vmem:[#allocation13 + $0xa8] sm:$0xff]
        %v5331 = vld [vmem:[#allocation13 + $0xb0] sm:$0xff]
        %v5332 = vld [vmem:[#allocation13 + $0xb8] sm:$0xff]
        %v5333 = vld [vmem:[#allocation13 + $0xc0] sm:$0xff]
        %v5334 = vld [vmem:[#allocation13 + $0xc8] sm:$0xff]
        %v5335 = vld [vmem:[#allocation13 + $0xd0] sm:$0xff]
        %v5336 = vld [vmem:[#allocation13 + $0xd8] sm:$0xff]
        %v5337 = vld [vmem:[#allocation13 + $0xe0] sm:$0xff]
        %v5338 = vld [vmem:[#allocation13 + $0xe8] sm:$0xff]
        %v5339 = vld [vmem:[#allocation13 + $0xf0] sm:$0xff]
        %v5340 = vld [vmem:[#allocation13 + $0xf8] sm:$0xff]
        %v5341 = vld [vmem:[#allocation13 + $0x100] sm:$0xff]
        %v5342 = vld [vmem:[#allocation13 + $0x108] sm:$0xff]
        %v5343 = vld [vmem:[#allocation13 + $0x110] sm:$0xff]
        %v5344 = vld [vmem:[#allocation13 + $0x118] sm:$0xff]
        %v5345 = vld [vmem:[#allocation13 + $0x120] sm:$0xff]
        %v5346 = vld [vmem:[#allocation13 + $0x128] sm:$0xff]
        %v5347 = vld [vmem:[#allocation13 + $0x130] sm:$0xff]
        %v5348 = vld [vmem:[#allocation13 + $0x138] sm:$0xff]
        %v5349 = vld [vmem:[#allocation13 + $0x140] sm:$0xff]
        %v5350 = vld [vmem:[#allocation13 + $0x148] sm:$0xff]
        %v5351 = vld [vmem:[#allocation13 + $0x150] sm:$0xff]
        %v5352 = vld [vmem:[#allocation13 + $0x158] sm:$0xff]
        %v5353 = vld [vmem:[#allocation13 + $0x160] sm:$0xff]
        %v5354 = vld [vmem:[#allocation13 + $0x168] sm:$0xff]
        %v5355 = vld [vmem:[#allocation13 + $0x170] sm:$0xff]
        %v5356 = vld [vmem:[#allocation13 + $0x178] sm:$0xff]
        %v5357 = vld [vmem:[#allocation13 + $0x180] sm:$0xff]
        %v5358 = vld [vmem:[#allocation13 + $0x188] sm:$0xff]
        %v5359 = vld [vmem:[#allocation13 + $0x190] sm:$0xff]
        %v5360 = vld [vmem:[#allocation13 + $0x198] sm:$0xff]
        %v5361 = vld [vmem:[#allocation13 + $0x1a0] sm:$0xff]
        %v5362 = vld [vmem:[#allocation13 + $0x1a8] sm:$0xff]
        %v5363 = vld [vmem:[#allocation13 + $0x1b0] sm:$0xff]
        %v5364 = vld [vmem:[#allocation13 + $0x1b8] sm:$0xff]
        %v5365 = vld [vmem:[#allocation13 + $0x1c0] sm:$0xff]
        %v5366 = vld [vmem:[#allocation13 + $0x1c8] sm:$0xff]
        %v5367 = vld [vmem:[#allocation13 + $0x1d0] sm:$0xff]
        %v5368 = vld [vmem:[#allocation13 + $0x1d8] sm:$0xff]
        %v5369 = vld [vmem:[#allocation13 + $0x1e0] sm:$0xff]
        %v5370 = vld [vmem:[#allocation13 + $0x1e8] sm:$0xff]
        %v5371 = vld [vmem:[#allocation13 + $0x1f0] sm:$0xff]
        %v5372 = vld [vmem:[#allocation13 + $0x1f8] sm:$0xff]
        %v5373 = vld [vmem:[#allocation13 + $0x200] sm:$0xff]
        %v5374 = vld [vmem:[#allocation13 + $0x208] sm:$0xff]
        %v5375 = vld [vmem:[#allocation13 + $0x210] sm:$0xff]
        %v5376 = vld [vmem:[#allocation13 + $0x218] sm:$0xff]
        %v5377 = vld [vmem:[#allocation13 + $0x220] sm:$0xff]
        %v5378 = vld [vmem:[#allocation13 + $0x228] sm:$0xff]
        %v5379 = vld [vmem:[#allocation13 + $0x230] sm:$0xff]
        %v5380 = vld [vmem:[#allocation13 + $0x238] sm:$0xff]
        %v5381 = vld [vmem:[#allocation13 + $0x240] sm:$0xff]
        %v5382 = vld [vmem:[#allocation13 + $0x248] sm:$0xff]
        %v5383 = vld [vmem:[#allocation13 + $0x250] sm:$0xff]
        %v5384 = vld [vmem:[#allocation13 + $0x258] sm:$0xff]
        %v5385 = vld [vmem:[#allocation13 + $0x260] sm:$0xff]
        %v5386 = vld [vmem:[#allocation13 + $0x268] sm:$0xff]
        %v5387 = vld [vmem:[#allocation13 + $0x270] sm:$0xff]
        %v5388 = vld [vmem:[#allocation13 + $0x278] sm:$0xff]
        %v5389 = vld [vmem:[#allocation13 + $0x280] sm:$0xff]
        %v5390 = vld [vmem:[#allocation13 + $0x288] sm:$0xff]
        %v5391 = vld [vmem:[#allocation13 + $0x290] sm:$0xff]
        %v5392 = vld [vmem:[#allocation13 + $0x298] sm:$0xff]
        %v5393 = vld [vmem:[#allocation13 + $0x2a0] sm:$0xff]
        %v5394 = vld [vmem:[#allocation13 + $0x2a8] sm:$0xff]
        %v5395 = vld [vmem:[#allocation13 + $0x2b0] sm:$0xff]
        %v5396 = vld [vmem:[#allocation13 + $0x2b8] sm:$0xff]
        %v5397 = vld [vmem:[#allocation13 + $0x2c0] sm:$0xff]
        %v5398 = vld [vmem:[#allocation13 + $0x2c8] sm:$0xff]
        %v5399 = vld [vmem:[#allocation13 + $0x2d0] sm:$0xff]
        %v5400 = vld [vmem:[#allocation13 + $0x2d8] sm:$0xff]
        %v5401 = vld [vmem:[#allocation13 + $0x2e0] sm:$0xff]
        %v5402 = vld [vmem:[#allocation13 + $0x2e8] sm:$0xff]
        %v5403 = vld [vmem:[#allocation13 + $0x2f0] sm:$0xff]
        %v5404 = vld [vmem:[#allocation13 + $0x2f8] sm:$0xff]
        %v5405 = vld [vmem:[#allocation13 + $0x300] sm:$0xff]
        %v5406 = vld [vmem:[#allocation13 + $0x308] sm:$0xff]
        %v5407 = vld [vmem:[#allocation13 + $0x310] sm:$0xff]
        %v5408 = vld [vmem:[#allocation13 + $0x318] sm:$0xff]
        %v5409 = vld [vmem:[#allocation13 + $0x320] sm:$0xff]
        %v5410 = vld [vmem:[#allocation13 + $0x328] sm:$0xff]
        %v5411 = vld [vmem:[#allocation13 + $0x330] sm:$0xff]
        %v5412 = vld [vmem:[#allocation13 + $0x338] sm:$0xff]
        %v5413 = vld [vmem:[#allocation13 + $0x340] sm:$0xff]
        %v5414 = vld [vmem:[#allocation13 + $0x348] sm:$0xff]
        %v5415 = vld [vmem:[#allocation13 + $0x350] sm:$0xff]
        %v5416 = vld [vmem:[#allocation13 + $0x358] sm:$0xff]
        %v5417 = vld [vmem:[#allocation13 + $0x360] sm:$0xff]
        %v5418 = vld [vmem:[#allocation13 + $0x368] sm:$0xff]
        %v5419 = vld [vmem:[#allocation13 + $0x370] sm:$0xff]
        %v5420 = vld [vmem:[#allocation13 + $0x378] sm:$0xff]
        %v5421 = vld [vmem:[#allocation13 + $0x380] sm:$0xff]
        %v5422 = vld [vmem:[#allocation13 + $0x388] sm:$0xff]
        %v5423 = vld [vmem:[#allocation13 + $0x390] sm:$0xff]
        %v5424 = vld [vmem:[#allocation13 + $0x398] sm:$0xff]
        %v5425 = vld [vmem:[#allocation13 + $0x3a0] sm:$0xff]
        %v5426 = vld [vmem:[#allocation13 + $0x3a8] sm:$0xff]
        %v5427 = vld [vmem:[#allocation13 + $0x3b0] sm:$0xff]
        %v5428 = vld [vmem:[#allocation13 + $0x3b8] sm:$0xff]
        %v5429 = vld [vmem:[#allocation13 + $0x3c0] sm:$0xff]
        %v5430 = vld [vmem:[#allocation13 + $0x3c8] sm:$0xff]
        %v5431 = vld [vmem:[#allocation13 + $0x3d0] sm:$0xff]
        %v5432 = vld [vmem:[#allocation13 + $0x3d8] sm:$0xff]
        %v5433 = vld [vmem:[#allocation13 + $0x3e0] sm:$0xff]
        %v5434 = vld [vmem:[#allocation13 + $0x3e8] sm:$0xff]
        %v5435 = vld [vmem:[#allocation13 + $0x3f0] sm:$0xff]
        %v5436 = vld [vmem:[#allocation13 + $0x3f8] sm:$0xff]
        %v5565 = vunpack.c.l.b16 %v5309
        %v5566 = vunpack.c.h.b16 %v5309
        %v5567 = vunpack.c.l.b16 %v5310
        %v5568 = vunpack.c.h.b16 %v5310
        %v5569 = vunpack.c.l.b16 %v5311
        %v5570 = vunpack.c.h.b16 %v5311
        %v5571 = vunpack.c.l.b16 %v5312
        %v5572 = vunpack.c.h.b16 %v5312
        %v5573 = vunpack.c.l.b16 %v5313
        %v5574 = vunpack.c.h.b16 %v5313
        %v5575 = vunpack.c.l.b16 %v5314
        %v5576 = vunpack.c.h.b16 %v5314
        %v5577 = vunpack.c.l.b16 %v5315
        %v5578 = vunpack.c.h.b16 %v5315
        %v5579 = vunpack.c.l.b16 %v5316
        %v5580 = vunpack.c.h.b16 %v5316
        %v5581 = vunpack.c.l.b16 %v5317
        %v5582 = vunpack.c.h.b16 %v5317
        %v5583 = vunpack.c.l.b16 %v5318
        %v5584 = vunpack.c.h.b16 %v5318
        %v5585 = vunpack.c.l.b16 %v5319
        %v5586 = vunpack.c.h.b16 %v5319
        %v5587 = vunpack.c.l.b16 %v5320
        %v5588 = vunpack.c.h.b16 %v5320
        %v5589 = vunpack.c.l.b16 %v5321
        %v5590 = vunpack.c.h.b16 %v5321
        %v5591 = vunpack.c.l.b16 %v5322
        %v5592 = vunpack.c.h.b16 %v5322
        %v5593 = vunpack.c.l.b16 %v5323
        %v5594 = vunpack.c.h.b16 %v5323
        %v5595 = vunpack.c.l.b16 %v5324
        %v5596 = vunpack.c.h.b16 %v5324
        %v5597 = vunpack.c.l.b16 %v5325
        %v5598 = vunpack.c.h.b16 %v5325
        %v5599 = vunpack.c.l.b16 %v5326
        %v5600 = vunpack.c.h.b16 %v5326
        %v5601 = vunpack.c.l.b16 %v5327
        %v5602 = vunpack.c.h.b16 %v5327
        %v5603 = vunpack.c.l.b16 %v5328
        %v5604 = vunpack.c.h.b16 %v5328
        %v5605 = vunpack.c.l.b16 %v5329
        %v5606 = vunpack.c.h.b16 %v5329
        %v5607 = vunpack.c.l.b16 %v5330
        %v5608 = vunpack.c.h.b16 %v5330
        %v5609 = vunpack.c.l.b16 %v5331
        %v5610 = vunpack.c.h.b16 %v5331
        %v5611 = vunpack.c.l.b16 %v5332
        %v5612 = vunpack.c.h.b16 %v5332
        %v5613 = vunpack.c.l.b16 %v5333
        %v5614 = vunpack.c.h.b16 %v5333
        %v5615 = vunpack.c.l.b16 %v5334
        %v5616 = vunpack.c.h.b16 %v5334
        %v5617 = vunpack.c.l.b16 %v5335
        %v5618 = vunpack.c.h.b16 %v5335
        %v5619 = vunpack.c.l.b16 %v5336
        %v5620 = vunpack.c.h.b16 %v5336
        %v5621 = vunpack.c.l.b16 %v5337
        %v5622 = vunpack.c.h.b16 %v5337
        %v5623 = vunpack.c.l.b16 %v5338
        %v5624 = vunpack.c.h.b16 %v5338
        %v5625 = vunpack.c.l.b16 %v5339
        %v5626 = vunpack.c.h.b16 %v5339
        %v5627 = vunpack.c.l.b16 %v5340
        %v5628 = vunpack.c.h.b16 %v5340
        %v5629 = vunpack.c.l.b16 %v5341
        %v5630 = vunpack.c.h.b16 %v5341
        %v5631 = vunpack.c.l.b16 %v5342
        %v5632 = vunpack.c.h.b16 %v5342
        %v5633 = vunpack.c.l.b16 %v5343
        %v5634 = vunpack.c.h.b16 %v5343
        %v5635 = vunpack.c.l.b16 %v5344
        %v5636 = vunpack.c.h.b16 %v5344
        %v5637 = vunpack.c.l.b16 %v5345
        %v5638 = vunpack.c.h.b16 %v5345
        %v5639 = vunpack.c.l.b16 %v5346
        %v5640 = vunpack.c.h.b16 %v5346
        %v5641 = vunpack.c.l.b16 %v5347
        %v5642 = vunpack.c.h.b16 %v5347
        %v5643 = vunpack.c.l.b16 %v5348
        %v5644 = vunpack.c.h.b16 %v5348
        %v5645 = vunpack.c.l.b16 %v5349
        %v5646 = vunpack.c.h.b16 %v5349
        %v5647 = vunpack.c.l.b16 %v5350
        %v5648 = vunpack.c.h.b16 %v5350
        %v5649 = vunpack.c.l.b16 %v5351
        %v5650 = vunpack.c.h.b16 %v5351
        %v5651 = vunpack.c.l.b16 %v5352
        %v5652 = vunpack.c.h.b16 %v5352
        %v5653 = vunpack.c.l.b16 %v5353
        %v5654 = vunpack.c.h.b16 %v5353
        %v5655 = vunpack.c.l.b16 %v5354
        %v5656 = vunpack.c.h.b16 %v5354
        %v5657 = vunpack.c.l.b16 %v5355
        %v5658 = vunpack.c.h.b16 %v5355
        %v5659 = vunpack.c.l.b16 %v5356
        %v5660 = vunpack.c.h.b16 %v5356
        %v5661 = vunpack.c.l.b16 %v5357
        %v5662 = vunpack.c.h.b16 %v5357
        %v5663 = vunpack.c.l.b16 %v5358
        %v5664 = vunpack.c.h.b16 %v5358
        %v5665 = vunpack.c.l.b16 %v5359
        %v5666 = vunpack.c.h.b16 %v5359
        %v5667 = vunpack.c.l.b16 %v5360
        %v5668 = vunpack.c.h.b16 %v5360
        %v5669 = vunpack.c.l.b16 %v5361
        %v5670 = vunpack.c.h.b16 %v5361
        %v5671 = vunpack.c.l.b16 %v5362
        %v5672 = vunpack.c.h.b16 %v5362
        %v5673 = vunpack.c.l.b16 %v5363
        %v5674 = vunpack.c.h.b16 %v5363
        %v5675 = vunpack.c.l.b16 %v5364
        %v5676 = vunpack.c.h.b16 %v5364
        %v5677 = vunpack.c.l.b16 %v5365
        %v5678 = vunpack.c.h.b16 %v5365
        %v5679 = vunpack.c.l.b16 %v5366
        %v5680 = vunpack.c.h.b16 %v5366
        %v5681 = vunpack.c.l.b16 %v5367
        %v5682 = vunpack.c.h.b16 %v5367
        %v5683 = vunpack.c.l.b16 %v5368
        %v5684 = vunpack.c.h.b16 %v5368
        %v5685 = vunpack.c.l.b16 %v5369
        %v5686 = vunpack.c.h.b16 %v5369
        %v5687 = vunpack.c.l.b16 %v5370
        %v5688 = vunpack.c.h.b16 %v5370
        %v5689 = vunpack.c.l.b16 %v5371
        %v5690 = vunpack.c.h.b16 %v5371
        %v5691 = vunpack.c.l.b16 %v5372
        %v5692 = vunpack.c.h.b16 %v5372
        %v5693 = vunpack.c.l.b16 %v5373
        %v5694 = vunpack.c.h.b16 %v5373
        %v5695 = vunpack.c.l.b16 %v5374
        %v5696 = vunpack.c.h.b16 %v5374
        %v5697 = vunpack.c.l.b16 %v5375
        %v5698 = vunpack.c.h.b16 %v5375
        %v5699 = vunpack.c.l.b16 %v5376
        %v5700 = vunpack.c.h.b16 %v5376
        %v5701 = vunpack.c.l.b16 %v5377
        %v5702 = vunpack.c.h.b16 %v5377
        %v5703 = vunpack.c.l.b16 %v5378
        %v5704 = vunpack.c.h.b16 %v5378
        %v5705 = vunpack.c.l.b16 %v5379
        %v5706 = vunpack.c.h.b16 %v5379
        %v5707 = vunpack.c.l.b16 %v5380
        %v5708 = vunpack.c.h.b16 %v5380
        %v5709 = vunpack.c.l.b16 %v5381
        %v5710 = vunpack.c.h.b16 %v5381
        %v5711 = vunpack.c.l.b16 %v5382
        %v5712 = vunpack.c.h.b16 %v5382
        %v5713 = vunpack.c.l.b16 %v5383
        %v5714 = vunpack.c.h.b16 %v5383
        %v5715 = vunpack.c.l.b16 %v5384
        %v5716 = vunpack.c.h.b16 %v5384
        %v5717 = vunpack.c.l.b16 %v5385
        %v5718 = vunpack.c.h.b16 %v5385
        %v5719 = vunpack.c.l.b16 %v5386
        %v5720 = vunpack.c.h.b16 %v5386
        %v5721 = vunpack.c.l.b16 %v5387
        %v5722 = vunpack.c.h.b16 %v5387
        %v5723 = vunpack.c.l.b16 %v5388
        %v5724 = vunpack.c.h.b16 %v5388
        %v5725 = vunpack.c.l.b16 %v5389
        %v5726 = vunpack.c.h.b16 %v5389
        %v5727 = vunpack.c.l.b16 %v5390
        %v5728 = vunpack.c.h.b16 %v5390
        %v5729 = vunpack.c.l.b16 %v5391
        %v5730 = vunpack.c.h.b16 %v5391
        %v5731 = vunpack.c.l.b16 %v5392
        %v5732 = vunpack.c.h.b16 %v5392
        %v5733 = vunpack.c.l.b16 %v5393
        %v5734 = vunpack.c.h.b16 %v5393
        %v5735 = vunpack.c.l.b16 %v5394
        %v5736 = vunpack.c.h.b16 %v5394
        %v5737 = vunpack.c.l.b16 %v5395
        %v5738 = vunpack.c.h.b16 %v5395
        %v5739 = vunpack.c.l.b16 %v5396
        %v5740 = vunpack.c.h.b16 %v5396
        %v5741 = vunpack.c.l.b16 %v5397
        %v5742 = vunpack.c.h.b16 %v5397
        %v5743 = vunpack.c.l.b16 %v5398
        %v5744 = vunpack.c.h.b16 %v5398
        %v5745 = vunpack.c.l.b16 %v5399
        %v5746 = vunpack.c.h.b16 %v5399
        %v5747 = vunpack.c.l.b16 %v5400
        %v5748 = vunpack.c.h.b16 %v5400
        %v5749 = vunpack.c.l.b16 %v5401
        %v5750 = vunpack.c.h.b16 %v5401
        %v5751 = vunpack.c.l.b16 %v5402
        %v5752 = vunpack.c.h.b16 %v5402
        %v5753 = vunpack.c.l.b16 %v5403
        %v5754 = vunpack.c.h.b16 %v5403
        %v5755 = vunpack.c.l.b16 %v5404
        %v5756 = vunpack.c.h.b16 %v5404
        %v5757 = vunpack.c.l.b16 %v5405
        %v5758 = vunpack.c.h.b16 %v5405
        %v5759 = vunpack.c.l.b16 %v5406
        %v5760 = vunpack.c.h.b16 %v5406
        %v5761 = vunpack.c.l.b16 %v5407
        %v5762 = vunpack.c.h.b16 %v5407
        %v5763 = vunpack.c.l.b16 %v5408
        %v5764 = vunpack.c.h.b16 %v5408
        %v5765 = vunpack.c.l.b16 %v5409
        %v5766 = vunpack.c.h.b16 %v5409
        %v5767 = vunpack.c.l.b16 %v5410
        %v5768 = vunpack.c.h.b16 %v5410
        %v5769 = vunpack.c.l.b16 %v5411
        %v5770 = vunpack.c.h.b16 %v5411
        %v5771 = vunpack.c.l.b16 %v5412
        %v5772 = vunpack.c.h.b16 %v5412
        %v5773 = vunpack.c.l.b16 %v5413
        %v5774 = vunpack.c.h.b16 %v5413
        %v5775 = vunpack.c.l.b16 %v5414
        %v5776 = vunpack.c.h.b16 %v5414
        %v5777 = vunpack.c.l.b16 %v5415
        %v5778 = vunpack.c.h.b16 %v5415
        %v5779 = vunpack.c.l.b16 %v5416
        %v5780 = vunpack.c.h.b16 %v5416
        %v5781 = vunpack.c.l.b16 %v5417
        %v5782 = vunpack.c.h.b16 %v5417
        %v5783 = vunpack.c.l.b16 %v5418
        %v5784 = vunpack.c.h.b16 %v5418
        %v5785 = vunpack.c.l.b16 %v5419
        %v5786 = vunpack.c.h.b16 %v5419
        %v5787 = vunpack.c.l.b16 %v5420
        %v5788 = vunpack.c.h.b16 %v5420
        %v5789 = vunpack.c.l.b16 %v5421
        %v5790 = vunpack.c.h.b16 %v5421
        %v5791 = vunpack.c.l.b16 %v5422
        %v5792 = vunpack.c.h.b16 %v5422
        %v5793 = vunpack.c.l.b16 %v5423
        %v5794 = vunpack.c.h.b16 %v5423
        %v5795 = vunpack.c.l.b16 %v5424
        %v5796 = vunpack.c.h.b16 %v5424
        %v5797 = vunpack.c.l.b16 %v5425
        %v5798 = vunpack.c.h.b16 %v5425
        %v5799 = vunpack.c.l.b16 %v5426
        %v5800 = vunpack.c.h.b16 %v5426
        %v5801 = vunpack.c.l.b16 %v5427
        %v5802 = vunpack.c.h.b16 %v5427
        %v5803 = vunpack.c.l.b16 %v5428
        %v5804 = vunpack.c.h.b16 %v5428
        %v5805 = vunpack.c.l.b16 %v5429
        %v5806 = vunpack.c.h.b16 %v5429
        %v5807 = vunpack.c.l.b16 %v5430
        %v5808 = vunpack.c.h.b16 %v5430
        %v5809 = vunpack.c.l.b16 %v5431
        %v5810 = vunpack.c.h.b16 %v5431
        %v5811 = vunpack.c.l.b16 %v5432
        %v5812 = vunpack.c.h.b16 %v5432
        %v5813 = vunpack.c.l.b16 %v5433
        %v5814 = vunpack.c.h.b16 %v5433
        %v5815 = vunpack.c.l.b16 %v5434
        %v5816 = vunpack.c.h.b16 %v5434
        %v5817 = vunpack.c.l.b16 %v5435
        %v5818 = vunpack.c.h.b16 %v5435
        %v5819 = vunpack.c.l.b16 %v5436
        %v5820 = vunpack.c.h.b16 %v5436
        %v5821 = vpack.c.b16 %v5573, %v5565
        %v5822 = vpack.c.b16 %v5574, %v5566
        %v5823 = vpack.c.b16 %v5575, %v5567
        %v5824 = vpack.c.b16 %v5576, %v5568
        %v5825 = vpack.c.b16 %v5577, %v5569
        %v5826 = vpack.c.b16 %v5578, %v5570
        %v5827 = vpack.c.b16 %v5579, %v5571
        %v5828 = vpack.c.b16 %v5580, %v5572
        %v5829 = vpack.c.b16 %v5589, %v5581
        %v5830 = vpack.c.b16 %v5590, %v5582
        %v5831 = vpack.c.b16 %v5591, %v5583
        %v5832 = vpack.c.b16 %v5592, %v5584
        %v5833 = vpack.c.b16 %v5593, %v5585
        %v5834 = vpack.c.b16 %v5594, %v5586
        %v5835 = vpack.c.b16 %v5595, %v5587
        %v5836 = vpack.c.b16 %v5596, %v5588
        %v5837 = vpack.c.b16 %v5605, %v5597
        %v5838 = vpack.c.b16 %v5606, %v5598
        %v5839 = vpack.c.b16 %v5607, %v5599
        %v5840 = vpack.c.b16 %v5608, %v5600
        %v5841 = vpack.c.b16 %v5609, %v5601
        %v5842 = vpack.c.b16 %v5610, %v5602
        %v5843 = vpack.c.b16 %v5611, %v5603
        %v5844 = vpack.c.b16 %v5612, %v5604
        %v5845 = vpack.c.b16 %v5621, %v5613
        %v5846 = vpack.c.b16 %v5622, %v5614
        %v5847 = vpack.c.b16 %v5623, %v5615
        %v5848 = vpack.c.b16 %v5624, %v5616
        %v5849 = vpack.c.b16 %v5625, %v5617
        %v5850 = vpack.c.b16 %v5626, %v5618
        %v5851 = vpack.c.b16 %v5627, %v5619
        %v5852 = vpack.c.b16 %v5628, %v5620
        %v5853 = vpack.c.b16 %v5637, %v5629
        %v5854 = vpack.c.b16 %v5638, %v5630
        %v5855 = vpack.c.b16 %v5639, %v5631
        %v5856 = vpack.c.b16 %v5640, %v5632
        %v5857 = vpack.c.b16 %v5641, %v5633
        %v5858 = vpack.c.b16 %v5642, %v5634
        %v5859 = vpack.c.b16 %v5643, %v5635
        %v5860 = vpack.c.b16 %v5644, %v5636
        %v5861 = vpack.c.b16 %v5653, %v5645
        %v5862 = vpack.c.b16 %v5654, %v5646
        %v5863 = vpack.c.b16 %v5655, %v5647
        %v5864 = vpack.c.b16 %v5656, %v5648
        %v5865 = vpack.c.b16 %v5657, %v5649
        %v5866 = vpack.c.b16 %v5658, %v5650
        %v5867 = vpack.c.b16 %v5659, %v5651
        %v5868 = vpack.c.b16 %v5660, %v5652
        %v5869 = vpack.c.b16 %v5669, %v5661
        %v5870 = vpack.c.b16 %v5670, %v5662
        %v5871 = vpack.c.b16 %v5671, %v5663
        %v5872 = vpack.c.b16 %v5672, %v5664
        %v5873 = vpack.c.b16 %v5673, %v5665
        %v5874 = vpack.c.b16 %v5674, %v5666
        %v5875 = vpack.c.b16 %v5675, %v5667
        %v5876 = vpack.c.b16 %v5676, %v5668
        %v5877 = vpack.c.b16 %v5685, %v5677
        %v5878 = vpack.c.b16 %v5686, %v5678
        %v5879 = vpack.c.b16 %v5687, %v5679
        %v5880 = vpack.c.b16 %v5688, %v5680
        %v5881 = vpack.c.b16 %v5689, %v5681
        %v5882 = vpack.c.b16 %v5690, %v5682
        %v5883 = vpack.c.b16 %v5691, %v5683
        %v5884 = vpack.c.b16 %v5692, %v5684
        %v5885 = vpack.c.b16 %v5701, %v5693
        %v5886 = vpack.c.b16 %v5702, %v5694
        %v5887 = vpack.c.b16 %v5703, %v5695
        %v5888 = vpack.c.b16 %v5704, %v5696
        %v5889 = vpack.c.b16 %v5705, %v5697
        %v5890 = vpack.c.b16 %v5706, %v5698
        %v5891 = vpack.c.b16 %v5707, %v5699
        %v5892 = vpack.c.b16 %v5708, %v5700
        %v5893 = vpack.c.b16 %v5717, %v5709
        %v5894 = vpack.c.b16 %v5718, %v5710
        %v5895 = vpack.c.b16 %v5719, %v5711
        %v5896 = vpack.c.b16 %v5720, %v5712
        %v5897 = vpack.c.b16 %v5721, %v5713
        %v5898 = vpack.c.b16 %v5722, %v5714
        %v5899 = vpack.c.b16 %v5723, %v5715
        %v5900 = vpack.c.b16 %v5724, %v5716
        %v5901 = vpack.c.b16 %v5733, %v5725
        %v5902 = vpack.c.b16 %v5734, %v5726
        %v5903 = vpack.c.b16 %v5735, %v5727
        %v5904 = vpack.c.b16 %v5736, %v5728
        %v5905 = vpack.c.b16 %v5737, %v5729
        %v5906 = vpack.c.b16 %v5738, %v5730
        %v5907 = vpack.c.b16 %v5739, %v5731
        %v5908 = vpack.c.b16 %v5740, %v5732
        %v5909 = vpack.c.b16 %v5749, %v5741
        %v5910 = vpack.c.b16 %v5750, %v5742
        %v5911 = vpack.c.b16 %v5751, %v5743
        %v5912 = vpack.c.b16 %v5752, %v5744
        %v5913 = vpack.c.b16 %v5753, %v5745
        %v5914 = vpack.c.b16 %v5754, %v5746
        %v5915 = vpack.c.b16 %v5755, %v5747
        %v5916 = vpack.c.b16 %v5756, %v5748
        %v5917 = vpack.c.b16 %v5765, %v5757
        %v5918 = vpack.c.b16 %v5766, %v5758
        %v5919 = vpack.c.b16 %v5767, %v5759
        %v5920 = vpack.c.b16 %v5768, %v5760
        %v5921 = vpack.c.b16 %v5769, %v5761
        %v5922 = vpack.c.b16 %v5770, %v5762
        %v5923 = vpack.c.b16 %v5771, %v5763
        %v5924 = vpack.c.b16 %v5772, %v5764
        %v5925 = vpack.c.b16 %v5781, %v5773
        %v5926 = vpack.c.b16 %v5782, %v5774
        %v5927 = vpack.c.b16 %v5783, %v5775
        %v5928 = vpack.c.b16 %v5784, %v5776
        %v5929 = vpack.c.b16 %v5785, %v5777
        %v5930 = vpack.c.b16 %v5786, %v5778
        %v5931 = vpack.c.b16 %v5787, %v5779
        %v5932 = vpack.c.b16 %v5788, %v5780
        %v5933 = vpack.c.b16 %v5797, %v5789
        %v5934 = vpack.c.b16 %v5798, %v5790
        %v5935 = vpack.c.b16 %v5799, %v5791
        %v5936 = vpack.c.b16 %v5800, %v5792
        %v5937 = vpack.c.b16 %v5801, %v5793
        %v5938 = vpack.c.b16 %v5802, %v5794
        %v5939 = vpack.c.b16 %v5803, %v5795
        %v5940 = vpack.c.b16 %v5804, %v5796
        %v5941 = vpack.c.b16 %v5813, %v5805
        %v5942 = vpack.c.b16 %v5814, %v5806
        %v5943 = vpack.c.b16 %v5815, %v5807
        %v5944 = vpack.c.b16 %v5816, %v5808
        %v5945 = vpack.c.b16 %v5817, %v5809
        %v5946 = vpack.c.b16 %v5818, %v5810
        %v5947 = vpack.c.b16 %v5819, %v5811
        %v5948 = vpack.c.b16 %v5820, %v5812
        %6077 = vmatpush.bf16.msra.mxu0 %v5877
        %6078 = vmatpush.bf16.msra.mxu0 %v5869
        %6079 = vmatpush.bf16.msra.mxu0 %v5861
        %6080 = vmatpush.bf16.msra.mxu0 %v5853
        %6081 = vmatpush.bf16.msra.mxu0 %v5845
        %6082 = vmatpush.bf16.msra.mxu0 %v5837
        %6083 = vmatpush.bf16.msra.mxu0 %v5829
        %6084 = vmatpush.bf16.msra.mxu0 %v5821
        %6085 = vmatmul.bf16.gmra.mxu0 %v5307
        %v6086 = vpop.f32.mrf.mxu0
        %v6087 = vadd.f32 0.0, %v6086
        %v6088 = vpop.f32.mrf.mxu0
        %6089 = vdwg.mxu0
        %6090 = vmatpush.bf16.msra.mxu0 %v5941
        %6091 = vmatpush.bf16.msra.mxu0 %v5933
        %6092 = vmatpush.bf16.msra.mxu0 %v5925
        %6093 = vmatpush.bf16.msra.mxu0 %v5917
        %6094 = vmatpush.bf16.msra.mxu0 %v5909
        %6095 = vmatpush.bf16.msra.mxu0 %v5901
        %6096 = vmatpush.bf16.msra.mxu0 %v5893
        %6097 = vmatpush.bf16.msra.mxu0 %v5885
        %6098 = vmatmul.bf16.gmra.mxu0 %v5308
        %v6099 = vpop.f32.mrf.mxu0
        %v6100 = vadd.f32 %v6087, %v6099
        %v6101 = vpop.f32.mrf.mxu0
        %6102 = vdwg.mxu0
        %6103 = vmatpush.bf16.msra.mxu0 %v5878
        %6104 = vmatpush.bf16.msra.mxu0 %v5870
        %6105 = vmatpush.bf16.msra.mxu0 %v5862
        %6106 = vmatpush.bf16.msra.mxu0 %v5854
        %6107 = vmatpush.bf16.msra.mxu0 %v5846
        %6108 = vmatpush.bf16.msra.mxu0 %v5838
        %6109 = vmatpush.bf16.msra.mxu0 %v5830
        %6110 = vmatpush.bf16.msra.mxu0 %v5822
        %6111 = vmatmul.bf16.gmra.mxu0 %v5307
        %v6112 = vpop.f32.mrf.mxu0
        %v6113 = vadd.f32 0.0, %v6112
        %v6114 = vpop.f32.mrf.mxu0
        %6115 = vdwg.mxu0
        %6116 = vmatpush.bf16.msra.mxu0 %v5942
        %6117 = vmatpush.bf16.msra.mxu0 %v5934
        %6118 = vmatpush.bf16.msra.mxu0 %v5926
        %6119 = vmatpush.bf16.msra.mxu0 %v5918
        %6120 = vmatpush.bf16.msra.mxu0 %v5910
        %6121 = vmatpush.bf16.msra.mxu0 %v5902
        %6122 = vmatpush.bf16.msra.mxu0 %v5894
        %6123 = vmatpush.bf16.msra.mxu0 %v5886
        %6124 = vmatmul.bf16.gmra.mxu0 %v5308
        %v6125 = vpop.f32.mrf.mxu0
        %v6126 = vadd.f32 %v6113, %v6125
        %v6127 = vpop.f32.mrf.mxu0
        %6128 = vdwg.mxu0
        %6129 = vmatpush.bf16.msra.mxu0 %v5879
        %6130 = vmatpush.bf16.msra.mxu0 %v5871
        %6131 = vmatpush.bf16.msra.mxu0 %v5863
        %6132 = vmatpush.bf16.msra.mxu0 %v5855
        %6133 = vmatpush.bf16.msra.mxu0 %v5847
        %6134 = vmatpush.bf16.msra.mxu0 %v5839
        %6135 = vmatpush.bf16.msra.mxu0 %v5831
        %6136 = vmatpush.bf16.msra.mxu0 %v5823
        %6137 = vmatmul.bf16.gmra.mxu0 %v5307
        %v6138 = vpop.f32.mrf.mxu0
        %v6139 = vadd.f32 0.0, %v6138
        %v6140 = vpop.f32.mrf.mxu0
        %6141 = vdwg.mxu0
        %6142 = vmatpush.bf16.msra.mxu0 %v5943
        %6143 = vmatpush.bf16.msra.mxu0 %v5935
        %6144 = vmatpush.bf16.msra.mxu0 %v5927
        %6145 = vmatpush.bf16.msra.mxu0 %v5919
        %6146 = vmatpush.bf16.msra.mxu0 %v5911
        %6147 = vmatpush.bf16.msra.mxu0 %v5903
        %6148 = vmatpush.bf16.msra.mxu0 %v5895
        %6149 = vmatpush.bf16.msra.mxu0 %v5887
        %6150 = vmatmul.bf16.gmra.mxu0 %v5308
        %v6151 = vpop.f32.mrf.mxu0
        %v6152 = vadd.f32 %v6139, %v6151
        %v6153 = vpop.f32.mrf.mxu0
        %6154 = vdwg.mxu0
        %6155 = vmatpush.bf16.msra.mxu0 %v5880
        %6156 = vmatpush.bf16.msra.mxu0 %v5872
        %6157 = vmatpush.bf16.msra.mxu0 %v5864
        %6158 = vmatpush.bf16.msra.mxu0 %v5856
        %6159 = vmatpush.bf16.msra.mxu0 %v5848
        %6160 = vmatpush.bf16.msra.mxu0 %v5840
        %6161 = vmatpush.bf16.msra.mxu0 %v5832
        %6162 = vmatpush.bf16.msra.mxu0 %v5824
        %6163 = vmatmul.bf16.gmra.mxu0 %v5307
        %v6164 = vpop.f32.mrf.mxu0
        %v6165 = vadd.f32 0.0, %v6164
        %v6166 = vpop.f32.mrf.mxu0
        %6167 = vdwg.mxu0
        %6168 = vmatpush.bf16.msra.mxu0 %v5944
        %6169 = vmatpush.bf16.msra.mxu0 %v5936
        %6170 = vmatpush.bf16.msra.mxu0 %v5928
        %6171 = vmatpush.bf16.msra.mxu0 %v5920
        %6172 = vmatpush.bf16.msra.mxu0 %v5912
        %6173 = vmatpush.bf16.msra.mxu0 %v5904
        %6174 = vmatpush.bf16.msra.mxu0 %v5896
        %6175 = vmatpush.bf16.msra.mxu0 %v5888
        %6176 = vmatmul.bf16.gmra.mxu0 %v5308
        %v6177 = vpop.f32.mrf.mxu0
        %v6178 = vadd.f32 %v6165, %v6177
        %v6179 = vpop.f32.mrf.mxu0
        %6180 = vdwg.mxu0
        %6181 = vmatpush.bf16.msra.mxu0 %v5881
        %6182 = vmatpush.bf16.msra.mxu0 %v5873
        %6183 = vmatpush.bf16.msra.mxu0 %v5865
        %6184 = vmatpush.bf16.msra.mxu0 %v5857
        %6185 = vmatpush.bf16.msra.mxu0 %v5849
        %6186 = vmatpush.bf16.msra.mxu0 %v5841
        %6187 = vmatpush.bf16.msra.mxu0 %v5833
        %6188 = vmatpush.bf16.msra.mxu0 %v5825
        %6189 = vmatmul.bf16.gmra.mxu0 %v5307
        %v6190 = vpop.f32.mrf.mxu0
        %v6191 = vadd.f32 0.0, %v6190
        %v6192 = vpop.f32.mrf.mxu0
        %6193 = vdwg.mxu0
        %6194 = vmatpush.bf16.msra.mxu0 %v5945
        %6195 = vmatpush.bf16.msra.mxu0 %v5937
        %6196 = vmatpush.bf16.msra.mxu0 %v5929
        %6197 = vmatpush.bf16.msra.mxu0 %v5921
        %6198 = vmatpush.bf16.msra.mxu0 %v5913
        %6199 = vmatpush.bf16.msra.mxu0 %v5905
        %6200 = vmatpush.bf16.msra.mxu0 %v5897
        %6201 = vmatpush.bf16.msra.mxu0 %v5889
        %6202 = vmatmul.bf16.gmra.mxu0 %v5308
        %v6203 = vpop.f32.mrf.mxu0
        %v6204 = vadd.f32 %v6191, %v6203
        %v6205 = vpop.f32.mrf.mxu0
        %6206 = vdwg.mxu0
        %6207 = vmatpush.bf16.msra.mxu0 %v5882
        %6208 = vmatpush.bf16.msra.mxu0 %v5874
        %6209 = vmatpush.bf16.msra.mxu0 %v5866
        %6210 = vmatpush.bf16.msra.mxu0 %v5858
        %6211 = vmatpush.bf16.msra.mxu0 %v5850
        %6212 = vmatpush.bf16.msra.mxu0 %v5842
        %6213 = vmatpush.bf16.msra.mxu0 %v5834
        %6214 = vmatpush.bf16.msra.mxu0 %v5826
        %6215 = vmatmul.bf16.gmra.mxu0 %v5307
        %v6216 = vpop.f32.mrf.mxu0
        %v6217 = vadd.f32 0.0, %v6216
        %v6218 = vpop.f32.mrf.mxu0
        %6219 = vdwg.mxu0
        %6220 = vmatpush.bf16.msra.mxu0 %v5946
        %6221 = vmatpush.bf16.msra.mxu0 %v5938
        %6222 = vmatpush.bf16.msra.mxu0 %v5930
        %6223 = vmatpush.bf16.msra.mxu0 %v5922
        %6224 = vmatpush.bf16.msra.mxu0 %v5914
        %6225 = vmatpush.bf16.msra.mxu0 %v5906
        %6226 = vmatpush.bf16.msra.mxu0 %v5898
        %6227 = vmatpush.bf16.msra.mxu0 %v5890
        %6228 = vmatmul.bf16.gmra.mxu0 %v5308
        %v6229 = vpop.f32.mrf.mxu0
        %v6230 = vadd.f32 %v6217, %v6229
        %v6231 = vpop.f32.mrf.mxu0
        %6232 = vdwg.mxu0
        %6233 = vmatpush.bf16.msra.mxu0 %v5883
        %6234 = vmatpush.bf16.msra.mxu0 %v5875
        %6235 = vmatpush.bf16.msra.mxu0 %v5867
        %6236 = vmatpush.bf16.msra.mxu0 %v5859
        %6237 = vmatpush.bf16.msra.mxu0 %v5851
        %6238 = vmatpush.bf16.msra.mxu0 %v5843
        %6239 = vmatpush.bf16.msra.mxu0 %v5835
        %6240 = vmatpush.bf16.msra.mxu0 %v5827
        %6241 = vmatmul.bf16.gmra.mxu0 %v5307
        %v6242 = vpop.f32.mrf.mxu0
        %v6243 = vadd.f32 0.0, %v6242
        %v6244 = vpop.f32.mrf.mxu0
        %6245 = vdwg.mxu0
        %6246 = vmatpush.bf16.msra.mxu0 %v5947
        %6247 = vmatpush.bf16.msra.mxu0 %v5939
        %6248 = vmatpush.bf16.msra.mxu0 %v5931
        %6249 = vmatpush.bf16.msra.mxu0 %v5923
        %6250 = vmatpush.bf16.msra.mxu0 %v5915
        %6251 = vmatpush.bf16.msra.mxu0 %v5907
        %6252 = vmatpush.bf16.msra.mxu0 %v5899
        %6253 = vmatpush.bf16.msra.mxu0 %v5891
        %6254 = vmatmul.bf16.gmra.mxu0 %v5308
        %v6255 = vpop.f32.mrf.mxu0
        %v6256 = vadd.f32 %v6243, %v6255
        %v6257 = vpop.f32.mrf.mxu0
        %6258 = vdwg.mxu0
        %6259 = vmatpush.bf16.msra.mxu0 %v5884
        %6260 = vmatpush.bf16.msra.mxu0 %v5876
        %6261 = vmatpush.bf16.msra.mxu0 %v5868
        %6262 = vmatpush.bf16.msra.mxu0 %v5860
        %6263 = vmatpush.bf16.msra.mxu0 %v5852
        %6264 = vmatpush.bf16.msra.mxu0 %v5844
        %6265 = vmatpush.bf16.msra.mxu0 %v5836
        %6266 = vmatpush.bf16.msra.mxu0 %v5828
        %6267 = vmatmul.bf16.gmra.mxu0 %v5307
        %v6268 = vpop.f32.mrf.mxu0
        %v6269 = vadd.f32 0.0, %v6268
        %v6270 = vpop.f32.mrf.mxu0
        %6271 = vdwg.mxu0
        %6272 = vmatpush.bf16.msra.mxu0 %v5948
        %6273 = vmatpush.bf16.msra.mxu0 %v5940
        %6274 = vmatpush.bf16.msra.mxu0 %v5932
        %6275 = vmatpush.bf16.msra.mxu0 %v5924
        %6276 = vmatpush.bf16.msra.mxu0 %v5916
        %6277 = vmatpush.bf16.msra.mxu0 %v5908
        %6278 = vmatpush.bf16.msra.mxu0 %v5900
        %6279 = vmatpush.bf16.msra.mxu0 %v5892
        %6280 = vmatmul.bf16.gmra.mxu0 %v5308
        %v6281 = vpop.f32.mrf.mxu0
        %v6282 = vadd.f32 %v6269, %v6281
        %v6283 = vpop.f32.mrf.mxu0
        %6284 = vdwg.mxu0
        %s6285 = smul.addr %s5256, 8
        %s6286 = scalar_lea.vmem [#allocation2], %s6285
        %v6287 = vld [vmem:[%s6286] sm:$0xff]
        %v6288 = vld [vmem:[%s6286 + $0x8] sm:$0xff]
        %v6289 = vld [vmem:[%s6286 + $0x10] sm:$0xff]
        %v6290 = vld [vmem:[%s6286 + $0x18] sm:$0xff]
        %v6291 = vadd.f32 %v6287, %v6100
        %v6292 = vadd.f32 %v6288, %v6126
        %v6293 = vadd.f32 %v6289, %v6152
        %v6294 = vadd.f32 %v6290, %v6178
        %s6295 = smul.addr %s5245, 8
        %s6296 = scalar_lea.vmem [#allocation3], %s6295
        %v6297 = vld [vmem:[%s6296] sm:$0xff]
        %v6298 = vld [vmem:[%s6296 + $0x8] sm:$0xff]
        %v6299 = vld [vmem:[%s6296 + $0x10] sm:$0xff]
        %v6300 = vld [vmem:[%s6296 + $0x18] sm:$0xff]
        %v6301 = vadd.f32 %v6297, %v6204
        %v6302 = vadd.f32 %v6298, %v6230
        %v6303 = vadd.f32 %v6299, %v6256
        %v6304 = vadd.f32 %v6300, %v6282
        %v6305 = vmul.f32 %v6291, 0.5
        %v6306 = vtanh.pop %v6305
        %v6307 = vmul.f32 %v6306, 0.5
        %v6308 = vadd.f32 %v6307, 0.5
        %v6309 = vmul.f32 %v6292, 0.5
        %v6310 = vtanh.pop %v6309
        %v6311 = vmul.f32 %v6310, 0.5
        %v6312 = vadd.f32 %v6311, 0.5
        %v6313 = vtanh.pop %v6293
        %v6314 = vmul.f32 %v6294, 0.5
        %v6315 = vtanh.pop %v6314
        %v6316 = vmul.f32 %v6315, 0.5
        %v6317 = vadd.f32 %v6316, 0.5
        %v6318 = vmul.f32 %v6312, %v5282
        %v6319 = vmul.f32 %v6308, %v6313
        %v6320 = vadd.f32 %v6318, %v6319
        %v6321 = vtanh.pop %v6320
        %v6322 = vmul.f32 %v6317, %v6321
        %v6323 = vmul.f32 %v6301, 0.5
        %v6324 = vtanh.pop %v6323
        %v6325 = vmul.f32 %v6324, 0.5
        %v6326 = vadd.f32 %v6325, 0.5
        %v6327 = vmul.f32 %v6302, 0.5
        %v6328 = vtanh.pop %v6327
        %v6329 = vmul.f32 %v6328, 0.5
        %v6330 = vadd.f32 %v6329, 0.5
        %v6331 = vtanh.pop %v6303
        %v6332 = vmul.f32 %v6304, 0.5
        %v6333 = vtanh.pop %v6332
        %v6334 = vmul.f32 %v6333, 0.5
        %v6335 = vadd.f32 %v6334, 0.5
        %v6336 = vmul.f32 %v6330, %v5300
        %v6337 = vmul.f32 %v6326, %v6331
        %v6338 = vadd.f32 %v6336, %v6337
        %v6339 = vtanh.pop %v6338
        %v6340 = vmul.f32 %v6335, %v6339
        %s6341 = scalar_lea.vmem %s376, 32 [#allocation14]
        %6342 = vst [vmem:[%s6341] sm:$0xff] %v6322
        %s6343 = scalar_lea.vmem %s383, 24 [#allocation15]
        %6344 = vst [vmem:[%s6343] sm:$0xff] %v6340
        %v6345 = vpack.c.bf16 %v6322, %v6322
        %v6346 = vpack.c.bf16 %v6340, %v6340
        %v6347 = vld [vmem:[#allocation13] sm:$0xff]
        %v6348 = vld [vmem:[#allocation13 + $0x8] sm:$0xff]
        %v6349 = vld [vmem:[#allocation13 + $0x10] sm:$0xff]
        %v6350 = vld [vmem:[#allocation13 + $0x18] sm:$0xff]
        %v6351 = vld [vmem:[#allocation13 + $0x20] sm:$0xff]
        %v6352 = vld [vmem:[#allocation13 + $0x28] sm:$0xff]
        %v6353 = vld [vmem:[#allocation13 + $0x30] sm:$0xff]
        %v6354 = vld [vmem:[#allocation13 + $0x38] sm:$0xff]
        %v6355 = vld [vmem:[#allocation13 + $0x40] sm:$0xff]
        %v6356 = vld [vmem:[#allocation13 + $0x48] sm:$0xff]
        %v6357 = vld [vmem:[#allocation13 + $0x50] sm:$0xff]
        %v6358 = vld [vmem:[#allocation13 + $0x58] sm:$0xff]
        %v6359 = vld [vmem:[#allocation13 + $0x60] sm:$0xff]
        %v6360 = vld [vmem:[#allocation13 + $0x68] sm:$0xff]
        %v6361 = vld [vmem:[#allocation13 + $0x70] sm:$0xff]
        %v6362 = vld [vmem:[#allocation13 + $0x78] sm:$0xff]
        %v6363 = vld [vmem:[#allocation13 + $0x80] sm:$0xff]
        %v6364 = vld [vmem:[#allocation13 + $0x88] sm:$0xff]
        %v6365 = vld [vmem:[#allocation13 + $0x90] sm:$0xff]
        %v6366 = vld [vmem:[#allocation13 + $0x98] sm:$0xff]
        %v6367 = vld [vmem:[#allocation13 + $0xa0] sm:$0xff]
        %v6368 = vld [vmem:[#allocation13 + $0xa8] sm:$0xff]
        %v6369 = vld [vmem:[#allocation13 + $0xb0] sm:$0xff]
        %v6370 = vld [vmem:[#allocation13 + $0xb8] sm:$0xff]
        %v6371 = vld [vmem:[#allocation13 + $0xc0] sm:$0xff]
        %v6372 = vld [vmem:[#allocation13 + $0xc8] sm:$0xff]
        %v6373 = vld [vmem:[#allocation13 + $0xd0] sm:$0xff]
        %v6374 = vld [vmem:[#allocation13 + $0xd8] sm:$0xff]
        %v6375 = vld [vmem:[#allocation13 + $0xe0] sm:$0xff]
        %v6376 = vld [vmem:[#allocation13 + $0xe8] sm:$0xff]
        %v6377 = vld [vmem:[#allocation13 + $0xf0] sm:$0xff]
        %v6378 = vld [vmem:[#allocation13 + $0xf8] sm:$0xff]
        %v6379 = vld [vmem:[#allocation13 + $0x100] sm:$0xff]
        %v6380 = vld [vmem:[#allocation13 + $0x108] sm:$0xff]
        %v6381 = vld [vmem:[#allocation13 + $0x110] sm:$0xff]
        %v6382 = vld [vmem:[#allocation13 + $0x118] sm:$0xff]
        %v6383 = vld [vmem:[#allocation13 + $0x120] sm:$0xff]
        %v6384 = vld [vmem:[#allocation13 + $0x128] sm:$0xff]
        %v6385 = vld [vmem:[#allocation13 + $0x130] sm:$0xff]
        %v6386 = vld [vmem:[#allocation13 + $0x138] sm:$0xff]
        %v6387 = vld [vmem:[#allocation13 + $0x140] sm:$0xff]
        %v6388 = vld [vmem:[#allocation13 + $0x148] sm:$0xff]
        %v6389 = vld [vmem:[#allocation13 + $0x150] sm:$0xff]
        %v6390 = vld [vmem:[#allocation13 + $0x158] sm:$0xff]
        %v6391 = vld [vmem:[#allocation13 + $0x160] sm:$0xff]
        %v6392 = vld [vmem:[#allocation13 + $0x168] sm:$0xff]
        %v6393 = vld [vmem:[#allocation13 + $0x170] sm:$0xff]
        %v6394 = vld [vmem:[#allocation13 + $0x178] sm:$0xff]
        %v6395 = vld [vmem:[#allocation13 + $0x180] sm:$0xff]
        %v6396 = vld [vmem:[#allocation13 + $0x188] sm:$0xff]
        %v6397 = vld [vmem:[#allocation13 + $0x190] sm:$0xff]
        %v6398 = vld [vmem:[#allocation13 + $0x198] sm:$0xff]
        %v6399 = vld [vmem:[#allocation13 + $0x1a0] sm:$0xff]
        %v6400 = vld [vmem:[#allocation13 + $0x1a8] sm:$0xff]
        %v6401 = vld [vmem:[#allocation13 + $0x1b0] sm:$0xff]
        %v6402 = vld [vmem:[#allocation13 + $0x1b8] sm:$0xff]
        %v6403 = vld [vmem:[#allocation13 + $0x1c0] sm:$0xff]
        %v6404 = vld [vmem:[#allocation13 + $0x1c8] sm:$0xff]
        %v6405 = vld [vmem:[#allocation13 + $0x1d0] sm:$0xff]
        %v6406 = vld [vmem:[#allocation13 + $0x1d8] sm:$0xff]
        %v6407 = vld [vmem:[#allocation13 + $0x1e0] sm:$0xff]
        %v6408 = vld [vmem:[#allocation13 + $0x1e8] sm:$0xff]
        %v6409 = vld [vmem:[#allocation13 + $0x1f0] sm:$0xff]
        %v6410 = vld [vmem:[#allocation13 + $0x1f8] sm:$0xff]
        %v6411 = vld [vmem:[#allocation13 + $0x200] sm:$0xff]
        %v6412 = vld [vmem:[#allocation13 + $0x208] sm:$0xff]
        %v6413 = vld [vmem:[#allocation13 + $0x210] sm:$0xff]
        %v6414 = vld [vmem:[#allocation13 + $0x218] sm:$0xff]
        %v6415 = vld [vmem:[#allocation13 + $0x220] sm:$0xff]
        %v6416 = vld [vmem:[#allocation13 + $0x228] sm:$0xff]
        %v6417 = vld [vmem:[#allocation13 + $0x230] sm:$0xff]
        %v6418 = vld [vmem:[#allocation13 + $0x238] sm:$0xff]
        %v6419 = vld [vmem:[#allocation13 + $0x240] sm:$0xff]
        %v6420 = vld [vmem:[#allocation13 + $0x248] sm:$0xff]
        %v6421 = vld [vmem:[#allocation13 + $0x250] sm:$0xff]
        %v6422 = vld [vmem:[#allocation13 + $0x258] sm:$0xff]
        %v6423 = vld [vmem:[#allocation13 + $0x260] sm:$0xff]
        %v6424 = vld [vmem:[#allocation13 + $0x268] sm:$0xff]
        %v6425 = vld [vmem:[#allocation13 + $0x270] sm:$0xff]
        %v6426 = vld [vmem:[#allocation13 + $0x278] sm:$0xff]
        %v6427 = vld [vmem:[#allocation13 + $0x280] sm:$0xff]
        %v6428 = vld [vmem:[#allocation13 + $0x288] sm:$0xff]
        %v6429 = vld [vmem:[#allocation13 + $0x290] sm:$0xff]
        %v6430 = vld [vmem:[#allocation13 + $0x298] sm:$0xff]
        %v6431 = vld [vmem:[#allocation13 + $0x2a0] sm:$0xff]
        %v6432 = vld [vmem:[#allocation13 + $0x2a8] sm:$0xff]
        %v6433 = vld [vmem:[#allocation13 + $0x2b0] sm:$0xff]
        %v6434 = vld [vmem:[#allocation13 + $0x2b8] sm:$0xff]
        %v6435 = vld [vmem:[#allocation13 + $0x2c0] sm:$0xff]
        %v6436 = vld [vmem:[#allocation13 + $0x2c8] sm:$0xff]
        %v6437 = vld [vmem:[#allocation13 + $0x2d0] sm:$0xff]
        %v6438 = vld [vmem:[#allocation13 + $0x2d8] sm:$0xff]
        %v6439 = vld [vmem:[#allocation13 + $0x2e0] sm:$0xff]
        %v6440 = vld [vmem:[#allocation13 + $0x2e8] sm:$0xff]
        %v6441 = vld [vmem:[#allocation13 + $0x2f0] sm:$0xff]
        %v6442 = vld [vmem:[#allocation13 + $0x2f8] sm:$0xff]
        %v6443 = vld [vmem:[#allocation13 + $0x300] sm:$0xff]
        %v6444 = vld [vmem:[#allocation13 + $0x308] sm:$0xff]
        %v6445 = vld [vmem:[#allocation13 + $0x310] sm:$0xff]
        %v6446 = vld [vmem:[#allocation13 + $0x318] sm:$0xff]
        %v6447 = vld [vmem:[#allocation13 + $0x320] sm:$0xff]
        %v6448 = vld [vmem:[#allocation13 + $0x328] sm:$0xff]
        %v6449 = vld [vmem:[#allocation13 + $0x330] sm:$0xff]
        %v6450 = vld [vmem:[#allocation13 + $0x338] sm:$0xff]
        %v6451 = vld [vmem:[#allocation13 + $0x340] sm:$0xff]
        %v6452 = vld [vmem:[#allocation13 + $0x348] sm:$0xff]
        %v6453 = vld [vmem:[#allocation13 + $0x350] sm:$0xff]
        %v6454 = vld [vmem:[#allocation13 + $0x358] sm:$0xff]
        %v6455 = vld [vmem:[#allocation13 + $0x360] sm:$0xff]
        %v6456 = vld [vmem:[#allocation13 + $0x368] sm:$0xff]
        %v6457 = vld [vmem:[#allocation13 + $0x370] sm:$0xff]
        %v6458 = vld [vmem:[#allocation13 + $0x378] sm:$0xff]
        %v6459 = vld [vmem:[#allocation13 + $0x380] sm:$0xff]
        %v6460 = vld [vmem:[#allocation13 + $0x388] sm:$0xff]
        %v6461 = vld [vmem:[#allocation13 + $0x390] sm:$0xff]
        %v6462 = vld [vmem:[#allocation13 + $0x398] sm:$0xff]
        %v6463 = vld [vmem:[#allocation13 + $0x3a0] sm:$0xff]
        %v6464 = vld [vmem:[#allocation13 + $0x3a8] sm:$0xff]
        %v6465 = vld [vmem:[#allocation13 + $0x3b0] sm:$0xff]
        %v6466 = vld [vmem:[#allocation13 + $0x3b8] sm:$0xff]
        %v6467 = vld [vmem:[#allocation13 + $0x3c0] sm:$0xff]
        %v6468 = vld [vmem:[#allocation13 + $0x3c8] sm:$0xff]
        %v6469 = vld [vmem:[#allocation13 + $0x3d0] sm:$0xff]
        %v6470 = vld [vmem:[#allocation13 + $0x3d8] sm:$0xff]
        %v6471 = vld [vmem:[#allocation13 + $0x3e0] sm:$0xff]
        %v6472 = vld [vmem:[#allocation13 + $0x3e8] sm:$0xff]
        %v6473 = vld [vmem:[#allocation13 + $0x3f0] sm:$0xff]
        %v6474 = vld [vmem:[#allocation13 + $0x3f8] sm:$0xff]
        %v6603 = vunpack.c.l.b16 %v6347
        %v6604 = vunpack.c.h.b16 %v6347
        %v6605 = vunpack.c.l.b16 %v6348
        %v6606 = vunpack.c.h.b16 %v6348
        %v6607 = vunpack.c.l.b16 %v6349
        %v6608 = vunpack.c.h.b16 %v6349
        %v6609 = vunpack.c.l.b16 %v6350
        %v6610 = vunpack.c.h.b16 %v6350
        %v6611 = vunpack.c.l.b16 %v6351
        %v6612 = vunpack.c.h.b16 %v6351
        %v6613 = vunpack.c.l.b16 %v6352
        %v6614 = vunpack.c.h.b16 %v6352
        %v6615 = vunpack.c.l.b16 %v6353
        %v6616 = vunpack.c.h.b16 %v6353
        %v6617 = vunpack.c.l.b16 %v6354
        %v6618 = vunpack.c.h.b16 %v6354
        %v6619 = vunpack.c.l.b16 %v6355
        %v6620 = vunpack.c.h.b16 %v6355
        %v6621 = vunpack.c.l.b16 %v6356
        %v6622 = vunpack.c.h.b16 %v6356
        %v6623 = vunpack.c.l.b16 %v6357
        %v6624 = vunpack.c.h.b16 %v6357
        %v6625 = vunpack.c.l.b16 %v6358
        %v6626 = vunpack.c.h.b16 %v6358
        %v6627 = vunpack.c.l.b16 %v6359
        %v6628 = vunpack.c.h.b16 %v6359
        %v6629 = vunpack.c.l.b16 %v6360
        %v6630 = vunpack.c.h.b16 %v6360
        %v6631 = vunpack.c.l.b16 %v6361
        %v6632 = vunpack.c.h.b16 %v6361
        %v6633 = vunpack.c.l.b16 %v6362
        %v6634 = vunpack.c.h.b16 %v6362
        %v6635 = vunpack.c.l.b16 %v6363
        %v6636 = vunpack.c.h.b16 %v6363
        %v6637 = vunpack.c.l.b16 %v6364
        %v6638 = vunpack.c.h.b16 %v6364
        %v6639 = vunpack.c.l.b16 %v6365
        %v6640 = vunpack.c.h.b16 %v6365
        %v6641 = vunpack.c.l.b16 %v6366
        %v6642 = vunpack.c.h.b16 %v6366
        %v6643 = vunpack.c.l.b16 %v6367
        %v6644 = vunpack.c.h.b16 %v6367
        %v6645 = vunpack.c.l.b16 %v6368
        %v6646 = vunpack.c.h.b16 %v6368
        %v6647 = vunpack.c.l.b16 %v6369
        %v6648 = vunpack.c.h.b16 %v6369
        %v6649 = vunpack.c.l.b16 %v6370
        %v6650 = vunpack.c.h.b16 %v6370
        %v6651 = vunpack.c.l.b16 %v6371
        %v6652 = vunpack.c.h.b16 %v6371
        %v6653 = vunpack.c.l.b16 %v6372
        %v6654 = vunpack.c.h.b16 %v6372
        %v6655 = vunpack.c.l.b16 %v6373
        %v6656 = vunpack.c.h.b16 %v6373
        %v6657 = vunpack.c.l.b16 %v6374
        %v6658 = vunpack.c.h.b16 %v6374
        %v6659 = vunpack.c.l.b16 %v6375
        %v6660 = vunpack.c.h.b16 %v6375
        %v6661 = vunpack.c.l.b16 %v6376
        %v6662 = vunpack.c.h.b16 %v6376
        %v6663 = vunpack.c.l.b16 %v6377
        %v6664 = vunpack.c.h.b16 %v6377
        %v6665 = vunpack.c.l.b16 %v6378
        %v6666 = vunpack.c.h.b16 %v6378
        %v6667 = vunpack.c.l.b16 %v6379
        %v6668 = vunpack.c.h.b16 %v6379
        %v6669 = vunpack.c.l.b16 %v6380
        %v6670 = vunpack.c.h.b16 %v6380
        %v6671 = vunpack.c.l.b16 %v6381
        %v6672 = vunpack.c.h.b16 %v6381
        %v6673 = vunpack.c.l.b16 %v6382
        %v6674 = vunpack.c.h.b16 %v6382
        %v6675 = vunpack.c.l.b16 %v6383
        %v6676 = vunpack.c.h.b16 %v6383
        %v6677 = vunpack.c.l.b16 %v6384
        %v6678 = vunpack.c.h.b16 %v6384
        %v6679 = vunpack.c.l.b16 %v6385
        %v6680 = vunpack.c.h.b16 %v6385
        %v6681 = vunpack.c.l.b16 %v6386
        %v6682 = vunpack.c.h.b16 %v6386
        %v6683 = vunpack.c.l.b16 %v6387
        %v6684 = vunpack.c.h.b16 %v6387
        %v6685 = vunpack.c.l.b16 %v6388
        %v6686 = vunpack.c.h.b16 %v6388
        %v6687 = vunpack.c.l.b16 %v6389
        %v6688 = vunpack.c.h.b16 %v6389
        %v6689 = vunpack.c.l.b16 %v6390
        %v6690 = vunpack.c.h.b16 %v6390
        %v6691 = vunpack.c.l.b16 %v6391
        %v6692 = vunpack.c.h.b16 %v6391
        %v6693 = vunpack.c.l.b16 %v6392
        %v6694 = vunpack.c.h.b16 %v6392
        %v6695 = vunpack.c.l.b16 %v6393
        %v6696 = vunpack.c.h.b16 %v6393
        %v6697 = vunpack.c.l.b16 %v6394
        %v6698 = vunpack.c.h.b16 %v6394
        %v6699 = vunpack.c.l.b16 %v6395
        %v6700 = vunpack.c.h.b16 %v6395
        %v6701 = vunpack.c.l.b16 %v6396
        %v6702 = vunpack.c.h.b16 %v6396
        %v6703 = vunpack.c.l.b16 %v6397
        %v6704 = vunpack.c.h.b16 %v6397
        %v6705 = vunpack.c.l.b16 %v6398
        %v6706 = vunpack.c.h.b16 %v6398
        %v6707 = vunpack.c.l.b16 %v6399
        %v6708 = vunpack.c.h.b16 %v6399
        %v6709 = vunpack.c.l.b16 %v6400
        %v6710 = vunpack.c.h.b16 %v6400
        %v6711 = vunpack.c.l.b16 %v6401
        %v6712 = vunpack.c.h.b16 %v6401
        %v6713 = vunpack.c.l.b16 %v6402
        %v6714 = vunpack.c.h.b16 %v6402
        %v6715 = vunpack.c.l.b16 %v6403
        %v6716 = vunpack.c.h.b16 %v6403
        %v6717 = vunpack.c.l.b16 %v6404
        %v6718 = vunpack.c.h.b16 %v6404
        %v6719 = vunpack.c.l.b16 %v6405
        %v6720 = vunpack.c.h.b16 %v6405
        %v6721 = vunpack.c.l.b16 %v6406
        %v6722 = vunpack.c.h.b16 %v6406
        %v6723 = vunpack.c.l.b16 %v6407
        %v6724 = vunpack.c.h.b16 %v6407
        %v6725 = vunpack.c.l.b16 %v6408
        %v6726 = vunpack.c.h.b16 %v6408
        %v6727 = vunpack.c.l.b16 %v6409
        %v6728 = vunpack.c.h.b16 %v6409
        %v6729 = vunpack.c.l.b16 %v6410
        %v6730 = vunpack.c.h.b16 %v6410
        %v6731 = vunpack.c.l.b16 %v6411
        %v6732 = vunpack.c.h.b16 %v6411
        %v6733 = vunpack.c.l.b16 %v6412
        %v6734 = vunpack.c.h.b16 %v6412
        %v6735 = vunpack.c.l.b16 %v6413
        %v6736 = vunpack.c.h.b16 %v6413
        %v6737 = vunpack.c.l.b16 %v6414
        %v6738 = vunpack.c.h.b16 %v6414
        %v6739 = vunpack.c.l.b16 %v6415
        %v6740 = vunpack.c.h.b16 %v6415
        %v6741 = vunpack.c.l.b16 %v6416
        %v6742 = vunpack.c.h.b16 %v6416
        %v6743 = vunpack.c.l.b16 %v6417
        %v6744 = vunpack.c.h.b16 %v6417
        %v6745 = vunpack.c.l.b16 %v6418
        %v6746 = vunpack.c.h.b16 %v6418
        %v6747 = vunpack.c.l.b16 %v6419
        %v6748 = vunpack.c.h.b16 %v6419
        %v6749 = vunpack.c.l.b16 %v6420
        %v6750 = vunpack.c.h.b16 %v6420
        %v6751 = vunpack.c.l.b16 %v6421
        %v6752 = vunpack.c.h.b16 %v6421
        %v6753 = vunpack.c.l.b16 %v6422
        %v6754 = vunpack.c.h.b16 %v6422
        %v6755 = vunpack.c.l.b16 %v6423
        %v6756 = vunpack.c.h.b16 %v6423
        %v6757 = vunpack.c.l.b16 %v6424
        %v6758 = vunpack.c.h.b16 %v6424
        %v6759 = vunpack.c.l.b16 %v6425
        %v6760 = vunpack.c.h.b16 %v6425
        %v6761 = vunpack.c.l.b16 %v6426
        %v6762 = vunpack.c.h.b16 %v6426
        %v6763 = vunpack.c.l.b16 %v6427
        %v6764 = vunpack.c.h.b16 %v6427
        %v6765 = vunpack.c.l.b16 %v6428
        %v6766 = vunpack.c.h.b16 %v6428
        %v6767 = vunpack.c.l.b16 %v6429
        %v6768 = vunpack.c.h.b16 %v6429
        %v6769 = vunpack.c.l.b16 %v6430
        %v6770 = vunpack.c.h.b16 %v6430
        %v6771 = vunpack.c.l.b16 %v6431
        %v6772 = vunpack.c.h.b16 %v6431
        %v6773 = vunpack.c.l.b16 %v6432
        %v6774 = vunpack.c.h.b16 %v6432
        %v6775 = vunpack.c.l.b16 %v6433
        %v6776 = vunpack.c.h.b16 %v6433
        %v6777 = vunpack.c.l.b16 %v6434
        %v6778 = vunpack.c.h.b16 %v6434
        %v6779 = vunpack.c.l.b16 %v6435
        %v6780 = vunpack.c.h.b16 %v6435
        %v6781 = vunpack.c.l.b16 %v6436
        %v6782 = vunpack.c.h.b16 %v6436
        %v6783 = vunpack.c.l.b16 %v6437
        %v6784 = vunpack.c.h.b16 %v6437
        %v6785 = vunpack.c.l.b16 %v6438
        %v6786 = vunpack.c.h.b16 %v6438
        %v6787 = vunpack.c.l.b16 %v6439
        %v6788 = vunpack.c.h.b16 %v6439
        %v6789 = vunpack.c.l.b16 %v6440
        %v6790 = vunpack.c.h.b16 %v6440
        %v6791 = vunpack.c.l.b16 %v6441
        %v6792 = vunpack.c.h.b16 %v6441
        %v6793 = vunpack.c.l.b16 %v6442
        %v6794 = vunpack.c.h.b16 %v6442
        %v6795 = vunpack.c.l.b16 %v6443
        %v6796 = vunpack.c.h.b16 %v6443
        %v6797 = vunpack.c.l.b16 %v6444
        %v6798 = vunpack.c.h.b16 %v6444
        %v6799 = vunpack.c.l.b16 %v6445
        %v6800 = vunpack.c.h.b16 %v6445
        %v6801 = vunpack.c.l.b16 %v6446
        %v6802 = vunpack.c.h.b16 %v6446
        %v6803 = vunpack.c.l.b16 %v6447
        %v6804 = vunpack.c.h.b16 %v6447
        %v6805 = vunpack.c.l.b16 %v6448
        %v6806 = vunpack.c.h.b16 %v6448
        %v6807 = vunpack.c.l.b16 %v6449
        %v6808 = vunpack.c.h.b16 %v6449
        %v6809 = vunpack.c.l.b16 %v6450
        %v6810 = vunpack.c.h.b16 %v6450
        %v6811 = vunpack.c.l.b16 %v6451
        %v6812 = vunpack.c.h.b16 %v6451
        %v6813 = vunpack.c.l.b16 %v6452
        %v6814 = vunpack.c.h.b16 %v6452
        %v6815 = vunpack.c.l.b16 %v6453
        %v6816 = vunpack.c.h.b16 %v6453
        %v6817 = vunpack.c.l.b16 %v6454
        %v6818 = vunpack.c.h.b16 %v6454
        %v6819 = vunpack.c.l.b16 %v6455
        %v6820 = vunpack.c.h.b16 %v6455
        %v6821 = vunpack.c.l.b16 %v6456
        %v6822 = vunpack.c.h.b16 %v6456
        %v6823 = vunpack.c.l.b16 %v6457
        %v6824 = vunpack.c.h.b16 %v6457
        %v6825 = vunpack.c.l.b16 %v6458
        %v6826 = vunpack.c.h.b16 %v6458
        %v6827 = vunpack.c.l.b16 %v6459
        %v6828 = vunpack.c.h.b16 %v6459
        %v6829 = vunpack.c.l.b16 %v6460
        %v6830 = vunpack.c.h.b16 %v6460
        %v6831 = vunpack.c.l.b16 %v6461
        %v6832 = vunpack.c.h.b16 %v6461
        %v6833 = vunpack.c.l.b16 %v6462
        %v6834 = vunpack.c.h.b16 %v6462
        %v6835 = vunpack.c.l.b16 %v6463
        %v6836 = vunpack.c.h.b16 %v6463
        %v6837 = vunpack.c.l.b16 %v6464
        %v6838 = vunpack.c.h.b16 %v6464
        %v6839 = vunpack.c.l.b16 %v6465
        %v6840 = vunpack.c.h.b16 %v6465
        %v6841 = vunpack.c.l.b16 %v6466
        %v6842 = vunpack.c.h.b16 %v6466
        %v6843 = vunpack.c.l.b16 %v6467
        %v6844 = vunpack.c.h.b16 %v6467
        %v6845 = vunpack.c.l.b16 %v6468
        %v6846 = vunpack.c.h.b16 %v6468
        %v6847 = vunpack.c.l.b16 %v6469
        %v6848 = vunpack.c.h.b16 %v6469
        %v6849 = vunpack.c.l.b16 %v6470
        %v6850 = vunpack.c.h.b16 %v6470
        %v6851 = vunpack.c.l.b16 %v6471
        %v6852 = vunpack.c.h.b16 %v6471
        %v6853 = vunpack.c.l.b16 %v6472
        %v6854 = vunpack.c.h.b16 %v6472
        %v6855 = vunpack.c.l.b16 %v6473
        %v6856 = vunpack.c.h.b16 %v6473
        %v6857 = vunpack.c.l.b16 %v6474
        %v6858 = vunpack.c.h.b16 %v6474
        %v6859 = vpack.c.b16 %v6611, %v6603
        %v6860 = vpack.c.b16 %v6612, %v6604
        %v6861 = vpack.c.b16 %v6613, %v6605
        %v6862 = vpack.c.b16 %v6614, %v6606
        %v6863 = vpack.c.b16 %v6615, %v6607
        %v6864 = vpack.c.b16 %v6616, %v6608
        %v6865 = vpack.c.b16 %v6617, %v6609
        %v6866 = vpack.c.b16 %v6618, %v6610
        %v6867 = vpack.c.b16 %v6627, %v6619
        %v6868 = vpack.c.b16 %v6628, %v6620
        %v6869 = vpack.c.b16 %v6629, %v6621
        %v6870 = vpack.c.b16 %v6630, %v6622
        %v6871 = vpack.c.b16 %v6631, %v6623
        %v6872 = vpack.c.b16 %v6632, %v6624
        %v6873 = vpack.c.b16 %v6633, %v6625
        %v6874 = vpack.c.b16 %v6634, %v6626
        %v6875 = vpack.c.b16 %v6643, %v6635
        %v6876 = vpack.c.b16 %v6644, %v6636
        %v6877 = vpack.c.b16 %v6645, %v6637
        %v6878 = vpack.c.b16 %v6646, %v6638
        %v6879 = vpack.c.b16 %v6647, %v6639
        %v6880 = vpack.c.b16 %v6648, %v6640
        %v6881 = vpack.c.b16 %v6649, %v6641
        %v6882 = vpack.c.b16 %v6650, %v6642
        %v6883 = vpack.c.b16 %v6659, %v6651
        %v6884 = vpack.c.b16 %v6660, %v6652
        %v6885 = vpack.c.b16 %v6661, %v6653
        %v6886 = vpack.c.b16 %v6662, %v6654
        %v6887 = vpack.c.b16 %v6663, %v6655
        %v6888 = vpack.c.b16 %v6664, %v6656
        %v6889 = vpack.c.b16 %v6665, %v6657
        %v6890 = vpack.c.b16 %v6666, %v6658
        %v6891 = vpack.c.b16 %v6675, %v6667
        %v6892 = vpack.c.b16 %v6676, %v6668
        %v6893 = vpack.c.b16 %v6677, %v6669
        %v6894 = vpack.c.b16 %v6678, %v6670
        %v6895 = vpack.c.b16 %v6679, %v6671
        %v6896 = vpack.c.b16 %v6680, %v6672
        %v6897 = vpack.c.b16 %v6681, %v6673
        %v6898 = vpack.c.b16 %v6682, %v6674
        %v6899 = vpack.c.b16 %v6691, %v6683
        %v6900 = vpack.c.b16 %v6692, %v6684
        %v6901 = vpack.c.b16 %v6693, %v6685
        %v6902 = vpack.c.b16 %v6694, %v6686
        %v6903 = vpack.c.b16 %v6695, %v6687
        %v6904 = vpack.c.b16 %v6696, %v6688
        %v6905 = vpack.c.b16 %v6697, %v6689
        %v6906 = vpack.c.b16 %v6698, %v6690
        %v6907 = vpack.c.b16 %v6707, %v6699
        %v6908 = vpack.c.b16 %v6708, %v6700
        %v6909 = vpack.c.b16 %v6709, %v6701
        %v6910 = vpack.c.b16 %v6710, %v6702
        %v6911 = vpack.c.b16 %v6711, %v6703
        %v6912 = vpack.c.b16 %v6712, %v6704
        %v6913 = vpack.c.b16 %v6713, %v6705
        %v6914 = vpack.c.b16 %v6714, %v6706
        %v6915 = vpack.c.b16 %v6723, %v6715
        %v6916 = vpack.c.b16 %v6724, %v6716
        %v6917 = vpack.c.b16 %v6725, %v6717
        %v6918 = vpack.c.b16 %v6726, %v6718
        %v6919 = vpack.c.b16 %v6727, %v6719
        %v6920 = vpack.c.b16 %v6728, %v6720
        %v6921 = vpack.c.b16 %v6729, %v6721
        %v6922 = vpack.c.b16 %v6730, %v6722
        %v6923 = vpack.c.b16 %v6739, %v6731
        %v6924 = vpack.c.b16 %v6740, %v6732
        %v6925 = vpack.c.b16 %v6741, %v6733
        %v6926 = vpack.c.b16 %v6742, %v6734
        %v6927 = vpack.c.b16 %v6743, %v6735
        %v6928 = vpack.c.b16 %v6744, %v6736
        %v6929 = vpack.c.b16 %v6745, %v6737
        %v6930 = vpack.c.b16 %v6746, %v6738
        %v6931 = vpack.c.b16 %v6755, %v6747
        %v6932 = vpack.c.b16 %v6756, %v6748
        %v6933 = vpack.c.b16 %v6757, %v6749
        %v6934 = vpack.c.b16 %v6758, %v6750
        %v6935 = vpack.c.b16 %v6759, %v6751
        %v6936 = vpack.c.b16 %v6760, %v6752
        %v6937 = vpack.c.b16 %v6761, %v6753
        %v6938 = vpack.c.b16 %v6762, %v6754
        %v6939 = vpack.c.b16 %v6771, %v6763
        %v6940 = vpack.c.b16 %v6772, %v6764
        %v6941 = vpack.c.b16 %v6773, %v6765
        %v6942 = vpack.c.b16 %v6774, %v6766
        %v6943 = vpack.c.b16 %v6775, %v6767
        %v6944 = vpack.c.b16 %v6776, %v6768
        %v6945 = vpack.c.b16 %v6777, %v6769
        %v6946 = vpack.c.b16 %v6778, %v6770
        %v6947 = vpack.c.b16 %v6787, %v6779
        %v6948 = vpack.c.b16 %v6788, %v6780
        %v6949 = vpack.c.b16 %v6789, %v6781
        %v6950 = vpack.c.b16 %v6790, %v6782
        %v6951 = vpack.c.b16 %v6791, %v6783
        %v6952 = vpack.c.b16 %v6792, %v6784
        %v6953 = vpack.c.b16 %v6793, %v6785
        %v6954 = vpack.c.b16 %v6794, %v6786
        %v6955 = vpack.c.b16 %v6803, %v6795
        %v6956 = vpack.c.b16 %v6804, %v6796
        %v6957 = vpack.c.b16 %v6805, %v6797
        %v6958 = vpack.c.b16 %v6806, %v6798
        %v6959 = vpack.c.b16 %v6807, %v6799
        %v6960 = vpack.c.b16 %v6808, %v6800
        %v6961 = vpack.c.b16 %v6809, %v6801
        %v6962 = vpack.c.b16 %v6810, %v6802
        %v6963 = vpack.c.b16 %v6819, %v6811
        %v6964 = vpack.c.b16 %v6820, %v6812
        %v6965 = vpack.c.b16 %v6821, %v6813
        %v6966 = vpack.c.b16 %v6822, %v6814
        %v6967 = vpack.c.b16 %v6823, %v6815
        %v6968 = vpack.c.b16 %v6824, %v6816
        %v6969 = vpack.c.b16 %v6825, %v6817
        %v6970 = vpack.c.b16 %v6826, %v6818
        %v6971 = vpack.c.b16 %v6835, %v6827
        %v6972 = vpack.c.b16 %v6836, %v6828
        %v6973 = vpack.c.b16 %v6837, %v6829
        %v6974 = vpack.c.b16 %v6838, %v6830
        %v6975 = vpack.c.b16 %v6839, %v6831
        %v6976 = vpack.c.b16 %v6840, %v6832
        %v6977 = vpack.c.b16 %v6841, %v6833
        %v6978 = vpack.c.b16 %v6842, %v6834
        %v6979 = vpack.c.b16 %v6851, %v6843
        %v6980 = vpack.c.b16 %v6852, %v6844
        %v6981 = vpack.c.b16 %v6853, %v6845
        %v6982 = vpack.c.b16 %v6854, %v6846
        %v6983 = vpack.c.b16 %v6855, %v6847
        %v6984 = vpack.c.b16 %v6856, %v6848
        %v6985 = vpack.c.b16 %v6857, %v6849
        %v6986 = vpack.c.b16 %v6858, %v6850
        %7115 = vmatpush.bf16.msra.mxu0 %v6915
        %7116 = vmatpush.bf16.msra.mxu0 %v6907
        %7117 = vmatpush.bf16.msra.mxu0 %v6899
        %7118 = vmatpush.bf16.msra.mxu0 %v6891
        %7119 = vmatpush.bf16.msra.mxu0 %v6883
        %7120 = vmatpush.bf16.msra.mxu0 %v6875
        %7121 = vmatpush.bf16.msra.mxu0 %v6867
        %7122 = vmatpush.bf16.msra.mxu0 %v6859
        %7123 = vmatmul.bf16.gmra.mxu0 %v6345
        %v7124 = vpop.f32.mrf.mxu0
        %v7125 = vadd.f32 0.0, %v7124
        %v7126 = vpop.f32.mrf.mxu0
        %7127 = vdwg.mxu0
        %7128 = vmatpush.bf16.msra.mxu0 %v6979
        %7129 = vmatpush.bf16.msra.mxu0 %v6971
        %7130 = vmatpush.bf16.msra.mxu0 %v6963
        %7131 = vmatpush.bf16.msra.mxu0 %v6955
        %7132 = vmatpush.bf16.msra.mxu0 %v6947
        %7133 = vmatpush.bf16.msra.mxu0 %v6939
        %7134 = vmatpush.bf16.msra.mxu0 %v6931
        %7135 = vmatpush.bf16.msra.mxu0 %v6923
        %7136 = vmatmul.bf16.gmra.mxu0 %v6346
        %v7137 = vpop.f32.mrf.mxu0
        %v7138 = vadd.f32 %v7125, %v7137
        %v7139 = vpop.f32.mrf.mxu0
        %7140 = vdwg.mxu0
        %7141 = vmatpush.bf16.msra.mxu0 %v6916
        %7142 = vmatpush.bf16.msra.mxu0 %v6908
        %7143 = vmatpush.bf16.msra.mxu0 %v6900
        %7144 = vmatpush.bf16.msra.mxu0 %v6892
        %7145 = vmatpush.bf16.msra.mxu0 %v6884
        %7146 = vmatpush.bf16.msra.mxu0 %v6876
        %7147 = vmatpush.bf16.msra.mxu0 %v6868
        %7148 = vmatpush.bf16.msra.mxu0 %v6860
        %7149 = vmatmul.bf16.gmra.mxu0 %v6345
        %v7150 = vpop.f32.mrf.mxu0
        %v7151 = vadd.f32 0.0, %v7150
        %v7152 = vpop.f32.mrf.mxu0
        %7153 = vdwg.mxu0
        %7154 = vmatpush.bf16.msra.mxu0 %v6980
        %7155 = vmatpush.bf16.msra.mxu0 %v6972
        %7156 = vmatpush.bf16.msra.mxu0 %v6964
        %7157 = vmatpush.bf16.msra.mxu0 %v6956
        %7158 = vmatpush.bf16.msra.mxu0 %v6948
        %7159 = vmatpush.bf16.msra.mxu0 %v6940
        %7160 = vmatpush.bf16.msra.mxu0 %v6932
        %7161 = vmatpush.bf16.msra.mxu0 %v6924
        %7162 = vmatmul.bf16.gmra.mxu0 %v6346
        %v7163 = vpop.f32.mrf.mxu0
        %v7164 = vadd.f32 %v7151, %v7163
        %v7165 = vpop.f32.mrf.mxu0
        %7166 = vdwg.mxu0
        %7167 = vmatpush.bf16.msra.mxu0 %v6917
        %7168 = vmatpush.bf16.msra.mxu0 %v6909
        %7169 = vmatpush.bf16.msra.mxu0 %v6901
        %7170 = vmatpush.bf16.msra.mxu0 %v6893
        %7171 = vmatpush.bf16.msra.mxu0 %v6885
        %7172 = vmatpush.bf16.msra.mxu0 %v6877
        %7173 = vmatpush.bf16.msra.mxu0 %v6869
        %7174 = vmatpush.bf16.msra.mxu0 %v6861
        %7175 = vmatmul.bf16.gmra.mxu0 %v6345
        %v7176 = vpop.f32.mrf.mxu0
        %v7177 = vadd.f32 0.0, %v7176
        %v7178 = vpop.f32.mrf.mxu0
        %7179 = vdwg.mxu0
        %7180 = vmatpush.bf16.msra.mxu0 %v6981
        %7181 = vmatpush.bf16.msra.mxu0 %v6973
        %7182 = vmatpush.bf16.msra.mxu0 %v6965
        %7183 = vmatpush.bf16.msra.mxu0 %v6957
        %7184 = vmatpush.bf16.msra.mxu0 %v6949
        %7185 = vmatpush.bf16.msra.mxu0 %v6941
        %7186 = vmatpush.bf16.msra.mxu0 %v6933
        %7187 = vmatpush.bf16.msra.mxu0 %v6925
        %7188 = vmatmul.bf16.gmra.mxu0 %v6346
        %v7189 = vpop.f32.mrf.mxu0
        %v7190 = vadd.f32 %v7177, %v7189
        %v7191 = vpop.f32.mrf.mxu0
        %7192 = vdwg.mxu0
        %7193 = vmatpush.bf16.msra.mxu0 %v6918
        %7194 = vmatpush.bf16.msra.mxu0 %v6910
        %7195 = vmatpush.bf16.msra.mxu0 %v6902
        %7196 = vmatpush.bf16.msra.mxu0 %v6894
        %7197 = vmatpush.bf16.msra.mxu0 %v6886
        %7198 = vmatpush.bf16.msra.mxu0 %v6878
        %7199 = vmatpush.bf16.msra.mxu0 %v6870
        %7200 = vmatpush.bf16.msra.mxu0 %v6862
        %7201 = vmatmul.bf16.gmra.mxu0 %v6345
        %v7202 = vpop.f32.mrf.mxu0
        %v7203 = vadd.f32 0.0, %v7202
        %v7204 = vpop.f32.mrf.mxu0
        %7205 = vdwg.mxu0
        %7206 = vmatpush.bf16.msra.mxu0 %v6982
        %7207 = vmatpush.bf16.msra.mxu0 %v6974
        %7208 = vmatpush.bf16.msra.mxu0 %v6966
        %7209 = vmatpush.bf16.msra.mxu0 %v6958
        %7210 = vmatpush.bf16.msra.mxu0 %v6950
        %7211 = vmatpush.bf16.msra.mxu0 %v6942
        %7212 = vmatpush.bf16.msra.mxu0 %v6934
        %7213 = vmatpush.bf16.msra.mxu0 %v6926
        %7214 = vmatmul.bf16.gmra.mxu0 %v6346
        %v7215 = vpop.f32.mrf.mxu0
        %v7216 = vadd.f32 %v7203, %v7215
        %v7217 = vpop.f32.mrf.mxu0
        %7218 = vdwg.mxu0
        %7219 = vmatpush.bf16.msra.mxu0 %v6919
        %7220 = vmatpush.bf16.msra.mxu0 %v6911
        %7221 = vmatpush.bf16.msra.mxu0 %v6903
        %7222 = vmatpush.bf16.msra.mxu0 %v6895
        %7223 = vmatpush.bf16.msra.mxu0 %v6887
        %7224 = vmatpush.bf16.msra.mxu0 %v6879
        %7225 = vmatpush.bf16.msra.mxu0 %v6871
        %7226 = vmatpush.bf16.msra.mxu0 %v6863
        %7227 = vmatmul.bf16.gmra.mxu0 %v6345
        %v7228 = vpop.f32.mrf.mxu0
        %v7229 = vadd.f32 0.0, %v7228
        %v7230 = vpop.f32.mrf.mxu0
        %7231 = vdwg.mxu0
        %7232 = vmatpush.bf16.msra.mxu0 %v6983
        %7233 = vmatpush.bf16.msra.mxu0 %v6975
        %7234 = vmatpush.bf16.msra.mxu0 %v6967
        %7235 = vmatpush.bf16.msra.mxu0 %v6959
        %7236 = vmatpush.bf16.msra.mxu0 %v6951
        %7237 = vmatpush.bf16.msra.mxu0 %v6943
        %7238 = vmatpush.bf16.msra.mxu0 %v6935
        %7239 = vmatpush.bf16.msra.mxu0 %v6927
        %7240 = vmatmul.bf16.gmra.mxu0 %v6346
        %v7241 = vpop.f32.mrf.mxu0
        %v7242 = vadd.f32 %v7229, %v7241
        %v7243 = vpop.f32.mrf.mxu0
        %7244 = vdwg.mxu0
        %7245 = vmatpush.bf16.msra.mxu0 %v6920
        %7246 = vmatpush.bf16.msra.mxu0 %v6912
        %7247 = vmatpush.bf16.msra.mxu0 %v6904
        %7248 = vmatpush.bf16.msra.mxu0 %v6896
        %7249 = vmatpush.bf16.msra.mxu0 %v6888
        %7250 = vmatpush.bf16.msra.mxu0 %v6880
        %7251 = vmatpush.bf16.msra.mxu0 %v6872
        %7252 = vmatpush.bf16.msra.mxu0 %v6864
        %7253 = vmatmul.bf16.gmra.mxu0 %v6345
        %v7254 = vpop.f32.mrf.mxu0
        %v7255 = vadd.f32 0.0, %v7254
        %v7256 = vpop.f32.mrf.mxu0
        %7257 = vdwg.mxu0
        %7258 = vmatpush.bf16.msra.mxu0 %v6984
        %7259 = vmatpush.bf16.msra.mxu0 %v6976
        %7260 = vmatpush.bf16.msra.mxu0 %v6968
        %7261 = vmatpush.bf16.msra.mxu0 %v6960
        %7262 = vmatpush.bf16.msra.mxu0 %v6952
        %7263 = vmatpush.bf16.msra.mxu0 %v6944
        %7264 = vmatpush.bf16.msra.mxu0 %v6936
        %7265 = vmatpush.bf16.msra.mxu0 %v6928
        %7266 = vmatmul.bf16.gmra.mxu0 %v6346
        %v7267 = vpop.f32.mrf.mxu0
        %v7268 = vadd.f32 %v7255, %v7267
        %v7269 = vpop.f32.mrf.mxu0
        %7270 = vdwg.mxu0
        %7271 = vmatpush.bf16.msra.mxu0 %v6921
        %7272 = vmatpush.bf16.msra.mxu0 %v6913
        %7273 = vmatpush.bf16.msra.mxu0 %v6905
        %7274 = vmatpush.bf16.msra.mxu0 %v6897
        %7275 = vmatpush.bf16.msra.mxu0 %v6889
        %7276 = vmatpush.bf16.msra.mxu0 %v6881
        %7277 = vmatpush.bf16.msra.mxu0 %v6873
        %7278 = vmatpush.bf16.msra.mxu0 %v6865
        %7279 = vmatmul.bf16.gmra.mxu0 %v6345
        %v7280 = vpop.f32.mrf.mxu0
        %v7281 = vadd.f32 0.0, %v7280
        %v7282 = vpop.f32.mrf.mxu0
        %7283 = vdwg.mxu0
        %7284 = vmatpush.bf16.msra.mxu0 %v6985
        %7285 = vmatpush.bf16.msra.mxu0 %v6977
        %7286 = vmatpush.bf16.msra.mxu0 %v6969
        %7287 = vmatpush.bf16.msra.mxu0 %v6961
        %7288 = vmatpush.bf16.msra.mxu0 %v6953
        %7289 = vmatpush.bf16.msra.mxu0 %v6945
        %7290 = vmatpush.bf16.msra.mxu0 %v6937
        %7291 = vmatpush.bf16.msra.mxu0 %v6929
        %7292 = vmatmul.bf16.gmra.mxu0 %v6346
        %v7293 = vpop.f32.mrf.mxu0
        %v7294 = vadd.f32 %v7281, %v7293
        %v7295 = vpop.f32.mrf.mxu0
        %7296 = vdwg.mxu0
        %7297 = vmatpush.bf16.msra.mxu0 %v6922
        %7298 = vmatpush.bf16.msra.mxu0 %v6914
        %7299 = vmatpush.bf16.msra.mxu0 %v6906
        %7300 = vmatpush.bf16.msra.mxu0 %v6898
        %7301 = vmatpush.bf16.msra.mxu0 %v6890
        %7302 = vmatpush.bf16.msra.mxu0 %v6882
        %7303 = vmatpush.bf16.msra.mxu0 %v6874
        %7304 = vmatpush.bf16.msra.mxu0 %v6866
        %7305 = vmatmul.bf16.gmra.mxu0 %v6345
        %v7306 = vpop.f32.mrf.mxu0
        %v7307 = vadd.f32 0.0, %v7306
        %v7308 = vpop.f32.mrf.mxu0
        %7309 = vdwg.mxu0
        %7310 = vmatpush.bf16.msra.mxu0 %v6986
        %7311 = vmatpush.bf16.msra.mxu0 %v6978
        %7312 = vmatpush.bf16.msra.mxu0 %v6970
        %7313 = vmatpush.bf16.msra.mxu0 %v6962
        %7314 = vmatpush.bf16.msra.mxu0 %v6954
        %7315 = vmatpush.bf16.msra.mxu0 %v6946
        %7316 = vmatpush.bf16.msra.mxu0 %v6938
        %7317 = vmatpush.bf16.msra.mxu0 %v6930
        %7318 = vmatmul.bf16.gmra.mxu0 %v6346
        %v7319 = vpop.f32.mrf.mxu0
        %v7320 = vadd.f32 %v7307, %v7319
        %v7321 = vpop.f32.mrf.mxu0
        %7322 = vdwg.mxu0
        %s7323 = smul.addr %s4216, 8
        %s7324 = scalar_lea.vmem [#allocation2], %s7323
        %v7325 = vld [vmem:[%s7324] sm:$0xff]
        %v7326 = vld [vmem:[%s7324 + $0x8] sm:$0xff]
        %v7327 = vld [vmem:[%s7324 + $0x10] sm:$0xff]
        %v7328 = vld [vmem:[%s7324 + $0x18] sm:$0xff]
        %v7329 = vadd.f32 %v7325, %v7138
        %v7330 = vadd.f32 %v7326, %v7164
        %v7331 = vadd.f32 %v7327, %v7190
        %v7332 = vadd.f32 %v7328, %v7216
        %s7333 = smul.addr %s4205, 8
        %s7334 = scalar_lea.vmem [#allocation3], %s7333
        %v7335 = vld [vmem:[%s7334] sm:$0xff]
        %v7336 = vld [vmem:[%s7334 + $0x8] sm:$0xff]
        %v7337 = vld [vmem:[%s7334 + $0x10] sm:$0xff]
        %v7338 = vld [vmem:[%s7334 + $0x18] sm:$0xff]
        %v7339 = vadd.f32 %v7335, %v7242
        %v7340 = vadd.f32 %v7336, %v7268
        %v7341 = vadd.f32 %v7337, %v7294
        %v7342 = vadd.f32 %v7338, %v7320
        %v7343 = vmul.f32 %v7329, 0.5
        %v7344 = vtanh.pop %v7343
        %v7345 = vmul.f32 %v7344, 0.5
        %v7346 = vadd.f32 %v7345, 0.5
        %v7347 = vmul.f32 %v7330, 0.5
        %v7348 = vtanh.pop %v7347
        %v7349 = vmul.f32 %v7348, 0.5
        %v7350 = vadd.f32 %v7349, 0.5
        %v7351 = vtanh.pop %v7331
        %v7352 = vmul.f32 %v7332, 0.5
        %v7353 = vtanh.pop %v7352
        %v7354 = vmul.f32 %v7353, 0.5
        %v7355 = vadd.f32 %v7354, 0.5
        %v7356 = vmul.f32 %v7350, %v6320
        %v7357 = vmul.f32 %v7346, %v7351
        %v7358 = vadd.f32 %v7356, %v7357
        %v7359 = vtanh.pop %v7358
        %v7360 = vmul.f32 %v7355, %v7359
        %v7361 = vmul.f32 %v7339, 0.5
        %v7362 = vtanh.pop %v7361
        %v7363 = vmul.f32 %v7362, 0.5
        %v7364 = vadd.f32 %v7363, 0.5
        %v7365 = vmul.f32 %v7340, 0.5
        %v7366 = vtanh.pop %v7365
        %v7367 = vmul.f32 %v7366, 0.5
        %v7368 = vadd.f32 %v7367, 0.5
        %v7369 = vtanh.pop %v7341
        %v7370 = vmul.f32 %v7342, 0.5
        %v7371 = vtanh.pop %v7370
        %v7372 = vmul.f32 %v7371, 0.5
        %v7373 = vadd.f32 %v7372, 0.5
        %v7374 = vmul.f32 %v7368, %v6338
        %v7375 = vmul.f32 %v7364, %v7369
        %v7376 = vadd.f32 %v7374, %v7375
        %v7377 = vtanh.pop %v7376
        %v7378 = vmul.f32 %v7373, %v7377
        %s7379 = scalar_lea.vmem %s376, 40 [#allocation14]
        %7380 = vst [vmem:[%s7379] sm:$0xff] %v7360
        %s7381 = scalar_lea.vmem %s383, 16 [#allocation15]
        %7382 = vst [vmem:[%s7381] sm:$0xff] %v7378
        %v7383 = vpack.c.bf16 %v7360, %v7360
        %v7384 = vpack.c.bf16 %v7378, %v7378
        %v7385 = vld [vmem:[#allocation13] sm:$0xff]
        %v7386 = vld [vmem:[#allocation13 + $0x8] sm:$0xff]
        %v7387 = vld [vmem:[#allocation13 + $0x10] sm:$0xff]
        %v7388 = vld [vmem:[#allocation13 + $0x18] sm:$0xff]
        %v7389 = vld [vmem:[#allocation13 + $0x20] sm:$0xff]
        %v7390 = vld [vmem:[#allocation13 + $0x28] sm:$0xff]
        %v7391 = vld [vmem:[#allocation13 + $0x30] sm:$0xff]
        %v7392 = vld [vmem:[#allocation13 + $0x38] sm:$0xff]
        %v7393 = vld [vmem:[#allocation13 + $0x40] sm:$0xff]
        %v7394 = vld [vmem:[#allocation13 + $0x48] sm:$0xff]
        %v7395 = vld [vmem:[#allocation13 + $0x50] sm:$0xff]
        %v7396 = vld [vmem:[#allocation13 + $0x58] sm:$0xff]
        %v7397 = vld [vmem:[#allocation13 + $0x60] sm:$0xff]
        %v7398 = vld [vmem:[#allocation13 + $0x68] sm:$0xff]
        %v7399 = vld [vmem:[#allocation13 + $0x70] sm:$0xff]
        %v7400 = vld [vmem:[#allocation13 + $0x78] sm:$0xff]
        %v7401 = vld [vmem:[#allocation13 + $0x80] sm:$0xff]
        %v7402 = vld [vmem:[#allocation13 + $0x88] sm:$0xff]
        %v7403 = vld [vmem:[#allocation13 + $0x90] sm:$0xff]
        %v7404 = vld [vmem:[#allocation13 + $0x98] sm:$0xff]
        %v7405 = vld [vmem:[#allocation13 + $0xa0] sm:$0xff]
        %v7406 = vld [vmem:[#allocation13 + $0xa8] sm:$0xff]
        %v7407 = vld [vmem:[#allocation13 + $0xb0] sm:$0xff]
        %v7408 = vld [vmem:[#allocation13 + $0xb8] sm:$0xff]
        %v7409 = vld [vmem:[#allocation13 + $0xc0] sm:$0xff]
        %v7410 = vld [vmem:[#allocation13 + $0xc8] sm:$0xff]
        %v7411 = vld [vmem:[#allocation13 + $0xd0] sm:$0xff]
        %v7412 = vld [vmem:[#allocation13 + $0xd8] sm:$0xff]
        %v7413 = vld [vmem:[#allocation13 + $0xe0] sm:$0xff]
        %v7414 = vld [vmem:[#allocation13 + $0xe8] sm:$0xff]
        %v7415 = vld [vmem:[#allocation13 + $0xf0] sm:$0xff]
        %v7416 = vld [vmem:[#allocation13 + $0xf8] sm:$0xff]
        %v7417 = vld [vmem:[#allocation13 + $0x100] sm:$0xff]
        %v7418 = vld [vmem:[#allocation13 + $0x108] sm:$0xff]
        %v7419 = vld [vmem:[#allocation13 + $0x110] sm:$0xff]
        %v7420 = vld [vmem:[#allocation13 + $0x118] sm:$0xff]
        %v7421 = vld [vmem:[#allocation13 + $0x120] sm:$0xff]
        %v7422 = vld [vmem:[#allocation13 + $0x128] sm:$0xff]
        %v7423 = vld [vmem:[#allocation13 + $0x130] sm:$0xff]
        %v7424 = vld [vmem:[#allocation13 + $0x138] sm:$0xff]
        %v7425 = vld [vmem:[#allocation13 + $0x140] sm:$0xff]
        %v7426 = vld [vmem:[#allocation13 + $0x148] sm:$0xff]
        %v7427 = vld [vmem:[#allocation13 + $0x150] sm:$0xff]
        %v7428 = vld [vmem:[#allocation13 + $0x158] sm:$0xff]
        %v7429 = vld [vmem:[#allocation13 + $0x160] sm:$0xff]
        %v7430 = vld [vmem:[#allocation13 + $0x168] sm:$0xff]
        %v7431 = vld [vmem:[#allocation13 + $0x170] sm:$0xff]
        %v7432 = vld [vmem:[#allocation13 + $0x178] sm:$0xff]
        %v7433 = vld [vmem:[#allocation13 + $0x180] sm:$0xff]
        %v7434 = vld [vmem:[#allocation13 + $0x188] sm:$0xff]
        %v7435 = vld [vmem:[#allocation13 + $0x190] sm:$0xff]
        %v7436 = vld [vmem:[#allocation13 + $0x198] sm:$0xff]
        %v7437 = vld [vmem:[#allocation13 + $0x1a0] sm:$0xff]
        %v7438 = vld [vmem:[#allocation13 + $0x1a8] sm:$0xff]
        %v7439 = vld [vmem:[#allocation13 + $0x1b0] sm:$0xff]
        %v7440 = vld [vmem:[#allocation13 + $0x1b8] sm:$0xff]
        %v7441 = vld [vmem:[#allocation13 + $0x1c0] sm:$0xff]
        %v7442 = vld [vmem:[#allocation13 + $0x1c8] sm:$0xff]
        %v7443 = vld [vmem:[#allocation13 + $0x1d0] sm:$0xff]
        %v7444 = vld [vmem:[#allocation13 + $0x1d8] sm:$0xff]
        %v7445 = vld [vmem:[#allocation13 + $0x1e0] sm:$0xff]
        %v7446 = vld [vmem:[#allocation13 + $0x1e8] sm:$0xff]
        %v7447 = vld [vmem:[#allocation13 + $0x1f0] sm:$0xff]
        %v7448 = vld [vmem:[#allocation13 + $0x1f8] sm:$0xff]
        %v7449 = vld [vmem:[#allocation13 + $0x200] sm:$0xff]
        %v7450 = vld [vmem:[#allocation13 + $0x208] sm:$0xff]
        %v7451 = vld [vmem:[#allocation13 + $0x210] sm:$0xff]
        %v7452 = vld [vmem:[#allocation13 + $0x218] sm:$0xff]
        %v7453 = vld [vmem:[#allocation13 + $0x220] sm:$0xff]
        %v7454 = vld [vmem:[#allocation13 + $0x228] sm:$0xff]
        %v7455 = vld [vmem:[#allocation13 + $0x230] sm:$0xff]
        %v7456 = vld [vmem:[#allocation13 + $0x238] sm:$0xff]
        %v7457 = vld [vmem:[#allocation13 + $0x240] sm:$0xff]
        %v7458 = vld [vmem:[#allocation13 + $0x248] sm:$0xff]
        %v7459 = vld [vmem:[#allocation13 + $0x250] sm:$0xff]
        %v7460 = vld [vmem:[#allocation13 + $0x258] sm:$0xff]
        %v7461 = vld [vmem:[#allocation13 + $0x260] sm:$0xff]
        %v7462 = vld [vmem:[#allocation13 + $0x268] sm:$0xff]
        %v7463 = vld [vmem:[#allocation13 + $0x270] sm:$0xff]
        %v7464 = vld [vmem:[#allocation13 + $0x278] sm:$0xff]
        %v7465 = vld [vmem:[#allocation13 + $0x280] sm:$0xff]
        %v7466 = vld [vmem:[#allocation13 + $0x288] sm:$0xff]
        %v7467 = vld [vmem:[#allocation13 + $0x290] sm:$0xff]
        %v7468 = vld [vmem:[#allocation13 + $0x298] sm:$0xff]
        %v7469 = vld [vmem:[#allocation13 + $0x2a0] sm:$0xff]
        %v7470 = vld [vmem:[#allocation13 + $0x2a8] sm:$0xff]
        %v7471 = vld [vmem:[#allocation13 + $0x2b0] sm:$0xff]
        %v7472 = vld [vmem:[#allocation13 + $0x2b8] sm:$0xff]
        %v7473 = vld [vmem:[#allocation13 + $0x2c0] sm:$0xff]
        %v7474 = vld [vmem:[#allocation13 + $0x2c8] sm:$0xff]
        %v7475 = vld [vmem:[#allocation13 + $0x2d0] sm:$0xff]
        %v7476 = vld [vmem:[#allocation13 + $0x2d8] sm:$0xff]
        %v7477 = vld [vmem:[#allocation13 + $0x2e0] sm:$0xff]
        %v7478 = vld [vmem:[#allocation13 + $0x2e8] sm:$0xff]
        %v7479 = vld [vmem:[#allocation13 + $0x2f0] sm:$0xff]
        %v7480 = vld [vmem:[#allocation13 + $0x2f8] sm:$0xff]
        %v7481 = vld [vmem:[#allocation13 + $0x300] sm:$0xff]
        %v7482 = vld [vmem:[#allocation13 + $0x308] sm:$0xff]
        %v7483 = vld [vmem:[#allocation13 + $0x310] sm:$0xff]
        %v7484 = vld [vmem:[#allocation13 + $0x318] sm:$0xff]
        %v7485 = vld [vmem:[#allocation13 + $0x320] sm:$0xff]
        %v7486 = vld [vmem:[#allocation13 + $0x328] sm:$0xff]
        %v7487 = vld [vmem:[#allocation13 + $0x330] sm:$0xff]
        %v7488 = vld [vmem:[#allocation13 + $0x338] sm:$0xff]
        %v7489 = vld [vmem:[#allocation13 + $0x340] sm:$0xff]
        %v7490 = vld [vmem:[#allocation13 + $0x348] sm:$0xff]
        %v7491 = vld [vmem:[#allocation13 + $0x350] sm:$0xff]
        %v7492 = vld [vmem:[#allocation13 + $0x358] sm:$0xff]
        %v7493 = vld [vmem:[#allocation13 + $0x360] sm:$0xff]
        %v7494 = vld [vmem:[#allocation13 + $0x368] sm:$0xff]
        %v7495 = vld [vmem:[#allocation13 + $0x370] sm:$0xff]
        %v7496 = vld [vmem:[#allocation13 + $0x378] sm:$0xff]
        %v7497 = vld [vmem:[#allocation13 + $0x380] sm:$0xff]
        %v7498 = vld [vmem:[#allocation13 + $0x388] sm:$0xff]
        %v7499 = vld [vmem:[#allocation13 + $0x390] sm:$0xff]
        %v7500 = vld [vmem:[#allocation13 + $0x398] sm:$0xff]
        %v7501 = vld [vmem:[#allocation13 + $0x3a0] sm:$0xff]
        %v7502 = vld [vmem:[#allocation13 + $0x3a8] sm:$0xff]
        %v7503 = vld [vmem:[#allocation13 + $0x3b0] sm:$0xff]
        %v7504 = vld [vmem:[#allocation13 + $0x3b8] sm:$0xff]
        %v7505 = vld [vmem:[#allocation13 + $0x3c0] sm:$0xff]
        %v7506 = vld [vmem:[#allocation13 + $0x3c8] sm:$0xff]
        %v7507 = vld [vmem:[#allocation13 + $0x3d0] sm:$0xff]
        %v7508 = vld [vmem:[#allocation13 + $0x3d8] sm:$0xff]
        %v7509 = vld [vmem:[#allocation13 + $0x3e0] sm:$0xff]
        %v7510 = vld [vmem:[#allocation13 + $0x3e8] sm:$0xff]
        %v7511 = vld [vmem:[#allocation13 + $0x3f0] sm:$0xff]
        %v7512 = vld [vmem:[#allocation13 + $0x3f8] sm:$0xff]
        %v7641 = vunpack.c.l.b16 %v7385
        %v7642 = vunpack.c.h.b16 %v7385
        %v7643 = vunpack.c.l.b16 %v7386
        %v7644 = vunpack.c.h.b16 %v7386
        %v7645 = vunpack.c.l.b16 %v7387
        %v7646 = vunpack.c.h.b16 %v7387
        %v7647 = vunpack.c.l.b16 %v7388
        %v7648 = vunpack.c.h.b16 %v7388
        %v7649 = vunpack.c.l.b16 %v7389
        %v7650 = vunpack.c.h.b16 %v7389
        %v7651 = vunpack.c.l.b16 %v7390
        %v7652 = vunpack.c.h.b16 %v7390
        %v7653 = vunpack.c.l.b16 %v7391
        %v7654 = vunpack.c.h.b16 %v7391
        %v7655 = vunpack.c.l.b16 %v7392
        %v7656 = vunpack.c.h.b16 %v7392
        %v7657 = vunpack.c.l.b16 %v7393
        %v7658 = vunpack.c.h.b16 %v7393
        %v7659 = vunpack.c.l.b16 %v7394
        %v7660 = vunpack.c.h.b16 %v7394
        %v7661 = vunpack.c.l.b16 %v7395
        %v7662 = vunpack.c.h.b16 %v7395
        %v7663 = vunpack.c.l.b16 %v7396
        %v7664 = vunpack.c.h.b16 %v7396
        %v7665 = vunpack.c.l.b16 %v7397
        %v7666 = vunpack.c.h.b16 %v7397
        %v7667 = vunpack.c.l.b16 %v7398
        %v7668 = vunpack.c.h.b16 %v7398
        %v7669 = vunpack.c.l.b16 %v7399
        %v7670 = vunpack.c.h.b16 %v7399
        %v7671 = vunpack.c.l.b16 %v7400
        %v7672 = vunpack.c.h.b16 %v7400
        %v7673 = vunpack.c.l.b16 %v7401
        %v7674 = vunpack.c.h.b16 %v7401
        %v7675 = vunpack.c.l.b16 %v7402
        %v7676 = vunpack.c.h.b16 %v7402
        %v7677 = vunpack.c.l.b16 %v7403
        %v7678 = vunpack.c.h.b16 %v7403
        %v7679 = vunpack.c.l.b16 %v7404
        %v7680 = vunpack.c.h.b16 %v7404
        %v7681 = vunpack.c.l.b16 %v7405
        %v7682 = vunpack.c.h.b16 %v7405
        %v7683 = vunpack.c.l.b16 %v7406
        %v7684 = vunpack.c.h.b16 %v7406
        %v7685 = vunpack.c.l.b16 %v7407
        %v7686 = vunpack.c.h.b16 %v7407
        %v7687 = vunpack.c.l.b16 %v7408
        %v7688 = vunpack.c.h.b16 %v7408
        %v7689 = vunpack.c.l.b16 %v7409
        %v7690 = vunpack.c.h.b16 %v7409
        %v7691 = vunpack.c.l.b16 %v7410
        %v7692 = vunpack.c.h.b16 %v7410
        %v7693 = vunpack.c.l.b16 %v7411
        %v7694 = vunpack.c.h.b16 %v7411
        %v7695 = vunpack.c.l.b16 %v7412
        %v7696 = vunpack.c.h.b16 %v7412
        %v7697 = vunpack.c.l.b16 %v7413
        %v7698 = vunpack.c.h.b16 %v7413
        %v7699 = vunpack.c.l.b16 %v7414
        %v7700 = vunpack.c.h.b16 %v7414
        %v7701 = vunpack.c.l.b16 %v7415
        %v7702 = vunpack.c.h.b16 %v7415
        %v7703 = vunpack.c.l.b16 %v7416
        %v7704 = vunpack.c.h.b16 %v7416
        %v7705 = vunpack.c.l.b16 %v7417
        %v7706 = vunpack.c.h.b16 %v7417
        %v7707 = vunpack.c.l.b16 %v7418
        %v7708 = vunpack.c.h.b16 %v7418
        %v7709 = vunpack.c.l.b16 %v7419
        %v7710 = vunpack.c.h.b16 %v7419
        %v7711 = vunpack.c.l.b16 %v7420
        %v7712 = vunpack.c.h.b16 %v7420
        %v7713 = vunpack.c.l.b16 %v7421
        %v7714 = vunpack.c.h.b16 %v7421
        %v7715 = vunpack.c.l.b16 %v7422
        %v7716 = vunpack.c.h.b16 %v7422
        %v7717 = vunpack.c.l.b16 %v7423
        %v7718 = vunpack.c.h.b16 %v7423
        %v7719 = vunpack.c.l.b16 %v7424
        %v7720 = vunpack.c.h.b16 %v7424
        %v7721 = vunpack.c.l.b16 %v7425
        %v7722 = vunpack.c.h.b16 %v7425
        %v7723 = vunpack.c.l.b16 %v7426
        %v7724 = vunpack.c.h.b16 %v7426
        %v7725 = vunpack.c.l.b16 %v7427
        %v7726 = vunpack.c.h.b16 %v7427
        %v7727 = vunpack.c.l.b16 %v7428
        %v7728 = vunpack.c.h.b16 %v7428
        %v7729 = vunpack.c.l.b16 %v7429
        %v7730 = vunpack.c.h.b16 %v7429
        %v7731 = vunpack.c.l.b16 %v7430
        %v7732 = vunpack.c.h.b16 %v7430
        %v7733 = vunpack.c.l.b16 %v7431
        %v7734 = vunpack.c.h.b16 %v7431
        %v7735 = vunpack.c.l.b16 %v7432
        %v7736 = vunpack.c.h.b16 %v7432
        %v7737 = vunpack.c.l.b16 %v7433
        %v7738 = vunpack.c.h.b16 %v7433
        %v7739 = vunpack.c.l.b16 %v7434
        %v7740 = vunpack.c.h.b16 %v7434
        %v7741 = vunpack.c.l.b16 %v7435
        %v7742 = vunpack.c.h.b16 %v7435
        %v7743 = vunpack.c.l.b16 %v7436
        %v7744 = vunpack.c.h.b16 %v7436
        %v7745 = vunpack.c.l.b16 %v7437
        %v7746 = vunpack.c.h.b16 %v7437
        %v7747 = vunpack.c.l.b16 %v7438
        %v7748 = vunpack.c.h.b16 %v7438
        %v7749 = vunpack.c.l.b16 %v7439
        %v7750 = vunpack.c.h.b16 %v7439
        %v7751 = vunpack.c.l.b16 %v7440
        %v7752 = vunpack.c.h.b16 %v7440
        %v7753 = vunpack.c.l.b16 %v7441
        %v7754 = vunpack.c.h.b16 %v7441
        %v7755 = vunpack.c.l.b16 %v7442
        %v7756 = vunpack.c.h.b16 %v7442
        %v7757 = vunpack.c.l.b16 %v7443
        %v7758 = vunpack.c.h.b16 %v7443
        %v7759 = vunpack.c.l.b16 %v7444
        %v7760 = vunpack.c.h.b16 %v7444
        %v7761 = vunpack.c.l.b16 %v7445
        %v7762 = vunpack.c.h.b16 %v7445
        %v7763 = vunpack.c.l.b16 %v7446
        %v7764 = vunpack.c.h.b16 %v7446
        %v7765 = vunpack.c.l.b16 %v7447
        %v7766 = vunpack.c.h.b16 %v7447
        %v7767 = vunpack.c.l.b16 %v7448
        %v7768 = vunpack.c.h.b16 %v7448
        %v7769 = vunpack.c.l.b16 %v7449
        %v7770 = vunpack.c.h.b16 %v7449
        %v7771 = vunpack.c.l.b16 %v7450
        %v7772 = vunpack.c.h.b16 %v7450
        %v7773 = vunpack.c.l.b16 %v7451
        %v7774 = vunpack.c.h.b16 %v7451
        %v7775 = vunpack.c.l.b16 %v7452
        %v7776 = vunpack.c.h.b16 %v7452
        %v7777 = vunpack.c.l.b16 %v7453
        %v7778 = vunpack.c.h.b16 %v7453
        %v7779 = vunpack.c.l.b16 %v7454
        %v7780 = vunpack.c.h.b16 %v7454
        %v7781 = vunpack.c.l.b16 %v7455
        %v7782 = vunpack.c.h.b16 %v7455
        %v7783 = vunpack.c.l.b16 %v7456
        %v7784 = vunpack.c.h.b16 %v7456
        %v7785 = vunpack.c.l.b16 %v7457
        %v7786 = vunpack.c.h.b16 %v7457
        %v7787 = vunpack.c.l.b16 %v7458
        %v7788 = vunpack.c.h.b16 %v7458
        %v7789 = vunpack.c.l.b16 %v7459
        %v7790 = vunpack.c.h.b16 %v7459
        %v7791 = vunpack.c.l.b16 %v7460
        %v7792 = vunpack.c.h.b16 %v7460
        %v7793 = vunpack.c.l.b16 %v7461
        %v7794 = vunpack.c.h.b16 %v7461
        %v7795 = vunpack.c.l.b16 %v7462
        %v7796 = vunpack.c.h.b16 %v7462
        %v7797 = vunpack.c.l.b16 %v7463
        %v7798 = vunpack.c.h.b16 %v7463
        %v7799 = vunpack.c.l.b16 %v7464
        %v7800 = vunpack.c.h.b16 %v7464
        %v7801 = vunpack.c.l.b16 %v7465
        %v7802 = vunpack.c.h.b16 %v7465
        %v7803 = vunpack.c.l.b16 %v7466
        %v7804 = vunpack.c.h.b16 %v7466
        %v7805 = vunpack.c.l.b16 %v7467
        %v7806 = vunpack.c.h.b16 %v7467
        %v7807 = vunpack.c.l.b16 %v7468
        %v7808 = vunpack.c.h.b16 %v7468
        %v7809 = vunpack.c.l.b16 %v7469
        %v7810 = vunpack.c.h.b16 %v7469
        %v7811 = vunpack.c.l.b16 %v7470
        %v7812 = vunpack.c.h.b16 %v7470
        %v7813 = vunpack.c.l.b16 %v7471
        %v7814 = vunpack.c.h.b16 %v7471
        %v7815 = vunpack.c.l.b16 %v7472
        %v7816 = vunpack.c.h.b16 %v7472
        %v7817 = vunpack.c.l.b16 %v7473
        %v7818 = vunpack.c.h.b16 %v7473
        %v7819 = vunpack.c.l.b16 %v7474
        %v7820 = vunpack.c.h.b16 %v7474
        %v7821 = vunpack.c.l.b16 %v7475
        %v7822 = vunpack.c.h.b16 %v7475
        %v7823 = vunpack.c.l.b16 %v7476
        %v7824 = vunpack.c.h.b16 %v7476
        %v7825 = vunpack.c.l.b16 %v7477
        %v7826 = vunpack.c.h.b16 %v7477
        %v7827 = vunpack.c.l.b16 %v7478
        %v7828 = vunpack.c.h.b16 %v7478
        %v7829 = vunpack.c.l.b16 %v7479
        %v7830 = vunpack.c.h.b16 %v7479
        %v7831 = vunpack.c.l.b16 %v7480
        %v7832 = vunpack.c.h.b16 %v7480
        %v7833 = vunpack.c.l.b16 %v7481
        %v7834 = vunpack.c.h.b16 %v7481
        %v7835 = vunpack.c.l.b16 %v7482
        %v7836 = vunpack.c.h.b16 %v7482
        %v7837 = vunpack.c.l.b16 %v7483
        %v7838 = vunpack.c.h.b16 %v7483
        %v7839 = vunpack.c.l.b16 %v7484
        %v7840 = vunpack.c.h.b16 %v7484
        %v7841 = vunpack.c.l.b16 %v7485
        %v7842 = vunpack.c.h.b16 %v7485
        %v7843 = vunpack.c.l.b16 %v7486
        %v7844 = vunpack.c.h.b16 %v7486
        %v7845 = vunpack.c.l.b16 %v7487
        %v7846 = vunpack.c.h.b16 %v7487
        %v7847 = vunpack.c.l.b16 %v7488
        %v7848 = vunpack.c.h.b16 %v7488
        %v7849 = vunpack.c.l.b16 %v7489
        %v7850 = vunpack.c.h.b16 %v7489
        %v7851 = vunpack.c.l.b16 %v7490
        %v7852 = vunpack.c.h.b16 %v7490
        %v7853 = vunpack.c.l.b16 %v7491
        %v7854 = vunpack.c.h.b16 %v7491
        %v7855 = vunpack.c.l.b16 %v7492
        %v7856 = vunpack.c.h.b16 %v7492
        %v7857 = vunpack.c.l.b16 %v7493
        %v7858 = vunpack.c.h.b16 %v7493
        %v7859 = vunpack.c.l.b16 %v7494
        %v7860 = vunpack.c.h.b16 %v7494
        %v7861 = vunpack.c.l.b16 %v7495
        %v7862 = vunpack.c.h.b16 %v7495
        %v7863 = vunpack.c.l.b16 %v7496
        %v7864 = vunpack.c.h.b16 %v7496
        %v7865 = vunpack.c.l.b16 %v7497
        %v7866 = vunpack.c.h.b16 %v7497
        %v7867 = vunpack.c.l.b16 %v7498
        %v7868 = vunpack.c.h.b16 %v7498
        %v7869 = vunpack.c.l.b16 %v7499
        %v7870 = vunpack.c.h.b16 %v7499
        %v7871 = vunpack.c.l.b16 %v7500
        %v7872 = vunpack.c.h.b16 %v7500
        %v7873 = vunpack.c.l.b16 %v7501
        %v7874 = vunpack.c.h.b16 %v7501
        %v7875 = vunpack.c.l.b16 %v7502
        %v7876 = vunpack.c.h.b16 %v7502
        %v7877 = vunpack.c.l.b16 %v7503
        %v7878 = vunpack.c.h.b16 %v7503
        %v7879 = vunpack.c.l.b16 %v7504
        %v7880 = vunpack.c.h.b16 %v7504
        %v7881 = vunpack.c.l.b16 %v7505
        %v7882 = vunpack.c.h.b16 %v7505
        %v7883 = vunpack.c.l.b16 %v7506
        %v7884 = vunpack.c.h.b16 %v7506
        %v7885 = vunpack.c.l.b16 %v7507
        %v7886 = vunpack.c.h.b16 %v7507
        %v7887 = vunpack.c.l.b16 %v7508
        %v7888 = vunpack.c.h.b16 %v7508
        %v7889 = vunpack.c.l.b16 %v7509
        %v7890 = vunpack.c.h.b16 %v7509
        %v7891 = vunpack.c.l.b16 %v7510
        %v7892 = vunpack.c.h.b16 %v7510
        %v7893 = vunpack.c.l.b16 %v7511
        %v7894 = vunpack.c.h.b16 %v7511
        %v7895 = vunpack.c.l.b16 %v7512
        %v7896 = vunpack.c.h.b16 %v7512
        %v7897 = vpack.c.b16 %v7649, %v7641
        %v7898 = vpack.c.b16 %v7650, %v7642
        %v7899 = vpack.c.b16 %v7651, %v7643
        %v7900 = vpack.c.b16 %v7652, %v7644
        %v7901 = vpack.c.b16 %v7653, %v7645
        %v7902 = vpack.c.b16 %v7654, %v7646
        %v7903 = vpack.c.b16 %v7655, %v7647
        %v7904 = vpack.c.b16 %v7656, %v7648
        %v7905 = vpack.c.b16 %v7665, %v7657
        %v7906 = vpack.c.b16 %v7666, %v7658
        %v7907 = vpack.c.b16 %v7667, %v7659
        %v7908 = vpack.c.b16 %v7668, %v7660
        %v7909 = vpack.c.b16 %v7669, %v7661
        %v7910 = vpack.c.b16 %v7670, %v7662
        %v7911 = vpack.c.b16 %v7671, %v7663
        %v7912 = vpack.c.b16 %v7672, %v7664
        %v7913 = vpack.c.b16 %v7681, %v7673
        %v7914 = vpack.c.b16 %v7682, %v7674
        %v7915 = vpack.c.b16 %v7683, %v7675
        %v7916 = vpack.c.b16 %v7684, %v7676
        %v7917 = vpack.c.b16 %v7685, %v7677
        %v7918 = vpack.c.b16 %v7686, %v7678
        %v7919 = vpack.c.b16 %v7687, %v7679
        %v7920 = vpack.c.b16 %v7688, %v7680
        %v7921 = vpack.c.b16 %v7697, %v7689
        %v7922 = vpack.c.b16 %v7698, %v7690
        %v7923 = vpack.c.b16 %v7699, %v7691
        %v7924 = vpack.c.b16 %v7700, %v7692
        %v7925 = vpack.c.b16 %v7701, %v7693
        %v7926 = vpack.c.b16 %v7702, %v7694
        %v7927 = vpack.c.b16 %v7703, %v7695
        %v7928 = vpack.c.b16 %v7704, %v7696
        %v7929 = vpack.c.b16 %v7713, %v7705
        %v7930 = vpack.c.b16 %v7714, %v7706
        %v7931 = vpack.c.b16 %v7715, %v7707
        %v7932 = vpack.c.b16 %v7716, %v7708
        %v7933 = vpack.c.b16 %v7717, %v7709
        %v7934 = vpack.c.b16 %v7718, %v7710
        %v7935 = vpack.c.b16 %v7719, %v7711
        %v7936 = vpack.c.b16 %v7720, %v7712
        %v7937 = vpack.c.b16 %v7729, %v7721
        %v7938 = vpack.c.b16 %v7730, %v7722
        %v7939 = vpack.c.b16 %v7731, %v7723
        %v7940 = vpack.c.b16 %v7732, %v7724
        %v7941 = vpack.c.b16 %v7733, %v7725
        %v7942 = vpack.c.b16 %v7734, %v7726
        %v7943 = vpack.c.b16 %v7735, %v7727
        %v7944 = vpack.c.b16 %v7736, %v7728
        %v7945 = vpack.c.b16 %v7745, %v7737
        %v7946 = vpack.c.b16 %v7746, %v7738
        %v7947 = vpack.c.b16 %v7747, %v7739
        %v7948 = vpack.c.b16 %v7748, %v7740
        %v7949 = vpack.c.b16 %v7749, %v7741
        %v7950 = vpack.c.b16 %v7750, %v7742
        %v7951 = vpack.c.b16 %v7751, %v7743
        %v7952 = vpack.c.b16 %v7752, %v7744
        %v7953 = vpack.c.b16 %v7761, %v7753
        %v7954 = vpack.c.b16 %v7762, %v7754
        %v7955 = vpack.c.b16 %v7763, %v7755
        %v7956 = vpack.c.b16 %v7764, %v7756
        %v7957 = vpack.c.b16 %v7765, %v7757
        %v7958 = vpack.c.b16 %v7766, %v7758
        %v7959 = vpack.c.b16 %v7767, %v7759
        %v7960 = vpack.c.b16 %v7768, %v7760
        %v7961 = vpack.c.b16 %v7777, %v7769
        %v7962 = vpack.c.b16 %v7778, %v7770
        %v7963 = vpack.c.b16 %v7779, %v7771
        %v7964 = vpack.c.b16 %v7780, %v7772
        %v7965 = vpack.c.b16 %v7781, %v7773
        %v7966 = vpack.c.b16 %v7782, %v7774
        %v7967 = vpack.c.b16 %v7783, %v7775
        %v7968 = vpack.c.b16 %v7784, %v7776
        %v7969 = vpack.c.b16 %v7793, %v7785
        %v7970 = vpack.c.b16 %v7794, %v7786
        %v7971 = vpack.c.b16 %v7795, %v7787
        %v7972 = vpack.c.b16 %v7796, %v7788
        %v7973 = vpack.c.b16 %v7797, %v7789
        %v7974 = vpack.c.b16 %v7798, %v7790
        %v7975 = vpack.c.b16 %v7799, %v7791
        %v7976 = vpack.c.b16 %v7800, %v7792
        %v7977 = vpack.c.b16 %v7809, %v7801
        %v7978 = vpack.c.b16 %v7810, %v7802
        %v7979 = vpack.c.b16 %v7811, %v7803
        %v7980 = vpack.c.b16 %v7812, %v7804
        %v7981 = vpack.c.b16 %v7813, %v7805
        %v7982 = vpack.c.b16 %v7814, %v7806
        %v7983 = vpack.c.b16 %v7815, %v7807
        %v7984 = vpack.c.b16 %v7816, %v7808
        %v7985 = vpack.c.b16 %v7825, %v7817
        %v7986 = vpack.c.b16 %v7826, %v7818
        %v7987 = vpack.c.b16 %v7827, %v7819
        %v7988 = vpack.c.b16 %v7828, %v7820
        %v7989 = vpack.c.b16 %v7829, %v7821
        %v7990 = vpack.c.b16 %v7830, %v7822
        %v7991 = vpack.c.b16 %v7831, %v7823
        %v7992 = vpack.c.b16 %v7832, %v7824
        %v7993 = vpack.c.b16 %v7841, %v7833
        %v7994 = vpack.c.b16 %v7842, %v7834
        %v7995 = vpack.c.b16 %v7843, %v7835
        %v7996 = vpack.c.b16 %v7844, %v7836
        %v7997 = vpack.c.b16 %v7845, %v7837
        %v7998 = vpack.c.b16 %v7846, %v7838
        %v7999 = vpack.c.b16 %v7847, %v7839
        %v8000 = vpack.c.b16 %v7848, %v7840
        %v8001 = vpack.c.b16 %v7857, %v7849
        %v8002 = vpack.c.b16 %v7858, %v7850
        %v8003 = vpack.c.b16 %v7859, %v7851
        %v8004 = vpack.c.b16 %v7860, %v7852
        %v8005 = vpack.c.b16 %v7861, %v7853
        %v8006 = vpack.c.b16 %v7862, %v7854
        %v8007 = vpack.c.b16 %v7863, %v7855
        %v8008 = vpack.c.b16 %v7864, %v7856
        %v8009 = vpack.c.b16 %v7873, %v7865
        %v8010 = vpack.c.b16 %v7874, %v7866
        %v8011 = vpack.c.b16 %v7875, %v7867
        %v8012 = vpack.c.b16 %v7876, %v7868
        %v8013 = vpack.c.b16 %v7877, %v7869
        %v8014 = vpack.c.b16 %v7878, %v7870
        %v8015 = vpack.c.b16 %v7879, %v7871
        %v8016 = vpack.c.b16 %v7880, %v7872
        %v8017 = vpack.c.b16 %v7889, %v7881
        %v8018 = vpack.c.b16 %v7890, %v7882
        %v8019 = vpack.c.b16 %v7891, %v7883
        %v8020 = vpack.c.b16 %v7892, %v7884
        %v8021 = vpack.c.b16 %v7893, %v7885
        %v8022 = vpack.c.b16 %v7894, %v7886
        %v8023 = vpack.c.b16 %v7895, %v7887
        %v8024 = vpack.c.b16 %v7896, %v7888
        %8153 = vmatpush.bf16.msra.mxu0 %v7953
        %8154 = vmatpush.bf16.msra.mxu0 %v7945
        %8155 = vmatpush.bf16.msra.mxu0 %v7937
        %8156 = vmatpush.bf16.msra.mxu0 %v7929
        %8157 = vmatpush.bf16.msra.mxu0 %v7921
        %8158 = vmatpush.bf16.msra.mxu0 %v7913
        %8159 = vmatpush.bf16.msra.mxu0 %v7905
        %8160 = vmatpush.bf16.msra.mxu0 %v7897
        %8161 = vmatmul.bf16.gmra.mxu0 %v7383
        %v8162 = vpop.f32.mrf.mxu0
        %v8163 = vadd.f32 0.0, %v8162
        %v8164 = vpop.f32.mrf.mxu0
        %8165 = vdwg.mxu0
        %8166 = vmatpush.bf16.msra.mxu0 %v8017
        %8167 = vmatpush.bf16.msra.mxu0 %v8009
        %8168 = vmatpush.bf16.msra.mxu0 %v8001
        %8169 = vmatpush.bf16.msra.mxu0 %v7993
        %8170 = vmatpush.bf16.msra.mxu0 %v7985
        %8171 = vmatpush.bf16.msra.mxu0 %v7977
        %8172 = vmatpush.bf16.msra.mxu0 %v7969
        %8173 = vmatpush.bf16.msra.mxu0 %v7961
        %8174 = vmatmul.bf16.gmra.mxu0 %v7384
        %v8175 = vpop.f32.mrf.mxu0
        %v8176 = vadd.f32 %v8163, %v8175
        %v8177 = vpop.f32.mrf.mxu0
        %8178 = vdwg.mxu0
        %8179 = vmatpush.bf16.msra.mxu0 %v7954
        %8180 = vmatpush.bf16.msra.mxu0 %v7946
        %8181 = vmatpush.bf16.msra.mxu0 %v7938
        %8182 = vmatpush.bf16.msra.mxu0 %v7930
        %8183 = vmatpush.bf16.msra.mxu0 %v7922
        %8184 = vmatpush.bf16.msra.mxu0 %v7914
        %8185 = vmatpush.bf16.msra.mxu0 %v7906
        %8186 = vmatpush.bf16.msra.mxu0 %v7898
        %8187 = vmatmul.bf16.gmra.mxu0 %v7383
        %v8188 = vpop.f32.mrf.mxu0
        %v8189 = vadd.f32 0.0, %v8188
        %v8190 = vpop.f32.mrf.mxu0
        %8191 = vdwg.mxu0
        %8192 = vmatpush.bf16.msra.mxu0 %v8018
        %8193 = vmatpush.bf16.msra.mxu0 %v8010
        %8194 = vmatpush.bf16.msra.mxu0 %v8002
        %8195 = vmatpush.bf16.msra.mxu0 %v7994
        %8196 = vmatpush.bf16.msra.mxu0 %v7986
        %8197 = vmatpush.bf16.msra.mxu0 %v7978
        %8198 = vmatpush.bf16.msra.mxu0 %v7970
        %8199 = vmatpush.bf16.msra.mxu0 %v7962
        %8200 = vmatmul.bf16.gmra.mxu0 %v7384
        %v8201 = vpop.f32.mrf.mxu0
        %v8202 = vadd.f32 %v8189, %v8201
        %v8203 = vpop.f32.mrf.mxu0
        %8204 = vdwg.mxu0
        %8205 = vmatpush.bf16.msra.mxu0 %v7955
        %8206 = vmatpush.bf16.msra.mxu0 %v7947
        %8207 = vmatpush.bf16.msra.mxu0 %v7939
        %8208 = vmatpush.bf16.msra.mxu0 %v7931
        %8209 = vmatpush.bf16.msra.mxu0 %v7923
        %8210 = vmatpush.bf16.msra.mxu0 %v7915
        %8211 = vmatpush.bf16.msra.mxu0 %v7907
        %8212 = vmatpush.bf16.msra.mxu0 %v7899
        %8213 = vmatmul.bf16.gmra.mxu0 %v7383
        %v8214 = vpop.f32.mrf.mxu0
        %v8215 = vadd.f32 0.0, %v8214
        %v8216 = vpop.f32.mrf.mxu0
        %8217 = vdwg.mxu0
        %8218 = vmatpush.bf16.msra.mxu0 %v8019
        %8219 = vmatpush.bf16.msra.mxu0 %v8011
        %8220 = vmatpush.bf16.msra.mxu0 %v8003
        %8221 = vmatpush.bf16.msra.mxu0 %v7995
        %8222 = vmatpush.bf16.msra.mxu0 %v7987
        %8223 = vmatpush.bf16.msra.mxu0 %v7979
        %8224 = vmatpush.bf16.msra.mxu0 %v7971
        %8225 = vmatpush.bf16.msra.mxu0 %v7963
        %8226 = vmatmul.bf16.gmra.mxu0 %v7384
        %v8227 = vpop.f32.mrf.mxu0
        %v8228 = vadd.f32 %v8215, %v8227
        %v8229 = vpop.f32.mrf.mxu0
        %8230 = vdwg.mxu0
        %8231 = vmatpush.bf16.msra.mxu0 %v7956
        %8232 = vmatpush.bf16.msra.mxu0 %v7948
        %8233 = vmatpush.bf16.msra.mxu0 %v7940
        %8234 = vmatpush.bf16.msra.mxu0 %v7932
        %8235 = vmatpush.bf16.msra.mxu0 %v7924
        %8236 = vmatpush.bf16.msra.mxu0 %v7916
        %8237 = vmatpush.bf16.msra.mxu0 %v7908
        %8238 = vmatpush.bf16.msra.mxu0 %v7900
        %8239 = vmatmul.bf16.gmra.mxu0 %v7383
        %v8240 = vpop.f32.mrf.mxu0
        %v8241 = vadd.f32 0.0, %v8240
        %v8242 = vpop.f32.mrf.mxu0
        %8243 = vdwg.mxu0
        %8244 = vmatpush.bf16.msra.mxu0 %v8020
        %8245 = vmatpush.bf16.msra.mxu0 %v8012
        %8246 = vmatpush.bf16.msra.mxu0 %v8004
        %8247 = vmatpush.bf16.msra.mxu0 %v7996
        %8248 = vmatpush.bf16.msra.mxu0 %v7988
        %8249 = vmatpush.bf16.msra.mxu0 %v7980
        %8250 = vmatpush.bf16.msra.mxu0 %v7972
        %8251 = vmatpush.bf16.msra.mxu0 %v7964
        %8252 = vmatmul.bf16.gmra.mxu0 %v7384
        %v8253 = vpop.f32.mrf.mxu0
        %v8254 = vadd.f32 %v8241, %v8253
        %v8255 = vpop.f32.mrf.mxu0
        %8256 = vdwg.mxu0
        %8257 = vmatpush.bf16.msra.mxu0 %v7957
        %8258 = vmatpush.bf16.msra.mxu0 %v7949
        %8259 = vmatpush.bf16.msra.mxu0 %v7941
        %8260 = vmatpush.bf16.msra.mxu0 %v7933
        %8261 = vmatpush.bf16.msra.mxu0 %v7925
        %8262 = vmatpush.bf16.msra.mxu0 %v7917
        %8263 = vmatpush.bf16.msra.mxu0 %v7909
        %8264 = vmatpush.bf16.msra.mxu0 %v7901
        %8265 = vmatmul.bf16.gmra.mxu0 %v7383
        %v8266 = vpop.f32.mrf.mxu0
        %v8267 = vadd.f32 0.0, %v8266
        %v8268 = vpop.f32.mrf.mxu0
        %8269 = vdwg.mxu0
        %8270 = vmatpush.bf16.msra.mxu0 %v8021
        %8271 = vmatpush.bf16.msra.mxu0 %v8013
        %8272 = vmatpush.bf16.msra.mxu0 %v8005
        %8273 = vmatpush.bf16.msra.mxu0 %v7997
        %8274 = vmatpush.bf16.msra.mxu0 %v7989
        %8275 = vmatpush.bf16.msra.mxu0 %v7981
        %8276 = vmatpush.bf16.msra.mxu0 %v7973
        %8277 = vmatpush.bf16.msra.mxu0 %v7965
        %8278 = vmatmul.bf16.gmra.mxu0 %v7384
        %v8279 = vpop.f32.mrf.mxu0
        %v8280 = vadd.f32 %v8267, %v8279
        %v8281 = vpop.f32.mrf.mxu0
        %8282 = vdwg.mxu0
        %8283 = vmatpush.bf16.msra.mxu0 %v7958
        %8284 = vmatpush.bf16.msra.mxu0 %v7950
        %8285 = vmatpush.bf16.msra.mxu0 %v7942
        %8286 = vmatpush.bf16.msra.mxu0 %v7934
        %8287 = vmatpush.bf16.msra.mxu0 %v7926
        %8288 = vmatpush.bf16.msra.mxu0 %v7918
        %8289 = vmatpush.bf16.msra.mxu0 %v7910
        %8290 = vmatpush.bf16.msra.mxu0 %v7902
        %8291 = vmatmul.bf16.gmra.mxu0 %v7383
        %v8292 = vpop.f32.mrf.mxu0
        %v8293 = vadd.f32 0.0, %v8292
        %v8294 = vpop.f32.mrf.mxu0
        %8295 = vdwg.mxu0
        %8296 = vmatpush.bf16.msra.mxu0 %v8022
        %8297 = vmatpush.bf16.msra.mxu0 %v8014
        %8298 = vmatpush.bf16.msra.mxu0 %v8006
        %8299 = vmatpush.bf16.msra.mxu0 %v7998
        %8300 = vmatpush.bf16.msra.mxu0 %v7990
        %8301 = vmatpush.bf16.msra.mxu0 %v7982
        %8302 = vmatpush.bf16.msra.mxu0 %v7974
        %8303 = vmatpush.bf16.msra.mxu0 %v7966
        %8304 = vmatmul.bf16.gmra.mxu0 %v7384
        %v8305 = vpop.f32.mrf.mxu0
        %v8306 = vadd.f32 %v8293, %v8305
        %v8307 = vpop.f32.mrf.mxu0
        %8308 = vdwg.mxu0
        %8309 = vmatpush.bf16.msra.mxu0 %v7959
        %8310 = vmatpush.bf16.msra.mxu0 %v7951
        %8311 = vmatpush.bf16.msra.mxu0 %v7943
        %8312 = vmatpush.bf16.msra.mxu0 %v7935
        %8313 = vmatpush.bf16.msra.mxu0 %v7927
        %8314 = vmatpush.bf16.msra.mxu0 %v7919
        %8315 = vmatpush.bf16.msra.mxu0 %v7911
        %8316 = vmatpush.bf16.msra.mxu0 %v7903
        %8317 = vmatmul.bf16.gmra.mxu0 %v7383
        %v8318 = vpop.f32.mrf.mxu0
        %v8319 = vadd.f32 0.0, %v8318
        %v8320 = vpop.f32.mrf.mxu0
        %8321 = vdwg.mxu0
        %8322 = vmatpush.bf16.msra.mxu0 %v8023
        %8323 = vmatpush.bf16.msra.mxu0 %v8015
        %8324 = vmatpush.bf16.msra.mxu0 %v8007
        %8325 = vmatpush.bf16.msra.mxu0 %v7999
        %8326 = vmatpush.bf16.msra.mxu0 %v7991
        %8327 = vmatpush.bf16.msra.mxu0 %v7983
        %8328 = vmatpush.bf16.msra.mxu0 %v7975
        %8329 = vmatpush.bf16.msra.mxu0 %v7967
        %8330 = vmatmul.bf16.gmra.mxu0 %v7384
        %v8331 = vpop.f32.mrf.mxu0
        %v8332 = vadd.f32 %v8319, %v8331
        %v8333 = vpop.f32.mrf.mxu0
        %8334 = vdwg.mxu0
        %8335 = vmatpush.bf16.msra.mxu0 %v7960
        %8336 = vmatpush.bf16.msra.mxu0 %v7952
        %8337 = vmatpush.bf16.msra.mxu0 %v7944
        %8338 = vmatpush.bf16.msra.mxu0 %v7936
        %8339 = vmatpush.bf16.msra.mxu0 %v7928
        %8340 = vmatpush.bf16.msra.mxu0 %v7920
        %8341 = vmatpush.bf16.msra.mxu0 %v7912
        %8342 = vmatpush.bf16.msra.mxu0 %v7904
        %8343 = vmatmul.bf16.gmra.mxu0 %v7383
        %v8344 = vpop.f32.mrf.mxu0
        %v8345 = vadd.f32 0.0, %v8344
        %v8346 = vpop.f32.mrf.mxu0
        %8347 = vdwg.mxu0
        %8348 = vmatpush.bf16.msra.mxu0 %v8024
        %8349 = vmatpush.bf16.msra.mxu0 %v8016
        %8350 = vmatpush.bf16.msra.mxu0 %v8008
        %8351 = vmatpush.bf16.msra.mxu0 %v8000
        %8352 = vmatpush.bf16.msra.mxu0 %v7992
        %8353 = vmatpush.bf16.msra.mxu0 %v7984
        %8354 = vmatpush.bf16.msra.mxu0 %v7976
        %8355 = vmatpush.bf16.msra.mxu0 %v7968
        %8356 = vmatmul.bf16.gmra.mxu0 %v7384
        %v8357 = vpop.f32.mrf.mxu0
        %v8358 = vadd.f32 %v8345, %v8357
        %v8359 = vpop.f32.mrf.mxu0
        %8360 = vdwg.mxu0
        %s8361 = smul.addr %s3176, 8
        %s8362 = scalar_lea.vmem [#allocation2], %s8361
        %v8363 = vld [vmem:[%s8362] sm:$0xff]
        %v8364 = vld [vmem:[%s8362 + $0x8] sm:$0xff]
        %v8365 = vld [vmem:[%s8362 + $0x10] sm:$0xff]
        %v8366 = vld [vmem:[%s8362 + $0x18] sm:$0xff]
        %v8367 = vadd.f32 %v8363, %v8176
        %v8368 = vadd.f32 %v8364, %v8202
        %v8369 = vadd.f32 %v8365, %v8228
        %v8370 = vadd.f32 %v8366, %v8254
        %s8371 = smul.addr %s3165, 8
        %s8372 = scalar_lea.vmem [#allocation3], %s8371
        %v8373 = vld [vmem:[%s8372] sm:$0xff]
        %v8374 = vld [vmem:[%s8372 + $0x8] sm:$0xff]
        %v8375 = vld [vmem:[%s8372 + $0x10] sm:$0xff]
        %v8376 = vld [vmem:[%s8372 + $0x18] sm:$0xff]
        %v8377 = vadd.f32 %v8373, %v8280
        %v8378 = vadd.f32 %v8374, %v8306
        %v8379 = vadd.f32 %v8375, %v8332
        %v8380 = vadd.f32 %v8376, %v8358
        %v8381 = vmul.f32 %v8367, 0.5
        %v8382 = vtanh.pop %v8381
        %v8383 = vmul.f32 %v8382, 0.5
        %v8384 = vadd.f32 %v8383, 0.5
        %v8385 = vmul.f32 %v8368, 0.5
        %v8386 = vtanh.pop %v8385
        %v8387 = vmul.f32 %v8386, 0.5
        %v8388 = vadd.f32 %v8387, 0.5
        %v8389 = vtanh.pop %v8369
        %v8390 = vmul.f32 %v8370, 0.5
        %v8391 = vtanh.pop %v8390
        %v8392 = vmul.f32 %v8391, 0.5
        %v8393 = vadd.f32 %v8392, 0.5
        %v8394 = vmul.f32 %v8388, %v7358
        %v8395 = vmul.f32 %v8384, %v8389
        %v8396 = vadd.f32 %v8394, %v8395
        %v8397 = vtanh.pop %v8396
        %v8398 = vmul.f32 %v8393, %v8397
        %v8399 = vmul.f32 %v8377, 0.5
        %v8400 = vtanh.pop %v8399
        %v8401 = vmul.f32 %v8400, 0.5
        %v8402 = vadd.f32 %v8401, 0.5
        %v8403 = vmul.f32 %v8378, 0.5
        %v8404 = vtanh.pop %v8403
        %v8405 = vmul.f32 %v8404, 0.5
        %v8406 = vadd.f32 %v8405, 0.5
        %v8407 = vtanh.pop %v8379
        %v8408 = vmul.f32 %v8380, 0.5
        %v8409 = vtanh.pop %v8408
        %v8410 = vmul.f32 %v8409, 0.5
        %v8411 = vadd.f32 %v8410, 0.5
        %v8412 = vmul.f32 %v8406, %v7376
        %v8413 = vmul.f32 %v8402, %v8407
        %v8414 = vadd.f32 %v8412, %v8413
        %v8415 = vtanh.pop %v8414
        %v8416 = vmul.f32 %v8411, %v8415
        %s8417 = scalar_lea.vmem %s376, 48 [#allocation14]
        %8418 = vst [vmem:[%s8417] sm:$0xff] %v8398
        %s8419 = scalar_lea.vmem %s383, 8 [#allocation15]
        %8420 = vst [vmem:[%s8419] sm:$0xff] %v8416
        %v8421 = vpack.c.bf16 %v8398, %v8398
        %v8422 = vpack.c.bf16 %v8416, %v8416
        %v8423 = vld [vmem:[#allocation13] sm:$0xff]
        %v8424 = vld [vmem:[#allocation13 + $0x8] sm:$0xff]
        %v8425 = vld [vmem:[#allocation13 + $0x10] sm:$0xff]
        %v8426 = vld [vmem:[#allocation13 + $0x18] sm:$0xff]
        %v8427 = vld [vmem:[#allocation13 + $0x20] sm:$0xff]
        %v8428 = vld [vmem:[#allocation13 + $0x28] sm:$0xff]
        %v8429 = vld [vmem:[#allocation13 + $0x30] sm:$0xff]
        %v8430 = vld [vmem:[#allocation13 + $0x38] sm:$0xff]
        %v8431 = vld [vmem:[#allocation13 + $0x40] sm:$0xff]
        %v8432 = vld [vmem:[#allocation13 + $0x48] sm:$0xff]
        %v8433 = vld [vmem:[#allocation13 + $0x50] sm:$0xff]
        %v8434 = vld [vmem:[#allocation13 + $0x58] sm:$0xff]
        %v8435 = vld [vmem:[#allocation13 + $0x60] sm:$0xff]
        %v8436 = vld [vmem:[#allocation13 + $0x68] sm:$0xff]
        %v8437 = vld [vmem:[#allocation13 + $0x70] sm:$0xff]
        %v8438 = vld [vmem:[#allocation13 + $0x78] sm:$0xff]
        %v8439 = vld [vmem:[#allocation13 + $0x80] sm:$0xff]
        %v8440 = vld [vmem:[#allocation13 + $0x88] sm:$0xff]
        %v8441 = vld [vmem:[#allocation13 + $0x90] sm:$0xff]
        %v8442 = vld [vmem:[#allocation13 + $0x98] sm:$0xff]
        %v8443 = vld [vmem:[#allocation13 + $0xa0] sm:$0xff]
        %v8444 = vld [vmem:[#allocation13 + $0xa8] sm:$0xff]
        %v8445 = vld [vmem:[#allocation13 + $0xb0] sm:$0xff]
        %v8446 = vld [vmem:[#allocation13 + $0xb8] sm:$0xff]
        %v8447 = vld [vmem:[#allocation13 + $0xc0] sm:$0xff]
        %v8448 = vld [vmem:[#allocation13 + $0xc8] sm:$0xff]
        %v8449 = vld [vmem:[#allocation13 + $0xd0] sm:$0xff]
        %v8450 = vld [vmem:[#allocation13 + $0xd8] sm:$0xff]
        %v8451 = vld [vmem:[#allocation13 + $0xe0] sm:$0xff]
        %v8452 = vld [vmem:[#allocation13 + $0xe8] sm:$0xff]
        %v8453 = vld [vmem:[#allocation13 + $0xf0] sm:$0xff]
        %v8454 = vld [vmem:[#allocation13 + $0xf8] sm:$0xff]
        %v8455 = vld [vmem:[#allocation13 + $0x100] sm:$0xff]
        %v8456 = vld [vmem:[#allocation13 + $0x108] sm:$0xff]
        %v8457 = vld [vmem:[#allocation13 + $0x110] sm:$0xff]
        %v8458 = vld [vmem:[#allocation13 + $0x118] sm:$0xff]
        %v8459 = vld [vmem:[#allocation13 + $0x120] sm:$0xff]
        %v8460 = vld [vmem:[#allocation13 + $0x128] sm:$0xff]
        %v8461 = vld [vmem:[#allocation13 + $0x130] sm:$0xff]
        %v8462 = vld [vmem:[#allocation13 + $0x138] sm:$0xff]
        %v8463 = vld [vmem:[#allocation13 + $0x140] sm:$0xff]
        %v8464 = vld [vmem:[#allocation13 + $0x148] sm:$0xff]
        %v8465 = vld [vmem:[#allocation13 + $0x150] sm:$0xff]
        %v8466 = vld [vmem:[#allocation13 + $0x158] sm:$0xff]
        %v8467 = vld [vmem:[#allocation13 + $0x160] sm:$0xff]
        %v8468 = vld [vmem:[#allocation13 + $0x168] sm:$0xff]
        %v8469 = vld [vmem:[#allocation13 + $0x170] sm:$0xff]
        %v8470 = vld [vmem:[#allocation13 + $0x178] sm:$0xff]
        %v8471 = vld [vmem:[#allocation13 + $0x180] sm:$0xff]
        %v8472 = vld [vmem:[#allocation13 + $0x188] sm:$0xff]
        %v8473 = vld [vmem:[#allocation13 + $0x190] sm:$0xff]
        %v8474 = vld [vmem:[#allocation13 + $0x198] sm:$0xff]
        %v8475 = vld [vmem:[#allocation13 + $0x1a0] sm:$0xff]
        %v8476 = vld [vmem:[#allocation13 + $0x1a8] sm:$0xff]
        %v8477 = vld [vmem:[#allocation13 + $0x1b0] sm:$0xff]
        %v8478 = vld [vmem:[#allocation13 + $0x1b8] sm:$0xff]
        %v8479 = vld [vmem:[#allocation13 + $0x1c0] sm:$0xff]
        %v8480 = vld [vmem:[#allocation13 + $0x1c8] sm:$0xff]
        %v8481 = vld [vmem:[#allocation13 + $0x1d0] sm:$0xff]
        %v8482 = vld [vmem:[#allocation13 + $0x1d8] sm:$0xff]
        %v8483 = vld [vmem:[#allocation13 + $0x1e0] sm:$0xff]
        %v8484 = vld [vmem:[#allocation13 + $0x1e8] sm:$0xff]
        %v8485 = vld [vmem:[#allocation13 + $0x1f0] sm:$0xff]
        %v8486 = vld [vmem:[#allocation13 + $0x1f8] sm:$0xff]
        %v8487 = vld [vmem:[#allocation13 + $0x200] sm:$0xff]
        %v8488 = vld [vmem:[#allocation13 + $0x208] sm:$0xff]
        %v8489 = vld [vmem:[#allocation13 + $0x210] sm:$0xff]
        %v8490 = vld [vmem:[#allocation13 + $0x218] sm:$0xff]
        %v8491 = vld [vmem:[#allocation13 + $0x220] sm:$0xff]
        %v8492 = vld [vmem:[#allocation13 + $0x228] sm:$0xff]
        %v8493 = vld [vmem:[#allocation13 + $0x230] sm:$0xff]
        %v8494 = vld [vmem:[#allocation13 + $0x238] sm:$0xff]
        %v8495 = vld [vmem:[#allocation13 + $0x240] sm:$0xff]
        %v8496 = vld [vmem:[#allocation13 + $0x248] sm:$0xff]
        %v8497 = vld [vmem:[#allocation13 + $0x250] sm:$0xff]
        %v8498 = vld [vmem:[#allocation13 + $0x258] sm:$0xff]
        %v8499 = vld [vmem:[#allocation13 + $0x260] sm:$0xff]
        %v8500 = vld [vmem:[#allocation13 + $0x268] sm:$0xff]
        %v8501 = vld [vmem:[#allocation13 + $0x270] sm:$0xff]
        %v8502 = vld [vmem:[#allocation13 + $0x278] sm:$0xff]
        %v8503 = vld [vmem:[#allocation13 + $0x280] sm:$0xff]
        %v8504 = vld [vmem:[#allocation13 + $0x288] sm:$0xff]
        %v8505 = vld [vmem:[#allocation13 + $0x290] sm:$0xff]
        %v8506 = vld [vmem:[#allocation13 + $0x298] sm:$0xff]
        %v8507 = vld [vmem:[#allocation13 + $0x2a0] sm:$0xff]
        %v8508 = vld [vmem:[#allocation13 + $0x2a8] sm:$0xff]
        %v8509 = vld [vmem:[#allocation13 + $0x2b0] sm:$0xff]
        %v8510 = vld [vmem:[#allocation13 + $0x2b8] sm:$0xff]
        %v8511 = vld [vmem:[#allocation13 + $0x2c0] sm:$0xff]
        %v8512 = vld [vmem:[#allocation13 + $0x2c8] sm:$0xff]
        %v8513 = vld [vmem:[#allocation13 + $0x2d0] sm:$0xff]
        %v8514 = vld [vmem:[#allocation13 + $0x2d8] sm:$0xff]
        %v8515 = vld [vmem:[#allocation13 + $0x2e0] sm:$0xff]
        %v8516 = vld [vmem:[#allocation13 + $0x2e8] sm:$0xff]
        %v8517 = vld [vmem:[#allocation13 + $0x2f0] sm:$0xff]
        %v8518 = vld [vmem:[#allocation13 + $0x2f8] sm:$0xff]
        %v8519 = vld [vmem:[#allocation13 + $0x300] sm:$0xff]
        %v8520 = vld [vmem:[#allocation13 + $0x308] sm:$0xff]
        %v8521 = vld [vmem:[#allocation13 + $0x310] sm:$0xff]
        %v8522 = vld [vmem:[#allocation13 + $0x318] sm:$0xff]
        %v8523 = vld [vmem:[#allocation13 + $0x320] sm:$0xff]
        %v8524 = vld [vmem:[#allocation13 + $0x328] sm:$0xff]
        %v8525 = vld [vmem:[#allocation13 + $0x330] sm:$0xff]
        %v8526 = vld [vmem:[#allocation13 + $0x338] sm:$0xff]
        %v8527 = vld [vmem:[#allocation13 + $0x340] sm:$0xff]
        %v8528 = vld [vmem:[#allocation13 + $0x348] sm:$0xff]
        %v8529 = vld [vmem:[#allocation13 + $0x350] sm:$0xff]
        %v8530 = vld [vmem:[#allocation13 + $0x358] sm:$0xff]
        %v8531 = vld [vmem:[#allocation13 + $0x360] sm:$0xff]
        %v8532 = vld [vmem:[#allocation13 + $0x368] sm:$0xff]
        %v8533 = vld [vmem:[#allocation13 + $0x370] sm:$0xff]
        %v8534 = vld [vmem:[#allocation13 + $0x378] sm:$0xff]
        %v8535 = vld [vmem:[#allocation13 + $0x380] sm:$0xff]
        %v8536 = vld [vmem:[#allocation13 + $0x388] sm:$0xff]
        %v8537 = vld [vmem:[#allocation13 + $0x390] sm:$0xff]
        %v8538 = vld [vmem:[#allocation13 + $0x398] sm:$0xff]
        %v8539 = vld [vmem:[#allocation13 + $0x3a0] sm:$0xff]
        %v8540 = vld [vmem:[#allocation13 + $0x3a8] sm:$0xff]
        %v8541 = vld [vmem:[#allocation13 + $0x3b0] sm:$0xff]
        %v8542 = vld [vmem:[#allocation13 + $0x3b8] sm:$0xff]
        %v8543 = vld [vmem:[#allocation13 + $0x3c0] sm:$0xff]
        %v8544 = vld [vmem:[#allocation13 + $0x3c8] sm:$0xff]
        %v8545 = vld [vmem:[#allocation13 + $0x3d0] sm:$0xff]
        %v8546 = vld [vmem:[#allocation13 + $0x3d8] sm:$0xff]
        %v8547 = vld [vmem:[#allocation13 + $0x3e0] sm:$0xff]
        %v8548 = vld [vmem:[#allocation13 + $0x3e8] sm:$0xff]
        %v8549 = vld [vmem:[#allocation13 + $0x3f0] sm:$0xff]
        %v8550 = vld [vmem:[#allocation13 + $0x3f8] sm:$0xff]
        %v8679 = vunpack.c.l.b16 %v8423
        %v8680 = vunpack.c.h.b16 %v8423
        %v8681 = vunpack.c.l.b16 %v8424
        %v8682 = vunpack.c.h.b16 %v8424
        %v8683 = vunpack.c.l.b16 %v8425
        %v8684 = vunpack.c.h.b16 %v8425
        %v8685 = vunpack.c.l.b16 %v8426
        %v8686 = vunpack.c.h.b16 %v8426
        %v8687 = vunpack.c.l.b16 %v8427
        %v8688 = vunpack.c.h.b16 %v8427
        %v8689 = vunpack.c.l.b16 %v8428
        %v8690 = vunpack.c.h.b16 %v8428
        %v8691 = vunpack.c.l.b16 %v8429
        %v8692 = vunpack.c.h.b16 %v8429
        %v8693 = vunpack.c.l.b16 %v8430
        %v8694 = vunpack.c.h.b16 %v8430
        %v8695 = vunpack.c.l.b16 %v8431
        %v8696 = vunpack.c.h.b16 %v8431
        %v8697 = vunpack.c.l.b16 %v8432
        %v8698 = vunpack.c.h.b16 %v8432
        %v8699 = vunpack.c.l.b16 %v8433
        %v8700 = vunpack.c.h.b16 %v8433
        %v8701 = vunpack.c.l.b16 %v8434
        %v8702 = vunpack.c.h.b16 %v8434
        %v8703 = vunpack.c.l.b16 %v8435
        %v8704 = vunpack.c.h.b16 %v8435
        %v8705 = vunpack.c.l.b16 %v8436
        %v8706 = vunpack.c.h.b16 %v8436
        %v8707 = vunpack.c.l.b16 %v8437
        %v8708 = vunpack.c.h.b16 %v8437
        %v8709 = vunpack.c.l.b16 %v8438
        %v8710 = vunpack.c.h.b16 %v8438
        %v8711 = vunpack.c.l.b16 %v8439
        %v8712 = vunpack.c.h.b16 %v8439
        %v8713 = vunpack.c.l.b16 %v8440
        %v8714 = vunpack.c.h.b16 %v8440
        %v8715 = vunpack.c.l.b16 %v8441
        %v8716 = vunpack.c.h.b16 %v8441
        %v8717 = vunpack.c.l.b16 %v8442
        %v8718 = vunpack.c.h.b16 %v8442
        %v8719 = vunpack.c.l.b16 %v8443
        %v8720 = vunpack.c.h.b16 %v8443
        %v8721 = vunpack.c.l.b16 %v8444
        %v8722 = vunpack.c.h.b16 %v8444
        %v8723 = vunpack.c.l.b16 %v8445
        %v8724 = vunpack.c.h.b16 %v8445
        %v8725 = vunpack.c.l.b16 %v8446
        %v8726 = vunpack.c.h.b16 %v8446
        %v8727 = vunpack.c.l.b16 %v8447
        %v8728 = vunpack.c.h.b16 %v8447
        %v8729 = vunpack.c.l.b16 %v8448
        %v8730 = vunpack.c.h.b16 %v8448
        %v8731 = vunpack.c.l.b16 %v8449
        %v8732 = vunpack.c.h.b16 %v8449
        %v8733 = vunpack.c.l.b16 %v8450
        %v8734 = vunpack.c.h.b16 %v8450
        %v8735 = vunpack.c.l.b16 %v8451
        %v8736 = vunpack.c.h.b16 %v8451
        %v8737 = vunpack.c.l.b16 %v8452
        %v8738 = vunpack.c.h.b16 %v8452
        %v8739 = vunpack.c.l.b16 %v8453
        %v8740 = vunpack.c.h.b16 %v8453
        %v8741 = vunpack.c.l.b16 %v8454
        %v8742 = vunpack.c.h.b16 %v8454
        %v8743 = vunpack.c.l.b16 %v8455
        %v8744 = vunpack.c.h.b16 %v8455
        %v8745 = vunpack.c.l.b16 %v8456
        %v8746 = vunpack.c.h.b16 %v8456
        %v8747 = vunpack.c.l.b16 %v8457
        %v8748 = vunpack.c.h.b16 %v8457
        %v8749 = vunpack.c.l.b16 %v8458
        %v8750 = vunpack.c.h.b16 %v8458
        %v8751 = vunpack.c.l.b16 %v8459
        %v8752 = vunpack.c.h.b16 %v8459
        %v8753 = vunpack.c.l.b16 %v8460
        %v8754 = vunpack.c.h.b16 %v8460
        %v8755 = vunpack.c.l.b16 %v8461
        %v8756 = vunpack.c.h.b16 %v8461
        %v8757 = vunpack.c.l.b16 %v8462
        %v8758 = vunpack.c.h.b16 %v8462
        %v8759 = vunpack.c.l.b16 %v8463
        %v8760 = vunpack.c.h.b16 %v8463
        %v8761 = vunpack.c.l.b16 %v8464
        %v8762 = vunpack.c.h.b16 %v8464
        %v8763 = vunpack.c.l.b16 %v8465
        %v8764 = vunpack.c.h.b16 %v8465
        %v8765 = vunpack.c.l.b16 %v8466
        %v8766 = vunpack.c.h.b16 %v8466
        %v8767 = vunpack.c.l.b16 %v8467
        %v8768 = vunpack.c.h.b16 %v8467
        %v8769 = vunpack.c.l.b16 %v8468
        %v8770 = vunpack.c.h.b16 %v8468
        %v8771 = vunpack.c.l.b16 %v8469
        %v8772 = vunpack.c.h.b16 %v8469
        %v8773 = vunpack.c.l.b16 %v8470
        %v8774 = vunpack.c.h.b16 %v8470
        %v8775 = vunpack.c.l.b16 %v8471
        %v8776 = vunpack.c.h.b16 %v8471
        %v8777 = vunpack.c.l.b16 %v8472
        %v8778 = vunpack.c.h.b16 %v8472
        %v8779 = vunpack.c.l.b16 %v8473
        %v8780 = vunpack.c.h.b16 %v8473
        %v8781 = vunpack.c.l.b16 %v8474
        %v8782 = vunpack.c.h.b16 %v8474
        %v8783 = vunpack.c.l.b16 %v8475
        %v8784 = vunpack.c.h.b16 %v8475
        %v8785 = vunpack.c.l.b16 %v8476
        %v8786 = vunpack.c.h.b16 %v8476
        %v8787 = vunpack.c.l.b16 %v8477
        %v8788 = vunpack.c.h.b16 %v8477
        %v8789 = vunpack.c.l.b16 %v8478
        %v8790 = vunpack.c.h.b16 %v8478
        %v8791 = vunpack.c.l.b16 %v8479
        %v8792 = vunpack.c.h.b16 %v8479
        %v8793 = vunpack.c.l.b16 %v8480
        %v8794 = vunpack.c.h.b16 %v8480
        %v8795 = vunpack.c.l.b16 %v8481
        %v8796 = vunpack.c.h.b16 %v8481
        %v8797 = vunpack.c.l.b16 %v8482
        %v8798 = vunpack.c.h.b16 %v8482
        %v8799 = vunpack.c.l.b16 %v8483
        %v8800 = vunpack.c.h.b16 %v8483
        %v8801 = vunpack.c.l.b16 %v8484
        %v8802 = vunpack.c.h.b16 %v8484
        %v8803 = vunpack.c.l.b16 %v8485
        %v8804 = vunpack.c.h.b16 %v8485
        %v8805 = vunpack.c.l.b16 %v8486
        %v8806 = vunpack.c.h.b16 %v8486
        %v8807 = vunpack.c.l.b16 %v8487
        %v8808 = vunpack.c.h.b16 %v8487
        %v8809 = vunpack.c.l.b16 %v8488
        %v8810 = vunpack.c.h.b16 %v8488
        %v8811 = vunpack.c.l.b16 %v8489
        %v8812 = vunpack.c.h.b16 %v8489
        %v8813 = vunpack.c.l.b16 %v8490
        %v8814 = vunpack.c.h.b16 %v8490
        %v8815 = vunpack.c.l.b16 %v8491
        %v8816 = vunpack.c.h.b16 %v8491
        %v8817 = vunpack.c.l.b16 %v8492
        %v8818 = vunpack.c.h.b16 %v8492
        %v8819 = vunpack.c.l.b16 %v8493
        %v8820 = vunpack.c.h.b16 %v8493
        %v8821 = vunpack.c.l.b16 %v8494
        %v8822 = vunpack.c.h.b16 %v8494
        %v8823 = vunpack.c.l.b16 %v8495
        %v8824 = vunpack.c.h.b16 %v8495
        %v8825 = vunpack.c.l.b16 %v8496
        %v8826 = vunpack.c.h.b16 %v8496
        %v8827 = vunpack.c.l.b16 %v8497
        %v8828 = vunpack.c.h.b16 %v8497
        %v8829 = vunpack.c.l.b16 %v8498
        %v8830 = vunpack.c.h.b16 %v8498
        %v8831 = vunpack.c.l.b16 %v8499
        %v8832 = vunpack.c.h.b16 %v8499
        %v8833 = vunpack.c.l.b16 %v8500
        %v8834 = vunpack.c.h.b16 %v8500
        %v8835 = vunpack.c.l.b16 %v8501
        %v8836 = vunpack.c.h.b16 %v8501
        %v8837 = vunpack.c.l.b16 %v8502
        %v8838 = vunpack.c.h.b16 %v8502
        %v8839 = vunpack.c.l.b16 %v8503
        %v8840 = vunpack.c.h.b16 %v8503
        %v8841 = vunpack.c.l.b16 %v8504
        %v8842 = vunpack.c.h.b16 %v8504
        %v8843 = vunpack.c.l.b16 %v8505
        %v8844 = vunpack.c.h.b16 %v8505
        %v8845 = vunpack.c.l.b16 %v8506
        %v8846 = vunpack.c.h.b16 %v8506
        %v8847 = vunpack.c.l.b16 %v8507
        %v8848 = vunpack.c.h.b16 %v8507
        %v8849 = vunpack.c.l.b16 %v8508
        %v8850 = vunpack.c.h.b16 %v8508
        %v8851 = vunpack.c.l.b16 %v8509
        %v8852 = vunpack.c.h.b16 %v8509
        %v8853 = vunpack.c.l.b16 %v8510
        %v8854 = vunpack.c.h.b16 %v8510
        %v8855 = vunpack.c.l.b16 %v8511
        %v8856 = vunpack.c.h.b16 %v8511
        %v8857 = vunpack.c.l.b16 %v8512
        %v8858 = vunpack.c.h.b16 %v8512
        %v8859 = vunpack.c.l.b16 %v8513
        %v8860 = vunpack.c.h.b16 %v8513
        %v8861 = vunpack.c.l.b16 %v8514
        %v8862 = vunpack.c.h.b16 %v8514
        %v8863 = vunpack.c.l.b16 %v8515
        %v8864 = vunpack.c.h.b16 %v8515
        %v8865 = vunpack.c.l.b16 %v8516
        %v8866 = vunpack.c.h.b16 %v8516
        %v8867 = vunpack.c.l.b16 %v8517
        %v8868 = vunpack.c.h.b16 %v8517
        %v8869 = vunpack.c.l.b16 %v8518
        %v8870 = vunpack.c.h.b16 %v8518
        %v8871 = vunpack.c.l.b16 %v8519
        %v8872 = vunpack.c.h.b16 %v8519
        %v8873 = vunpack.c.l.b16 %v8520
        %v8874 = vunpack.c.h.b16 %v8520
        %v8875 = vunpack.c.l.b16 %v8521
        %v8876 = vunpack.c.h.b16 %v8521
        %v8877 = vunpack.c.l.b16 %v8522
        %v8878 = vunpack.c.h.b16 %v8522
        %v8879 = vunpack.c.l.b16 %v8523
        %v8880 = vunpack.c.h.b16 %v8523
        %v8881 = vunpack.c.l.b16 %v8524
        %v8882 = vunpack.c.h.b16 %v8524
        %v8883 = vunpack.c.l.b16 %v8525
        %v8884 = vunpack.c.h.b16 %v8525
        %v8885 = vunpack.c.l.b16 %v8526
        %v8886 = vunpack.c.h.b16 %v8526
        %v8887 = vunpack.c.l.b16 %v8527
        %v8888 = vunpack.c.h.b16 %v8527
        %v8889 = vunpack.c.l.b16 %v8528
        %v8890 = vunpack.c.h.b16 %v8528
        %v8891 = vunpack.c.l.b16 %v8529
        %v8892 = vunpack.c.h.b16 %v8529
        %v8893 = vunpack.c.l.b16 %v8530
        %v8894 = vunpack.c.h.b16 %v8530
        %v8895 = vunpack.c.l.b16 %v8531
        %v8896 = vunpack.c.h.b16 %v8531
        %v8897 = vunpack.c.l.b16 %v8532
        %v8898 = vunpack.c.h.b16 %v8532
        %v8899 = vunpack.c.l.b16 %v8533
        %v8900 = vunpack.c.h.b16 %v8533
        %v8901 = vunpack.c.l.b16 %v8534
        %v8902 = vunpack.c.h.b16 %v8534
        %v8903 = vunpack.c.l.b16 %v8535
        %v8904 = vunpack.c.h.b16 %v8535
        %v8905 = vunpack.c.l.b16 %v8536
        %v8906 = vunpack.c.h.b16 %v8536
        %v8907 = vunpack.c.l.b16 %v8537
        %v8908 = vunpack.c.h.b16 %v8537
        %v8909 = vunpack.c.l.b16 %v8538
        %v8910 = vunpack.c.h.b16 %v8538
        %v8911 = vunpack.c.l.b16 %v8539
        %v8912 = vunpack.c.h.b16 %v8539
        %v8913 = vunpack.c.l.b16 %v8540
        %v8914 = vunpack.c.h.b16 %v8540
        %v8915 = vunpack.c.l.b16 %v8541
        %v8916 = vunpack.c.h.b16 %v8541
        %v8917 = vunpack.c.l.b16 %v8542
        %v8918 = vunpack.c.h.b16 %v8542
        %v8919 = vunpack.c.l.b16 %v8543
        %v8920 = vunpack.c.h.b16 %v8543
        %v8921 = vunpack.c.l.b16 %v8544
        %v8922 = vunpack.c.h.b16 %v8544
        %v8923 = vunpack.c.l.b16 %v8545
        %v8924 = vunpack.c.h.b16 %v8545
        %v8925 = vunpack.c.l.b16 %v8546
        %v8926 = vunpack.c.h.b16 %v8546
        %v8927 = vunpack.c.l.b16 %v8547
        %v8928 = vunpack.c.h.b16 %v8547
        %v8929 = vunpack.c.l.b16 %v8548
        %v8930 = vunpack.c.h.b16 %v8548
        %v8931 = vunpack.c.l.b16 %v8549
        %v8932 = vunpack.c.h.b16 %v8549
        %v8933 = vunpack.c.l.b16 %v8550
        %v8934 = vunpack.c.h.b16 %v8550
        %v8935 = vpack.c.b16 %v8687, %v8679
        %v8936 = vpack.c.b16 %v8688, %v8680
        %v8937 = vpack.c.b16 %v8689, %v8681
        %v8938 = vpack.c.b16 %v8690, %v8682
        %v8939 = vpack.c.b16 %v8691, %v8683
        %v8940 = vpack.c.b16 %v8692, %v8684
        %v8941 = vpack.c.b16 %v8693, %v8685
        %v8942 = vpack.c.b16 %v8694, %v8686
        %v8943 = vpack.c.b16 %v8703, %v8695
        %v8944 = vpack.c.b16 %v8704, %v8696
        %v8945 = vpack.c.b16 %v8705, %v8697
        %v8946 = vpack.c.b16 %v8706, %v8698
        %v8947 = vpack.c.b16 %v8707, %v8699
        %v8948 = vpack.c.b16 %v8708, %v8700
        %v8949 = vpack.c.b16 %v8709, %v8701
        %v8950 = vpack.c.b16 %v8710, %v8702
        %v8951 = vpack.c.b16 %v8719, %v8711
        %v8952 = vpack.c.b16 %v8720, %v8712
        %v8953 = vpack.c.b16 %v8721, %v8713
        %v8954 = vpack.c.b16 %v8722, %v8714
        %v8955 = vpack.c.b16 %v8723, %v8715
        %v8956 = vpack.c.b16 %v8724, %v8716
        %v8957 = vpack.c.b16 %v8725, %v8717
        %v8958 = vpack.c.b16 %v8726, %v8718
        %v8959 = vpack.c.b16 %v8735, %v8727
        %v8960 = vpack.c.b16 %v8736, %v8728
        %v8961 = vpack.c.b16 %v8737, %v8729
        %v8962 = vpack.c.b16 %v8738, %v8730
        %v8963 = vpack.c.b16 %v8739, %v8731
        %v8964 = vpack.c.b16 %v8740, %v8732
        %v8965 = vpack.c.b16 %v8741, %v8733
        %v8966 = vpack.c.b16 %v8742, %v8734
        %v8967 = vpack.c.b16 %v8751, %v8743
        %v8968 = vpack.c.b16 %v8752, %v8744
        %v8969 = vpack.c.b16 %v8753, %v8745
        %v8970 = vpack.c.b16 %v8754, %v8746
        %v8971 = vpack.c.b16 %v8755, %v8747
        %v8972 = vpack.c.b16 %v8756, %v8748
        %v8973 = vpack.c.b16 %v8757, %v8749
        %v8974 = vpack.c.b16 %v8758, %v8750
        %v8975 = vpack.c.b16 %v8767, %v8759
        %v8976 = vpack.c.b16 %v8768, %v8760
        %v8977 = vpack.c.b16 %v8769, %v8761
        %v8978 = vpack.c.b16 %v8770, %v8762
        %v8979 = vpack.c.b16 %v8771, %v8763
        %v8980 = vpack.c.b16 %v8772, %v8764
        %v8981 = vpack.c.b16 %v8773, %v8765
        %v8982 = vpack.c.b16 %v8774, %v8766
        %v8983 = vpack.c.b16 %v8783, %v8775
        %v8984 = vpack.c.b16 %v8784, %v8776
        %v8985 = vpack.c.b16 %v8785, %v8777
        %v8986 = vpack.c.b16 %v8786, %v8778
        %v8987 = vpack.c.b16 %v8787, %v8779
        %v8988 = vpack.c.b16 %v8788, %v8780
        %v8989 = vpack.c.b16 %v8789, %v8781
        %v8990 = vpack.c.b16 %v8790, %v8782
        %v8991 = vpack.c.b16 %v8799, %v8791
        %v8992 = vpack.c.b16 %v8800, %v8792
        %v8993 = vpack.c.b16 %v8801, %v8793
        %v8994 = vpack.c.b16 %v8802, %v8794
        %v8995 = vpack.c.b16 %v8803, %v8795
        %v8996 = vpack.c.b16 %v8804, %v8796
        %v8997 = vpack.c.b16 %v8805, %v8797
        %v8998 = vpack.c.b16 %v8806, %v8798
        %v8999 = vpack.c.b16 %v8815, %v8807
        %v9000 = vpack.c.b16 %v8816, %v8808
        %v9001 = vpack.c.b16 %v8817, %v8809
        %v9002 = vpack.c.b16 %v8818, %v8810
        %v9003 = vpack.c.b16 %v8819, %v8811
        %v9004 = vpack.c.b16 %v8820, %v8812
        %v9005 = vpack.c.b16 %v8821, %v8813
        %v9006 = vpack.c.b16 %v8822, %v8814
        %v9007 = vpack.c.b16 %v8831, %v8823
        %v9008 = vpack.c.b16 %v8832, %v8824
        %v9009 = vpack.c.b16 %v8833, %v8825
        %v9010 = vpack.c.b16 %v8834, %v8826
        %v9011 = vpack.c.b16 %v8835, %v8827
        %v9012 = vpack.c.b16 %v8836, %v8828
        %v9013 = vpack.c.b16 %v8837, %v8829
        %v9014 = vpack.c.b16 %v8838, %v8830
        %v9015 = vpack.c.b16 %v8847, %v8839
        %v9016 = vpack.c.b16 %v8848, %v8840
        %v9017 = vpack.c.b16 %v8849, %v8841
        %v9018 = vpack.c.b16 %v8850, %v8842
        %v9019 = vpack.c.b16 %v8851, %v8843
        %v9020 = vpack.c.b16 %v8852, %v8844
        %v9021 = vpack.c.b16 %v8853, %v8845
        %v9022 = vpack.c.b16 %v8854, %v8846
        %v9023 = vpack.c.b16 %v8863, %v8855
        %v9024 = vpack.c.b16 %v8864, %v8856
        %v9025 = vpack.c.b16 %v8865, %v8857
        %v9026 = vpack.c.b16 %v8866, %v8858
        %v9027 = vpack.c.b16 %v8867, %v8859
        %v9028 = vpack.c.b16 %v8868, %v8860
        %v9029 = vpack.c.b16 %v8869, %v8861
        %v9030 = vpack.c.b16 %v8870, %v8862
        %v9031 = vpack.c.b16 %v8879, %v8871
        %v9032 = vpack.c.b16 %v8880, %v8872
        %v9033 = vpack.c.b16 %v8881, %v8873
        %v9034 = vpack.c.b16 %v8882, %v8874
        %v9035 = vpack.c.b16 %v8883, %v8875
        %v9036 = vpack.c.b16 %v8884, %v8876
        %v9037 = vpack.c.b16 %v8885, %v8877
        %v9038 = vpack.c.b16 %v8886, %v8878
        %v9039 = vpack.c.b16 %v8895, %v8887
        %v9040 = vpack.c.b16 %v8896, %v8888
        %v9041 = vpack.c.b16 %v8897, %v8889
        %v9042 = vpack.c.b16 %v8898, %v8890
        %v9043 = vpack.c.b16 %v8899, %v8891
        %v9044 = vpack.c.b16 %v8900, %v8892
        %v9045 = vpack.c.b16 %v8901, %v8893
        %v9046 = vpack.c.b16 %v8902, %v8894
        %v9047 = vpack.c.b16 %v8911, %v8903
        %v9048 = vpack.c.b16 %v8912, %v8904
        %v9049 = vpack.c.b16 %v8913, %v8905
        %v9050 = vpack.c.b16 %v8914, %v8906
        %v9051 = vpack.c.b16 %v8915, %v8907
        %v9052 = vpack.c.b16 %v8916, %v8908
        %v9053 = vpack.c.b16 %v8917, %v8909
        %v9054 = vpack.c.b16 %v8918, %v8910
        %v9055 = vpack.c.b16 %v8927, %v8919
        %v9056 = vpack.c.b16 %v8928, %v8920
        %v9057 = vpack.c.b16 %v8929, %v8921
        %v9058 = vpack.c.b16 %v8930, %v8922
        %v9059 = vpack.c.b16 %v8931, %v8923
        %v9060 = vpack.c.b16 %v8932, %v8924
        %v9061 = vpack.c.b16 %v8933, %v8925
        %v9062 = vpack.c.b16 %v8934, %v8926
        %9191 = vmatpush.bf16.msra.mxu0 %v8991
        %9192 = vmatpush.bf16.msra.mxu0 %v8983
        %9193 = vmatpush.bf16.msra.mxu0 %v8975
        %9194 = vmatpush.bf16.msra.mxu0 %v8967
        %9195 = vmatpush.bf16.msra.mxu0 %v8959
        %9196 = vmatpush.bf16.msra.mxu0 %v8951
        %9197 = vmatpush.bf16.msra.mxu0 %v8943
        %9198 = vmatpush.bf16.msra.mxu0 %v8935
        %9199 = vmatmul.bf16.gmra.mxu0 %v8421
        %v9200 = vpop.f32.mrf.mxu0
        %v9201 = vadd.f32 0.0, %v9200
        %v9202 = vpop.f32.mrf.mxu0
        %9203 = vdwg.mxu0
        %9204 = vmatpush.bf16.msra.mxu0 %v9055
        %9205 = vmatpush.bf16.msra.mxu0 %v9047
        %9206 = vmatpush.bf16.msra.mxu0 %v9039
        %9207 = vmatpush.bf16.msra.mxu0 %v9031
        %9208 = vmatpush.bf16.msra.mxu0 %v9023
        %9209 = vmatpush.bf16.msra.mxu0 %v9015
        %9210 = vmatpush.bf16.msra.mxu0 %v9007
        %9211 = vmatpush.bf16.msra.mxu0 %v8999
        %9212 = vmatmul.bf16.gmra.mxu0 %v8422
        %v9213 = vpop.f32.mrf.mxu0
        %v9214 = vadd.f32 %v9201, %v9213
        %v9215 = vpop.f32.mrf.mxu0
        %9216 = vdwg.mxu0
        %9217 = vmatpush.bf16.msra.mxu0 %v8992
        %9218 = vmatpush.bf16.msra.mxu0 %v8984
        %9219 = vmatpush.bf16.msra.mxu0 %v8976
        %9220 = vmatpush.bf16.msra.mxu0 %v8968
        %9221 = vmatpush.bf16.msra.mxu0 %v8960
        %9222 = vmatpush.bf16.msra.mxu0 %v8952
        %9223 = vmatpush.bf16.msra.mxu0 %v8944
        %9224 = vmatpush.bf16.msra.mxu0 %v8936
        %9225 = vmatmul.bf16.gmra.mxu0 %v8421
        %v9226 = vpop.f32.mrf.mxu0
        %v9227 = vadd.f32 0.0, %v9226
        %v9228 = vpop.f32.mrf.mxu0
        %9229 = vdwg.mxu0
        %9230 = vmatpush.bf16.msra.mxu0 %v9056
        %9231 = vmatpush.bf16.msra.mxu0 %v9048
        %9232 = vmatpush.bf16.msra.mxu0 %v9040
        %9233 = vmatpush.bf16.msra.mxu0 %v9032
        %9234 = vmatpush.bf16.msra.mxu0 %v9024
        %9235 = vmatpush.bf16.msra.mxu0 %v9016
        %9236 = vmatpush.bf16.msra.mxu0 %v9008
        %9237 = vmatpush.bf16.msra.mxu0 %v9000
        %9238 = vmatmul.bf16.gmra.mxu0 %v8422
        %v9239 = vpop.f32.mrf.mxu0
        %v9240 = vadd.f32 %v9227, %v9239
        %v9241 = vpop.f32.mrf.mxu0
        %9242 = vdwg.mxu0
        %9243 = vmatpush.bf16.msra.mxu0 %v8993
        %9244 = vmatpush.bf16.msra.mxu0 %v8985
        %9245 = vmatpush.bf16.msra.mxu0 %v8977
        %9246 = vmatpush.bf16.msra.mxu0 %v8969
        %9247 = vmatpush.bf16.msra.mxu0 %v8961
        %9248 = vmatpush.bf16.msra.mxu0 %v8953
        %9249 = vmatpush.bf16.msra.mxu0 %v8945
        %9250 = vmatpush.bf16.msra.mxu0 %v8937
        %9251 = vmatmul.bf16.gmra.mxu0 %v8421
        %v9252 = vpop.f32.mrf.mxu0
        %v9253 = vadd.f32 0.0, %v9252
        %v9254 = vpop.f32.mrf.mxu0
        %9255 = vdwg.mxu0
        %9256 = vmatpush.bf16.msra.mxu0 %v9057
        %9257 = vmatpush.bf16.msra.mxu0 %v9049
        %9258 = vmatpush.bf16.msra.mxu0 %v9041
        %9259 = vmatpush.bf16.msra.mxu0 %v9033
        %9260 = vmatpush.bf16.msra.mxu0 %v9025
        %9261 = vmatpush.bf16.msra.mxu0 %v9017
        %9262 = vmatpush.bf16.msra.mxu0 %v9009
        %9263 = vmatpush.bf16.msra.mxu0 %v9001
        %9264 = vmatmul.bf16.gmra.mxu0 %v8422
        %v9265 = vpop.f32.mrf.mxu0
        %v9266 = vadd.f32 %v9253, %v9265
        %v9267 = vpop.f32.mrf.mxu0
        %9268 = vdwg.mxu0
        %9269 = vmatpush.bf16.msra.mxu0 %v8994
        %9270 = vmatpush.bf16.msra.mxu0 %v8986
        %9271 = vmatpush.bf16.msra.mxu0 %v8978
        %9272 = vmatpush.bf16.msra.mxu0 %v8970
        %9273 = vmatpush.bf16.msra.mxu0 %v8962
        %9274 = vmatpush.bf16.msra.mxu0 %v8954
        %9275 = vmatpush.bf16.msra.mxu0 %v8946
        %9276 = vmatpush.bf16.msra.mxu0 %v8938
        %9277 = vmatmul.bf16.gmra.mxu0 %v8421
        %v9278 = vpop.f32.mrf.mxu0
        %v9279 = vadd.f32 0.0, %v9278
        %v9280 = vpop.f32.mrf.mxu0
        %9281 = vdwg.mxu0
        %9282 = vmatpush.bf16.msra.mxu0 %v9058
        %9283 = vmatpush.bf16.msra.mxu0 %v9050
        %9284 = vmatpush.bf16.msra.mxu0 %v9042
        %9285 = vmatpush.bf16.msra.mxu0 %v9034
        %9286 = vmatpush.bf16.msra.mxu0 %v9026
        %9287 = vmatpush.bf16.msra.mxu0 %v9018
        %9288 = vmatpush.bf16.msra.mxu0 %v9010
        %9289 = vmatpush.bf16.msra.mxu0 %v9002
        %9290 = vmatmul.bf16.gmra.mxu0 %v8422
        %v9291 = vpop.f32.mrf.mxu0
        %v9292 = vadd.f32 %v9279, %v9291
        %v9293 = vpop.f32.mrf.mxu0
        %9294 = vdwg.mxu0
        %9295 = vmatpush.bf16.msra.mxu0 %v8995
        %9296 = vmatpush.bf16.msra.mxu0 %v8987
        %9297 = vmatpush.bf16.msra.mxu0 %v8979
        %9298 = vmatpush.bf16.msra.mxu0 %v8971
        %9299 = vmatpush.bf16.msra.mxu0 %v8963
        %9300 = vmatpush.bf16.msra.mxu0 %v8955
        %9301 = vmatpush.bf16.msra.mxu0 %v8947
        %9302 = vmatpush.bf16.msra.mxu0 %v8939
        %9303 = vmatmul.bf16.gmra.mxu0 %v8421
        %v9304 = vpop.f32.mrf.mxu0
        %v9305 = vadd.f32 0.0, %v9304
        %v9306 = vpop.f32.mrf.mxu0
        %9307 = vdwg.mxu0
        %9308 = vmatpush.bf16.msra.mxu0 %v9059
        %9309 = vmatpush.bf16.msra.mxu0 %v9051
        %9310 = vmatpush.bf16.msra.mxu0 %v9043
        %9311 = vmatpush.bf16.msra.mxu0 %v9035
        %9312 = vmatpush.bf16.msra.mxu0 %v9027
        %9313 = vmatpush.bf16.msra.mxu0 %v9019
        %9314 = vmatpush.bf16.msra.mxu0 %v9011
        %9315 = vmatpush.bf16.msra.mxu0 %v9003
        %9316 = vmatmul.bf16.gmra.mxu0 %v8422
        %v9317 = vpop.f32.mrf.mxu0
        %v9318 = vadd.f32 %v9305, %v9317
        %v9319 = vpop.f32.mrf.mxu0
        %9320 = vdwg.mxu0
        %9321 = vmatpush.bf16.msra.mxu0 %v8996
        %9322 = vmatpush.bf16.msra.mxu0 %v8988
        %9323 = vmatpush.bf16.msra.mxu0 %v8980
        %9324 = vmatpush.bf16.msra.mxu0 %v8972
        %9325 = vmatpush.bf16.msra.mxu0 %v8964
        %9326 = vmatpush.bf16.msra.mxu0 %v8956
        %9327 = vmatpush.bf16.msra.mxu0 %v8948
        %9328 = vmatpush.bf16.msra.mxu0 %v8940
        %9329 = vmatmul.bf16.gmra.mxu0 %v8421
        %v9330 = vpop.f32.mrf.mxu0
        %v9331 = vadd.f32 0.0, %v9330
        %v9332 = vpop.f32.mrf.mxu0
        %9333 = vdwg.mxu0
        %9334 = vmatpush.bf16.msra.mxu0 %v9060
        %9335 = vmatpush.bf16.msra.mxu0 %v9052
        %9336 = vmatpush.bf16.msra.mxu0 %v9044
        %9337 = vmatpush.bf16.msra.mxu0 %v9036
        %9338 = vmatpush.bf16.msra.mxu0 %v9028
        %9339 = vmatpush.bf16.msra.mxu0 %v9020
        %9340 = vmatpush.bf16.msra.mxu0 %v9012
        %9341 = vmatpush.bf16.msra.mxu0 %v9004
        %9342 = vmatmul.bf16.gmra.mxu0 %v8422
        %v9343 = vpop.f32.mrf.mxu0
        %v9344 = vadd.f32 %v9331, %v9343
        %v9345 = vpop.f32.mrf.mxu0
        %9346 = vdwg.mxu0
        %9347 = vmatpush.bf16.msra.mxu0 %v8997
        %9348 = vmatpush.bf16.msra.mxu0 %v8989
        %9349 = vmatpush.bf16.msra.mxu0 %v8981
        %9350 = vmatpush.bf16.msra.mxu0 %v8973
        %9351 = vmatpush.bf16.msra.mxu0 %v8965
        %9352 = vmatpush.bf16.msra.mxu0 %v8957
        %9353 = vmatpush.bf16.msra.mxu0 %v8949
        %9354 = vmatpush.bf16.msra.mxu0 %v8941
        %9355 = vmatmul.bf16.gmra.mxu0 %v8421
        %v9356 = vpop.f32.mrf.mxu0
        %v9357 = vadd.f32 0.0, %v9356
        %v9358 = vpop.f32.mrf.mxu0
        %9359 = vdwg.mxu0
        %9360 = vmatpush.bf16.msra.mxu0 %v9061
        %9361 = vmatpush.bf16.msra.mxu0 %v9053
        %9362 = vmatpush.bf16.msra.mxu0 %v9045
        %9363 = vmatpush.bf16.msra.mxu0 %v9037
        %9364 = vmatpush.bf16.msra.mxu0 %v9029
        %9365 = vmatpush.bf16.msra.mxu0 %v9021
        %9366 = vmatpush.bf16.msra.mxu0 %v9013
        %9367 = vmatpush.bf16.msra.mxu0 %v9005
        %9368 = vmatmul.bf16.gmra.mxu0 %v8422
        %v9369 = vpop.f32.mrf.mxu0
        %v9370 = vadd.f32 %v9357, %v9369
        %v9371 = vpop.f32.mrf.mxu0
        %9372 = vdwg.mxu0
        %9373 = vmatpush.bf16.msra.mxu0 %v8998
        %9374 = vmatpush.bf16.msra.mxu0 %v8990
        %9375 = vmatpush.bf16.msra.mxu0 %v8982
        %9376 = vmatpush.bf16.msra.mxu0 %v8974
        %9377 = vmatpush.bf16.msra.mxu0 %v8966
        %9378 = vmatpush.bf16.msra.mxu0 %v8958
        %9379 = vmatpush.bf16.msra.mxu0 %v8950
        %9380 = vmatpush.bf16.msra.mxu0 %v8942
        %9381 = vmatmul.bf16.gmra.mxu0 %v8421
        %v9382 = vpop.f32.mrf.mxu0
        %v9383 = vadd.f32 0.0, %v9382
        %v9384 = vpop.f32.mrf.mxu0
        %9385 = vdwg.mxu0
        %9386 = vmatpush.bf16.msra.mxu0 %v9062
        %9387 = vmatpush.bf16.msra.mxu0 %v9054
        %9388 = vmatpush.bf16.msra.mxu0 %v9046
        %9389 = vmatpush.bf16.msra.mxu0 %v9038
        %9390 = vmatpush.bf16.msra.mxu0 %v9030
        %9391 = vmatpush.bf16.msra.mxu0 %v9022
        %9392 = vmatpush.bf16.msra.mxu0 %v9014
        %9393 = vmatpush.bf16.msra.mxu0 %v9006
        %9394 = vmatmul.bf16.gmra.mxu0 %v8422
        %v9395 = vpop.f32.mrf.mxu0
        %v9396 = vadd.f32 %v9383, %v9395
        %v9397 = vpop.f32.mrf.mxu0
        %9398 = vdwg.mxu0
        %s9399 = smul.addr %s2137, 8
        %s9400 = scalar_lea.vmem [#allocation2], %s9399
        %v9401 = vld [vmem:[%s9400] sm:$0xff]
        %v9402 = vld [vmem:[%s9400 + $0x8] sm:$0xff]
        %v9403 = vld [vmem:[%s9400 + $0x10] sm:$0xff]
        %v9404 = vld [vmem:[%s9400 + $0x18] sm:$0xff]
        %v9405 = vadd.f32 %v9401, %v9214
        %v9406 = vadd.f32 %v9402, %v9240
        %v9407 = vadd.f32 %v9403, %v9266
        %v9408 = vadd.f32 %v9404, %v9292
        %s9409 = smul.addr %s2126, 8
        %s9410 = scalar_lea.vmem [#allocation3], %s9409
        %v9411 = vld [vmem:[%s9410] sm:$0xff]
        %v9412 = vld [vmem:[%s9410 + $0x8] sm:$0xff]
        %v9413 = vld [vmem:[%s9410 + $0x10] sm:$0xff]
        %v9414 = vld [vmem:[%s9410 + $0x18] sm:$0xff]
        %v9415 = vadd.f32 %v9411, %v9318
        %v9416 = vadd.f32 %v9412, %v9344
        %v9417 = vadd.f32 %v9413, %v9370
        %v9418 = vadd.f32 %v9414, %v9396
        %v9419 = vmul.f32 %v9405, 0.5
        %v9420 = vtanh.pop %v9419
        %v9421 = vmul.f32 %v9420, 0.5
        %v9422 = vadd.f32 %v9421, 0.5
        %v9423 = vmul.f32 %v9406, 0.5
        %v9424 = vtanh.pop %v9423
        %v9425 = vmul.f32 %v9424, 0.5
        %v9426 = vadd.f32 %v9425, 0.5
        %v9427 = vtanh.pop %v9407
        %v9428 = vmul.f32 %v9408, 0.5
        %v9429 = vtanh.pop %v9428
        %v9430 = vmul.f32 %v9429, 0.5
        %v9431 = vadd.f32 %v9430, 0.5
        %v9432 = vmul.f32 %v9426, %v8396
        %v9433 = vmul.f32 %v9422, %v9427
        %v9434 = vadd.f32 %v9432, %v9433
        %v9435 = vtanh.pop %v9434
        %v9436 = vmul.f32 %v9431, %v9435
        %v9437 = vmul.f32 %v9415, 0.5
        %v9438 = vtanh.pop %v9437
        %v9439 = vmul.f32 %v9438, 0.5
        %v9440 = vadd.f32 %v9439, 0.5
        %v9441 = vmul.f32 %v9416, 0.5
        %v9442 = vtanh.pop %v9441
        %v9443 = vmul.f32 %v9442, 0.5
        %v9444 = vadd.f32 %v9443, 0.5
        %v9445 = vtanh.pop %v9417
        %v9446 = vmul.f32 %v9418, 0.5
        %v9447 = vtanh.pop %v9446
        %v9448 = vmul.f32 %v9447, 0.5
        %v9449 = vadd.f32 %v9448, 0.5
        %v9450 = vmul.f32 %v9444, %v8414
        %v9451 = vmul.f32 %v9440, %v9445
        %v9452 = vadd.f32 %v9450, %v9451
        %v9453 = vtanh.pop %v9452
        %v9454 = vmul.f32 %v9449, %v9453
        %s9455 = scalar_lea.vmem %s376, 56 [#allocation14]
        %9456 = vst [vmem:[%s9455] sm:$0xff] %v9436
        %9457 = vst [vmem:[%s383] sm:$0xff] %v9454
        %9458 = vst [vmem:[#allocation4] sm:$0xff] %v9436
        %9459 = vst [vmem:[#allocation5] sm:$0xff] %v9434
        %9460 = vst [vmem:[#allocation6] sm:$0xff] %v9454
        %9461 = vst [vmem:[#allocation7] sm:$0xff] %v9452
        %s9462 = sand.u32 %s195, 1
        %s9463 = scalar_lea.sflag [#allocation10], %s9462
        %s9464 = sand.u32 %s195, 1
        %s9465 = smul.addr %s9464, 64
        %s9466 = scalar_lea.vmem [#allocation14], %s9465
        %s9467 = sand.u32 %s223, 1
        %s9468 = scalar_lea.sflag [#allocation16], %s9467
        %s9469 = sand.u32 %s223, 1
        %s9470 = smul.addr %s9469, 64
        %s9471 = scalar_lea.vmem [#allocation15], %s9470
        // Predicated region
        $region65: #{tpu_custom_call.1} parent=47 // pred_check
          %p9472 = pneg %p205
        $region66: #{tpu_custom_call.1} parent=47 // pred_check_branch
          %9474 = sbr.rel (%p9472) target = $region68
        $region67: #{tpu_custom_call.1} parent=47 // pred_region
          %s9475 = smul.u32 8, %s28
          %9477 = vsyncadd %s9463, 0
          %s9478 = smul.addr %s9475, 8
          %s9479 = scalar_lea.hbm %s7, %s9478
          %s9480 = sshll.u32 %s9466, 4
          %s9481 = int_to_ptr.vmem [resolvable:$true] %s9480
          %s9482 = sshll.u32 %s9479, 4
          %s9483 = int_to_ptr.hbm [resolvable:$true] %s9482
          %9488 = dma.vmem_to_hbm [thread:$0]  %s9481, 1024, %s9483, %s9463, 128, 128, 8
        $region68: #{tpu_custom_call.1} parent=47 // pred_fallthru
          _
        // Predicated region
        $region69: #{tpu_custom_call.1} parent=47 // pred_check
          %p9489 = pneg %p233
        $region70: #{tpu_custom_call.1} parent=47 // pred_check_branch
          %9491 = sbr.rel (%p9489) target = $region72
        $region71: #{tpu_custom_call.1} parent=47 // pred_region
          %s9492 = ssub.s32 1, %s28
          %s9493 = smul.u32 8, %s9492
          %9495 = vsyncadd %s9468, 0
          %s9496 = smul.addr %s9493, 8
          %s9497 = scalar_lea.hbm %s8, %s9496
          %s9498 = sshll.u32 %s9471, 4
          %s9499 = int_to_ptr.vmem [resolvable:$true] %s9498
          %s9500 = sshll.u32 %s9497, 4
          %s9501 = int_to_ptr.hbm [resolvable:$true] %s9500
          %9506 = dma.vmem_to_hbm [thread:$0]  %s9499, 1024, %s9501, %s9468, 128, 128, 8
        $region72: #{tpu_custom_call.1} parent=47 // pred_fallthru
          _
      $region48: #{tpu_custom_call.1} parent=5 // pred_fallthru
        _
      %p9507 = scmp.le.s32.totalorder 2, %s23
      // Predicated region
      $region73: #{tpu_custom_call.1} parent=5 // pred_check
        %p9508 = pneg %p9507
      $region74: #{tpu_custom_call.1} parent=5 // pred_check_branch
        %9510 = sbr.rel (%p9508) target = $region76
      $region75: #{tpu_custom_call.1} parent=5 // pred_region
        %s9511 = ssub.s32 %s23, 2
        // Predicated region
        $region77: #{tpu_custom_call.1} parent=75 // pred_check
          %p9512 = pneg %p211
        $region78: #{tpu_custom_call.1} parent=75 // pred_check_branch
          %9514 = sbr.rel (%p9512) target = $region80
        $region79: #{tpu_custom_call.1} parent=75 // pred_region
          %s9515 = sand.u32 %s196, 1
          %s9516 = scalar_lea.sflag [#allocation10], %s9515
          %s9517 = sand.u32 %s196, 1
          %s9518 = smul.addr %s9517, 64
          %s9519 = scalar_lea.vmem [#allocation14], %s9518
          %9521 = dma.done %s9516, 1024
        $region80: #{tpu_custom_call.1} parent=75 // pred_fallthru
          _
        // Predicated region
        $region81: #{tpu_custom_call.1} parent=75 // pred_check
          %p9522 = pneg %p239
        $region82: #{tpu_custom_call.1} parent=75 // pred_check_branch
          %9524 = sbr.rel (%p9522) target = $region84
        $region83: #{tpu_custom_call.1} parent=75 // pred_region
          %s9525 = sand.u32 %s224, 1
          %s9526 = scalar_lea.sflag [#allocation16], %s9525
          %s9527 = sand.u32 %s224, 1
          %s9528 = smul.addr %s9527, 64
          %s9529 = scalar_lea.vmem [#allocation15], %s9528
          %9531 = dma.done %s9526, 1024
        $region84: #{tpu_custom_call.1} parent=75 // pred_fallthru
          _
      $region76: #{tpu_custom_call.1} parent=5 // pred_fallthru
        _
    $region6: #{tpu_custom_call.1} parent=1 // loop_footer
      %s27 = sadd.s32 1, %s23
    $region7: #{tpu_custom_call.1} parent=1 // loop_footer_branch
      %22 = sbr.rel target = $region3
    $region8: #{tpu_custom_call.1} parent=1 // loop_exit
      _
    %9532 = vsyncpa [#allocation9], 1
    %s9533 = scalar_lea.sflag [#allocation9], 1
    %9534 = vsyncpa %s9533, 1
    %9535 = vsyncpa [#allocation12], 1
    %9536 = vsyncpa [#allocation10], 1
    %s9537 = scalar_lea.sflag [#allocation10], 1
    %9538 = vsyncpa %s9537, 1
    %9539 = vsyncpa [#allocation16], 1
    %s9540 = scalar_lea.sflag [#allocation16], 1
    %9541 = vsyncpa %s9540, 1

</llo_original>
